<compile_context>
chip_gen: v5e
topology: v5e:2x2
jax: 0.10.0
libtpu: 0.0.40
codegen_flags: <defaults>
</compile_context>

<pallas_src>
import functools

import jax
import jax.numpy as jnp
from jax.experimental import pallas as pl
from jax.experimental.pallas import tpu as pltpu


# ----------------------------------------------------------------------------
# Small helpers
# ----------------------------------------------------------------------------
@functools.lru_cache(maxsize=None)
def _vmem_limit_bytes():
    """Generation-aware scoped-VMEM budget (v5e/v6e: 128 MiB phys, v7x: 64 MiB)."""
    cap = 64 << 20
    try:
        info = pltpu.get_tpu_info()
        cap = int(getattr(info, "vmem_capacity_bytes", cap) or cap)
    except Exception:
        pass
    # leave headroom for the compiler: 3/4 of physical, capped at ~100 MiB
    return int(min(cap * 3 // 4, 100 << 20))


def _pick_tile_h(H, Wp, max_rows=2048):
    """Largest even divisor TH of H with TH * Wp <= max_rows.

    Targets a per-step matmul M = TH*Wp in the ~512-2048 row sweet spot so the
    ~0.35us/grid-step overhead is amortised while scratch stays small."""
    even_divs = [t for t in range(2, H + 1, 2) if H % t == 0]
    if not even_divs:
        return H
    fitting = [t for t in even_divs if t * Wp <= max_rows]
    return max(fitting) if fitting else min(even_divs)


# ----------------------------------------------------------------------------
# Kernels
# ----------------------------------------------------------------------------
def _conv3x3_bn_leaky_kernel(x_ref, w_ref, s_ref, b_ref, o_ref,
                             slab_ref, patch_ref, *, in_ranges):
    """W-paired 3x3 conv (stride 1) + folded BN + LeakyReLU(0.1), row-tiled.

    x_ref:     (1, H, Wp, Cx)   bf16 paired input image, resident across h tiles
    w_ref:     (9*Cin, Cout)    bf16 paired-domain taps, row = (kh*3+kw)*Cin+ci
    s_ref:     (1, Cout)        f32 folded BN scale (paired)
    b_ref:     (1, Cout)        f32 folded BN bias  (paired)
    o_ref:     (1, TH, Wp, Cout)
    slab_ref:  VMEM (TH+2, Wp+2, Cin) bf16 halo slab (zero border = SAME pad)
    patch_ref: VMEM (TH*Wp, 9*Cin)    bf16 im2col scratch
    in_ranges: static ((start, size), ...) lane ranges of x_ref that form the
               conv input (lets conv2 take route[..., c/2:] without an HBM copy)
    """
    _, TH, Wp, Cout = o_ref.shape
    Cin = slab_ref.shape[-1]

    h = pl.program_id(1)
    nh = pl.num_programs(1)
    r0 = pl.multiple_of(h * TH, TH)

    zero_row = jnp.zeros((1, Wp + 2, Cin), slab_ref.dtype)
    zero_col = jnp.zeros((TH + 2, 1, Cin), slab_ref.dtype)

    # Left / right halo columns: zero every step (cheap, robust to grid splits).
    slab_ref[:, 0:1, :] = zero_col
    slab_ref[:, Wp + 1:Wp + 2, :] = zero_col

    def fill_rows(dst_start, nrows, src_start):
        off = 0
        for cs, sz in in_ranges:
            slab_ref[dst_start:dst_start + nrows, 1:Wp + 1, off:off + sz] = (
                x_ref[0, pl.ds(src_start, nrows), :, cs:cs + sz])
            off += sz

    # Interior rows: input rows r0 .. r0+TH-1 -> slab rows 1 .. TH.
    fill_rows(1, TH, r0)

    # Top halo row (input row r0-1, or zeros at the image top).
    @pl.when(h == 0)
    def _():
        slab_ref[0:1, :, :] = zero_row

    @pl.when(h > 0)
    def _():
        fill_rows(0, 1, r0 - 1)

    # Bottom halo row (input row r0+TH, or zeros at the image bottom).
    @pl.when(h == nh - 1)
    def _():
        slab_ref[TH + 1:TH + 2, :, :] = zero_row

    @pl.when(h < nh - 1)
    def _():
        fill_rows(TH + 1, 1, r0 + TH)

    # im2col: gather the 9 shifted taps, then ONE fused K = 9*Cin matmul.
    for kh in range(3):
        for kw in range(3):
            t = kh * 3 + kw
            patch_ref[:, t * Cin:(t + 1) * Cin] = (
                slab_ref[kh:kh + TH, kw:kw + Wp, :].reshape(TH * Wp, Cin))

    y = jnp.dot(patch_ref[...], w_ref[...],
                preferred_element_type=jnp.float32)          # (TH*Wp, Cout) f32
    y = y * s_ref[...] + b_ref[...]
    y = jnp.where(y > 0.0, y, 0.1 * y)                       # LeakyReLU(0.1)
    o_ref[...] = y.reshape(1, TH, Wp, Cout).astype(o_ref.dtype)


def _conv1x1_pool_kernel(x3_ref, r1_ref, rt_ref, wa_ref, wb_ref, s_ref, b_ref,
                         feat_ref, pool_ref):
    """1x1 conv over concat([x3, route1]) + BN + LeakyReLU, with the 2x2/2
    max-pool of concat([route, feat]) fused into the epilogue.

    x3_ref/r1_ref: (1, TH, Wp, c)   bf16 paired x3 / route1 (c = out_channels)
    rt_ref:        (1, TH, Wp, 2c)  bf16 paired route (for pooling)
    wa_ref/wb_ref: (c, 2c)          bf16 paired conv4 weight halves
    s_ref/b_ref:   (1, 2c)          f32 folded BN scale / bias (paired)
    feat_ref:      (1, TH, Wp, 2c)  f32 paired feat
    pool_ref:      (1, TH/2, Wp, 2c) f32 pooled [route | feat]
    """
    _, TH, Wp, c2 = feat_ref.shape
    c = c2 // 2
    ck = x3_ref.shape[-1]

    a = x3_ref[...].reshape(TH * Wp, ck)
    b = r1_ref[...].reshape(TH * Wp, ck)
    y = jnp.dot(a, wa_ref[...], preferred_element_type=jnp.float32)
    y = y + jnp.dot(b, wb_ref[...], preferred_element_type=jnp.float32)
    y = y * s_ref[...] + b_ref[...]
    y = jnp.where(y > 0.0, y, 0.1 * y)                       # (TH*Wp, 2c) f32
    feat_ref[...] = y.reshape(1, TH, Wp, c2).astype(feat_ref.dtype)

    # 2x2/2 max pool: H pair via row pairing, W pair via the lane halves.
    f = y.reshape(TH // 2, 2, Wp, c2)
    fh = jnp.maximum(f[:, 0], f[:, 1])
    pf = jnp.maximum(fh[:, :, :c], fh[:, :, c:])             # (TH/2, Wp, c)

    r = rt_ref[...].astype(jnp.float32).reshape(TH // 2, 2, Wp, c2)
    rh = jnp.maximum(r[:, 0], r[:, 1])
    pr = jnp.maximum(rh[:, :, :c], rh[:, :, c:])             # (TH/2, Wp, c)

    pool_ref[...] = jnp.concatenate([pr, pf], axis=-1).reshape(1, TH // 2, Wp, c2)


# ----------------------------------------------------------------------------
# pallas_call wrappers
# ----------------------------------------------------------------------------
def paired_conv3x3(x_p, w2, scale2, bias2, in_ranges, out_dtype=jnp.bfloat16):
    """x_p: (N, H, Wp, Cx) paired activation; w2: (3,3,Cin,Cout) paired weight."""
    N, H, Wp, Cx = x_p.shape
    Cin = sum(sz for _, sz in in_ranges)
    Cout = w2.shape[-1]
    TH = _pick_tile_h(H, Wp)
    nh = H // TH

    wf = w2.reshape(9 * Cin, Cout).astype(jnp.bfloat16)
    xb = x_p.astype(jnp.bfloat16)
    kernel = functools.partial(_conv3x3_bn_leaky_kernel,
                               in_ranges=tuple(in_ranges))

    return pl.pallas_call(
        kernel,
        out_shape=jax.ShapeDtypeStruct((N, H, Wp, Cout), out_dtype),
        grid=(N, nh),
        in_specs=[
            # full paired image stays VMEM-resident across the h-tile axis
            pl.BlockSpec((1, H, Wp, Cx), lambda n, h: (n, 0, 0, 0)),
            pl.BlockSpec((9 * Cin, Cout), lambda n, h: (0, 0)),
            pl.BlockSpec((1, Cout), lambda n, h: (0, 0)),
            pl.BlockSpec((1, Cout), lambda n, h: (0, 0)),
        ],
        out_specs=pl.BlockSpec((1, TH, Wp, Cout), lambda n, h: (n, h, 0, 0)),
        scratch_shapes=[
            pltpu.VMEM((TH + 2, Wp + 2, Cin), jnp.bfloat16),
            pltpu.VMEM((TH * Wp, 9 * Cin), jnp.bfloat16),
        ],
        compiler_params=pltpu.CompilerParams(
            # h is "arbitrary": splitting it on v7x megacore would make each
            # core re-DMA the full resident image; shard on batch only.
            dimension_semantics=("parallel", "arbitrary"),
            vmem_limit_bytes=_vmem_limit_bytes()),
    )(xb, wf, scale2, bias2)


def conv4_and_pool(x3_p, r1_p, route_p, wa, wb, scale2, bias2):
    N, H, Wp, ck = x3_p.shape
    c2 = route_p.shape[-1]
    TH = _pick_tile_h(H, Wp)
    nh = H // TH

    return pl.pallas_call(
        _conv1x1_pool_kernel,
        out_shape=(jax.ShapeDtypeStruct((N, H, Wp, c2), jnp.float32),
                   jax.ShapeDtypeStruct((N, H // 2, Wp, c2), jnp.float32)),
        grid=(N, nh),
        in_specs=[
            pl.BlockSpec((1, TH, Wp, ck), lambda n, h: (n, h, 0, 0)),
            pl.BlockSpec((1, TH, Wp, ck), lambda n, h: (n, h, 0, 0)),
            pl.BlockSpec((1, TH, Wp, c2), lambda n, h: (n, h, 0, 0)),
            pl.BlockSpec((ck, c2), lambda n, h: (0, 0)),
            pl.BlockSpec((ck, c2), lambda n, h: (0, 0)),
            pl.BlockSpec((1, c2), lambda n, h: (0, 0)),
            pl.BlockSpec((1, c2), lambda n, h: (0, 0)),
        ],
        out_specs=(
            pl.BlockSpec((1, TH, Wp, c2), lambda n, h: (n, h, 0, 0)),
            pl.BlockSpec((1, TH // 2, Wp, c2), lambda n, h: (n, h, 0, 0)),
        ),
        compiler_params=pltpu.CompilerParams(
            dimension_semantics=("parallel", "parallel"),
            vmem_limit_bytes=_vmem_limit_bytes()),
    )(x3_p.astype(jnp.bfloat16), r1_p.astype(jnp.bfloat16),
      route_p.astype(jnp.bfloat16), wa.astype(jnp.bfloat16),
      wb.astype(jnp.bfloat16), scale2, bias2)


# ----------------------------------------------------------------------------
# Weight / BN re-expression in the W-paired domain (exact transforms)
# ----------------------------------------------------------------------------
def _pair_conv3x3_weight(w):
    """(3,3,Cin,Cout) HWIO weight -> paired-domain (3,3,2Cin,2Cout) weight."""
    Cin, Cout = w.shape[2], w.shape[3]
    w2 = jnp.zeros((3, 3, 2, Cin, 2, Cout), w.dtype)
    for q in range(2):            # output sub-position within the W pair
        for s in (-1, 0, 1):      # paired-column tap offset
            for p in range(2):    # input sub-position within the W pair
                kw = 2 * s + p - q + 1
                if 0 <= kw <= 2:
                    w2 = w2.at[:, s + 1, p, :, q, :].set(w[:, kw, :, :])
    return w2.reshape(3, 3, 2 * Cin, 2 * Cout)


def _pair_conv1x1_weight(w):
    """(Ck, Cout) -> (2Ck, 2Cout), block-diagonal over the W-pair index."""
    Ck, Cout = w.shape
    w2 = jnp.zeros((2, Ck, 2, Cout), w.dtype)
    w2 = w2.at[0, :, 0, :].set(w).at[1, :, 1, :].set(w)
    return w2.reshape(2 * Ck, 2 * Cout)


def _pair_cb(v):
    """Folded BN scale/bias (1, C) -> paired (1, 2C)."""
    return jnp.concatenate([v, v], axis=-1)


def _fold_bn(gamma, beta, mean, var, eps=1e-5):
    scale = gamma / jnp.sqrt(var + eps)
    bias = beta - mean * scale
    return scale[None, :], bias[None, :]          # (1, C)


# ----------------------------------------------------------------------------
# Parameters (deterministic synthetic init) + module forward
# ----------------------------------------------------------------------------
def _make_conv_params(key, cin, cout, ksize):
    k1, k2, k3, k4, k5 = jax.random.split(key, 5)
    if ksize == 3:
        w = 0.1 * jax.random.normal(k1, (3, 3, cin, cout), dtype=jnp.float32)
    else:
        w = 0.1 * jax.random.normal(k1, (cin, cout), dtype=jnp.float32)
    gamma = 1.0 + 0.1 * jax.random.normal(k2, (cout,), dtype=jnp.float32)
    beta = 0.1 * jax.random.normal(k3, (cout,), dtype=jnp.float32)
    mean = 0.1 * jax.random.normal(k4, (cout,), dtype=jnp.float32)
    var = 1.0 + 0.1 * jax.random.uniform(k5, (cout,), dtype=jnp.float32)
    scale, bias = _fold_bn(gamma, beta, mean, var)
    return {"w": w, "scale": scale, "bias": bias}


def init_resblock_params(key, in_channels, out_channels):
    k1, k2, k3, k4 = jax.random.split(key, 4)
    c = out_channels
    return {
        "conv1": _make_conv_params(k1, in_channels, c, 3),
        "conv2": _make_conv_params(k2, c // 2, c // 2, 3),
        "conv3": _make_conv_params(k3, c // 2, c // 2, 3),
        "conv4": _make_conv_params(k4, c, c, 1),
    }


@functools.partial(jax.jit, static_argnums=(2,))
def resblock_body_forward(x_nchw, params, out_channels):
    c = out_channels
    N, Cin0, H, W = x_nchw.shape
    assert H % 2 == 0 and W % 2 == 0, "2x2 maxpool / W-pairing need even H, W"
    assert c % 2 == 0
    Wp = W // 2

    x = jnp.transpose(x_nchw, (0, 2, 3, 1))                 # NCHW -> NHWC
    xp = x.reshape(N, H, Wp, 2 * Cin0)                      # W-paired view (free)

    p = params["conv1"]
    route_p = paired_conv3x3(xp, _pair_conv3x3_weight(p["w"]),
                             _pair_cb(p["scale"]), _pair_cb(p["bias"]),
                             in_ranges=((0, 2 * Cin0),))    # (N,H,Wp,2c) bf16

    # conv2: input = route[..., c/2:]; the split is applied in-kernel via
    # the two paired lane ranges of route_p (no HBM slice copy).
    p = params["conv2"]
    r1_p = paired_conv3x3(route_p, _pair_conv3x3_weight(p["w"]),
                          _pair_cb(p["scale"]), _pair_cb(p["bias"]),
                          in_ranges=((c // 2, c // 2), (c + c // 2, c // 2)))

    p = params["conv3"]
    x3_p = paired_conv3x3(r1_p, _pair_conv3x3_weight(p["w"]),
                          _pair_cb(p["scale"]), _pair_cb(p["bias"]),
                          in_ranges=((0, c),))              # (N,H,Wp,c) bf16

    # conv4 over concat([x3, route1]) + fused 2x2 maxpool of [route | feat].
    p = params["conv4"]
    wa = _pair_conv1x1_weight(p["w"][: c // 2])             # (c, 2c)
    wb = _pair_conv1x1_weight(p["w"][c // 2:])              # (c, 2c)
    feat_p, pooled = conv4_and_pool(x3_p, r1_p, route_p, wa, wb,
                                    _pair_cb(p["scale"]), _pair_cb(p["bias"]))

    feat = feat_p.reshape(N, H, W, c)                       # un-pair (free)
    pooled_nchw = jnp.transpose(pooled, (0, 3, 1, 2))       # NHWC -> NCHW
    feat_nchw = jnp.transpose(feat, (0, 3, 1, 2))
    return pooled_nchw, feat_nchw


# ----------------------------------------------------------------------------
# Pure-JAX (f32) reference for the correctness check
# ----------------------------------------------------------------------------
def _ref_forward(x_nchw, params, c):
    x = jnp.transpose(x_nchw, (0, 2, 3, 1))

    def conv3(x, p):
        y = jax.lax.conv_general_dilated(
            x, p["w"], (1, 1), "SAME",
            dimension_numbers=("NHWC", "HWIO", "NHWC"))
        y = y * p["scale"][0] + p["bias"][0]
        return jnp.where(y > 0, y, 0.1 * y)

    def conv1(x, p):
        y = jnp.einsum("nhwc,cd->nhwd", x, p["w"])
        y = y * p["scale"][0] + p["bias"][0]
        return jnp.where(y > 0, y, 0.1 * y)

    r = conv3(x, params["conv1"])
    r1 = conv3(r[..., c // 2:], params["conv2"])
    x3 = conv3(r1, params["conv3"])
    feat = conv1(jnp.concatenate([x3, r1], axis=-1), params["conv4"])
    cat = jnp.concatenate([r, feat], axis=-1)
    N, H, W, C2 = cat.shape
    pooled = cat.reshape(N, H // 2, 2, W // 2, 2, C2).max(axis=(2, 4))
    return jnp.transpose(pooled, (0, 3, 1, 2)), jnp.transpose(feat, (0, 3, 1, 2))


# ----------------------------------------------------------------------------
if __name__ == "__main__":
    N, IN_C, H, W = 2, 4, 16, 16
    OUT_C = 8

    key = jax.random.PRNGKey(0)
    kx, kp = jax.random.split(key)
    x = jax.random.normal(kx, (N, IN_C, H, W), dtype=jnp.float32)
    params = init_resblock_params(kp, IN_C, OUT_C)

    pooled, feat = resblock_body_forward(x, params, OUT_C)
    jax.block_until_ready((pooled, feat))

    assert pooled.shape == (N, 2 * OUT_C, H // 2, W // 2), pooled.shape
    assert feat.shape == (N, OUT_C, H, W), feat.shape
    assert pooled.dtype == jnp.float32 and feat.dtype == jnp.float32

    # Numerical check vs f32 reference (Pallas path feeds the MXU with bf16).
    pooled_ref, feat_ref = _ref_forward(x, params, OUT_C)
    err_p = float(jnp.max(jnp.abs(pooled - pooled_ref)))
    err_f = float(jnp.max(jnp.abs(feat - feat_ref)))
    tol_p = 0.05 + 0.02 * float(jnp.max(jnp.abs(pooled_ref)))
    tol_f = 0.05 + 0.02 * float(jnp.max(jnp.abs(feat_ref)))
    assert err_p < tol_p and err_f < tol_f, (err_p, tol_p, err_f, tol_f)

    print("KERNEL_OK")
</pallas_src>

<mosaic_0001>
module attributes {stable_mosaic.version = 11 : i64} {
  func.func @_conv3x3_bn_leaky_kernel(%arg0: i32, %arg1: i32, %arg2: memref<1x16x8x8xbf16, #tpu.memory_space<vmem>>, %arg3: memref<72x16xbf16, #tpu.memory_space<vmem>>, %arg4: memref<1x16xf32, #tpu.memory_space<vmem>>, %arg5: memref<1x16xf32, #tpu.memory_space<vmem>>, %arg6: memref<1x16x8x16xbf16, #tpu.memory_space<vmem>>, %arg7: memref<18x10x8xbf16, #tpu.memory_space<vmem>>, %arg8: memref<128x72xbf16, #tpu.memory_space<vmem>>) attributes {dimension_semantics = [#tpu.dimension_semantics<parallel>, #tpu.dimension_semantics<arbitrary>], iteration_bounds = array<i64: 2, 1>, scalar_prefetch = 0 : i64, scratch_operands = 2 : i64, tpu.core_type = #tpu.core_type<tc>, window_params = [{transform_indices = @transform_0, window_bounds = array<i64: 1, 16, 8, 8>}, {pipeline_mode = #tpu.pipeline_mode<synchronous>, transform_indices = @transform_1, window_bounds = array<i64: 72, 16>}, {pipeline_mode = #tpu.pipeline_mode<synchronous>, transform_indices = @transform_2, window_bounds = array<i64: 1, 16>}, {pipeline_mode = #tpu.pipeline_mode<synchronous>, transform_indices = @transform_3, window_bounds = array<i64: 1, 16>}, {transform_indices = @transform_4, window_bounds = array<i64: 1, 16, 8, 16>}]} {
    %c16_i32 = arith.constant 16 : i32
    %0 = arith.muli %arg1, %c16_i32 : i32
    %1 = tpu.assume_multiple %0, 16 : i32
    %cst = arith.constant 0.000000e+00 : bf16
    %2 = vector.broadcast %cst : bf16 to vector<1x10x8xbf16>
    %cst_0 = arith.constant 0.000000e+00 : bf16
    %3 = vector.broadcast %cst_0 : bf16 to vector<18x1x8xbf16>
    %c0 = arith.constant 0 : index
    %c0_1 = arith.constant 0 : index
    %c0_2 = arith.constant 0 : index
    %4 = vector.load %arg7[%c0, %c0_1, %c0_2] : memref<18x10x8xbf16, #tpu.memory_space<vmem>>, vector<18x1x8xbf16>
    tpu.vector_store %arg7[%c0, %c0_1, %c0_2], %3 {strides = array<i32>} : memref<18x10x8xbf16, #tpu.memory_space<vmem>>, vector<18x1x8xbf16>,
    %c0_3 = arith.constant 0 : index
    %c9 = arith.constant 9 : index
    %c0_4 = arith.constant 0 : index
    %5 = vector.load %arg7[%c0_3, %c9, %c0_4] : memref<18x10x8xbf16, #tpu.memory_space<vmem>>, vector<18x1x8xbf16>
    tpu.vector_store %arg7[%c0_3, %c9, %c0_4], %3 {strides = array<i32>} : memref<18x10x8xbf16, #tpu.memory_space<vmem>>, vector<18x1x8xbf16>,
    %c0_5 = arith.constant 0 : index
    %6 = arith.index_cast %1 : i32 to index
    %c0_6 = arith.constant 0 : index
    %c0_7 = arith.constant 0 : index
    %7 = vector.load %arg2[%c0_5, %6, %c0_6, %c0_7] : memref<1x16x8x8xbf16, #tpu.memory_space<vmem>>, vector<1x16x8x8xbf16>
    %8 = vector.shape_cast %7 : vector<1x16x8x8xbf16> to vector<16x8x8xbf16>
    %c1 = arith.constant 1 : index
    %c1_8 = arith.constant 1 : index
    %c0_9 = arith.constant 0 : index
    %9 = vector.load %arg7[%c1, %c1_8, %c0_9] : memref<18x10x8xbf16, #tpu.memory_space<vmem>>, vector<16x8x8xbf16>
    tpu.vector_store %arg7[%c1, %c1_8, %c0_9], %8 {strides = array<i32>} : memref<18x10x8xbf16, #tpu.memory_space<vmem>>, vector<16x8x8xbf16>,
    %c0_i32 = arith.constant 0 : i32
    %10 = arith.cmpi eq, %arg1, %c0_i32 : i32
    %11 = arith.extui %10 : i1 to i32
    %c0_i32_10 = arith.constant 0 : i32
    %12 = arith.cmpi ne, %11, %c0_i32_10 : i32
    scf.if %12 {
      %c0_68 = arith.constant 0 : index
      %c0_69 = arith.constant 0 : index
      %c0_70 = arith.constant 0 : index
      %66 = vector.load %arg7[%c0_68, %c0_69, %c0_70] : memref<18x10x8xbf16, #tpu.memory_space<vmem>>, vector<1x10x8xbf16>
      tpu.vector_store %arg7[%c0_68, %c0_69, %c0_70], %2 {strides = array<i32>} : memref<18x10x8xbf16, #tpu.memory_space<vmem>>, vector<1x10x8xbf16>,
    } else {
    }
    %c0_i32_11 = arith.constant 0 : i32
    %13 = arith.cmpi sgt, %arg1, %c0_i32_11 : i32
    %14 = arith.extui %13 : i1 to i32
    %c0_i32_12 = arith.constant 0 : i32
    %15 = arith.cmpi ne, %14, %c0_i32_12 : i32
    scf.if %15 {
      %c1_i32 = arith.constant 1 : i32
      %66 = arith.subi %1, %c1_i32 : i32
      %c0_68 = arith.constant 0 : index
      %67 = arith.index_cast %66 : i32 to index
      %c0_69 = arith.constant 0 : index
      %c0_70 = arith.constant 0 : index
      %68 = vector.load %arg2[%c0_68, %67, %c0_69, %c0_70] : memref<1x16x8x8xbf16, #tpu.memory_space<vmem>>, vector<1x1x8x8xbf16>
      %69 = vector.shape_cast %68 : vector<1x1x8x8xbf16> to vector<1x8x8xbf16>
      %c0_71 = arith.constant 0 : index
      %c1_72 = arith.constant 1 : index
      %c0_73 = arith.constant 0 : index
      %70 = vector.load %arg7[%c0_71, %c1_72, %c0_73] : memref<18x10x8xbf16, #tpu.memory_space<vmem>>, vector<1x8x8xbf16>
      tpu.vector_store %arg7[%c0_71, %c1_72, %c0_73], %69 {strides = array<i32>} : memref<18x10x8xbf16, #tpu.memory_space<vmem>>, vector<1x8x8xbf16>,
    } else {
    }
    %c0_i32_13 = arith.constant 0 : i32
    %16 = arith.cmpi eq, %arg1, %c0_i32_13 : i32
    %17 = arith.extui %16 : i1 to i32
    %c0_i32_14 = arith.constant 0 : i32
    %18 = arith.cmpi ne, %17, %c0_i32_14 : i32
    scf.if %18 {
      %c17 = arith.constant 17 : index
      %c0_68 = arith.constant 0 : index
      %c0_69 = arith.constant 0 : index
      %66 = vector.load %arg7[%c17, %c0_68, %c0_69] : memref<18x10x8xbf16, #tpu.memory_space<vmem>>, vector<1x10x8xbf16>
      tpu.vector_store %arg7[%c17, %c0_68, %c0_69], %2 {strides = array<i32>} : memref<18x10x8xbf16, #tpu.memory_space<vmem>>, vector<1x10x8xbf16>,
    } else {
    }
    %c0_i32_15 = arith.constant 0 : i32
    %19 = arith.cmpi slt, %arg1, %c0_i32_15 : i32
    %20 = arith.extui %19 : i1 to i32
    %c0_i32_16 = arith.constant 0 : i32
    %21 = arith.cmpi ne, %20, %c0_i32_16 : i32
    scf.if %21 {
      %c16_i32_68 = arith.constant 16 : i32
      %66 = arith.addi %1, %c16_i32_68 : i32
      %c0_69 = arith.constant 0 : index
      %67 = arith.index_cast %66 : i32 to index
      %c0_70 = arith.constant 0 : index
      %c0_71 = arith.constant 0 : index
      %68 = vector.load %arg2[%c0_69, %67, %c0_70, %c0_71] : memref<1x16x8x8xbf16, #tpu.memory_space<vmem>>, vector<1x1x8x8xbf16>
      %69 = vector.shape_cast %68 : vector<1x1x8x8xbf16> to vector<1x8x8xbf16>
      %c17 = arith.constant 17 : index
      %c1_72 = arith.constant 1 : index
      %c0_73 = arith.constant 0 : index
      %70 = vector.load %arg7[%c17, %c1_72, %c0_73] : memref<18x10x8xbf16, #tpu.memory_space<vmem>>, vector<1x8x8xbf16>
      tpu.vector_store %arg7[%c17, %c1_72, %c0_73], %69 {strides = array<i32>} : memref<18x10x8xbf16, #tpu.memory_space<vmem>>, vector<1x8x8xbf16>,
    } else {
    }
    %c0_17 = arith.constant 0 : index
    %c0_18 = arith.constant 0 : index
    %c0_19 = arith.constant 0 : index
    %22 = vector.load %arg7[%c0_17, %c0_18, %c0_19] : memref<18x10x8xbf16, #tpu.memory_space<vmem>>, vector<16x8x8xbf16>
    %23 = vector.shape_cast %22 : vector<16x8x8xbf16> to vector<128x8xbf16>
    %c0_20 = arith.constant 0 : index
    %c0_21 = arith.constant 0 : index
    %24 = vector.load %arg8[%c0_20, %c0_21] : memref<128x72xbf16, #tpu.memory_space<vmem>>, vector<128x8xbf16>
    tpu.vector_store %arg8[%c0_20, %c0_21], %23 {strides = array<i32>} : memref<128x72xbf16, #tpu.memory_space<vmem>>, vector<128x8xbf16>,
    %c0_22 = arith.constant 0 : index
    %c1_23 = arith.constant 1 : index
    %c0_24 = arith.constant 0 : index
    %25 = vector.load %arg7[%c0_22, %c1_23, %c0_24] : memref<18x10x8xbf16, #tpu.memory_space<vmem>>, vector<16x8x8xbf16>
    %26 = vector.shape_cast %25 : vector<16x8x8xbf16> to vector<128x8xbf16>
    %c0_25 = arith.constant 0 : index
    %c8 = arith.constant 8 : index
    %27 = vector.load %arg8[%c0_25, %c8] : memref<128x72xbf16, #tpu.memory_space<vmem>>, vector<128x8xbf16>
    tpu.vector_store %arg8[%c0_25, %c8], %26 {strides = array<i32>} : memref<128x72xbf16, #tpu.memory_space<vmem>>, vector<128x8xbf16>,
    %c0_26 = arith.constant 0 : index
    %c2 = arith.constant 2 : index
    %c0_27 = arith.constant 0 : index
    %28 = vector.load %arg7[%c0_26, %c2, %c0_27] : memref<18x10x8xbf16, #tpu.memory_space<vmem>>, vector<16x8x8xbf16>
    %29 = vector.shape_cast %28 : vector<16x8x8xbf16> to vector<128x8xbf16>
    %c0_28 = arith.constant 0 : index
    %c16 = arith.constant 16 : index
    %30 = vector.load %arg8[%c0_28, %c16] : memref<128x72xbf16, #tpu.memory_space<vmem>>, vector<128x8xbf16>
    tpu.vector_store %arg8[%c0_28, %c16], %29 {strides = array<i32>} : memref<128x72xbf16, #tpu.memory_space<vmem>>, vector<128x8xbf16>,
    %c1_29 = arith.constant 1 : index
    %c0_30 = arith.constant 0 : index
    %c0_31 = arith.constant 0 : index
    %31 = vector.load %arg7[%c1_29, %c0_30, %c0_31] : memref<18x10x8xbf16, #tpu.memory_space<vmem>>, vector<16x8x8xbf16>
    %32 = vector.shape_cast %31 : vector<16x8x8xbf16> to vector<128x8xbf16>
    %c0_32 = arith.constant 0 : index
    %c24 = arith.constant 24 : index
    %33 = vector.load %arg8[%c0_32, %c24] : memref<128x72xbf16, #tpu.memory_space<vmem>>, vector<128x8xbf16>
    tpu.vector_store %arg8[%c0_32, %c24], %32 {strides = array<i32>} : memref<128x72xbf16, #tpu.memory_space<vmem>>, vector<128x8xbf16>,
    %c1_33 = arith.constant 1 : index
    %c1_34 = arith.constant 1 : index
    %c0_35 = arith.constant 0 : index
    %34 = vector.load %arg7[%c1_33, %c1_34, %c0_35] : memref<18x10x8xbf16, #tpu.memory_space<vmem>>, vector<16x8x8xbf16>
    %35 = vector.shape_cast %34 : vector<16x8x8xbf16> to vector<128x8xbf16>
    %c0_36 = arith.constant 0 : index
    %c32 = arith.constant 32 : index
    %36 = vector.load %arg8[%c0_36, %c32] : memref<128x72xbf16, #tpu.memory_space<vmem>>, vector<128x8xbf16>
    tpu.vector_store %arg8[%c0_36, %c32], %35 {strides = array<i32>} : memref<128x72xbf16, #tpu.memory_space<vmem>>, vector<128x8xbf16>,
    %c1_37 = arith.constant 1 : index
    %c2_38 = arith.constant 2 : index
    %c0_39 = arith.constant 0 : index
    %37 = vector.load %arg7[%c1_37, %c2_38, %c0_39] : memref<18x10x8xbf16, #tpu.memory_space<vmem>>, vector<16x8x8xbf16>
    %38 = vector.shape_cast %37 : vector<16x8x8xbf16> to vector<128x8xbf16>
    %c0_40 = arith.constant 0 : index
    %c40 = arith.constant 40 : index
    %39 = vector.load %arg8[%c0_40, %c40] : memref<128x72xbf16, #tpu.memory_space<vmem>>, vector<128x8xbf16>
    tpu.vector_store %arg8[%c0_40, %c40], %38 {strides = array<i32>} : memref<128x72xbf16, #tpu.memory_space<vmem>>, vector<128x8xbf16>,
    %c2_41 = arith.constant 2 : index
    %c0_42 = arith.constant 0 : index
    %c0_43 = arith.constant 0 : index
    %40 = vector.load %arg7[%c2_41, %c0_42, %c0_43] : memref<18x10x8xbf16, #tpu.memory_space<vmem>>, vector<16x8x8xbf16>
    %41 = vector.shape_cast %40 : vector<16x8x8xbf16> to vector<128x8xbf16>
    %c0_44 = arith.constant 0 : index
    %c48 = arith.constant 48 : index
    %42 = vector.load %arg8[%c0_44, %c48] : memref<128x72xbf16, #tpu.memory_space<vmem>>, vector<128x8xbf16>
    tpu.vector_store %arg8[%c0_44, %c48], %41 {strides = array<i32>} : memref<128x72xbf16, #tpu.memory_space<vmem>>, vector<128x8xbf16>,
    %c2_45 = arith.constant 2 : index
    %c1_46 = arith.constant 1 : index
    %c0_47 = arith.constant 0 : index
    %43 = vector.load %arg7[%c2_45, %c1_46, %c0_47] : memref<18x10x8xbf16, #tpu.memory_space<vmem>>, vector<16x8x8xbf16>
    %44 = vector.shape_cast %43 : vector<16x8x8xbf16> to vector<128x8xbf16>
    %c0_48 = arith.constant 0 : index
    %c56 = arith.constant 56 : index
    %45 = vector.load %arg8[%c0_48, %c56] : memref<128x72xbf16, #tpu.memory_space<vmem>>, vector<128x8xbf16>
    tpu.vector_store %arg8[%c0_48, %c56], %44 {strides = array<i32>} : memref<128x72xbf16, #tpu.memory_space<vmem>>, vector<128x8xbf16>,
    %c2_49 = arith.constant 2 : index
    %c2_50 = arith.constant 2 : index
    %c0_51 = arith.constant 0 : index
    %46 = vector.load %arg7[%c2_49, %c2_50, %c0_51] : memref<18x10x8xbf16, #tpu.memory_space<vmem>>, vector<16x8x8xbf16>
    %47 = vector.shape_cast %46 : vector<16x8x8xbf16> to vector<128x8xbf16>
    %c0_52 = arith.constant 0 : index
    %c64 = arith.constant 64 : index
    %48 = vector.load %arg8[%c0_52, %c64] : memref<128x72xbf16, #tpu.memory_space<vmem>>, vector<128x8xbf16>
    tpu.vector_store %arg8[%c0_52, %c64], %47 {strides = array<i32>} : memref<128x72xbf16, #tpu.memory_space<vmem>>, vector<128x8xbf16>,
    %c0_53 = arith.constant 0 : index
    %c0_54 = arith.constant 0 : index
    %49 = vector.load %arg8[%c0_53, %c0_54] : memref<128x72xbf16, #tpu.memory_space<vmem>>, vector<128x72xbf16>
    %c0_55 = arith.constant 0 : index
    %c0_56 = arith.constant 0 : index
    %50 = vector.load %arg3[%c0_55, %c0_56] : memref<72x16xbf16, #tpu.memory_space<vmem>>, vector<72x16xbf16>
    %cst_57 = arith.constant dense<0.000000e+00> : vector<128x16xf32>
    %51 = tpu.matmul %49, %50, %cst_57 {dimension_numbers = #tpu.dot_dimension_numbers<[1], [0], [0], [1], [0, 0, 1, 1], [], []>} : vector<128x72xbf16>, vector<72x16xbf16>, vector<128x16xf32> -> vector<128x16xf32>
    %c0_58 = arith.constant 0 : index
    %c0_59 = arith.constant 0 : index
    %52 = vector.load %arg4[%c0_58, %c0_59] : memref<1x16xf32, #tpu.memory_space<vmem>>, vector<1x16xf32>
    %53 = vector.broadcast %52 : vector<1x16xf32> to vector<128x16xf32>
    %54 = arith.mulf %51, %53 : vector<128x16xf32>
    %c0_60 = arith.constant 0 : index
    %c0_61 = arith.constant 0 : index
    %55 = vector.load %arg5[%c0_60, %c0_61] : memref<1x16xf32, #tpu.memory_space<vmem>>, vector<1x16xf32>
    %56 = vector.broadcast %55 : vector<1x16xf32> to vector<128x16xf32>
    %57 = arith.addf %54, %56 : vector<128x16xf32>
    %cst_62 = arith.constant 0.000000e+00 : f32
    %58 = vector.broadcast %cst_62 : f32 to vector<128x16xf32>
    %59 = arith.cmpf ogt, %57, %58 : vector<128x16xf32>
    %cst_63 = arith.constant 1.000000e-01 : f32
    %60 = vector.broadcast %cst_63 : f32 to vector<128x16xf32>
    %61 = arith.mulf %60, %57 : vector<128x16xf32>
    %62 = arith.select %59, %57, %61 : vector<128x16xi1>, vector<128x16xf32>
    %63 = vector.shape_cast %62 : vector<128x16xf32> to vector<1x16x8x16xf32>
    %64 = arith.truncf %63 : vector<1x16x8x16xf32> to vector<1x16x8x16xbf16>
    %c0_64 = arith.constant 0 : index
    %c0_65 = arith.constant 0 : index
    %c0_66 = arith.constant 0 : index
    %c0_67 = arith.constant 0 : index
    %65 = vector.load %arg6[%c0_64, %c0_65, %c0_66, %c0_67] : memref<1x16x8x16xbf16, #tpu.memory_space<vmem>>, vector<1x16x8x16xbf16>
    tpu.vector_store %arg6[%c0_64, %c0_65, %c0_66, %c0_67], %64 {strides = array<i32>} : memref<1x16x8x16xbf16, #tpu.memory_space<vmem>>, vector<1x16x8x16xbf16>,
    return
  }
  func.func @transform_0(%arg0: i32, %arg1: i32) -> (i32, i32, i32, i32) {
    %c0_i32 = arith.constant 0 : i32
    %c0_i32_0 = arith.constant 0 : i32
    %c0_i32_1 = arith.constant 0 : i32
    %c0_i32_2 = arith.constant 0 : i32
    return %arg0, %c0_i32, %c0_i32_0, %c0_i32_1 : i32, i32, i32, i32
  }
  func.func @transform_1(%arg0: i32, %arg1: i32) -> (i32, i32) {
    %c0_i32 = arith.constant 0 : i32
    %c0_i32_0 = arith.constant 0 : i32
    %c0_i32_1 = arith.constant 0 : i32
    return %c0_i32, %c0_i32_0 : i32, i32
  }
  func.func @transform_2(%arg0: i32, %arg1: i32) -> (i32, i32) {
    %c0_i32 = arith.constant 0 : i32
    %c0_i32_0 = arith.constant 0 : i32
    %c0_i32_1 = arith.constant 0 : i32
    return %c0_i32, %c0_i32_0 : i32, i32
  }
  func.func @transform_3(%arg0: i32, %arg1: i32) -> (i32, i32) {
    %c0_i32 = arith.constant 0 : i32
    %c0_i32_0 = arith.constant 0 : i32
    %c0_i32_1 = arith.constant 0 : i32
    return %c0_i32, %c0_i32_0 : i32, i32
  }
  func.func @transform_4(%arg0: i32, %arg1: i32) -> (i32, i32, i32, i32) {
    %c0_i32 = arith.constant 0 : i32
    %c0_i32_0 = arith.constant 0 : i32
    %c0_i32_1 = arith.constant 0 : i32
    return %arg0, %arg1, %c0_i32, %c0_i32_0 : i32, i32, i32, i32
  }
}

module attributes {stable_mosaic.version = 11 : i64} {
  func.func @_conv3x3_bn_leaky_kernel(%arg0: i32, %arg1: i32, %arg2: memref<1x16x8x16xbf16, #tpu.memory_space<vmem>>, %arg3: memref<72x8xbf16, #tpu.memory_space<vmem>>, %arg4: memref<1x8xf32, #tpu.memory_space<vmem>>, %arg5: memref<1x8xf32, #tpu.memory_space<vmem>>, %arg6: memref<1x16x8x8xbf16, #tpu.memory_space<vmem>>, %arg7: memref<18x10x8xbf16, #tpu.memory_space<vmem>>, %arg8: memref<128x72xbf16, #tpu.memory_space<vmem>>) attributes {dimension_semantics = [#tpu.dimension_semantics<parallel>, #tpu.dimension_semantics<arbitrary>], iteration_bounds = array<i64: 2, 1>, scalar_prefetch = 0 : i64, scratch_operands = 2 : i64, tpu.core_type = #tpu.core_type<tc>, window_params = [{transform_indices = @transform_0, window_bounds = array<i64: 1, 16, 8, 16>}, {pipeline_mode = #tpu.pipeline_mode<synchronous>, transform_indices = @transform_1, window_bounds = array<i64: 72, 8>}, {pipeline_mode = #tpu.pipeline_mode<synchronous>, transform_indices = @transform_2, window_bounds = array<i64: 1, 8>}, {pipeline_mode = #tpu.pipeline_mode<synchronous>, transform_indices = @transform_3, window_bounds = array<i64: 1, 8>}, {transform_indices = @transform_4, window_bounds = array<i64: 1, 16, 8, 8>}]} {
    %c16_i32 = arith.constant 16 : i32
    %0 = arith.muli %arg1, %c16_i32 : i32
    %1 = tpu.assume_multiple %0, 16 : i32
    %cst = arith.constant 0.000000e+00 : bf16
    %2 = vector.broadcast %cst : bf16 to vector<1x10x8xbf16>
    %cst_0 = arith.constant 0.000000e+00 : bf16
    %3 = vector.broadcast %cst_0 : bf16 to vector<18x1x8xbf16>
    %c0 = arith.constant 0 : index
    %c0_1 = arith.constant 0 : index
    %c0_2 = arith.constant 0 : index
    %4 = vector.load %arg7[%c0, %c0_1, %c0_2] : memref<18x10x8xbf16, #tpu.memory_space<vmem>>, vector<18x1x8xbf16>
    tpu.vector_store %arg7[%c0, %c0_1, %c0_2], %3 {strides = array<i32>} : memref<18x10x8xbf16, #tpu.memory_space<vmem>>, vector<18x1x8xbf16>,
    %c0_3 = arith.constant 0 : index
    %c9 = arith.constant 9 : index
    %c0_4 = arith.constant 0 : index
    %5 = vector.load %arg7[%c0_3, %c9, %c0_4] : memref<18x10x8xbf16, #tpu.memory_space<vmem>>, vector<18x1x8xbf16>
    tpu.vector_store %arg7[%c0_3, %c9, %c0_4], %3 {strides = array<i32>} : memref<18x10x8xbf16, #tpu.memory_space<vmem>>, vector<18x1x8xbf16>,
    %c0_5 = arith.constant 0 : index
    %6 = arith.index_cast %1 : i32 to index
    %c0_6 = arith.constant 0 : index
    %c4 = arith.constant 4 : index
    %7 = vector.load %arg2[%c0_5, %6, %c0_6, %c4] : memref<1x16x8x16xbf16, #tpu.memory_space<vmem>>, vector<1x16x8x4xbf16>
    %8 = vector.shape_cast %7 : vector<1x16x8x4xbf16> to vector<16x8x4xbf16>
    %c1 = arith.constant 1 : index
    %c1_7 = arith.constant 1 : index
    %c0_8 = arith.constant 0 : index
    %9 = vector.load %arg7[%c1, %c1_7, %c0_8] : memref<18x10x8xbf16, #tpu.memory_space<vmem>>, vector<16x8x4xbf16>
    tpu.vector_store %arg7[%c1, %c1_7, %c0_8], %8 {strides = array<i32>} : memref<18x10x8xbf16, #tpu.memory_space<vmem>>, vector<16x8x4xbf16>,
    %c0_9 = arith.constant 0 : index
    %10 = arith.index_cast %1 : i32 to index
    %c0_10 = arith.constant 0 : index
    %c12 = arith.constant 12 : index
    %11 = vector.load %arg2[%c0_9, %10, %c0_10, %c12] : memref<1x16x8x16xbf16, #tpu.memory_space<vmem>>, vector<1x16x8x4xbf16>
    %12 = vector.shape_cast %11 : vector<1x16x8x4xbf16> to vector<16x8x4xbf16>
    %c1_11 = arith.constant 1 : index
    %c1_12 = arith.constant 1 : index
    %c4_13 = arith.constant 4 : index
    %13 = vector.load %arg7[%c1_11, %c1_12, %c4_13] : memref<18x10x8xbf16, #tpu.memory_space<vmem>>, vector<16x8x4xbf16>
    tpu.vector_store %arg7[%c1_11, %c1_12, %c4_13], %12 {strides = array<i32>} : memref<18x10x8xbf16, #tpu.memory_space<vmem>>, vector<16x8x4xbf16>,
    %c0_i32 = arith.constant 0 : i32
    %14 = arith.cmpi eq, %arg1, %c0_i32 : i32
    %15 = arith.extui %14 : i1 to i32
    %c0_i32_14 = arith.constant 0 : i32
    %16 = arith.cmpi ne, %15, %c0_i32_14 : i32
    scf.if %16 {
      %c0_72 = arith.constant 0 : index
      %c0_73 = arith.constant 0 : index
      %c0_74 = arith.constant 0 : index
      %70 = vector.load %arg7[%c0_72, %c0_73, %c0_74] : memref<18x10x8xbf16, #tpu.memory_space<vmem>>, vector<1x10x8xbf16>
      tpu.vector_store %arg7[%c0_72, %c0_73, %c0_74], %2 {strides = array<i32>} : memref<18x10x8xbf16, #tpu.memory_space<vmem>>, vector<1x10x8xbf16>,
    } else {
    }
    %c0_i32_15 = arith.constant 0 : i32
    %17 = arith.cmpi sgt, %arg1, %c0_i32_15 : i32
    %18 = arith.extui %17 : i1 to i32
    %c0_i32_16 = arith.constant 0 : i32
    %19 = arith.cmpi ne, %18, %c0_i32_16 : i32
    scf.if %19 {
      %c1_i32 = arith.constant 1 : i32
      %70 = arith.subi %1, %c1_i32 : i32
      %c0_72 = arith.constant 0 : index
      %71 = arith.index_cast %70 : i32 to index
      %c0_73 = arith.constant 0 : index
      %c4_74 = arith.constant 4 : index
      %72 = vector.load %arg2[%c0_72, %71, %c0_73, %c4_74] : memref<1x16x8x16xbf16, #tpu.memory_space<vmem>>, vector<1x1x8x4xbf16>
      %73 = vector.shape_cast %72 : vector<1x1x8x4xbf16> to vector<1x8x4xbf16>
      %c0_75 = arith.constant 0 : index
      %c1_76 = arith.constant 1 : index
      %c0_77 = arith.constant 0 : index
      %74 = vector.load %arg7[%c0_75, %c1_76, %c0_77] : memref<18x10x8xbf16, #tpu.memory_space<vmem>>, vector<1x8x4xbf16>
      tpu.vector_store %arg7[%c0_75, %c1_76, %c0_77], %73 {strides = array<i32>} : memref<18x10x8xbf16, #tpu.memory_space<vmem>>, vector<1x8x4xbf16>,
      %c0_78 = arith.constant 0 : index
      %75 = arith.index_cast %70 : i32 to index
      %c0_79 = arith.constant 0 : index
      %c12_80 = arith.constant 12 : index
      %76 = vector.load %arg2[%c0_78, %75, %c0_79, %c12_80] : memref<1x16x8x16xbf16, #tpu.memory_space<vmem>>, vector<1x1x8x4xbf16>
      %77 = vector.shape_cast %76 : vector<1x1x8x4xbf16> to vector<1x8x4xbf16>
      %c0_81 = arith.constant 0 : index
      %c1_82 = arith.constant 1 : index
      %c4_83 = arith.constant 4 : index
      %78 = vector.load %arg7[%c0_81, %c1_82, %c4_83] : memref<18x10x8xbf16, #tpu.memory_space<vmem>>, vector<1x8x4xbf16>
      tpu.vector_store %arg7[%c0_81, %c1_82, %c4_83], %77 {strides = array<i32>} : memref<18x10x8xbf16, #tpu.memory_space<vmem>>, vector<1x8x4xbf16>,
    } else {
    }
    %c0_i32_17 = arith.constant 0 : i32
    %20 = arith.cmpi eq, %arg1, %c0_i32_17 : i32
    %21 = arith.extui %20 : i1 to i32
    %c0_i32_18 = arith.constant 0 : i32
    %22 = arith.cmpi ne, %21, %c0_i32_18 : i32
    scf.if %22 {
      %c17 = arith.constant 17 : index
      %c0_72 = arith.constant 0 : index
      %c0_73 = arith.constant 0 : index
      %70 = vector.load %arg7[%c17, %c0_72, %c0_73] : memref<18x10x8xbf16, #tpu.memory_space<vmem>>, vector<1x10x8xbf16>
      tpu.vector_store %arg7[%c17, %c0_72, %c0_73], %2 {strides = array<i32>} : memref<18x10x8xbf16, #tpu.memory_space<vmem>>, vector<1x10x8xbf16>,
    } else {
    }
    %c0_i32_19 = arith.constant 0 : i32
    %23 = arith.cmpi slt, %arg1, %c0_i32_19 : i32
    %24 = arith.extui %23 : i1 to i32
    %c0_i32_20 = arith.constant 0 : i32
    %25 = arith.cmpi ne, %24, %c0_i32_20 : i32
    scf.if %25 {
      %c16_i32_72 = arith.constant 16 : i32
      %70 = arith.addi %1, %c16_i32_72 : i32
      %c0_73 = arith.constant 0 : index
      %71 = arith.index_cast %70 : i32 to index
      %c0_74 = arith.constant 0 : index
      %c4_75 = arith.constant 4 : index
      %72 = vector.load %arg2[%c0_73, %71, %c0_74, %c4_75] : memref<1x16x8x16xbf16, #tpu.memory_space<vmem>>, vector<1x1x8x4xbf16>
      %73 = vector.shape_cast %72 : vector<1x1x8x4xbf16> to vector<1x8x4xbf16>
      %c17 = arith.constant 17 : index
      %c1_76 = arith.constant 1 : index
      %c0_77 = arith.constant 0 : index
      %74 = vector.load %arg7[%c17, %c1_76, %c0_77] : memref<18x10x8xbf16, #tpu.memory_space<vmem>>, vector<1x8x4xbf16>
      tpu.vector_store %arg7[%c17, %c1_76, %c0_77], %73 {strides = array<i32>} : memref<18x10x8xbf16, #tpu.memory_space<vmem>>, vector<1x8x4xbf16>,
      %c0_78 = arith.constant 0 : index
      %75 = arith.index_cast %70 : i32 to index
      %c0_79 = arith.constant 0 : index
      %c12_80 = arith.constant 12 : index
      %76 = vector.load %arg2[%c0_78, %75, %c0_79, %c12_80] : memref<1x16x8x16xbf16, #tpu.memory_space<vmem>>, vector<1x1x8x4xbf16>
      %77 = vector.shape_cast %76 : vector<1x1x8x4xbf16> to vector<1x8x4xbf16>
      %c17_81 = arith.constant 17 : index
      %c1_82 = arith.constant 1 : index
      %c4_83 = arith.constant 4 : index
      %78 = vector.load %arg7[%c17_81, %c1_82, %c4_83] : memref<18x10x8xbf16, #tpu.memory_space<vmem>>, vector<1x8x4xbf16>
      tpu.vector_store %arg7[%c17_81, %c1_82, %c4_83], %77 {strides = array<i32>} : memref<18x10x8xbf16, #tpu.memory_space<vmem>>, vector<1x8x4xbf16>,
    } else {
    }
    %c0_21 = arith.constant 0 : index
    %c0_22 = arith.constant 0 : index
    %c0_23 = arith.constant 0 : index
    %26 = vector.load %arg7[%c0_21, %c0_22, %c0_23] : memref<18x10x8xbf16, #tpu.memory_space<vmem>>, vector<16x8x8xbf16>
    %27 = vector.shape_cast %26 : vector<16x8x8xbf16> to vector<128x8xbf16>
    %c0_24 = arith.constant 0 : index
    %c0_25 = arith.constant 0 : index
    %28 = vector.load %arg8[%c0_24, %c0_25] : memref<128x72xbf16, #tpu.memory_space<vmem>>, vector<128x8xbf16>
    tpu.vector_store %arg8[%c0_24, %c0_25], %27 {strides = array<i32>} : memref<128x72xbf16, #tpu.memory_space<vmem>>, vector<128x8xbf16>,
    %c0_26 = arith.constant 0 : index
    %c1_27 = arith.constant 1 : index
    %c0_28 = arith.constant 0 : index
    %29 = vector.load %arg7[%c0_26, %c1_27, %c0_28] : memref<18x10x8xbf16, #tpu.memory_space<vmem>>, vector<16x8x8xbf16>
    %30 = vector.shape_cast %29 : vector<16x8x8xbf16> to vector<128x8xbf16>
    %c0_29 = arith.constant 0 : index
    %c8 = arith.constant 8 : index
    %31 = vector.load %arg8[%c0_29, %c8] : memref<128x72xbf16, #tpu.memory_space<vmem>>, vector<128x8xbf16>
    tpu.vector_store %arg8[%c0_29, %c8], %30 {strides = array<i32>} : memref<128x72xbf16, #tpu.memory_space<vmem>>, vector<128x8xbf16>,
    %c0_30 = arith.constant 0 : index
    %c2 = arith.constant 2 : index
    %c0_31 = arith.constant 0 : index
    %32 = vector.load %arg7[%c0_30, %c2, %c0_31] : memref<18x10x8xbf16, #tpu.memory_space<vmem>>, vector<16x8x8xbf16>
    %33 = vector.shape_cast %32 : vector<16x8x8xbf16> to vector<128x8xbf16>
    %c0_32 = arith.constant 0 : index
    %c16 = arith.constant 16 : index
    %34 = vector.load %arg8[%c0_32, %c16] : memref<128x72xbf16, #tpu.memory_space<vmem>>, vector<128x8xbf16>
    tpu.vector_store %arg8[%c0_32, %c16], %33 {strides = array<i32>} : memref<128x72xbf16, #tpu.memory_space<vmem>>, vector<128x8xbf16>,
    %c1_33 = arith.constant 1 : index
    %c0_34 = arith.constant 0 : index
    %c0_35 = arith.constant 0 : index
    %35 = vector.load %arg7[%c1_33, %c0_34, %c0_35] : memref<18x10x8xbf16, #tpu.memory_space<vmem>>, vector<16x8x8xbf16>
    %36 = vector.shape_cast %35 : vector<16x8x8xbf16> to vector<128x8xbf16>
    %c0_36 = arith.constant 0 : index
    %c24 = arith.constant 24 : index
    %37 = vector.load %arg8[%c0_36, %c24] : memref<128x72xbf16, #tpu.memory_space<vmem>>, vector<128x8xbf16>
    tpu.vector_store %arg8[%c0_36, %c24], %36 {strides = array<i32>} : memref<128x72xbf16, #tpu.memory_space<vmem>>, vector<128x8xbf16>,
    %c1_37 = arith.constant 1 : index
    %c1_38 = arith.constant 1 : index
    %c0_39 = arith.constant 0 : index
    %38 = vector.load %arg7[%c1_37, %c1_38, %c0_39] : memref<18x10x8xbf16, #tpu.memory_space<vmem>>, vector<16x8x8xbf16>
    %39 = vector.shape_cast %38 : vector<16x8x8xbf16> to vector<128x8xbf16>
    %c0_40 = arith.constant 0 : index
    %c32 = arith.constant 32 : index
    %40 = vector.load %arg8[%c0_40, %c32] : memref<128x72xbf16, #tpu.memory_space<vmem>>, vector<128x8xbf16>
    tpu.vector_store %arg8[%c0_40, %c32], %39 {strides = array<i32>} : memref<128x72xbf16, #tpu.memory_space<vmem>>, vector<128x8xbf16>,
    %c1_41 = arith.constant 1 : index
    %c2_42 = arith.constant 2 : index
    %c0_43 = arith.constant 0 : index
    %41 = vector.load %arg7[%c1_41, %c2_42, %c0_43] : memref<18x10x8xbf16, #tpu.memory_space<vmem>>, vector<16x8x8xbf16>
    %42 = vector.shape_cast %41 : vector<16x8x8xbf16> to vector<128x8xbf16>
    %c0_44 = arith.constant 0 : index
    %c40 = arith.constant 40 : index
    %43 = vector.load %arg8[%c0_44, %c40] : memref<128x72xbf16, #tpu.memory_space<vmem>>, vector<128x8xbf16>
    tpu.vector_store %arg8[%c0_44, %c40], %42 {strides = array<i32>} : memref<128x72xbf16, #tpu.memory_space<vmem>>, vector<128x8xbf16>,
    %c2_45 = arith.constant 2 : index
    %c0_46 = arith.constant 0 : index
    %c0_47 = arith.constant 0 : index
    %44 = vector.load %arg7[%c2_45, %c0_46, %c0_47] : memref<18x10x8xbf16, #tpu.memory_space<vmem>>, vector<16x8x8xbf16>
    %45 = vector.shape_cast %44 : vector<16x8x8xbf16> to vector<128x8xbf16>
    %c0_48 = arith.constant 0 : index
    %c48 = arith.constant 48 : index
    %46 = vector.load %arg8[%c0_48, %c48] : memref<128x72xbf16, #tpu.memory_space<vmem>>, vector<128x8xbf16>
    tpu.vector_store %arg8[%c0_48, %c48], %45 {strides = array<i32>} : memref<128x72xbf16, #tpu.memory_space<vmem>>, vector<128x8xbf16>,
    %c2_49 = arith.constant 2 : index
    %c1_50 = arith.constant 1 : index
    %c0_51 = arith.constant 0 : index
    %47 = vector.load %arg7[%c2_49, %c1_50, %c0_51] : memref<18x10x8xbf16, #tpu.memory_space<vmem>>, vector<16x8x8xbf16>
    %48 = vector.shape_cast %47 : vector<16x8x8xbf16> to vector<128x8xbf16>
    %c0_52 = arith.constant 0 : index
    %c56 = arith.constant 56 : index
    %49 = vector.load %arg8[%c0_52, %c56] : memref<128x72xbf16, #tpu.memory_space<vmem>>, vector<128x8xbf16>
    tpu.vector_store %arg8[%c0_52, %c56], %48 {strides = array<i32>} : memref<128x72xbf16, #tpu.memory_space<vmem>>, vector<128x8xbf16>,
    %c2_53 = arith.constant 2 : index
    %c2_54 = arith.constant 2 : index
    %c0_55 = arith.constant 0 : index
    %50 = vector.load %arg7[%c2_53, %c2_54, %c0_55] : memref<18x10x8xbf16, #tpu.memory_space<vmem>>, vector<16x8x8xbf16>
    %51 = vector.shape_cast %50 : vector<16x8x8xbf16> to vector<128x8xbf16>
    %c0_56 = arith.constant 0 : index
    %c64 = arith.constant 64 : index
    %52 = vector.load %arg8[%c0_56, %c64] : memref<128x72xbf16, #tpu.memory_space<vmem>>, vector<128x8xbf16>
    tpu.vector_store %arg8[%c0_56, %c64], %51 {strides = array<i32>} : memref<128x72xbf16, #tpu.memory_space<vmem>>, vector<128x8xbf16>,
    %c0_57 = arith.constant 0 : index
    %c0_58 = arith.constant 0 : index
    %53 = vector.load %arg8[%c0_57, %c0_58] : memref<128x72xbf16, #tpu.memory_space<vmem>>, vector<128x72xbf16>
    %c0_59 = arith.constant 0 : index
    %c0_60 = arith.constant 0 : index
    %54 = vector.load %arg3[%c0_59, %c0_60] : memref<72x8xbf16, #tpu.memory_space<vmem>>, vector<72x8xbf16>
    %cst_61 = arith.constant dense<0.000000e+00> : vector<128x8xf32>
    %55 = tpu.matmul %53, %54, %cst_61 {dimension_numbers = #tpu.dot_dimension_numbers<[1], [0], [0], [1], [0, 0, 1, 1], [], []>} : vector<128x72xbf16>, vector<72x8xbf16>, vector<128x8xf32> -> vector<128x8xf32>
    %c0_62 = arith.constant 0 : index
    %c0_63 = arith.constant 0 : index
    %56 = vector.load %arg4[%c0_62, %c0_63] : memref<1x8xf32, #tpu.memory_space<vmem>>, vector<1x8xf32>
    %57 = vector.broadcast %56 : vector<1x8xf32> to vector<128x8xf32>
    %58 = arith.mulf %55, %57 : vector<128x8xf32>
    %c0_64 = arith.constant 0 : index
    %c0_65 = arith.constant 0 : index
    %59 = vector.load %arg5[%c0_64, %c0_65] : memref<1x8xf32, #tpu.memory_space<vmem>>, vector<1x8xf32>
    %60 = vector.broadcast %59 : vector<1x8xf32> to vector<128x8xf32>
    %61 = arith.addf %58, %60 : vector<128x8xf32>
    %cst_66 = arith.constant 0.000000e+00 : f32
    %62 = vector.broadcast %cst_66 : f32 to vector<128x8xf32>
    %63 = arith.cmpf ogt, %61, %62 : vector<128x8xf32>
    %cst_67 = arith.constant 1.000000e-01 : f32
    %64 = vector.broadcast %cst_67 : f32 to vector<128x8xf32>
    %65 = arith.mulf %64, %61 : vector<128x8xf32>
    %66 = arith.select %63, %61, %65 : vector<128x8xi1>, vector<128x8xf32>
    %67 = vector.shape_cast %66 : vector<128x8xf32> to vector<1x16x8x8xf32>
    %68 = arith.truncf %67 : vector<1x16x8x8xf32> to vector<1x16x8x8xbf16>
    %c0_68 = arith.constant 0 : index
    %c0_69 = arith.constant 0 : index
    %c0_70 = arith.constant 0 : index
    %c0_71 = arith.constant 0 : index
    %69 = vector.load %arg6[%c0_68, %c0_69, %c0_70, %c0_71] : memref<1x16x8x8xbf16, #tpu.memory_space<vmem>>, vector<1x16x8x8xbf16>
    tpu.vector_store %arg6[%c0_68, %c0_69, %c0_70, %c0_71], %68 {strides = array<i32>} : memref<1x16x8x8xbf16, #tpu.memory_space<vmem>>, vector<1x16x8x8xbf16>,
    return
  }
  func.func @transform_0(%arg0: i32, %arg1: i32) -> (i32, i32, i32, i32) {
    %c0_i32 = arith.constant 0 : i32
    %c0_i32_0 = arith.constant 0 : i32
    %c0_i32_1 = arith.constant 0 : i32
    %c0_i32_2 = arith.constant 0 : i32
    return %arg0, %c0_i32, %c0_i32_0, %c0_i32_1 : i32, i32, i32, i32
  }
  func.func @transform_1(%arg0: i32, %arg1: i32) -> (i32, i32) {
    %c0_i32 = arith.constant 0 : i32
    %c0_i32_0 = arith.constant 0 : i32
    %c0_i32_1 = arith.constant 0 : i32
    return %c0_i32, %c0_i32_0 : i32, i32
  }
  func.func @transform_2(%arg0: i32, %arg1: i32) -> (i32, i32) {
    %c0_i32 = arith.constant 0 : i32
    %c0_i32_0 = arith.constant 0 : i32
    %c0_i32_1 = arith.constant 0 : i32
    return %c0_i32, %c0_i32_0 : i32, i32
  }
  func.func @transform_3(%arg0: i32, %arg1: i32) -> (i32, i32) {
    %c0_i32 = arith.constant 0 : i32
    %c0_i32_0 = arith.constant 0 : i32
    %c0_i32_1 = arith.constant 0 : i32
    return %c0_i32, %c0_i32_0 : i32, i32
  }
  func.func @transform_4(%arg0: i32, %arg1: i32) -> (i32, i32, i32, i32) {
    %c0_i32 = arith.constant 0 : i32
    %c0_i32_0 = arith.constant 0 : i32
    %c0_i32_1 = arith.constant 0 : i32
    return %arg0, %arg1, %c0_i32, %c0_i32_0 : i32, i32, i32, i32
  }
}

module attributes {stable_mosaic.version = 11 : i64} {
  func.func @_conv1x1_pool_kernel(%arg0: i32, %arg1: i32, %arg2: memref<1x16x8x8xbf16, #tpu.memory_space<vmem>>, %arg3: memref<1x16x8x8xbf16, #tpu.memory_space<vmem>>, %arg4: memref<1x16x8x16xbf16, #tpu.memory_space<vmem>>, %arg5: memref<8x16xbf16, #tpu.memory_space<vmem>>, %arg6: memref<8x16xbf16, #tpu.memory_space<vmem>>, %arg7: memref<1x16xf32, #tpu.memory_space<vmem>>, %arg8: memref<1x16xf32, #tpu.memory_space<vmem>>, %arg9: memref<1x16x8x16xf32, #tpu.memory_space<vmem>>, %arg10: memref<1x8x8x16xf32, #tpu.memory_space<vmem>>) attributes {dimension_semantics = [#tpu.dimension_semantics<parallel>, #tpu.dimension_semantics<parallel>], iteration_bounds = array<i64: 2, 1>, scalar_prefetch = 0 : i64, scratch_operands = 0 : i64, tpu.core_type = #tpu.core_type<tc>, window_params = [{transform_indices = @transform_0, window_bounds = array<i64: 1, 16, 8, 8>}, {transform_indices = @transform_1, window_bounds = array<i64: 1, 16, 8, 8>}, {transform_indices = @transform_2, window_bounds = array<i64: 1, 16, 8, 16>}, {pipeline_mode = #tpu.pipeline_mode<synchronous>, transform_indices = @transform_3, window_bounds = array<i64: 8, 16>}, {pipeline_mode = #tpu.pipeline_mode<synchronous>, transform_indices = @transform_4, window_bounds = array<i64: 8, 16>}, {pipeline_mode = #tpu.pipeline_mode<synchronous>, transform_indices = @transform_5, window_bounds = array<i64: 1, 16>}, {pipeline_mode = #tpu.pipeline_mode<synchronous>, transform_indices = @transform_6, window_bounds = array<i64: 1, 16>}, {transform_indices = @transform_7, window_bounds = array<i64: 1, 16, 8, 16>}, {transform_indices = @transform_8, window_bounds = array<i64: 1, 8, 8, 16>}]} {
    %c0 = arith.constant 0 : index
    %c0_0 = arith.constant 0 : index
    %c0_1 = arith.constant 0 : index
    %c0_2 = arith.constant 0 : index
    %0 = vector.load %arg2[%c0, %c0_0, %c0_1, %c0_2] : memref<1x16x8x8xbf16, #tpu.memory_space<vmem>>, vector<1x16x8x8xbf16>
    %1 = vector.shape_cast %0 : vector<1x16x8x8xbf16> to vector<128x8xbf16>
    %c0_3 = arith.constant 0 : index
    %c0_4 = arith.constant 0 : index
    %c0_5 = arith.constant 0 : index
    %c0_6 = arith.constant 0 : index
    %2 = vector.load %arg3[%c0_3, %c0_4, %c0_5, %c0_6] : memref<1x16x8x8xbf16, #tpu.memory_space<vmem>>, vector<1x16x8x8xbf16>
    %3 = vector.shape_cast %2 : vector<1x16x8x8xbf16> to vector<128x8xbf16>
    %c0_7 = arith.constant 0 : index
    %c0_8 = arith.constant 0 : index
    %4 = vector.load %arg5[%c0_7, %c0_8] : memref<8x16xbf16, #tpu.memory_space<vmem>>, vector<8x16xbf16>
    %cst = arith.constant dense<0.000000e+00> : vector<128x16xf32>
    %5 = tpu.matmul %1, %4, %cst {dimension_numbers = #tpu.dot_dimension_numbers<[1], [0], [0], [1], [0, 0, 1, 1], [], []>} : vector<128x8xbf16>, vector<8x16xbf16>, vector<128x16xf32> -> vector<128x16xf32>
    %c0_9 = arith.constant 0 : index
    %c0_10 = arith.constant 0 : index
    %6 = vector.load %arg6[%c0_9, %c0_10] : memref<8x16xbf16, #tpu.memory_space<vmem>>, vector<8x16xbf16>
    %cst_11 = arith.constant dense<0.000000e+00> : vector<128x16xf32>
    %7 = tpu.matmul %3, %6, %cst_11 {dimension_numbers = #tpu.dot_dimension_numbers<[1], [0], [0], [1], [0, 0, 1, 1], [], []>} : vector<128x8xbf16>, vector<8x16xbf16>, vector<128x16xf32> -> vector<128x16xf32>
    %8 = arith.addf %5, %7 : vector<128x16xf32>
    %c0_12 = arith.constant 0 : index
    %c0_13 = arith.constant 0 : index
    %9 = vector.load %arg7[%c0_12, %c0_13] : memref<1x16xf32, #tpu.memory_space<vmem>>, vector<1x16xf32>
    %10 = vector.broadcast %9 : vector<1x16xf32> to vector<128x16xf32>
    %11 = arith.mulf %8, %10 : vector<128x16xf32>
    %c0_14 = arith.constant 0 : index
    %c0_15 = arith.constant 0 : index
    %12 = vector.load %arg8[%c0_14, %c0_15] : memref<1x16xf32, #tpu.memory_space<vmem>>, vector<1x16xf32>
    %13 = vector.broadcast %12 : vector<1x16xf32> to vector<128x16xf32>
    %14 = arith.addf %11, %13 : vector<128x16xf32>
    %cst_16 = arith.constant 0.000000e+00 : f32
    %15 = vector.broadcast %cst_16 : f32 to vector<128x16xf32>
    %16 = arith.cmpf ogt, %14, %15 : vector<128x16xf32>
    %cst_17 = arith.constant 1.000000e-01 : f32
    %17 = vector.broadcast %cst_17 : f32 to vector<128x16xf32>
    %18 = arith.mulf %17, %14 : vector<128x16xf32>
    %19 = arith.select %16, %14, %18 : vector<128x16xi1>, vector<128x16xf32>
    %20 = vector.shape_cast %19 : vector<128x16xf32> to vector<1x16x8x16xf32>
    %c0_18 = arith.constant 0 : index
    %c0_19 = arith.constant 0 : index
    %c0_20 = arith.constant 0 : index
    %c0_21 = arith.constant 0 : index
    %21 = vector.load %arg9[%c0_18, %c0_19, %c0_20, %c0_21] : memref<1x16x8x16xf32, #tpu.memory_space<vmem>>, vector<1x16x8x16xf32>
    tpu.vector_store %arg9[%c0_18, %c0_19, %c0_20, %c0_21], %20 {strides = array<i32>} : memref<1x16x8x16xf32, #tpu.memory_space<vmem>>, vector<1x16x8x16xf32>,
    %22 = vector.shape_cast %19 : vector<128x16xf32> to vector<8x2x8x16xf32>
    %23 = vector.extract_strided_slice %22 {offsets = [0, 0, 0, 0], sizes = [8, 1, 8, 16], strides = [1, 1, 1, 1]} : vector<8x2x8x16xf32> to vector<8x1x8x16xf32>
    %24 = vector.shape_cast %23 : vector<8x1x8x16xf32> to vector<8x8x16xf32>
    %25 = vector.extract_strided_slice %22 {offsets = [0, 1, 0, 0], sizes = [8, 1, 8, 16], strides = [1, 1, 1, 1]} : vector<8x2x8x16xf32> to vector<8x1x8x16xf32>
    %26 = vector.shape_cast %25 : vector<8x1x8x16xf32> to vector<8x8x16xf32>
    %27 = arith.maximumf %24, %26 : vector<8x8x16xf32>
    %28 = vector.extract_strided_slice %27 {offsets = [0, 0, 0], sizes = [8, 8, 8], strides = [1, 1, 1]} : vector<8x8x16xf32> to vector<8x8x8xf32>
    %29 = vector.extract_strided_slice %27 {offsets = [0, 0, 8], sizes = [8, 8, 8], strides = [1, 1, 1]} : vector<8x8x16xf32> to vector<8x8x8xf32>
    %30 = arith.maximumf %28, %29 : vector<8x8x8xf32>
    %c0_22 = arith.constant 0 : index
    %c0_23 = arith.constant 0 : index
    %c0_24 = arith.constant 0 : index
    %c0_25 = arith.constant 0 : index
    %31 = vector.load %arg4[%c0_22, %c0_23, %c0_24, %c0_25] : memref<1x16x8x16xbf16, #tpu.memory_space<vmem>>, vector<1x16x8x16xbf16>
    %32 = arith.extf %31 : vector<1x16x8x16xbf16> to vector<1x16x8x16xf32>
    %33 = vector.shape_cast %32 : vector<1x16x8x16xf32> to vector<8x2x8x16xf32>
    %34 = vector.extract_strided_slice %33 {offsets = [0, 0, 0, 0], sizes = [8, 1, 8, 16], strides = [1, 1, 1, 1]} : vector<8x2x8x16xf32> to vector<8x1x8x16xf32>
    %35 = vector.shape_cast %34 : vector<8x1x8x16xf32> to vector<8x8x16xf32>
    %36 = vector.extract_strided_slice %33 {offsets = [0, 1, 0, 0], sizes = [8, 1, 8, 16], strides = [1, 1, 1, 1]} : vector<8x2x8x16xf32> to vector<8x1x8x16xf32>
    %37 = vector.shape_cast %36 : vector<8x1x8x16xf32> to vector<8x8x16xf32>
    %38 = arith.maximumf %35, %37 : vector<8x8x16xf32>
    %39 = vector.extract_strided_slice %38 {offsets = [0, 0, 0], sizes = [8, 8, 8], strides = [1, 1, 1]} : vector<8x8x16xf32> to vector<8x8x8xf32>
    %40 = vector.extract_strided_slice %38 {offsets = [0, 0, 8], sizes = [8, 8, 8], strides = [1, 1, 1]} : vector<8x8x16xf32> to vector<8x8x8xf32>
    %41 = arith.maximumf %39, %40 : vector<8x8x8xf32>
    %42 = tpu.concatenate %41, %30 in 2 : vector<8x8x8xf32>, vector<8x8x8xf32> -> vector<8x8x16xf32>
    %43 = vector.shape_cast %42 : vector<8x8x16xf32> to vector<1x8x8x16xf32>
    %c0_26 = arith.constant 0 : index
    %c0_27 = arith.constant 0 : index
    %c0_28 = arith.constant 0 : index
    %c0_29 = arith.constant 0 : index
    %44 = vector.load %arg10[%c0_26, %c0_27, %c0_28, %c0_29] : memref<1x8x8x16xf32, #tpu.memory_space<vmem>>, vector<1x8x8x16xf32>
    tpu.vector_store %arg10[%c0_26, %c0_27, %c0_28, %c0_29], %43 {strides = array<i32>} : memref<1x8x8x16xf32, #tpu.memory_space<vmem>>, vector<1x8x8x16xf32>,
    return
  }
  func.func @transform_0(%arg0: i32, %arg1: i32) -> (i32, i32, i32, i32) {
    %c0_i32 = arith.constant 0 : i32
    %c0_i32_0 = arith.constant 0 : i32
    %c0_i32_1 = arith.constant 0 : i32
    return %arg0, %arg1, %c0_i32, %c0_i32_0 : i32, i32, i32, i32
  }
  func.func @transform_1(%arg0: i32, %arg1: i32) -> (i32, i32, i32, i32) {
    %c0_i32 = arith.constant 0 : i32
    %c0_i32_0 = arith.constant 0 : i32
    %c0_i32_1 = arith.constant 0 : i32
    return %arg0, %arg1, %c0_i32, %c0_i32_0 : i32, i32, i32, i32
  }
  func.func @transform_2(%arg0: i32, %arg1: i32) -> (i32, i32, i32, i32) {
    %c0_i32 = arith.constant 0 : i32
    %c0_i32_0 = arith.constant 0 : i32
    %c0_i32_1 = arith.constant 0 : i32
    return %arg0, %arg1, %c0_i32, %c0_i32_0 : i32, i32, i32, i32
  }
  func.func @transform_3(%arg0: i32, %arg1: i32) -> (i32, i32) {
    %c0_i32 = arith.constant 0 : i32
    %c0_i32_0 = arith.constant 0 : i32
    %c0_i32_1 = arith.constant 0 : i32
    return %c0_i32, %c0_i32_0 : i32, i32
  }
  func.func @transform_4(%arg0: i32, %arg1: i32) -> (i32, i32) {
    %c0_i32 = arith.constant 0 : i32
    %c0_i32_0 = arith.constant 0 : i32
    %c0_i32_1 = arith.constant 0 : i32
    return %c0_i32, %c0_i32_0 : i32, i32
  }
  func.func @transform_5(%arg0: i32, %arg1: i32) -> (i32, i32) {
    %c0_i32 = arith.constant 0 : i32
    %c0_i32_0 = arith.constant 0 : i32
    %c0_i32_1 = arith.constant 0 : i32
    return %c0_i32, %c0_i32_0 : i32, i32
  }
  func.func @transform_6(%arg0: i32, %arg1: i32) -> (i32, i32) {
    %c0_i32 = arith.constant 0 : i32
    %c0_i32_0 = arith.constant 0 : i32
    %c0_i32_1 = arith.constant 0 : i32
    return %c0_i32, %c0_i32_0 : i32, i32
  }
  func.func @transform_7(%arg0: i32, %arg1: i32) -> (i32, i32, i32, i32) {
    %c0_i32 = arith.constant 0 : i32
    %c0_i32_0 = arith.constant 0 : i32
    %c0_i32_1 = arith.constant 0 : i32
    return %arg0, %arg1, %c0_i32, %c0_i32_0 : i32, i32, i32, i32
  }
  func.func @transform_8(%arg0: i32, %arg1: i32) -> (i32, i32, i32, i32) {
    %c0_i32 = arith.constant 0 : i32
    %c0_i32_0 = arith.constant 0 : i32
    %c0_i32_1 = arith.constant 0 : i32
    return %arg0, %arg1, %c0_i32, %c0_i32_0 : i32, i32, i32, i32
  }
}

module attributes {stable_mosaic.version = 11 : i64} {
  func.func @_conv3x3_bn_leaky_kernel(%arg0: i32, %arg1: i32, %arg2: memref<1x16x8x8xbf16, #tpu.memory_space<vmem>>, %arg3: memref<72x8xbf16, #tpu.memory_space<vmem>>, %arg4: memref<1x8xf32, #tpu.memory_space<vmem>>, %arg5: memref<1x8xf32, #tpu.memory_space<vmem>>, %arg6: memref<1x16x8x8xbf16, #tpu.memory_space<vmem>>, %arg7: memref<18x10x8xbf16, #tpu.memory_space<vmem>>, %arg8: memref<128x72xbf16, #tpu.memory_space<vmem>>) attributes {dimension_semantics = [#tpu.dimension_semantics<parallel>, #tpu.dimension_semantics<arbitrary>], iteration_bounds = array<i64: 2, 1>, scalar_prefetch = 0 : i64, scratch_operands = 2 : i64, tpu.core_type = #tpu.core_type<tc>, window_params = [{transform_indices = @transform_0, window_bounds = array<i64: 1, 16, 8, 8>}, {pipeline_mode = #tpu.pipeline_mode<synchronous>, transform_indices = @transform_1, window_bounds = array<i64: 72, 8>}, {pipeline_mode = #tpu.pipeline_mode<synchronous>, transform_indices = @transform_2, window_bounds = array<i64: 1, 8>}, {pipeline_mode = #tpu.pipeline_mode<synchronous>, transform_indices = @transform_3, window_bounds = array<i64: 1, 8>}, {transform_indices = @transform_4, window_bounds = array<i64: 1, 16, 8, 8>}]} {
    %c16_i32 = arith.constant 16 : i32
    %0 = arith.muli %arg1, %c16_i32 : i32
    %1 = tpu.assume_multiple %0, 16 : i32
    %cst = arith.constant 0.000000e+00 : bf16
    %2 = vector.broadcast %cst : bf16 to vector<1x10x8xbf16>
    %cst_0 = arith.constant 0.000000e+00 : bf16
    %3 = vector.broadcast %cst_0 : bf16 to vector<18x1x8xbf16>
    %c0 = arith.constant 0 : index
    %c0_1 = arith.constant 0 : index
    %c0_2 = arith.constant 0 : index
    %4 = vector.load %arg7[%c0, %c0_1, %c0_2] : memref<18x10x8xbf16, #tpu.memory_space<vmem>>, vector<18x1x8xbf16>
    tpu.vector_store %arg7[%c0, %c0_1, %c0_2], %3 {strides = array<i32>} : memref<18x10x8xbf16, #tpu.memory_space<vmem>>, vector<18x1x8xbf16>,
    %c0_3 = arith.constant 0 : index
    %c9 = arith.constant 9 : index
    %c0_4 = arith.constant 0 : index
    %5 = vector.load %arg7[%c0_3, %c9, %c0_4] : memref<18x10x8xbf16, #tpu.memory_space<vmem>>, vector<18x1x8xbf16>
    tpu.vector_store %arg7[%c0_3, %c9, %c0_4], %3 {strides = array<i32>} : memref<18x10x8xbf16, #tpu.memory_space<vmem>>, vector<18x1x8xbf16>,
    %c0_5 = arith.constant 0 : index
    %6 = arith.index_cast %1 : i32 to index
    %c0_6 = arith.constant 0 : index
    %c0_7 = arith.constant 0 : index
    %7 = vector.load %arg2[%c0_5, %6, %c0_6, %c0_7] : memref<1x16x8x8xbf16, #tpu.memory_space<vmem>>, vector<1x16x8x8xbf16>
    %8 = vector.shape_cast %7 : vector<1x16x8x8xbf16> to vector<16x8x8xbf16>
    %c1 = arith.constant 1 : index
    %c1_8 = arith.constant 1 : index
    %c0_9 = arith.constant 0 : index
    %9 = vector.load %arg7[%c1, %c1_8, %c0_9] : memref<18x10x8xbf16, #tpu.memory_space<vmem>>, vector<16x8x8xbf16>
    tpu.vector_store %arg7[%c1, %c1_8, %c0_9], %8 {strides = array<i32>} : memref<18x10x8xbf16, #tpu.memory_space<vmem>>, vector<16x8x8xbf16>,
    %c0_i32 = arith.constant 0 : i32
    %10 = arith.cmpi eq, %arg1, %c0_i32 : i32
    %11 = arith.extui %10 : i1 to i32
    %c0_i32_10 = arith.constant 0 : i32
    %12 = arith.cmpi ne, %11, %c0_i32_10 : i32
    scf.if %12 {
      %c0_68 = arith.constant 0 : index
      %c0_69 = arith.constant 0 : index
      %c0_70 = arith.constant 0 : index
      %66 = vector.load %arg7[%c0_68, %c0_69, %c0_70] : memref<18x10x8xbf16, #tpu.memory_space<vmem>>, vector<1x10x8xbf16>
      tpu.vector_store %arg7[%c0_68, %c0_69, %c0_70], %2 {strides = array<i32>} : memref<18x10x8xbf16, #tpu.memory_space<vmem>>, vector<1x10x8xbf16>,
    } else {
    }
    %c0_i32_11 = arith.constant 0 : i32
    %13 = arith.cmpi sgt, %arg1, %c0_i32_11 : i32
    %14 = arith.extui %13 : i1 to i32
    %c0_i32_12 = arith.constant 0 : i32
    %15 = arith.cmpi ne, %14, %c0_i32_12 : i32
    scf.if %15 {
      %c1_i32 = arith.constant 1 : i32
      %66 = arith.subi %1, %c1_i32 : i32
      %c0_68 = arith.constant 0 : index
      %67 = arith.index_cast %66 : i32 to index
      %c0_69 = arith.constant 0 : index
      %c0_70 = arith.constant 0 : index
      %68 = vector.load %arg2[%c0_68, %67, %c0_69, %c0_70] : memref<1x16x8x8xbf16, #tpu.memory_space<vmem>>, vector<1x1x8x8xbf16>
      %69 = vector.shape_cast %68 : vector<1x1x8x8xbf16> to vector<1x8x8xbf16>
      %c0_71 = arith.constant 0 : index
      %c1_72 = arith.constant 1 : index
      %c0_73 = arith.constant 0 : index
      %70 = vector.load %arg7[%c0_71, %c1_72, %c0_73] : memref<18x10x8xbf16, #tpu.memory_space<vmem>>, vector<1x8x8xbf16>
      tpu.vector_store %arg7[%c0_71, %c1_72, %c0_73], %69 {strides = array<i32>} : memref<18x10x8xbf16, #tpu.memory_space<vmem>>, vector<1x8x8xbf16>,
    } else {
    }
    %c0_i32_13 = arith.constant 0 : i32
    %16 = arith.cmpi eq, %arg1, %c0_i32_13 : i32
    %17 = arith.extui %16 : i1 to i32
    %c0_i32_14 = arith.constant 0 : i32
    %18 = arith.cmpi ne, %17, %c0_i32_14 : i32
    scf.if %18 {
      %c17 = arith.constant 17 : index
      %c0_68 = arith.constant 0 : index
      %c0_69 = arith.constant 0 : index
      %66 = vector.load %arg7[%c17, %c0_68, %c0_69] : memref<18x10x8xbf16, #tpu.memory_space<vmem>>, vector<1x10x8xbf16>
      tpu.vector_store %arg7[%c17, %c0_68, %c0_69], %2 {strides = array<i32>} : memref<18x10x8xbf16, #tpu.memory_space<vmem>>, vector<1x10x8xbf16>,
    } else {
    }
    %c0_i32_15 = arith.constant 0 : i32
    %19 = arith.cmpi slt, %arg1, %c0_i32_15 : i32
    %20 = arith.extui %19 : i1 to i32
    %c0_i32_16 = arith.constant 0 : i32
    %21 = arith.cmpi ne, %20, %c0_i32_16 : i32
    scf.if %21 {
      %c16_i32_68 = arith.constant 16 : i32
      %66 = arith.addi %1, %c16_i32_68 : i32
      %c0_69 = arith.constant 0 : index
      %67 = arith.index_cast %66 : i32 to index
      %c0_70 = arith.constant 0 : index
      %c0_71 = arith.constant 0 : index
      %68 = vector.load %arg2[%c0_69, %67, %c0_70, %c0_71] : memref<1x16x8x8xbf16, #tpu.memory_space<vmem>>, vector<1x1x8x8xbf16>
      %69 = vector.shape_cast %68 : vector<1x1x8x8xbf16> to vector<1x8x8xbf16>
      %c17 = arith.constant 17 : index
      %c1_72 = arith.constant 1 : index
      %c0_73 = arith.constant 0 : index
      %70 = vector.load %arg7[%c17, %c1_72, %c0_73] : memref<18x10x8xbf16, #tpu.memory_space<vmem>>, vector<1x8x8xbf16>
      tpu.vector_store %arg7[%c17, %c1_72, %c0_73], %69 {strides = array<i32>} : memref<18x10x8xbf16, #tpu.memory_space<vmem>>, vector<1x8x8xbf16>,
    } else {
    }
    %c0_17 = arith.constant 0 : index
    %c0_18 = arith.constant 0 : index
    %c0_19 = arith.constant 0 : index
    %22 = vector.load %arg7[%c0_17, %c0_18, %c0_19] : memref<18x10x8xbf16, #tpu.memory_space<vmem>>, vector<16x8x8xbf16>
    %23 = vector.shape_cast %22 : vector<16x8x8xbf16> to vector<128x8xbf16>
    %c0_20 = arith.constant 0 : index
    %c0_21 = arith.constant 0 : index
    %24 = vector.load %arg8[%c0_20, %c0_21] : memref<128x72xbf16, #tpu.memory_space<vmem>>, vector<128x8xbf16>
    tpu.vector_store %arg8[%c0_20, %c0_21], %23 {strides = array<i32>} : memref<128x72xbf16, #tpu.memory_space<vmem>>, vector<128x8xbf16>,
    %c0_22 = arith.constant 0 : index
    %c1_23 = arith.constant 1 : index
    %c0_24 = arith.constant 0 : index
    %25 = vector.load %arg7[%c0_22, %c1_23, %c0_24] : memref<18x10x8xbf16, #tpu.memory_space<vmem>>, vector<16x8x8xbf16>
    %26 = vector.shape_cast %25 : vector<16x8x8xbf16> to vector<128x8xbf16>
    %c0_25 = arith.constant 0 : index
    %c8 = arith.constant 8 : index
    %27 = vector.load %arg8[%c0_25, %c8] : memref<128x72xbf16, #tpu.memory_space<vmem>>, vector<128x8xbf16>
    tpu.vector_store %arg8[%c0_25, %c8], %26 {strides = array<i32>} : memref<128x72xbf16, #tpu.memory_space<vmem>>, vector<128x8xbf16>,
    %c0_26 = arith.constant 0 : index
    %c2 = arith.constant 2 : index
    %c0_27 = arith.constant 0 : index
    %28 = vector.load %arg7[%c0_26, %c2, %c0_27] : memref<18x10x8xbf16, #tpu.memory_space<vmem>>, vector<16x8x8xbf16>
    %29 = vector.shape_cast %28 : vector<16x8x8xbf16> to vector<128x8xbf16>
    %c0_28 = arith.constant 0 : index
    %c16 = arith.constant 16 : index
    %30 = vector.load %arg8[%c0_28, %c16] : memref<128x72xbf16, #tpu.memory_space<vmem>>, vector<128x8xbf16>
    tpu.vector_store %arg8[%c0_28, %c16], %29 {strides = array<i32>} : memref<128x72xbf16, #tpu.memory_space<vmem>>, vector<128x8xbf16>,
    %c1_29 = arith.constant 1 : index
    %c0_30 = arith.constant 0 : index
    %c0_31 = arith.constant 0 : index
    %31 = vector.load %arg7[%c1_29, %c0_30, %c0_31] : memref<18x10x8xbf16, #tpu.memory_space<vmem>>, vector<16x8x8xbf16>
    %32 = vector.shape_cast %31 : vector<16x8x8xbf16> to vector<128x8xbf16>
    %c0_32 = arith.constant 0 : index
    %c24 = arith.constant 24 : index
    %33 = vector.load %arg8[%c0_32, %c24] : memref<128x72xbf16, #tpu.memory_space<vmem>>, vector<128x8xbf16>
    tpu.vector_store %arg8[%c0_32, %c24], %32 {strides = array<i32>} : memref<128x72xbf16, #tpu.memory_space<vmem>>, vector<128x8xbf16>,
    %c1_33 = arith.constant 1 : index
    %c1_34 = arith.constant 1 : index
    %c0_35 = arith.constant 0 : index
    %34 = vector.load %arg7[%c1_33, %c1_34, %c0_35] : memref<18x10x8xbf16, #tpu.memory_space<vmem>>, vector<16x8x8xbf16>
    %35 = vector.shape_cast %34 : vector<16x8x8xbf16> to vector<128x8xbf16>
    %c0_36 = arith.constant 0 : index
    %c32 = arith.constant 32 : index
    %36 = vector.load %arg8[%c0_36, %c32] : memref<128x72xbf16, #tpu.memory_space<vmem>>, vector<128x8xbf16>
    tpu.vector_store %arg8[%c0_36, %c32], %35 {strides = array<i32>} : memref<128x72xbf16, #tpu.memory_space<vmem>>, vector<128x8xbf16>,
    %c1_37 = arith.constant 1 : index
    %c2_38 = arith.constant 2 : index
    %c0_39 = arith.constant 0 : index
    %37 = vector.load %arg7[%c1_37, %c2_38, %c0_39] : memref<18x10x8xbf16, #tpu.memory_space<vmem>>, vector<16x8x8xbf16>
    %38 = vector.shape_cast %37 : vector<16x8x8xbf16> to vector<128x8xbf16>
    %c0_40 = arith.constant 0 : index
    %c40 = arith.constant 40 : index
    %39 = vector.load %arg8[%c0_40, %c40] : memref<128x72xbf16, #tpu.memory_space<vmem>>, vector<128x8xbf16>
    tpu.vector_store %arg8[%c0_40, %c40], %38 {strides = array<i32>} : memref<128x72xbf16, #tpu.memory_space<vmem>>, vector<128x8xbf16>,
    %c2_41 = arith.constant 2 : index
    %c0_42 = arith.constant 0 : index
    %c0_43 = arith.constant 0 : index
    %40 = vector.load %arg7[%c2_41, %c0_42, %c0_43] : memref<18x10x8xbf16, #tpu.memory_space<vmem>>, vector<16x8x8xbf16>
    %41 = vector.shape_cast %40 : vector<16x8x8xbf16> to vector<128x8xbf16>
    %c0_44 = arith.constant 0 : index
    %c48 = arith.constant 48 : index
    %42 = vector.load %arg8[%c0_44, %c48] : memref<128x72xbf16, #tpu.memory_space<vmem>>, vector<128x8xbf16>
    tpu.vector_store %arg8[%c0_44, %c48], %41 {strides = array<i32>} : memref<128x72xbf16, #tpu.memory_space<vmem>>, vector<128x8xbf16>,
    %c2_45 = arith.constant 2 : index
    %c1_46 = arith.constant 1 : index
    %c0_47 = arith.constant 0 : index
    %43 = vector.load %arg7[%c2_45, %c1_46, %c0_47] : memref<18x10x8xbf16, #tpu.memory_space<vmem>>, vector<16x8x8xbf16>
    %44 = vector.shape_cast %43 : vector<16x8x8xbf16> to vector<128x8xbf16>
    %c0_48 = arith.constant 0 : index
    %c56 = arith.constant 56 : index
    %45 = vector.load %arg8[%c0_48, %c56] : memref<128x72xbf16, #tpu.memory_space<vmem>>, vector<128x8xbf16>
    tpu.vector_store %arg8[%c0_48, %c56], %44 {strides = array<i32>} : memref<128x72xbf16, #tpu.memory_space<vmem>>, vector<128x8xbf16>,
    %c2_49 = arith.constant 2 : index
    %c2_50 = arith.constant 2 : index
    %c0_51 = arith.constant 0 : index
    %46 = vector.load %arg7[%c2_49, %c2_50, %c0_51] : memref<18x10x8xbf16, #tpu.memory_space<vmem>>, vector<16x8x8xbf16>
    %47 = vector.shape_cast %46 : vector<16x8x8xbf16> to vector<128x8xbf16>
    %c0_52 = arith.constant 0 : index
    %c64 = arith.constant 64 : index
    %48 = vector.load %arg8[%c0_52, %c64] : memref<128x72xbf16, #tpu.memory_space<vmem>>, vector<128x8xbf16>
    tpu.vector_store %arg8[%c0_52, %c64], %47 {strides = array<i32>} : memref<128x72xbf16, #tpu.memory_space<vmem>>, vector<128x8xbf16>,
    %c0_53 = arith.constant 0 : index
    %c0_54 = arith.constant 0 : index
    %49 = vector.load %arg8[%c0_53, %c0_54] : memref<128x72xbf16, #tpu.memory_space<vmem>>, vector<128x72xbf16>
    %c0_55 = arith.constant 0 : index
    %c0_56 = arith.constant 0 : index
    %50 = vector.load %arg3[%c0_55, %c0_56] : memref<72x8xbf16, #tpu.memory_space<vmem>>, vector<72x8xbf16>
    %cst_57 = arith.constant dense<0.000000e+00> : vector<128x8xf32>
    %51 = tpu.matmul %49, %50, %cst_57 {dimension_numbers = #tpu.dot_dimension_numbers<[1], [0], [0], [1], [0, 0, 1, 1], [], []>} : vector<128x72xbf16>, vector<72x8xbf16>, vector<128x8xf32> -> vector<128x8xf32>
    %c0_58 = arith.constant 0 : index
    %c0_59 = arith.constant 0 : index
    %52 = vector.load %arg4[%c0_58, %c0_59] : memref<1x8xf32, #tpu.memory_space<vmem>>, vector<1x8xf32>
    %53 = vector.broadcast %52 : vector<1x8xf32> to vector<128x8xf32>
    %54 = arith.mulf %51, %53 : vector<128x8xf32>
    %c0_60 = arith.constant 0 : index
    %c0_61 = arith.constant 0 : index
    %55 = vector.load %arg5[%c0_60, %c0_61] : memref<1x8xf32, #tpu.memory_space<vmem>>, vector<1x8xf32>
    %56 = vector.broadcast %55 : vector<1x8xf32> to vector<128x8xf32>
    %57 = arith.addf %54, %56 : vector<128x8xf32>
    %cst_62 = arith.constant 0.000000e+00 : f32
    %58 = vector.broadcast %cst_62 : f32 to vector<128x8xf32>
    %59 = arith.cmpf ogt, %57, %58 : vector<128x8xf32>
    %cst_63 = arith.constant 1.000000e-01 : f32
    %60 = vector.broadcast %cst_63 : f32 to vector<128x8xf32>
    %61 = arith.mulf %60, %57 : vector<128x8xf32>
    %62 = arith.select %59, %57, %61 : vector<128x8xi1>, vector<128x8xf32>
    %63 = vector.shape_cast %62 : vector<128x8xf32> to vector<1x16x8x8xf32>
    %64 = arith.truncf %63 : vector<1x16x8x8xf32> to vector<1x16x8x8xbf16>
    %c0_64 = arith.constant 0 : index
    %c0_65 = arith.constant 0 : index
    %c0_66 = arith.constant 0 : index
    %c0_67 = arith.constant 0 : index
    %65 = vector.load %arg6[%c0_64, %c0_65, %c0_66, %c0_67] : memref<1x16x8x8xbf16, #tpu.memory_space<vmem>>, vector<1x16x8x8xbf16>
    tpu.vector_store %arg6[%c0_64, %c0_65, %c0_66, %c0_67], %64 {strides = array<i32>} : memref<1x16x8x8xbf16, #tpu.memory_space<vmem>>, vector<1x16x8x8xbf16>,
    return
  }
  func.func @transform_0(%arg0: i32, %arg1: i32) -> (i32, i32, i32, i32) {
    %c0_i32 = arith.constant 0 : i32
    %c0_i32_0 = arith.constant 0 : i32
    %c0_i32_1 = arith.constant 0 : i32
    %c0_i32_2 = arith.constant 0 : i32
    return %arg0, %c0_i32, %c0_i32_0, %c0_i32_1 : i32, i32, i32, i32
  }
  func.func @transform_1(%arg0: i32, %arg1: i32) -> (i32, i32) {
    %c0_i32 = arith.constant 0 : i32
    %c0_i32_0 = arith.constant 0 : i32
    %c0_i32_1 = arith.constant 0 : i32
    return %c0_i32, %c0_i32_0 : i32, i32
  }
  func.func @transform_2(%arg0: i32, %arg1: i32) -> (i32, i32) {
    %c0_i32 = arith.constant 0 : i32
    %c0_i32_0 = arith.constant 0 : i32
    %c0_i32_1 = arith.constant 0 : i32
    return %c0_i32, %c0_i32_0 : i32, i32
  }
  func.func @transform_3(%arg0: i32, %arg1: i32) -> (i32, i32) {
    %c0_i32 = arith.constant 0 : i32
    %c0_i32_0 = arith.constant 0 : i32
    %c0_i32_1 = arith.constant 0 : i32
    return %c0_i32, %c0_i32_0 : i32, i32
  }
  func.func @transform_4(%arg0: i32, %arg1: i32) -> (i32, i32, i32, i32) {
    %c0_i32 = arith.constant 0 : i32
    %c0_i32_0 = arith.constant 0 : i32
    %c0_i32_1 = arith.constant 0 : i32
    return %arg0, %arg1, %c0_i32, %c0_i32_0 : i32, i32, i32, i32
  }
}

</mosaic_0001>

<llo_original>
// kernel: resblock_body_forward.7
$region0: #{resblock_body_forward.7}
  #allocation0 [shape = 'u32[]', space=smem, size = 0x4, offset = 0x4, fixed_abs, tag = 'smem constant byte address 0x4 - core index']
  #allocation1 [shape = 'u32[72,128]{1,0:T(1,128)}', space=vmem, size = 0x9000, scoped, tag = 'internal scratch']
  %s0 = inlined_call_operand.vmem [shape: bf16[2,16,8,8], index: 0, kind: input, shape index: {}]
  %s1 = inlined_call_operand.vmem [shape: bf16[2,16,8,8], index: 1, kind: input, shape index: {}]
  %s2 = inlined_call_operand.vmem [shape: bf16[2,16,8,16], index: 2, kind: input, shape index: {}]
  %s3 = inlined_call_operand.vmem [shape: bf16[8,16], index: 3, kind: input, shape index: {}]
  %s4 = inlined_call_operand.vmem [shape: bf16[8,16], index: 4, kind: input, shape index: {}]
  %s5 = inlined_call_operand.vmem [shape: f32[1,16], index: 5, kind: input, shape index: {}]
  %s6 = inlined_call_operand.vmem [shape: f32[1,16], index: 6, kind: input, shape index: {}]
  %s7 = inlined_call_operand.vmem [shape: f32[2,16,8,16], index: 7, kind: output, shape index: {0}]
  %s8 = inlined_call_operand.hbm [shape: f32[2,8,8,16], index: 8, kind: output, shape index: {1}]
  %9 = xla_tuple %s7, %s8
  %s10 = sld [smem:[#allocation0]]
  $region69: #{resblock_body_forward.7} parent=0
    _
  %s12 = ssub.s32 1, %s10
  %s13 = scalar_select 0, %s12, %s10
  $region1: #{resblock_body_forward.7} parent=0
    #allocation2 [shape = 'u8[65536]{0}', space=vmem, size = 0x10000, scoped, tag = 'output window, operand 1']
    #allocation3 [shape = 's32[2]{0}', space=sflag, size = 0x8, scoped, tag = 'scoped memory for resblock_body_forward.7']
    %14 = vsyncpa [#allocation3], 0
    %s15 = scalar_lea.sflag [#allocation3], 1
    %16 = vsyncpa %s15, 0
    loop: start=0, step=1, limit=4
    $region2: #{resblock_body_forward.7} parent=1 // loop_pre_header
      _
    $region3: #{resblock_body_forward.7} parent=1 // loop_header
      %s18 = sphi 0, %s22
      %p19 = scmp.ge.s32.totalorder %s18, 4
      %s25 = sphi 0, %s37
      %s26 = sphi 0, %s33
      %s27 = sphi 0, %s25
      %s28 = sphi 0, %s26
      %s29 = sphi 0, %s27
      %s30 = sphi 0, %s28
      %s42 = sphi 0, %s44
      %s45 = sphi 0, %s42
      %s46 = sphi 0, %s45
      %s62 = sphi 0, %s46
      %s70 = sphi 0, %s72
      %s73 = sphi 0, %s70
      %s74 = sphi 0, %s73
      %s90 = sphi 0, %s74
      %s98 = sphi 0, %s100
      %s101 = sphi 0, %s98
      %s102 = sphi 0, %s101
      %s118 = sphi 0, %s102
      %s122 = sphi 0, %s122
      %s124 = sphi 0, %s122
      %s125 = sphi 0, %s124
      %s139 = sphi 0, %s125
      %s143 = sphi 0, %s143
      %s145 = sphi 0, %s143
      %s146 = sphi 0, %s145
      %s160 = sphi 0, %s146
      %s164 = sphi 0, %s164
      %s166 = sphi 0, %s164
      %s167 = sphi 0, %s166
      %s181 = sphi 0, %s167
      %s185 = sphi 0, %s185
      %s187 = sphi 0, %s185
      %s188 = sphi 0, %s187
      %s202 = sphi 0, %s188
      %s210 = sphi 0, %s212
      %s213 = sphi 0, %s210
      %s214 = sphi 0, %s213
      %s230 = sphi 0, %s214
      %s238 = sphi 0, %s240
      %s241 = sphi 0, %s238
      %s242 = sphi 0, %s241
      %s258 = sphi 0, %s242
    $region4: #{resblock_body_forward.7} parent=1 // loop_header_branch
      %21 = sbr.rel (%p19) target = $region8
    $region5: #{resblock_body_forward.7} parent=1 // loop_body
      %s23 = ssub.s32 %s18, 1
      %s24 = ssub.s32 %s18, 2
      %s31 = sadd.s32 1, %s26
      %p32 = scmp.ge.s32.totalorder %s31, 1
      %s33 = scalar_select %p32, 0, %s31
      %s34 = sadd.s32 1, %s25
      %s35 = scalar_select %p32, %s34, %s25
      %p36 = scmp.ge.s32.totalorder %s35, 2
      %s37 = scalar_select %p36, 0, %s35
      %s38 = ssub.s32 %s25, %s37
      %s39 = ssub.s32 %s26, %s33
      %s40 = sor.u32 %s38, %s39
      %p41 = scmp.eq.s32.totalorder %s40, 0
      %s43 = sadd.s32 %s42, 1
      %s44 = scalar_select %p41, %s42, %s43
      %p47 = pneg %p41
      %p48 = scmp.eq.s32.totalorder %s18, 1
      %p49 = por %p47, %p48
      %p50 = scmp.ne.s32.totalorder %s42, %s45
      %p51 = scmp.eq.s32.totalorder %s18, 0
      %p52 = por %p50, %p51
      %p53 = scmp.ne.s32.totalorder %s42, %s45
      %p54 = scmp.eq.s32.totalorder %s23, 1
      %p55 = por %p53, %p54
      %p56 = scmp.ne.s32.totalorder %s45, %s46
      %p57 = scmp.eq.s32.totalorder %s23, 0
      %p58 = por %p56, %p57
      %p59 = scmp.ne.s32.totalorder %s45, %s46
      %p60 = scmp.eq.s32.totalorder %s24, 1
      %p61 = por %p59, %p60
      %p63 = scmp.ne.s32.totalorder %s46, %s62
      %p64 = scmp.eq.s32.totalorder %s24, 0
      %p65 = por %p63, %p64
      %s66 = ssub.s32 %s25, %s37
      %s67 = ssub.s32 %s26, %s33
      %s68 = sor.u32 %s66, %s67
      %p69 = scmp.eq.s32.totalorder %s68, 0
      %s71 = sadd.s32 %s70, 1
      %s72 = scalar_select %p69, %s70, %s71
      %p75 = pneg %p69
      %p76 = scmp.eq.s32.totalorder %s18, 1
      %p77 = por %p75, %p76
      %p78 = scmp.ne.s32.totalorder %s70, %s73
      %p79 = scmp.eq.s32.totalorder %s18, 0
      %p80 = por %p78, %p79
      %p81 = scmp.ne.s32.totalorder %s70, %s73
      %p82 = scmp.eq.s32.totalorder %s23, 1
      %p83 = por %p81, %p82
      %p84 = scmp.ne.s32.totalorder %s73, %s74
      %p85 = scmp.eq.s32.totalorder %s23, 0
      %p86 = por %p84, %p85
      %p87 = scmp.ne.s32.totalorder %s73, %s74
      %p88 = scmp.eq.s32.totalorder %s24, 1
      %p89 = por %p87, %p88
      %p91 = scmp.ne.s32.totalorder %s74, %s90
      %p92 = scmp.eq.s32.totalorder %s24, 0
      %p93 = por %p91, %p92
      %s94 = ssub.s32 %s25, %s37
      %s95 = ssub.s32 %s26, %s33
      %s96 = sor.u32 %s94, %s95
      %p97 = scmp.eq.s32.totalorder %s96, 0
      %s99 = sadd.s32 %s98, 1
      %s100 = scalar_select %p97, %s98, %s99
      %p103 = pneg %p97
      %p104 = scmp.eq.s32.totalorder %s18, 1
      %p105 = por %p103, %p104
      %p106 = scmp.ne.s32.totalorder %s98, %s101
      %p107 = scmp.eq.s32.totalorder %s18, 0
      %p108 = por %p106, %p107
      %p109 = scmp.ne.s32.totalorder %s98, %s101
      %p110 = scmp.eq.s32.totalorder %s23, 1
      %p111 = por %p109, %p110
      %p112 = scmp.ne.s32.totalorder %s101, %s102
      %p113 = scmp.eq.s32.totalorder %s23, 0
      %p114 = por %p112, %p113
      %p115 = scmp.ne.s32.totalorder %s101, %s102
      %p116 = scmp.eq.s32.totalorder %s24, 1
      %p117 = por %p115, %p116
      %p119 = scmp.ne.s32.totalorder %s102, %s118
      %p120 = scmp.eq.s32.totalorder %s24, 0
      %p121 = por %p119, %p120
      %s123 = sadd.s32 %s122, 1
      %p126 = scmp.eq.s32.totalorder %s18, 1
      %p127 = scmp.ne.s32.totalorder %s122, %s124
      %p128 = scmp.eq.s32.totalorder %s18, 0
      %p129 = por %p127, %p128
      %p130 = scmp.ne.s32.totalorder %s122, %s124
      %p131 = scmp.eq.s32.totalorder %s23, 1
      %p132 = por %p130, %p131
      %p133 = scmp.ne.s32.totalorder %s124, %s125
      %p134 = scmp.eq.s32.totalorder %s23, 0
      %p135 = por %p133, %p134
      %p136 = scmp.ne.s32.totalorder %s124, %s125
      %p137 = scmp.eq.s32.totalorder %s24, 1
      %p138 = por %p136, %p137
      %p140 = scmp.ne.s32.totalorder %s125, %s139
      %p141 = scmp.eq.s32.totalorder %s24, 0
      %p142 = por %p140, %p141
      %s144 = sadd.s32 %s143, 1
      %p147 = scmp.eq.s32.totalorder %s18, 1
      %p148 = scmp.ne.s32.totalorder %s143, %s145
      %p149 = scmp.eq.s32.totalorder %s18, 0
      %p150 = por %p148, %p149
      %p151 = scmp.ne.s32.totalorder %s143, %s145
      %p152 = scmp.eq.s32.totalorder %s23, 1
      %p153 = por %p151, %p152
      %p154 = scmp.ne.s32.totalorder %s145, %s146
      %p155 = scmp.eq.s32.totalorder %s23, 0
      %p156 = por %p154, %p155
      %p157 = scmp.ne.s32.totalorder %s145, %s146
      %p158 = scmp.eq.s32.totalorder %s24, 1
      %p159 = por %p157, %p158
      %p161 = scmp.ne.s32.totalorder %s146, %s160
      %p162 = scmp.eq.s32.totalorder %s24, 0
      %p163 = por %p161, %p162
      %s165 = sadd.s32 %s164, 1
      %p168 = scmp.eq.s32.totalorder %s18, 1
      %p169 = scmp.ne.s32.totalorder %s164, %s166
      %p170 = scmp.eq.s32.totalorder %s18, 0
      %p171 = por %p169, %p170
      %p172 = scmp.ne.s32.totalorder %s164, %s166
      %p173 = scmp.eq.s32.totalorder %s23, 1
      %p174 = por %p172, %p173
      %p175 = scmp.ne.s32.totalorder %s166, %s167
      %p176 = scmp.eq.s32.totalorder %s23, 0
      %p177 = por %p175, %p176
      %p178 = scmp.ne.s32.totalorder %s166, %s167
      %p179 = scmp.eq.s32.totalorder %s24, 1
      %p180 = por %p178, %p179
      %p182 = scmp.ne.s32.totalorder %s167, %s181
      %p183 = scmp.eq.s32.totalorder %s24, 0
      %p184 = por %p182, %p183
      %s186 = sadd.s32 %s185, 1
      %p189 = scmp.eq.s32.totalorder %s18, 1
      %p190 = scmp.ne.s32.totalorder %s185, %s187
      %p191 = scmp.eq.s32.totalorder %s18, 0
      %p192 = por %p190, %p191
      %p193 = scmp.ne.s32.totalorder %s185, %s187
      %p194 = scmp.eq.s32.totalorder %s23, 1
      %p195 = por %p193, %p194
      %p196 = scmp.ne.s32.totalorder %s187, %s188
      %p197 = scmp.eq.s32.totalorder %s23, 0
      %p198 = por %p196, %p197
      %p199 = scmp.ne.s32.totalorder %s187, %s188
      %p200 = scmp.eq.s32.totalorder %s24, 1
      %p201 = por %p199, %p200
      %p203 = scmp.ne.s32.totalorder %s188, %s202
      %p204 = scmp.eq.s32.totalorder %s24, 0
      %p205 = por %p203, %p204
      %s206 = ssub.s32 %s25, %s37
      %s207 = ssub.s32 %s26, %s33
      %s208 = sor.u32 %s206, %s207
      %p209 = scmp.eq.s32.totalorder %s208, 0
      %s211 = sadd.s32 %s210, 1
      %s212 = scalar_select %p209, %s210, %s211
      %p215 = pneg %p209
      %p216 = scmp.eq.s32.totalorder %s18, 1
      %p217 = por %p215, %p216
      %p218 = scmp.ne.s32.totalorder %s210, %s213
      %p219 = scmp.eq.s32.totalorder %s18, 0
      %p220 = por %p218, %p219
      %p221 = scmp.ne.s32.totalorder %s210, %s213
      %p222 = scmp.eq.s32.totalorder %s23, 1
      %p223 = por %p221, %p222
      %p224 = scmp.ne.s32.totalorder %s213, %s214
      %p225 = scmp.eq.s32.totalorder %s23, 0
      %p226 = por %p224, %p225
      %p227 = scmp.ne.s32.totalorder %s213, %s214
      %p228 = scmp.eq.s32.totalorder %s24, 1
      %p229 = por %p227, %p228
      %p231 = scmp.ne.s32.totalorder %s214, %s230
      %p232 = scmp.eq.s32.totalorder %s24, 0
      %p233 = por %p231, %p232
      %s234 = ssub.s32 %s25, %s37
      %s235 = ssub.s32 %s26, %s33
      %s236 = sor.u32 %s234, %s235
      %p237 = scmp.eq.s32.totalorder %s236, 0
      %s239 = sadd.s32 %s238, 1
      %s240 = scalar_select %p237, %s238, %s239
      %p243 = pneg %p237
      %p244 = scmp.eq.s32.totalorder %s18, 1
      %p245 = por %p243, %p244
      %p246 = scmp.ne.s32.totalorder %s238, %s241
      %p247 = scmp.eq.s32.totalorder %s18, 0
      %p248 = por %p246, %p247
      %p249 = scmp.ne.s32.totalorder %s238, %s241
      %p250 = scmp.eq.s32.totalorder %s23, 1
      %p251 = por %p249, %p250
      %p252 = scmp.ne.s32.totalorder %s241, %s242
      %p253 = scmp.eq.s32.totalorder %s23, 0
      %p254 = por %p252, %p253
      %p255 = scmp.ne.s32.totalorder %s241, %s242
      %p256 = scmp.eq.s32.totalorder %s24, 1
      %p257 = por %p255, %p256
      %p259 = scmp.ne.s32.totalorder %s242, %s258
      %p260 = scmp.eq.s32.totalorder %s24, 0
      %p261 = por %p259, %p260
      %p262 = scmp.le.s32.totalorder 1, %s18
      %p263 = scmp.lt.s32.totalorder %s18, 3
      %p264 = pnand %p262, %p263
      %p265 = pneg %p264
      // Predicated region
      $region9: #{resblock_body_forward.7} parent=5 // pred_check
        _
      $region10: #{resblock_body_forward.7} parent=5 // pred_check_branch
        %267 = sbr.rel (%p264) target = $region12
      $region11: #{resblock_body_forward.7} parent=5 // pred_region
        %s268 = ssub.s32 %s18, 1
        // Predicated region
        $region13: #{resblock_body_forward.7} parent=11 // pred_check
          %p269 = pneg %p135
        $region14: #{resblock_body_forward.7} parent=11 // pred_check_branch
          %271 = sbr.rel (%p269) target = $region16
        $region15: #{resblock_body_forward.7} parent=11 // pred_region
          _
        $region16: #{resblock_body_forward.7} parent=11 // pred_fallthru
          _
        // Predicated region
        $region17: #{resblock_body_forward.7} parent=11 // pred_check
          %p272 = pneg %p156
        $region18: #{resblock_body_forward.7} parent=11 // pred_check_branch
          %274 = sbr.rel (%p272) target = $region20
        $region19: #{resblock_body_forward.7} parent=11 // pred_region
          _
        $region20: #{resblock_body_forward.7} parent=11 // pred_fallthru
          _
        // Predicated region
        $region21: #{resblock_body_forward.7} parent=11 // pred_check
          %p275 = pneg %p177
        $region22: #{resblock_body_forward.7} parent=11 // pred_check_branch
          %277 = sbr.rel (%p275) target = $region24
        $region23: #{resblock_body_forward.7} parent=11 // pred_region
          _
        $region24: #{resblock_body_forward.7} parent=11 // pred_fallthru
          _
        // Predicated region
        $region25: #{resblock_body_forward.7} parent=11 // pred_check
          %p278 = pneg %p198
        $region26: #{resblock_body_forward.7} parent=11 // pred_check_branch
          %280 = sbr.rel (%p278) target = $region28
        $region27: #{resblock_body_forward.7} parent=11 // pred_region
          _
        $region28: #{resblock_body_forward.7} parent=11 // pred_fallthru
          _
      $region12: #{resblock_body_forward.7} parent=5 // pred_fallthru
        _
      %p281 = scmp.lt.s32.totalorder %s18, 2
      // Predicated region
      $region29: #{resblock_body_forward.7} parent=5 // pred_check
        %p282 = pneg %p281
      $region30: #{resblock_body_forward.7} parent=5 // pred_check_branch
        %284 = sbr.rel (%p282) target = $region32
      $region31: #{resblock_body_forward.7} parent=5 // pred_region
        // Predicated region
        $region33: #{resblock_body_forward.7} parent=31 // pred_check
          %p285 = pneg %p52
        $region34: #{resblock_body_forward.7} parent=31 // pred_check_branch
          %287 = sbr.rel (%p285) target = $region36
        $region35: #{resblock_body_forward.7} parent=31 // pred_region
          %s288 = smul.u32 16, %s26
          %p289 = scmp.lt.s32.totalorder %s25, 1
          %s290 = scalar_select %p289, %s25, 1
          %p291 = scmp.lt.s32.totalorder %s288, 15
          %s292 = scalar_select %p291, %s288, 15
          %s293 = smul.addr %s290, 16
          %s294 = sadd.s32 %s292, %s293
          %s295 = smul.addr %s294, 4
          %s296 = scalar_lea.vmem %s0, %s295
          %s297 = smul.u32 16, %s26
        $region36: #{resblock_body_forward.7} parent=31 // pred_fallthru
          _
        // Predicated region
        $region37: #{resblock_body_forward.7} parent=31 // pred_check
          %p298 = pneg %p80
        $region38: #{resblock_body_forward.7} parent=31 // pred_check_branch
          %300 = sbr.rel (%p298) target = $region40
        $region39: #{resblock_body_forward.7} parent=31 // pred_region
          %s301 = smul.u32 16, %s26
          %p302 = scmp.lt.s32.totalorder %s25, 1
          %s303 = scalar_select %p302, %s25, 1
          %p304 = scmp.lt.s32.totalorder %s301, 15
          %s305 = scalar_select %p304, %s301, 15
          %s306 = smul.addr %s303, 16
          %s307 = sadd.s32 %s305, %s306
          %s308 = smul.addr %s307, 4
          %s309 = scalar_lea.vmem %s1, %s308
          %s310 = smul.u32 16, %s26
        $region40: #{resblock_body_forward.7} parent=31 // pred_fallthru
          _
        // Predicated region
        $region41: #{resblock_body_forward.7} parent=31 // pred_check
          %p311 = pneg %p108
        $region42: #{resblock_body_forward.7} parent=31 // pred_check_branch
          %313 = sbr.rel (%p311) target = $region44
        $region43: #{resblock_body_forward.7} parent=31 // pred_region
          %s314 = smul.u32 16, %s26
          %p315 = scmp.lt.s32.totalorder %s25, 1
          %s316 = scalar_select %p315, %s25, 1
          %p317 = scmp.lt.s32.totalorder %s314, 15
          %s318 = scalar_select %p317, %s314, 15
          %s319 = smul.addr %s316, 16
          %s320 = sadd.s32 %s318, %s319
          %s321 = smul.addr %s320, 4
          %s322 = scalar_lea.vmem %s2, %s321
          %s323 = smul.u32 16, %s26
        $region44: #{resblock_body_forward.7} parent=31 // pred_fallthru
          _
      $region32: #{resblock_body_forward.7} parent=5 // pred_fallthru
        _
      %p324 = scmp.le.s32.totalorder 1, %s18
      %p325 = scmp.lt.s32.totalorder %s18, 3
      %p326 = pnand %p324, %p325
      %p327 = pneg %p326
      // Predicated region
      $region45: #{resblock_body_forward.7} parent=5 // pred_check
        _
      $region46: #{resblock_body_forward.7} parent=5 // pred_check_branch
        %329 = sbr.rel (%p326) target = $region48
      $region47: #{resblock_body_forward.7} parent=5 // pred_region
        %s330 = ssub.s32 %s18, 1
        %s331 = smul.u32 16, %s28
        %p332 = scmp.lt.s32.totalorder %s27, 1
        %s333 = scalar_select %p332, %s27, 1
        %p334 = scmp.lt.s32.totalorder %s331, 15
        %s335 = scalar_select %p334, %s331, 15
        %s336 = smul.addr %s333, 16
        %s337 = sadd.s32 %s335, %s336
        %s338 = smul.addr %s337, 4
        %s339 = scalar_lea.vmem %s0, %s338
        %p340 = pneg %p58
        %p341 = pneg %p55
        %s342 = smul.u32 16, %s28
        %p343 = scmp.lt.s32.totalorder %s27, 1
        %s344 = scalar_select %p343, %s27, 1
        %p345 = scmp.lt.s32.totalorder %s342, 15
        %s346 = scalar_select %p345, %s342, 15
        %s347 = smul.addr %s344, 16
        %s348 = sadd.s32 %s346, %s347
        %s349 = smul.addr %s348, 4
        %s350 = scalar_lea.vmem %s1, %s349
        %p351 = pneg %p86
        %p352 = pneg %p83
        %s353 = smul.u32 16, %s28
        %p354 = scmp.lt.s32.totalorder %s27, 1
        %s355 = scalar_select %p354, %s27, 1
        %p356 = scmp.lt.s32.totalorder %s353, 15
        %s357 = scalar_select %p356, %s353, 15
        %s358 = smul.addr %s355, 16
        %s359 = sadd.s32 %s357, %s358
        %s360 = smul.addr %s359, 4
        %s361 = scalar_lea.vmem %s2, %s360
        %p362 = pneg %p114
        %p363 = pneg %p111
        %p364 = pneg %p135
        %p365 = pneg %p132
        %p366 = pneg %p156
        %p367 = pneg %p153
        %p368 = pneg %p177
        %p369 = pneg %p174
        %p370 = pneg %p198
        %p371 = pneg %p195
        %p372 = pneg %p226
        %p373 = pneg %p223
        %s374 = smul.u32 16, %s28
        %p375 = scmp.lt.s32.totalorder %s27, 1
        %s376 = scalar_select %p375, %s27, 1
        %p377 = scmp.lt.s32.totalorder %s374, 15
        %s378 = scalar_select %p377, %s374, 15
        %s379 = smul.addr %s376, 16
        %s380 = sadd.s32 %s378, %s379
        %s381 = smul.addr %s380, 8
        %s382 = scalar_lea.vmem %s7, %s381
        %p383 = pneg %p254
        %p384 = pneg %p251
        %s385 = sand.u32 %s241, 1
        %s386 = scalar_lea.sflag [#allocation3], %s385
        %s387 = sand.u32 %s241, 1
        %s388 = smul.addr %s387, 64
        %s389 = scalar_lea.vmem [#allocation2], %s388
        %s390 = smul.u32 16, %s28
        %p391 = scmp.lt.s32.totalorder %s27, 1
        %s392 = scalar_select %p391, %s27, 1
        %p393 = scmp.lt.s32.totalorder %s390, 15
        %s394 = scalar_select %p393, %s390, 15
        %s395 = smul.addr %s392, 16
        %s396 = sadd.s32 %s394, %s395
        %s397 = smul.addr %s396, 4
        %s398 = scalar_lea.vmem %s0, %s397
        %s399 = smul.u32 16, %s28
        %s400 = smul.u32 16, %s28
        %p401 = scmp.lt.s32.totalorder %s27, 1
        %s402 = scalar_select %p401, %s27, 1
        %p403 = scmp.lt.s32.totalorder %s400, 15
        %s404 = scalar_select %p403, %s400, 15
        %s405 = smul.addr %s402, 16
        %s406 = sadd.s32 %s404, %s405
        %s407 = smul.addr %s406, 4
        %s408 = scalar_lea.vmem %s1, %s407
        %s409 = smul.u32 16, %s28
        %s410 = smul.u32 16, %s28
        %p411 = scmp.lt.s32.totalorder %s27, 1
        %s412 = scalar_select %p411, %s27, 1
        %p413 = scmp.lt.s32.totalorder %s410, 15
        %s414 = scalar_select %p413, %s410, 15
        %s415 = smul.addr %s412, 16
        %s416 = sadd.s32 %s414, %s415
        %s417 = smul.addr %s416, 4
        %s418 = scalar_lea.vmem %s2, %s417
        %s419 = smul.u32 16, %s28
        %s420 = smul.u32 16, %s28
        %p421 = scmp.lt.s32.totalorder %s27, 1
        %s422 = scalar_select %p421, %s27, 1
        %p423 = scmp.lt.s32.totalorder %s420, 15
        %s424 = scalar_select %p423, %s420, 15
        %s425 = smul.addr %s422, 16
        %s426 = sadd.s32 %s424, %s425
        %s427 = smul.addr %s426, 8
        %s428 = scalar_lea.vmem %s7, %s427
        %s429 = smul.u32 16, %s28
        %s430 = smul.u32 8, %s28
        %v432 = vld [vmem:[%s398] sm:$0xf]
        %v433 = vld [vmem:[%s398 + $0x4] sm:$0xf]
        %v434 = vld [vmem:[%s398 + $0x8] sm:$0xf]
        %v435 = vld [vmem:[%s398 + $0xc] sm:$0xf]
        %v436 = vld [vmem:[%s398 + $0x10] sm:$0xf]
        %v437 = vld [vmem:[%s398 + $0x14] sm:$0xf]
        %v438 = vld [vmem:[%s398 + $0x18] sm:$0xf]
        %v439 = vld [vmem:[%s398 + $0x1c] sm:$0xf]
        %v440 = vld [vmem:[%s398 + $0x20] sm:$0xf]
        %v441 = vld [vmem:[%s398 + $0x24] sm:$0xf]
        %v442 = vld [vmem:[%s398 + $0x28] sm:$0xf]
        %v443 = vld [vmem:[%s398 + $0x2c] sm:$0xf]
        %v444 = vld [vmem:[%s398 + $0x30] sm:$0xf]
        %v445 = vld [vmem:[%s398 + $0x34] sm:$0xf]
        %v446 = vld [vmem:[%s398 + $0x38] sm:$0xf]
        %v447 = vld [vmem:[%s398 + $0x3c] sm:$0xf]
        %v448 = vld [vmem:[%s408] sm:$0xf]
        %v449 = vld [vmem:[%s408 + $0x4] sm:$0xf]
        %v450 = vld [vmem:[%s408 + $0x8] sm:$0xf]
        %v451 = vld [vmem:[%s408 + $0xc] sm:$0xf]
        %v452 = vld [vmem:[%s408 + $0x10] sm:$0xf]
        %v453 = vld [vmem:[%s408 + $0x14] sm:$0xf]
        %v454 = vld [vmem:[%s408 + $0x18] sm:$0xf]
        %v455 = vld [vmem:[%s408 + $0x1c] sm:$0xf]
        %v456 = vld [vmem:[%s408 + $0x20] sm:$0xf]
        %v457 = vld [vmem:[%s408 + $0x24] sm:$0xf]
        %v458 = vld [vmem:[%s408 + $0x28] sm:$0xf]
        %v459 = vld [vmem:[%s408 + $0x2c] sm:$0xf]
        %v460 = vld [vmem:[%s408 + $0x30] sm:$0xf]
        %v461 = vld [vmem:[%s408 + $0x34] sm:$0xf]
        %v462 = vld [vmem:[%s408 + $0x38] sm:$0xf]
        %v463 = vld [vmem:[%s408 + $0x3c] sm:$0xf]
        %v464 = vld [vmem:[%s3] sm:$0xf]
        %v465 = vld [vmem:[%s4] sm:$0xf]
        %v482 = vunpack.c.l.b16 %v448
        %v483 = vunpack.c.l.b16 %v449
        %v484 = vunpack.c.l.b16 %v450
        %v485 = vunpack.c.l.b16 %v451
        %v486 = vunpack.c.l.b16 %v452
        %v487 = vunpack.c.l.b16 %v453
        %v488 = vunpack.c.l.b16 %v454
        %v489 = vunpack.c.l.b16 %v455
        %v490 = vunpack.c.l.b16 %v456
        %v491 = vunpack.c.l.b16 %v457
        %v492 = vunpack.c.l.b16 %v458
        %v493 = vunpack.c.l.b16 %v459
        %v494 = vunpack.c.l.b16 %v460
        %v495 = vunpack.c.l.b16 %v461
        %v496 = vunpack.c.l.b16 %v462
        %v497 = vunpack.c.l.b16 %v463
        %v498 = vpack.c.b16 %v483, %v482
        %v499 = vpack.c.b16 %v485, %v484
        %v500 = vpack.c.b16 %v487, %v486
        %v501 = vpack.c.b16 %v489, %v488
        %v502 = vpack.c.b16 %v491, %v490
        %v503 = vpack.c.b16 %v493, %v492
        %v504 = vpack.c.b16 %v495, %v494
        %v505 = vpack.c.b16 %v497, %v496
        %vm506 = vcmask 64512
        %v508 = vsel %vm506, %v498, 0
        %v511 = vsel %vm506, %v499, 0
        %v514 = vsel %vm506, %v500, 0
        %v517 = vsel %vm506, %v501, 0
        %v520 = vsel %vm506, %v502, 0
        %v523 = vsel %vm506, %v503, 0
        %v526 = vsel %vm506, %v504, 0
        %v529 = vsel %vm506, %v505, 0
        %vm531 = vcmask 1043456
        %v533 = vsel %vm531, %v465, 0
        %535 = vmatpush.bf16.msra.mxu0 0
        %536 = vmatpush.bf16.msra.mxu0 0
        %537 = vmatpush.bf16.msra.mxu0 0
        %538 = vmatpush.bf16.msra.mxu0 0
        %539 = vmatpush.bf16.msra.mxu0 0
        %540 = vmatpush.bf16.msra.mxu0 0
        %541 = vmatpush.bf16.msra.mxu0 0
        %542 = vmatpush.bf16.msra.mxu0 %v533
        %543 = vmatmul.bf16.gmra.mxu0 %v508
        %v544 = vpop.f32.mrf.mxu0
        %v545 = vadd.f32 0.0, %v544
        %v546 = vpop.f32.mrf.mxu0
        %v547 = vadd.f32 0.0, %v546
        %548 = vmatmul.bf16.gmra.mxu0 %v511
        %v549 = vpop.f32.mrf.mxu0
        %v550 = vadd.f32 0.0, %v549
        %v551 = vpop.f32.mrf.mxu0
        %v552 = vadd.f32 0.0, %v551
        %553 = vmatmul.bf16.gmra.mxu0 %v514
        %v554 = vpop.f32.mrf.mxu0
        %v555 = vadd.f32 0.0, %v554
        %v556 = vpop.f32.mrf.mxu0
        %v557 = vadd.f32 0.0, %v556
        %558 = vmatmul.bf16.gmra.mxu0 %v517
        %v559 = vpop.f32.mrf.mxu0
        %v560 = vadd.f32 0.0, %v559
        %v561 = vpop.f32.mrf.mxu0
        %v562 = vadd.f32 0.0, %v561
        %563 = vmatmul.bf16.gmra.mxu0 %v520
        %v564 = vpop.f32.mrf.mxu0
        %v565 = vadd.f32 0.0, %v564
        %v566 = vpop.f32.mrf.mxu0
        %v567 = vadd.f32 0.0, %v566
        %568 = vmatmul.bf16.gmra.mxu0 %v523
        %v569 = vpop.f32.mrf.mxu0
        %v570 = vadd.f32 0.0, %v569
        %v571 = vpop.f32.mrf.mxu0
        %v572 = vadd.f32 0.0, %v571
        %573 = vmatmul.bf16.gmra.mxu0 %v526
        %v574 = vpop.f32.mrf.mxu0
        %v575 = vadd.f32 0.0, %v574
        %v576 = vpop.f32.mrf.mxu0
        %v577 = vadd.f32 0.0, %v576
        %578 = vmatmul.bf16.gmra.mxu0 %v529
        %v579 = vpop.f32.mrf.mxu0
        %v580 = vadd.f32 0.0, %v579
        %v581 = vpop.f32.mrf.mxu0
        %v582 = vadd.f32 0.0, %v581
        %583 = vdwg.mxu0
        %v600 = vunpack.c.l.b16 %v432
        %v601 = vunpack.c.l.b16 %v433
        %v602 = vunpack.c.l.b16 %v434
        %v603 = vunpack.c.l.b16 %v435
        %v604 = vunpack.c.l.b16 %v436
        %v605 = vunpack.c.l.b16 %v437
        %v606 = vunpack.c.l.b16 %v438
        %v607 = vunpack.c.l.b16 %v439
        %v608 = vunpack.c.l.b16 %v440
        %v609 = vunpack.c.l.b16 %v441
        %v610 = vunpack.c.l.b16 %v442
        %v611 = vunpack.c.l.b16 %v443
        %v612 = vunpack.c.l.b16 %v444
        %v613 = vunpack.c.l.b16 %v445
        %v614 = vunpack.c.l.b16 %v446
        %v615 = vunpack.c.l.b16 %v447
        %v616 = vpack.c.b16 %v601, %v600
        %v617 = vpack.c.b16 %v603, %v602
        %v618 = vpack.c.b16 %v605, %v604
        %v619 = vpack.c.b16 %v607, %v606
        %v620 = vpack.c.b16 %v609, %v608
        %v621 = vpack.c.b16 %v611, %v610
        %v622 = vpack.c.b16 %v613, %v612
        %v623 = vpack.c.b16 %v615, %v614
        %v625 = vsel %vm506, %v616, 0
        %v628 = vsel %vm506, %v617, 0
        %v631 = vsel %vm506, %v618, 0
        %v634 = vsel %vm506, %v619, 0
        %v637 = vsel %vm506, %v620, 0
        %v640 = vsel %vm506, %v621, 0
        %v643 = vsel %vm506, %v622, 0
        %v646 = vsel %vm506, %v623, 0
        %v649 = vsel %vm531, %v464, 0
        %651 = vmatpush.bf16.msra.mxu0 0
        %652 = vmatpush.bf16.msra.mxu0 0
        %653 = vmatpush.bf16.msra.mxu0 0
        %654 = vmatpush.bf16.msra.mxu0 0
        %655 = vmatpush.bf16.msra.mxu0 0
        %656 = vmatpush.bf16.msra.mxu0 0
        %657 = vmatpush.bf16.msra.mxu0 0
        %658 = vmatpush.bf16.msra.mxu0 %v649
        %659 = vmatmul.bf16.gmra.mxu0 %v625
        %v660 = vpop.f32.mrf.mxu0
        %v661 = vadd.f32 %v545, %v660
        %v662 = vpop.f32.mrf.mxu0
        %v663 = vadd.f32 %v547, %v662
        %664 = vmatmul.bf16.gmra.mxu0 %v628
        %v665 = vpop.f32.mrf.mxu0
        %v666 = vadd.f32 %v550, %v665
        %v667 = vpop.f32.mrf.mxu0
        %v668 = vadd.f32 %v552, %v667
        %669 = vmatmul.bf16.gmra.mxu0 %v631
        %v670 = vpop.f32.mrf.mxu0
        %v671 = vadd.f32 %v555, %v670
        %v672 = vpop.f32.mrf.mxu0
        %v673 = vadd.f32 %v557, %v672
        %674 = vmatmul.bf16.gmra.mxu0 %v634
        %v675 = vpop.f32.mrf.mxu0
        %v676 = vadd.f32 %v560, %v675
        %v677 = vpop.f32.mrf.mxu0
        %v678 = vadd.f32 %v562, %v677
        %679 = vmatmul.bf16.gmra.mxu0 %v637
        %v680 = vpop.f32.mrf.mxu0
        %v681 = vadd.f32 %v565, %v680
        %v682 = vpop.f32.mrf.mxu0
        %v683 = vadd.f32 %v567, %v682
        %684 = vmatmul.bf16.gmra.mxu0 %v640
        %v685 = vpop.f32.mrf.mxu0
        %v686 = vadd.f32 %v570, %v685
        %v687 = vpop.f32.mrf.mxu0
        %v688 = vadd.f32 %v572, %v687
        %689 = vmatmul.bf16.gmra.mxu0 %v643
        %v690 = vpop.f32.mrf.mxu0
        %v691 = vadd.f32 %v575, %v690
        %v692 = vpop.f32.mrf.mxu0
        %v693 = vadd.f32 %v577, %v692
        %694 = vmatmul.bf16.gmra.mxu0 %v646
        %v695 = vpop.f32.mrf.mxu0
        %v696 = vadd.f32 %v580, %v695
        %v697 = vpop.f32.mrf.mxu0
        %v698 = vadd.f32 %v582, %v697
        %699 = vdwg.mxu0
        %v700 = vld [vmem:[%s5] sm:$0x1]
        %v702 = vperm.slane %v700, 0
        %v704 = vmul.f32 %v661, %v702
        %v705 = vmul.f32 %v663, %v702
        %v706 = vmul.f32 %v666, %v702
        %v707 = vmul.f32 %v668, %v702
        %v708 = vmul.f32 %v671, %v702
        %v709 = vmul.f32 %v673, %v702
        %v710 = vmul.f32 %v676, %v702
        %v711 = vmul.f32 %v678, %v702
        %v712 = vmul.f32 %v681, %v702
        %v713 = vmul.f32 %v683, %v702
        %v714 = vmul.f32 %v686, %v702
        %v715 = vmul.f32 %v688, %v702
        %v716 = vmul.f32 %v691, %v702
        %v717 = vmul.f32 %v693, %v702
        %v718 = vmul.f32 %v696, %v702
        %v719 = vmul.f32 %v698, %v702
        %v720 = vld [vmem:[%s6] sm:$0x1]
        %v722 = vperm.slane %v720, 0
        %v724 = vadd.f32 %v704, %v722
        %v725 = vadd.f32 %v705, %v722
        %v726 = vadd.f32 %v706, %v722
        %v727 = vadd.f32 %v707, %v722
        %v728 = vadd.f32 %v708, %v722
        %v729 = vadd.f32 %v709, %v722
        %v730 = vadd.f32 %v710, %v722
        %v731 = vadd.f32 %v711, %v722
        %v732 = vadd.f32 %v712, %v722
        %v733 = vadd.f32 %v713, %v722
        %v734 = vadd.f32 %v714, %v722
        %v735 = vadd.f32 %v715, %v722
        %v736 = vadd.f32 %v716, %v722
        %v737 = vadd.f32 %v717, %v722
        %v738 = vadd.f32 %v718, %v722
        %v739 = vadd.f32 %v719, %v722
        %vm740 = vcmp.gt.f32.partialorder %v724, 0.0
        %vm741 = vcmp.gt.f32.partialorder %v725, 0.0
        %vm742 = vcmp.gt.f32.partialorder %v726, 0.0
        %vm743 = vcmp.gt.f32.partialorder %v727, 0.0
        %vm744 = vcmp.gt.f32.partialorder %v728, 0.0
        %vm745 = vcmp.gt.f32.partialorder %v729, 0.0
        %vm746 = vcmp.gt.f32.partialorder %v730, 0.0
        %vm747 = vcmp.gt.f32.partialorder %v731, 0.0
        %vm748 = vcmp.gt.f32.partialorder %v732, 0.0
        %vm749 = vcmp.gt.f32.partialorder %v733, 0.0
        %vm750 = vcmp.gt.f32.partialorder %v734, 0.0
        %vm751 = vcmp.gt.f32.partialorder %v735, 0.0
        %vm752 = vcmp.gt.f32.partialorder %v736, 0.0
        %vm753 = vcmp.gt.f32.partialorder %v737, 0.0
        %vm754 = vcmp.gt.f32.partialorder %v738, 0.0
        %vm755 = vcmp.gt.f32.partialorder %v739, 0.0
        %v756 = vmul.f32 %v724, 0.1
        %v757 = vmul.f32 %v725, 0.1
        %v758 = vmul.f32 %v726, 0.1
        %v759 = vmul.f32 %v727, 0.1
        %v760 = vmul.f32 %v728, 0.1
        %v761 = vmul.f32 %v729, 0.1
        %v762 = vmul.f32 %v730, 0.1
        %v763 = vmul.f32 %v731, 0.1
        %v764 = vmul.f32 %v732, 0.1
        %v765 = vmul.f32 %v733, 0.1
        %v766 = vmul.f32 %v734, 0.1
        %v767 = vmul.f32 %v735, 0.1
        %v768 = vmul.f32 %v736, 0.1
        %v769 = vmul.f32 %v737, 0.1
        %v770 = vmul.f32 %v738, 0.1
        %v771 = vmul.f32 %v739, 0.1
        %v772 = vsel %vm740, %v724, %v756
        %v773 = vsel %vm741, %v725, %v757
        %v774 = vsel %vm742, %v726, %v758
        %v775 = vsel %vm743, %v727, %v759
        %v776 = vsel %vm744, %v728, %v760
        %v777 = vsel %vm745, %v729, %v761
        %v778 = vsel %vm746, %v730, %v762
        %v779 = vsel %vm747, %v731, %v763
        %v780 = vsel %vm748, %v732, %v764
        %v781 = vsel %vm749, %v733, %v765
        %v782 = vsel %vm750, %v734, %v766
        %v783 = vsel %vm751, %v735, %v767
        %v784 = vsel %vm752, %v736, %v768
        %v785 = vsel %vm753, %v737, %v769
        %v786 = vsel %vm754, %v738, %v770
        %v787 = vsel %vm755, %v739, %v771
        %vm788 = vcmask 130048
        %789 = vst.msk [vmem:[%s428] sm:$0xff] %vm788, %v772
        %790 = vst.msk [vmem:[%s428 + $0x8] sm:$0xff] %vm788, %v773
        %791 = vst.msk [vmem:[%s428 + $0x10] sm:$0xff] %vm788, %v774
        %792 = vst.msk [vmem:[%s428 + $0x18] sm:$0xff] %vm788, %v775
        %793 = vst.msk [vmem:[%s428 + $0x20] sm:$0xff] %vm788, %v776
        %794 = vst.msk [vmem:[%s428 + $0x28] sm:$0xff] %vm788, %v777
        %795 = vst.msk [vmem:[%s428 + $0x30] sm:$0xff] %vm788, %v778
        %796 = vst.msk [vmem:[%s428 + $0x38] sm:$0xff] %vm788, %v779
        %797 = vst.msk [vmem:[%s428 + $0x40] sm:$0xff] %vm788, %v780
        %798 = vst.msk [vmem:[%s428 + $0x48] sm:$0xff] %vm788, %v781
        %799 = vst.msk [vmem:[%s428 + $0x50] sm:$0xff] %vm788, %v782
        %800 = vst.msk [vmem:[%s428 + $0x58] sm:$0xff] %vm788, %v783
        %801 = vst.msk [vmem:[%s428 + $0x60] sm:$0xff] %vm788, %v784
        %802 = vst.msk [vmem:[%s428 + $0x68] sm:$0xff] %vm788, %v785
        %803 = vst.msk [vmem:[%s428 + $0x70] sm:$0xff] %vm788, %v786
        %804 = vst.msk [vmem:[%s428 + $0x78] sm:$0xff] %vm788, %v787
        %v805 = vmax.f32 %v772, %v773
        %v806 = vmax.f32 %v774, %v775
        %v807 = vmax.f32 %v776, %v777
        %v808 = vmax.f32 %v778, %v779
        %v809 = vmax.f32 %v780, %v781
        %v810 = vmax.f32 %v782, %v783
        %v811 = vmax.f32 %v784, %v785
        %v812 = vmax.f32 %v786, %v787
        %821 = vrot.lane.b32.xlu0 %v805, 120
        %v822 = vpop.permute.xlu0 %821
        %823 = vrot.lane.b32.xlu0 %v806, 120
        %v824 = vpop.permute.xlu0 %823
        %825 = vrot.lane.b32.xlu0 %v807, 120
        %v826 = vpop.permute.xlu0 %825
        %827 = vrot.lane.b32.xlu0 %v808, 120
        %v828 = vpop.permute.xlu0 %827
        %829 = vrot.lane.b32.xlu0 %v809, 120
        %v830 = vpop.permute.xlu0 %829
        %831 = vrot.lane.b32.xlu0 %v810, 120
        %v832 = vpop.permute.xlu0 %831
        %833 = vrot.lane.b32.xlu0 %v811, 120
        %v834 = vpop.permute.xlu0 %833
        %835 = vrot.lane.b32.xlu0 %v812, 120
        %v836 = vpop.permute.xlu0 %835
        %v845 = vmax.f32 %v805, %v822
        %v846 = vmax.f32 %v806, %v824
        %v847 = vmax.f32 %v807, %v826
        %v848 = vmax.f32 %v808, %v828
        %v849 = vmax.f32 %v809, %v830
        %v850 = vmax.f32 %v810, %v832
        %v851 = vmax.f32 %v811, %v834
        %v852 = vmax.f32 %v812, %v836
        %v853 = vld [vmem:[%s418] sm:$0xf]
        %v854 = vld [vmem:[%s418 + $0x4] sm:$0xf]
        %v855 = vld [vmem:[%s418 + $0x8] sm:$0xf]
        %v856 = vld [vmem:[%s418 + $0xc] sm:$0xf]
        %v857 = vld [vmem:[%s418 + $0x10] sm:$0xf]
        %v858 = vld [vmem:[%s418 + $0x14] sm:$0xf]
        %v859 = vld [vmem:[%s418 + $0x18] sm:$0xf]
        %v860 = vld [vmem:[%s418 + $0x1c] sm:$0xf]
        %v861 = vld [vmem:[%s418 + $0x20] sm:$0xf]
        %v862 = vld [vmem:[%s418 + $0x24] sm:$0xf]
        %v863 = vld [vmem:[%s418 + $0x28] sm:$0xf]
        %v864 = vld [vmem:[%s418 + $0x2c] sm:$0xf]
        %v865 = vld [vmem:[%s418 + $0x30] sm:$0xf]
        %v866 = vld [vmem:[%s418 + $0x34] sm:$0xf]
        %v867 = vld [vmem:[%s418 + $0x38] sm:$0xf]
        %v868 = vld [vmem:[%s418 + $0x3c] sm:$0xf]
        %v869 = vunpack.c.l.bf16 %v853
        %v870 = vunpack.c.l.bf16 %v854
        %v871 = vunpack.c.l.bf16 %v855
        %v872 = vunpack.c.l.bf16 %v856
        %v873 = vunpack.c.l.bf16 %v857
        %v874 = vunpack.c.l.bf16 %v858
        %v875 = vunpack.c.l.bf16 %v859
        %v876 = vunpack.c.l.bf16 %v860
        %v877 = vunpack.c.l.bf16 %v861
        %v878 = vunpack.c.l.bf16 %v862
        %v879 = vunpack.c.l.bf16 %v863
        %v880 = vunpack.c.l.bf16 %v864
        %v881 = vunpack.c.l.bf16 %v865
        %v882 = vunpack.c.l.bf16 %v866
        %v883 = vunpack.c.l.bf16 %v867
        %v884 = vunpack.c.l.bf16 %v868
        %v885 = vmax.f32 %v869, %v870
        %v886 = vmax.f32 %v871, %v872
        %v887 = vmax.f32 %v873, %v874
        %v888 = vmax.f32 %v875, %v876
        %v889 = vmax.f32 %v877, %v878
        %v890 = vmax.f32 %v879, %v880
        %v891 = vmax.f32 %v881, %v882
        %v892 = vmax.f32 %v883, %v884
        %901 = vrot.lane.b32.xlu0 %v885, 120
        %v902 = vpop.permute.xlu0 %901
        %903 = vrot.lane.b32.xlu0 %v886, 120
        %v904 = vpop.permute.xlu0 %903
        %905 = vrot.lane.b32.xlu0 %v887, 120
        %v906 = vpop.permute.xlu0 %905
        %907 = vrot.lane.b32.xlu0 %v888, 120
        %v908 = vpop.permute.xlu0 %907
        %909 = vrot.lane.b32.xlu0 %v889, 120
        %v910 = vpop.permute.xlu0 %909
        %911 = vrot.lane.b32.xlu0 %v890, 120
        %v912 = vpop.permute.xlu0 %911
        %913 = vrot.lane.b32.xlu0 %v891, 120
        %v914 = vpop.permute.xlu0 %913
        %915 = vrot.lane.b32.xlu0 %v892, 120
        %v916 = vpop.permute.xlu0 %915
        %v925 = vmax.f32 %v885, %v902
        %v926 = vmax.f32 %v886, %v904
        %v927 = vmax.f32 %v887, %v906
        %v928 = vmax.f32 %v888, %v908
        %v929 = vmax.f32 %v889, %v910
        %v930 = vmax.f32 %v890, %v912
        %v931 = vmax.f32 %v891, %v914
        %v932 = vmax.f32 %v892, %v916
        %941 = vrot.lane.b32.xlu0 %v845, 8
        %v942 = vpop.permute.xlu0 %941
        %943 = vrot.lane.b32.xlu0 %v846, 8
        %v944 = vpop.permute.xlu0 %943
        %945 = vrot.lane.b32.xlu0 %v847, 8
        %v946 = vpop.permute.xlu0 %945
        %947 = vrot.lane.b32.xlu0 %v848, 8
        %v948 = vpop.permute.xlu0 %947
        %949 = vrot.lane.b32.xlu0 %v849, 8
        %v950 = vpop.permute.xlu0 %949
        %951 = vrot.lane.b32.xlu0 %v850, 8
        %v952 = vpop.permute.xlu0 %951
        %953 = vrot.lane.b32.xlu0 %v851, 8
        %v954 = vpop.permute.xlu0 %953
        %955 = vrot.lane.b32.xlu0 %v852, 8
        %v956 = vpop.permute.xlu0 %955
        %v965 = vsel %vm506, %v925, %v942
        %v966 = vsel %vm506, %v926, %v944
        %v967 = vsel %vm506, %v927, %v946
        %v968 = vsel %vm506, %v928, %v948
        %v969 = vsel %vm506, %v929, %v950
        %v970 = vsel %vm506, %v930, %v952
        %v971 = vsel %vm506, %v931, %v954
        %v972 = vsel %vm506, %v932, %v956
        %973 = vst.msk [vmem:[%s389] sm:$0xff] %vm788, %v965
        %974 = vst.msk [vmem:[%s389 + $0x8] sm:$0xff] %vm788, %v966
        %975 = vst.msk [vmem:[%s389 + $0x10] sm:$0xff] %vm788, %v967
        %976 = vst.msk [vmem:[%s389 + $0x18] sm:$0xff] %vm788, %v968
        %977 = vst.msk [vmem:[%s389 + $0x20] sm:$0xff] %vm788, %v969
        %978 = vst.msk [vmem:[%s389 + $0x28] sm:$0xff] %vm788, %v970
        %979 = vst.msk [vmem:[%s389 + $0x30] sm:$0xff] %vm788, %v971
        %980 = vst.msk [vmem:[%s389 + $0x38] sm:$0xff] %vm788, %v972
        %s981 = smul.u32 16, %s28
        %p982 = scmp.lt.s32.totalorder %s27, 1
        %s983 = scalar_select %p982, %s27, 1
        %p984 = scmp.lt.s32.totalorder %s981, 15
        %s985 = scalar_select %p984, %s981, 15
        %s986 = smul.addr %s983, 16
        %s987 = sadd.s32 %s985, %s986
        %s988 = smul.addr %s987, 8
        %s989 = scalar_lea.vmem %s7, %s988
        %s990 = sand.u32 %s241, 1
        %s991 = scalar_lea.sflag [#allocation3], %s990
        %s992 = sand.u32 %s241, 1
        %s993 = smul.addr %s992, 64
        %s994 = scalar_lea.vmem [#allocation2], %s993
        // Predicated region
        $region49: #{resblock_body_forward.7} parent=47 // pred_check
          %p995 = pneg %p223
        $region50: #{resblock_body_forward.7} parent=47 // pred_check_branch
          %997 = sbr.rel (%p995) target = $region52
        $region51: #{resblock_body_forward.7} parent=47 // pred_region
          %s998 = smul.u32 16, %s28
        $region52: #{resblock_body_forward.7} parent=47 // pred_fallthru
          _
        // Predicated region
        $region53: #{resblock_body_forward.7} parent=47 // pred_check
          %p999 = pneg %p251
        $region54: #{resblock_body_forward.7} parent=47 // pred_check_branch
          %1001 = sbr.rel (%p999) target = $region56
        $region55: #{resblock_body_forward.7} parent=47 // pred_region
          %s1002 = smul.u32 8, %s28
          %1004 = vsyncadd %s991, 0
          %s1005 = smul.addr %s27, 8
          %s1006 = sadd.s32 %s1002, %s1005
          %s1007 = smul.addr %s1006, 8
          %s1008 = scalar_lea.hbm %s8, %s1007
          %s1009 = sshll.u32 %s994, 4
          %s1010 = int_to_ptr.vmem [resolvable:$true] %s1009
          %s1011 = sshll.u32 %s1008, 4
          %s1012 = int_to_ptr.hbm [resolvable:$true] %s1011
          %1017 = dma.vmem_to_hbm [thread:$0]  %s1010, 1024, %s1012, %s991, 128, 128, 8
        $region56: #{resblock_body_forward.7} parent=47 // pred_fallthru
          _
      $region48: #{resblock_body_forward.7} parent=5 // pred_fallthru
        _
      %p1018 = scmp.le.s32.totalorder 2, %s18
      // Predicated region
      $region57: #{resblock_body_forward.7} parent=5 // pred_check
        %p1019 = pneg %p1018
      $region58: #{resblock_body_forward.7} parent=5 // pred_check_branch
        %1021 = sbr.rel (%p1019) target = $region60
      $region59: #{resblock_body_forward.7} parent=5 // pred_region
        %s1022 = ssub.s32 %s18, 2
        // Predicated region
        $region61: #{resblock_body_forward.7} parent=59 // pred_check
          %p1023 = pneg %p229
        $region62: #{resblock_body_forward.7} parent=59 // pred_check_branch
          %1025 = sbr.rel (%p1023) target = $region64
        $region63: #{resblock_body_forward.7} parent=59 // pred_region
          %s1026 = smul.u32 16, %s30
          %p1027 = scmp.lt.s32.totalorder %s29, 1
          %s1028 = scalar_select %p1027, %s29, 1
          %p1029 = scmp.lt.s32.totalorder %s1026, 15
          %s1030 = scalar_select %p1029, %s1026, 15
          %s1031 = smul.addr %s1028, 16
          %s1032 = sadd.s32 %s1030, %s1031
          %s1033 = smul.addr %s1032, 8
          %s1034 = scalar_lea.vmem %s7, %s1033
        $region64: #{resblock_body_forward.7} parent=59 // pred_fallthru
          _
        // Predicated region
        $region65: #{resblock_body_forward.7} parent=59 // pred_check
          %p1035 = pneg %p257
        $region66: #{resblock_body_forward.7} parent=59 // pred_check_branch
          %1037 = sbr.rel (%p1035) target = $region68
        $region67: #{resblock_body_forward.7} parent=59 // pred_region
          %s1038 = sand.u32 %s242, 1
          %s1039 = scalar_lea.sflag [#allocation3], %s1038
          %s1040 = sand.u32 %s242, 1
          %s1041 = smul.addr %s1040, 64
          %s1042 = scalar_lea.vmem [#allocation2], %s1041
          %1044 = dma.done %s1039, 1024
        $region68: #{resblock_body_forward.7} parent=59 // pred_fallthru
          _
      $region60: #{resblock_body_forward.7} parent=5 // pred_fallthru
        _
    $region6: #{resblock_body_forward.7} parent=1 // loop_footer
      %s22 = sadd.s32 1, %s18
    $region7: #{resblock_body_forward.7} parent=1 // loop_footer_branch
      %17 = sbr.rel target = $region3
    $region8: #{resblock_body_forward.7} parent=1 // loop_exit
      _
    %1045 = vsyncpa [#allocation3], 1
    %s1046 = scalar_lea.sflag [#allocation3], 1
    %1047 = vsyncpa %s1046, 1

// kernel: resblock_body_forward.4
$region0: #{resblock_body_forward.4}
  #allocation0 [shape = 'u32[]', space=smem, size = 0x4, offset = 0x4, fixed_abs, tag = 'smem constant byte address 0x4 - core index']
  #allocation1 [shape = 'u32[72,128]{1,0:T(1,128)}', space=vmem, size = 0x9000, scoped, tag = 'internal scratch']
  #allocation2 [shape = 'bf16[18,10,8]{2,1,0:T(8,128)(2,1)}', space=vmem, size = 0x12000, scoped, tag = 'scratch operand']
  #allocation3 [shape = 'bf16[128,72]{1,0:T(8,128)(2,1)}', space=vmem, size = 0x8000, scoped, tag = 'scratch operand']
  %s0 = inlined_call_operand.vmem [shape: bf16[2,16,8,8], index: 0, kind: input, shape index: {}]
  %s1 = inlined_call_operand.vmem [shape: bf16[72,16], index: 1, kind: input, shape index: {}]
  %s2 = inlined_call_operand.vmem [shape: f32[1,16], index: 2, kind: input, shape index: {}]
  %s3 = inlined_call_operand.vmem [shape: f32[1,16], index: 3, kind: input, shape index: {}]
  %s4 = inlined_call_operand.vmem [shape: bf16[2,16,8,16], index: 4, kind: output, shape index: {}]
  %s5 = sld [smem:[#allocation0]]
  $region65: #{resblock_body_forward.4} parent=0
    _
  %s7 = ssub.s32 1, %s5
  %s8 = scalar_select 0, %s7, %s5
  loop: start=0, step=1, limit=4
  $region2: #{resblock_body_forward.4} parent=0 // loop_pre_header
    _
  $region3: #{resblock_body_forward.4} parent=0 // loop_header
    %s10 = sphi 0, %s14
    %p11 = scmp.ge.s32.totalorder %s10, 4
    %s17 = sphi 0, %s29
    %s18 = sphi 0, %s25
    %s19 = sphi 0, %s17
    %s20 = sphi 0, %s18
    %s21 = sphi 0, %s19
    %s22 = sphi 0, %s20
    %s32 = sphi 0, %s34
    %s35 = sphi 0, %s32
    %s36 = sphi 0, %s35
    %s52 = sphi 0, %s36
    %s56 = sphi 0, %s56
    %s58 = sphi 0, %s56
    %s59 = sphi 0, %s58
    %s73 = sphi 0, %s59
    %s77 = sphi 0, %s77
    %s79 = sphi 0, %s77
    %s80 = sphi 0, %s79
    %s94 = sphi 0, %s80
    %s98 = sphi 0, %s98
    %s100 = sphi 0, %s98
    %s101 = sphi 0, %s100
    %s115 = sphi 0, %s101
    %s123 = sphi 0, %s125
    %s126 = sphi 0, %s123
    %s127 = sphi 0, %s126
    %s143 = sphi 0, %s127
  $region4: #{resblock_body_forward.4} parent=0 // loop_header_branch
    %13 = sbr.rel (%p11) target = $region8
  $region5: #{resblock_body_forward.4} parent=0 // loop_body
    %s15 = ssub.s32 %s10, 1
    %s16 = ssub.s32 %s10, 2
    %s23 = sadd.s32 1, %s18
    %p24 = scmp.ge.s32.totalorder %s23, 1
    %s25 = scalar_select %p24, 0, %s23
    %s26 = sadd.s32 1, %s17
    %s27 = scalar_select %p24, %s26, %s17
    %p28 = scmp.ge.s32.totalorder %s27, 2
    %s29 = scalar_select %p28, 0, %s27
    %s30 = ssub.s32 %s17, %s29
    %p31 = scmp.eq.s32.totalorder %s30, 0
    %s33 = sadd.s32 %s32, 1
    %s34 = scalar_select %p31, %s32, %s33
    %p37 = pneg %p31
    %p38 = scmp.eq.s32.totalorder %s10, 1
    %p39 = por %p37, %p38
    %p40 = scmp.ne.s32.totalorder %s32, %s35
    %p41 = scmp.eq.s32.totalorder %s10, 0
    %p42 = por %p40, %p41
    %p43 = scmp.ne.s32.totalorder %s32, %s35
    %p44 = scmp.eq.s32.totalorder %s15, 1
    %p45 = por %p43, %p44
    %p46 = scmp.ne.s32.totalorder %s35, %s36
    %p47 = scmp.eq.s32.totalorder %s15, 0
    %p48 = por %p46, %p47
    %p49 = scmp.ne.s32.totalorder %s35, %s36
    %p50 = scmp.eq.s32.totalorder %s16, 1
    %p51 = por %p49, %p50
    %p53 = scmp.ne.s32.totalorder %s36, %s52
    %p54 = scmp.eq.s32.totalorder %s16, 0
    %p55 = por %p53, %p54
    %s57 = sadd.s32 %s56, 1
    %p60 = scmp.eq.s32.totalorder %s10, 1
    %p61 = scmp.ne.s32.totalorder %s56, %s58
    %p62 = scmp.eq.s32.totalorder %s10, 0
    %p63 = por %p61, %p62
    %p64 = scmp.ne.s32.totalorder %s56, %s58
    %p65 = scmp.eq.s32.totalorder %s15, 1
    %p66 = por %p64, %p65
    %p67 = scmp.ne.s32.totalorder %s58, %s59
    %p68 = scmp.eq.s32.totalorder %s15, 0
    %p69 = por %p67, %p68
    %p70 = scmp.ne.s32.totalorder %s58, %s59
    %p71 = scmp.eq.s32.totalorder %s16, 1
    %p72 = por %p70, %p71
    %p74 = scmp.ne.s32.totalorder %s59, %s73
    %p75 = scmp.eq.s32.totalorder %s16, 0
    %p76 = por %p74, %p75
    %s78 = sadd.s32 %s77, 1
    %p81 = scmp.eq.s32.totalorder %s10, 1
    %p82 = scmp.ne.s32.totalorder %s77, %s79
    %p83 = scmp.eq.s32.totalorder %s10, 0
    %p84 = por %p82, %p83
    %p85 = scmp.ne.s32.totalorder %s77, %s79
    %p86 = scmp.eq.s32.totalorder %s15, 1
    %p87 = por %p85, %p86
    %p88 = scmp.ne.s32.totalorder %s79, %s80
    %p89 = scmp.eq.s32.totalorder %s15, 0
    %p90 = por %p88, %p89
    %p91 = scmp.ne.s32.totalorder %s79, %s80
    %p92 = scmp.eq.s32.totalorder %s16, 1
    %p93 = por %p91, %p92
    %p95 = scmp.ne.s32.totalorder %s80, %s94
    %p96 = scmp.eq.s32.totalorder %s16, 0
    %p97 = por %p95, %p96
    %s99 = sadd.s32 %s98, 1
    %p102 = scmp.eq.s32.totalorder %s10, 1
    %p103 = scmp.ne.s32.totalorder %s98, %s100
    %p104 = scmp.eq.s32.totalorder %s10, 0
    %p105 = por %p103, %p104
    %p106 = scmp.ne.s32.totalorder %s98, %s100
    %p107 = scmp.eq.s32.totalorder %s15, 1
    %p108 = por %p106, %p107
    %p109 = scmp.ne.s32.totalorder %s100, %s101
    %p110 = scmp.eq.s32.totalorder %s15, 0
    %p111 = por %p109, %p110
    %p112 = scmp.ne.s32.totalorder %s100, %s101
    %p113 = scmp.eq.s32.totalorder %s16, 1
    %p114 = por %p112, %p113
    %p116 = scmp.ne.s32.totalorder %s101, %s115
    %p117 = scmp.eq.s32.totalorder %s16, 0
    %p118 = por %p116, %p117
    %s119 = ssub.s32 %s17, %s29
    %s120 = ssub.s32 %s18, %s25
    %s121 = sor.u32 %s119, %s120
    %p122 = scmp.eq.s32.totalorder %s121, 0
    %s124 = sadd.s32 %s123, 1
    %s125 = scalar_select %p122, %s123, %s124
    %p128 = pneg %p122
    %p129 = scmp.eq.s32.totalorder %s10, 1
    %p130 = por %p128, %p129
    %p131 = scmp.ne.s32.totalorder %s123, %s126
    %p132 = scmp.eq.s32.totalorder %s10, 0
    %p133 = por %p131, %p132
    %p134 = scmp.ne.s32.totalorder %s123, %s126
    %p135 = scmp.eq.s32.totalorder %s15, 1
    %p136 = por %p134, %p135
    %p137 = scmp.ne.s32.totalorder %s126, %s127
    %p138 = scmp.eq.s32.totalorder %s15, 0
    %p139 = por %p137, %p138
    %p140 = scmp.ne.s32.totalorder %s126, %s127
    %p141 = scmp.eq.s32.totalorder %s16, 1
    %p142 = por %p140, %p141
    %p144 = scmp.ne.s32.totalorder %s127, %s143
    %p145 = scmp.eq.s32.totalorder %s16, 0
    %p146 = por %p144, %p145
    %p147 = scmp.le.s32.totalorder 1, %s10
    %p148 = scmp.lt.s32.totalorder %s10, 3
    %p149 = pnand %p147, %p148
    %p150 = pneg %p149
    // Predicated region
    $region9: #{resblock_body_forward.4} parent=5 // pred_check
      _
    $region10: #{resblock_body_forward.4} parent=5 // pred_check_branch
      %152 = sbr.rel (%p149) target = $region12
    $region11: #{resblock_body_forward.4} parent=5 // pred_region
      %s153 = ssub.s32 %s10, 1
      // Predicated region
      $region13: #{resblock_body_forward.4} parent=11 // pred_check
        %p154 = pneg %p69
      $region14: #{resblock_body_forward.4} parent=11 // pred_check_branch
        %156 = sbr.rel (%p154) target = $region16
      $region15: #{resblock_body_forward.4} parent=11 // pred_region
        _
      $region16: #{resblock_body_forward.4} parent=11 // pred_fallthru
        _
      // Predicated region
      $region17: #{resblock_body_forward.4} parent=11 // pred_check
        %p157 = pneg %p90
      $region18: #{resblock_body_forward.4} parent=11 // pred_check_branch
        %159 = sbr.rel (%p157) target = $region20
      $region19: #{resblock_body_forward.4} parent=11 // pred_region
        _
      $region20: #{resblock_body_forward.4} parent=11 // pred_fallthru
        _
      // Predicated region
      $region21: #{resblock_body_forward.4} parent=11 // pred_check
        %p160 = pneg %p111
      $region22: #{resblock_body_forward.4} parent=11 // pred_check_branch
        %162 = sbr.rel (%p160) target = $region24
      $region23: #{resblock_body_forward.4} parent=11 // pred_region
        _
      $region24: #{resblock_body_forward.4} parent=11 // pred_fallthru
        _
    $region12: #{resblock_body_forward.4} parent=5 // pred_fallthru
      _
    %p163 = scmp.lt.s32.totalorder %s10, 2
    // Predicated region
    $region25: #{resblock_body_forward.4} parent=5 // pred_check
      %p164 = pneg %p163
    $region26: #{resblock_body_forward.4} parent=5 // pred_check_branch
      %166 = sbr.rel (%p164) target = $region28
    $region27: #{resblock_body_forward.4} parent=5 // pred_region
      // Predicated region
      $region29: #{resblock_body_forward.4} parent=27 // pred_check
        %p167 = pneg %p42
      $region30: #{resblock_body_forward.4} parent=27 // pred_check_branch
        %169 = sbr.rel (%p167) target = $region32
      $region31: #{resblock_body_forward.4} parent=27 // pred_region
        %p170 = scmp.lt.s32.totalorder %s17, 1
        %s171 = scalar_select %p170, %s17, 1
        %s172 = smul.addr %s171, 16
        %s173 = smul.addr %s172, 4
        %s174 = scalar_lea.vmem %s0, %s173
      $region32: #{resblock_body_forward.4} parent=27 // pred_fallthru
        _
    $region28: #{resblock_body_forward.4} parent=5 // pred_fallthru
      _
    %p175 = scmp.le.s32.totalorder 1, %s10
    %p176 = scmp.lt.s32.totalorder %s10, 3
    %p177 = pnand %p175, %p176
    %p178 = pneg %p177
    // Predicated region
    $region33: #{resblock_body_forward.4} parent=5 // pred_check
      _
    $region34: #{resblock_body_forward.4} parent=5 // pred_check_branch
      %180 = sbr.rel (%p177) target = $region36
    $region35: #{resblock_body_forward.4} parent=5 // pred_region
      %s181 = ssub.s32 %s10, 1
      %p182 = scmp.lt.s32.totalorder %s19, 1
      %s183 = scalar_select %p182, %s19, 1
      %s184 = smul.addr %s183, 16
      %s185 = smul.addr %s184, 4
      %s186 = scalar_lea.vmem %s0, %s185
      %p187 = pneg %p48
      %p188 = pneg %p45
      %p189 = pneg %p69
      %p190 = pneg %p66
      %p191 = pneg %p90
      %p192 = pneg %p87
      %p193 = pneg %p111
      %p194 = pneg %p108
      %p195 = pneg %p139
      %p196 = pneg %p136
      %s197 = smul.u32 16, %s20
      %p198 = scmp.lt.s32.totalorder %s19, 1
      %s199 = scalar_select %p198, %s19, 1
      %p200 = scmp.lt.s32.totalorder %s197, 15
      %s201 = scalar_select %p200, %s197, 15
      %s202 = smul.addr %s199, 16
      %s203 = sadd.s32 %s201, %s202
      %s204 = smul.addr %s203, 4
      %s205 = scalar_lea.vmem %s4, %s204
      %p206 = scmp.lt.s32.totalorder %s19, 1
      %s207 = scalar_select %p206, %s19, 1
      %s208 = smul.addr %s207, 16
      %s209 = smul.addr %s208, 4
      %s210 = scalar_lea.vmem %s0, %s209
      %s211 = smul.u32 16, %s20
      %p212 = scmp.lt.s32.totalorder %s19, 1
      %s213 = scalar_select %p212, %s19, 1
      %p214 = scmp.lt.s32.totalorder %s211, 15
      %s215 = scalar_select %p214, %s211, 15
      %s216 = smul.addr %s213, 16
      %s217 = sadd.s32 %s215, %s216
      %s218 = smul.addr %s217, 4
      %s219 = scalar_lea.vmem %s4, %s218
      %s220 = smul.u32 16, %s20
      %s222 = smul.u32 %s20, 16
      %vm223 = vcmask 57344
      %vm224 = vsmask.f32 256
      %vm225 = vmand %vm223, %vm224
      %v226 = vld [vmem:[#allocation2] sm:$0x1]
      %v227 = vsel %vm225, 0, %v226
      %228 = vst [vmem:[#allocation2] sm:$0x1] %v227
      %v229 = vld [vmem:[#allocation2 + $0x8] sm:$0x1]
      %v230 = vsel %vm225, 0, %v229
      %231 = vst [vmem:[#allocation2 + $0x8] sm:$0x1] %v230
      %v232 = vld [vmem:[#allocation2 + $0x10] sm:$0x1]
      %v233 = vsel %vm225, 0, %v232
      %234 = vst [vmem:[#allocation2 + $0x10] sm:$0x1] %v233
      %v235 = vld [vmem:[#allocation2 + $0x18] sm:$0x1]
      %v236 = vsel %vm225, 0, %v235
      %237 = vst [vmem:[#allocation2 + $0x18] sm:$0x1] %v236
      %v238 = vld [vmem:[#allocation2 + $0x20] sm:$0x1]
      %v239 = vsel %vm225, 0, %v238
      %240 = vst [vmem:[#allocation2 + $0x20] sm:$0x1] %v239
      %v241 = vld [vmem:[#allocation2 + $0x28] sm:$0x1]
      %v242 = vsel %vm225, 0, %v241
      %243 = vst [vmem:[#allocation2 + $0x28] sm:$0x1] %v242
      %v244 = vld [vmem:[#allocation2 + $0x30] sm:$0x1]
      %v245 = vsel %vm225, 0, %v244
      %246 = vst [vmem:[#allocation2 + $0x30] sm:$0x1] %v245
      %v247 = vld [vmem:[#allocation2 + $0x38] sm:$0x1]
      %v248 = vsel %vm225, 0, %v247
      %249 = vst [vmem:[#allocation2 + $0x38] sm:$0x1] %v248
      %v250 = vld [vmem:[#allocation2 + $0x40] sm:$0x1]
      %v251 = vsel %vm225, 0, %v250
      %252 = vst [vmem:[#allocation2 + $0x40] sm:$0x1] %v251
      %v253 = vld [vmem:[#allocation2 + $0x48] sm:$0x1]
      %v254 = vsel %vm225, 0, %v253
      %255 = vst [vmem:[#allocation2 + $0x48] sm:$0x1] %v254
      %v256 = vld [vmem:[#allocation2 + $0x50] sm:$0x1]
      %v257 = vsel %vm225, 0, %v256
      %258 = vst [vmem:[#allocation2 + $0x50] sm:$0x1] %v257
      %v259 = vld [vmem:[#allocation2 + $0x58] sm:$0x1]
      %v260 = vsel %vm225, 0, %v259
      %261 = vst [vmem:[#allocation2 + $0x58] sm:$0x1] %v260
      %v262 = vld [vmem:[#allocation2 + $0x60] sm:$0x1]
      %v263 = vsel %vm225, 0, %v262
      %264 = vst [vmem:[#allocation2 + $0x60] sm:$0x1] %v263
      %v265 = vld [vmem:[#allocation2 + $0x68] sm:$0x1]
      %v266 = vsel %vm225, 0, %v265
      %267 = vst [vmem:[#allocation2 + $0x68] sm:$0x1] %v266
      %v268 = vld [vmem:[#allocation2 + $0x70] sm:$0x1]
      %v269 = vsel %vm225, 0, %v268
      %270 = vst [vmem:[#allocation2 + $0x70] sm:$0x1] %v269
      %v271 = vld [vmem:[#allocation2 + $0x78] sm:$0x1]
      %v272 = vsel %vm225, 0, %v271
      %273 = vst [vmem:[#allocation2 + $0x78] sm:$0x1] %v272
      %v274 = vld [vmem:[#allocation2 + $0x80] sm:$0x1]
      %v275 = vsel %vm225, 0, %v274
      %276 = vst [vmem:[#allocation2 + $0x80] sm:$0x1] %v275
      %v277 = vld [vmem:[#allocation2 + $0x88] sm:$0x1]
      %v278 = vsel %vm225, 0, %v277
      %279 = vst [vmem:[#allocation2 + $0x88] sm:$0x1] %v278
      %vm280 = vsmask.f32 7938
      %vm281 = vmand %vm223, %vm280
      %v282 = vld [vmem:[#allocation2 + $0x4] sm:$0x1]
      %v283 = vsel %vm281, 0, %v282
      %284 = vst [vmem:[#allocation2 + $0x4] sm:$0x1] %v283
      %v285 = vld [vmem:[#allocation2 + $0xc] sm:$0x1]
      %v286 = vsel %vm281, 0, %v285
      %287 = vst [vmem:[#allocation2 + $0xc] sm:$0x1] %v286
      %v288 = vld [vmem:[#allocation2 + $0x14] sm:$0x1]
      %v289 = vsel %vm281, 0, %v288
      %290 = vst [vmem:[#allocation2 + $0x14] sm:$0x1] %v289
      %v291 = vld [vmem:[#allocation2 + $0x1c] sm:$0x1]
      %v292 = vsel %vm281, 0, %v291
      %293 = vst [vmem:[#allocation2 + $0x1c] sm:$0x1] %v292
      %v294 = vld [vmem:[#allocation2 + $0x24] sm:$0x1]
      %v295 = vsel %vm281, 0, %v294
      %296 = vst [vmem:[#allocation2 + $0x24] sm:$0x1] %v295
      %v297 = vld [vmem:[#allocation2 + $0x2c] sm:$0x1]
      %v298 = vsel %vm281, 0, %v297
      %299 = vst [vmem:[#allocation2 + $0x2c] sm:$0x1] %v298
      %v300 = vld [vmem:[#allocation2 + $0x34] sm:$0x1]
      %v301 = vsel %vm281, 0, %v300
      %302 = vst [vmem:[#allocation2 + $0x34] sm:$0x1] %v301
      %v303 = vld [vmem:[#allocation2 + $0x3c] sm:$0x1]
      %v304 = vsel %vm281, 0, %v303
      %305 = vst [vmem:[#allocation2 + $0x3c] sm:$0x1] %v304
      %v306 = vld [vmem:[#allocation2 + $0x44] sm:$0x1]
      %v307 = vsel %vm281, 0, %v306
      %308 = vst [vmem:[#allocation2 + $0x44] sm:$0x1] %v307
      %v309 = vld [vmem:[#allocation2 + $0x4c] sm:$0x1]
      %v310 = vsel %vm281, 0, %v309
      %311 = vst [vmem:[#allocation2 + $0x4c] sm:$0x1] %v310
      %v312 = vld [vmem:[#allocation2 + $0x54] sm:$0x1]
      %v313 = vsel %vm281, 0, %v312
      %314 = vst [vmem:[#allocation2 + $0x54] sm:$0x1] %v313
      %v315 = vld [vmem:[#allocation2 + $0x5c] sm:$0x1]
      %v316 = vsel %vm281, 0, %v315
      %317 = vst [vmem:[#allocation2 + $0x5c] sm:$0x1] %v316
      %v318 = vld [vmem:[#allocation2 + $0x64] sm:$0x1]
      %v319 = vsel %vm281, 0, %v318
      %320 = vst [vmem:[#allocation2 + $0x64] sm:$0x1] %v319
      %v321 = vld [vmem:[#allocation2 + $0x6c] sm:$0x1]
      %v322 = vsel %vm281, 0, %v321
      %323 = vst [vmem:[#allocation2 + $0x6c] sm:$0x1] %v322
      %v324 = vld [vmem:[#allocation2 + $0x74] sm:$0x1]
      %v325 = vsel %vm281, 0, %v324
      %326 = vst [vmem:[#allocation2 + $0x74] sm:$0x1] %v325
      %v327 = vld [vmem:[#allocation2 + $0x7c] sm:$0x1]
      %v328 = vsel %vm281, 0, %v327
      %329 = vst [vmem:[#allocation2 + $0x7c] sm:$0x1] %v328
      %v330 = vld [vmem:[#allocation2 + $0x84] sm:$0x1]
      %v331 = vsel %vm281, 0, %v330
      %332 = vst [vmem:[#allocation2 + $0x84] sm:$0x1] %v331
      %v333 = vld [vmem:[#allocation2 + $0x8c] sm:$0x1]
      %v334 = vsel %vm281, 0, %v333
      %335 = vst [vmem:[#allocation2 + $0x8c] sm:$0x1] %v334
      %s336 = smul.addr %s222, 4
      %s337 = scalar_lea.vmem %s210, %s336
      %v338 = vld [vmem:[%s337] sm:$0xf]
      %v339 = vld [vmem:[%s337 + $0x4] sm:$0xf]
      %v340 = vld [vmem:[%s337 + $0x8] sm:$0xf]
      %v341 = vld [vmem:[%s337 + $0xc] sm:$0xf]
      %v342 = vld [vmem:[%s337 + $0x10] sm:$0xf]
      %v343 = vld [vmem:[%s337 + $0x14] sm:$0xf]
      %v344 = vld [vmem:[%s337 + $0x18] sm:$0xf]
      %v345 = vld [vmem:[%s337 + $0x1c] sm:$0xf]
      %v346 = vld [vmem:[%s337 + $0x20] sm:$0xf]
      %v347 = vld [vmem:[%s337 + $0x24] sm:$0xf]
      %v348 = vld [vmem:[%s337 + $0x28] sm:$0xf]
      %v349 = vld [vmem:[%s337 + $0x2c] sm:$0xf]
      %v350 = vld [vmem:[%s337 + $0x30] sm:$0xf]
      %v351 = vld [vmem:[%s337 + $0x34] sm:$0xf]
      %v352 = vld [vmem:[%s337 + $0x38] sm:$0xf]
      %v353 = vld [vmem:[%s337 + $0x3c] sm:$0xf]
      %v355 = vshrl.u32 %v338, 16
      %v357 = vrot.slane %v355, 7
      %v358 = vshll.u32 %v338, 16
      %v360 = vor.u32 %v357, %v358
      %v361 = vrot.slane %v357, 4
      %v363 = vshrl.u32 %v339, 16
      %v365 = vrot.slane %v363, 7
      %v366 = vshll.u32 %v339, 16
      %v368 = vor.u32 %v365, %v366
      %v369 = vrot.slane %v365, 4
      %v371 = vshrl.u32 %v340, 16
      %v373 = vrot.slane %v371, 7
      %v374 = vshll.u32 %v340, 16
      %v376 = vor.u32 %v373, %v374
      %v377 = vrot.slane %v373, 4
      %v379 = vshrl.u32 %v341, 16
      %v381 = vrot.slane %v379, 7
      %v382 = vshll.u32 %v341, 16
      %v384 = vor.u32 %v381, %v382
      %v385 = vrot.slane %v381, 4
      %v387 = vshrl.u32 %v342, 16
      %v389 = vrot.slane %v387, 7
      %v390 = vshll.u32 %v342, 16
      %v392 = vor.u32 %v389, %v390
      %v393 = vrot.slane %v389, 4
      %v395 = vshrl.u32 %v343, 16
      %v397 = vrot.slane %v395, 7
      %v398 = vshll.u32 %v343, 16
      %v400 = vor.u32 %v397, %v398
      %v401 = vrot.slane %v397, 4
      %v403 = vshrl.u32 %v344, 16
      %v405 = vrot.slane %v403, 7
      %v406 = vshll.u32 %v344, 16
      %v408 = vor.u32 %v405, %v406
      %v409 = vrot.slane %v405, 4
      %v411 = vshrl.u32 %v345, 16
      %v413 = vrot.slane %v411, 7
      %v414 = vshll.u32 %v345, 16
      %v416 = vor.u32 %v413, %v414
      %v417 = vrot.slane %v413, 4
      %v419 = vshrl.u32 %v346, 16
      %v421 = vrot.slane %v419, 7
      %v422 = vshll.u32 %v346, 16
      %v424 = vor.u32 %v421, %v422
      %v425 = vrot.slane %v421, 4
      %v427 = vshrl.u32 %v347, 16
      %v429 = vrot.slane %v427, 7
      %v430 = vshll.u32 %v347, 16
      %v432 = vor.u32 %v429, %v430
      %v433 = vrot.slane %v429, 4
      %v435 = vshrl.u32 %v348, 16
      %v437 = vrot.slane %v435, 7
      %v438 = vshll.u32 %v348, 16
      %v440 = vor.u32 %v437, %v438
      %v441 = vrot.slane %v437, 4
      %v443 = vshrl.u32 %v349, 16
      %v445 = vrot.slane %v443, 7
      %v446 = vshll.u32 %v349, 16
      %v448 = vor.u32 %v445, %v446
      %v449 = vrot.slane %v445, 4
      %v451 = vshrl.u32 %v350, 16
      %v453 = vrot.slane %v451, 7
      %v454 = vshll.u32 %v350, 16
      %v456 = vor.u32 %v453, %v454
      %v457 = vrot.slane %v453, 4
      %v459 = vshrl.u32 %v351, 16
      %v461 = vrot.slane %v459, 7
      %v462 = vshll.u32 %v351, 16
      %v464 = vor.u32 %v461, %v462
      %v465 = vrot.slane %v461, 4
      %v467 = vshrl.u32 %v352, 16
      %v469 = vrot.slane %v467, 7
      %v470 = vshll.u32 %v352, 16
      %v472 = vor.u32 %v469, %v470
      %v473 = vrot.slane %v469, 4
      %v475 = vshrl.u32 %v353, 16
      %v477 = vrot.slane %v475, 7
      %v478 = vshll.u32 %v353, 16
      %v480 = vor.u32 %v477, %v478
      %v481 = vrot.slane %v477, 4
      %s514 = scalar_lea.vmem [#allocation2], 8
      %vm515 = vcmask 60416
      %vm516 = vmand %vm515, %vm280
      %v517 = vld [vmem:[%s514] sm:$0xf]
      %v518 = vsel %vm516, %v360, %v517
      %519 = vst [vmem:[%s514] sm:$0xf] %v518
      %v520 = vld [vmem:[%s514 + $0x4] sm:$0x1]
      %v521 = vsel %vm225, %v361, %v520
      %522 = vst [vmem:[%s514 + $0x4] sm:$0x1] %v521
      %v523 = vld [vmem:[%s514 + $0x8] sm:$0xf]
      %v524 = vsel %vm516, %v368, %v523
      %525 = vst [vmem:[%s514 + $0x8] sm:$0xf] %v524
      %v526 = vld [vmem:[%s514 + $0xc] sm:$0x1]
      %v527 = vsel %vm225, %v369, %v526
      %528 = vst [vmem:[%s514 + $0xc] sm:$0x1] %v527
      %v529 = vld [vmem:[%s514 + $0x10] sm:$0xf]
      %v530 = vsel %vm516, %v376, %v529
      %531 = vst [vmem:[%s514 + $0x10] sm:$0xf] %v530
      %v532 = vld [vmem:[%s514 + $0x14] sm:$0x1]
      %v533 = vsel %vm225, %v377, %v532
      %534 = vst [vmem:[%s514 + $0x14] sm:$0x1] %v533
      %v535 = vld [vmem:[%s514 + $0x18] sm:$0xf]
      %v536 = vsel %vm516, %v384, %v535
      %537 = vst [vmem:[%s514 + $0x18] sm:$0xf] %v536
      %v538 = vld [vmem:[%s514 + $0x1c] sm:$0x1]
      %v539 = vsel %vm225, %v385, %v538
      %540 = vst [vmem:[%s514 + $0x1c] sm:$0x1] %v539
      %v541 = vld [vmem:[%s514 + $0x20] sm:$0xf]
      %v542 = vsel %vm516, %v392, %v541
      %543 = vst [vmem:[%s514 + $0x20] sm:$0xf] %v542
      %v544 = vld [vmem:[%s514 + $0x24] sm:$0x1]
      %v545 = vsel %vm225, %v393, %v544
      %546 = vst [vmem:[%s514 + $0x24] sm:$0x1] %v545
      %v547 = vld [vmem:[%s514 + $0x28] sm:$0xf]
      %v548 = vsel %vm516, %v400, %v547
      %549 = vst [vmem:[%s514 + $0x28] sm:$0xf] %v548
      %v550 = vld [vmem:[%s514 + $0x2c] sm:$0x1]
      %v551 = vsel %vm225, %v401, %v550
      %552 = vst [vmem:[%s514 + $0x2c] sm:$0x1] %v551
      %v553 = vld [vmem:[%s514 + $0x30] sm:$0xf]
      %v554 = vsel %vm516, %v408, %v553
      %555 = vst [vmem:[%s514 + $0x30] sm:$0xf] %v554
      %v556 = vld [vmem:[%s514 + $0x34] sm:$0x1]
      %v557 = vsel %vm225, %v409, %v556
      %558 = vst [vmem:[%s514 + $0x34] sm:$0x1] %v557
      %v559 = vld [vmem:[%s514 + $0x38] sm:$0xf]
      %v560 = vsel %vm516, %v416, %v559
      %561 = vst [vmem:[%s514 + $0x38] sm:$0xf] %v560
      %v562 = vld [vmem:[%s514 + $0x3c] sm:$0x1]
      %v563 = vsel %vm225, %v417, %v562
      %564 = vst [vmem:[%s514 + $0x3c] sm:$0x1] %v563
      %v565 = vld [vmem:[%s514 + $0x40] sm:$0xf]
      %v566 = vsel %vm516, %v424, %v565
      %567 = vst [vmem:[%s514 + $0x40] sm:$0xf] %v566
      %v568 = vld [vmem:[%s514 + $0x44] sm:$0x1]
      %v569 = vsel %vm225, %v425, %v568
      %570 = vst [vmem:[%s514 + $0x44] sm:$0x1] %v569
      %v571 = vld [vmem:[%s514 + $0x48] sm:$0xf]
      %v572 = vsel %vm516, %v432, %v571
      %573 = vst [vmem:[%s514 + $0x48] sm:$0xf] %v572
      %v574 = vld [vmem:[%s514 + $0x4c] sm:$0x1]
      %v575 = vsel %vm225, %v433, %v574
      %576 = vst [vmem:[%s514 + $0x4c] sm:$0x1] %v575
      %v577 = vld [vmem:[%s514 + $0x50] sm:$0xf]
      %v578 = vsel %vm516, %v440, %v577
      %579 = vst [vmem:[%s514 + $0x50] sm:$0xf] %v578
      %v580 = vld [vmem:[%s514 + $0x54] sm:$0x1]
      %v581 = vsel %vm225, %v441, %v580
      %582 = vst [vmem:[%s514 + $0x54] sm:$0x1] %v581
      %v583 = vld [vmem:[%s514 + $0x58] sm:$0xf]
      %v584 = vsel %vm516, %v448, %v583
      %585 = vst [vmem:[%s514 + $0x58] sm:$0xf] %v584
      %v586 = vld [vmem:[%s514 + $0x5c] sm:$0x1]
      %v587 = vsel %vm225, %v449, %v586
      %588 = vst [vmem:[%s514 + $0x5c] sm:$0x1] %v587
      %v589 = vld [vmem:[%s514 + $0x60] sm:$0xf]
      %v590 = vsel %vm516, %v456, %v589
      %591 = vst [vmem:[%s514 + $0x60] sm:$0xf] %v590
      %v592 = vld [vmem:[%s514 + $0x64] sm:$0x1]
      %v593 = vsel %vm225, %v457, %v592
      %594 = vst [vmem:[%s514 + $0x64] sm:$0x1] %v593
      %v595 = vld [vmem:[%s514 + $0x68] sm:$0xf]
      %v596 = vsel %vm516, %v464, %v595
      %597 = vst [vmem:[%s514 + $0x68] sm:$0xf] %v596
      %v598 = vld [vmem:[%s514 + $0x6c] sm:$0x1]
      %v599 = vsel %vm225, %v465, %v598
      %600 = vst [vmem:[%s514 + $0x6c] sm:$0x1] %v599
      %v601 = vld [vmem:[%s514 + $0x70] sm:$0xf]
      %v602 = vsel %vm516, %v472, %v601
      %603 = vst [vmem:[%s514 + $0x70] sm:$0xf] %v602
      %v604 = vld [vmem:[%s514 + $0x74] sm:$0x1]
      %v605 = vsel %vm225, %v473, %v604
      %606 = vst [vmem:[%s514 + $0x74] sm:$0x1] %v605
      %v607 = vld [vmem:[%s514 + $0x78] sm:$0xf]
      %v608 = vsel %vm516, %v480, %v607
      %609 = vst [vmem:[%s514 + $0x78] sm:$0xf] %v608
      %v610 = vld [vmem:[%s514 + $0x7c] sm:$0x1]
      %v611 = vsel %vm225, %v481, %v610
      %612 = vst [vmem:[%s514 + $0x7c] sm:$0x1] %v611
      %p613 = scmp.eq.s32.totalorder %s20, 0
      // Predicated region
      $region37: #{resblock_body_forward.4} parent=35 // pred_check
        %p614 = pneg %p613
      $region38: #{resblock_body_forward.4} parent=35 // pred_check_branch
        %616 = sbr.rel (%p614) target = $region40
      $region39: #{resblock_body_forward.4} parent=35 // pred_region
        %vm617 = vcmask 60416
        %618 = vst.msk [vmem:[#allocation2] sm:$0xf] %vm617, 0
        %vm619 = vcmask 57344
        %620 = vst.msk [vmem:[#allocation2 + $0x4] sm:$0x1] %vm619, 0
      $region40: #{resblock_body_forward.4} parent=35 // pred_fallthru
        _
      %p621 = scmp.gt.s32.totalorder %s20, 0
      // Predicated region
      $region41: #{resblock_body_forward.4} parent=35 // pred_check
        %p622 = pneg %p621
      $region42: #{resblock_body_forward.4} parent=35 // pred_check_branch
        %624 = sbr.rel (%p622) target = $region44
      $region43: #{resblock_body_forward.4} parent=35 // pred_region
        %s625 = ssub.s32 %s222, 1
        %s626 = smul.addr %s625, 4
        %s627 = scalar_lea.vmem %s210, %s626
        %v628 = vld [vmem:[%s627] sm:$0xf]
        %v630 = vshrl.u32 %v628, 16
        %v632 = vrot.slane %v630, 7
        %v633 = vshll.u32 %v628, 16
        %v635 = vor.u32 %v632, %v633
        %v636 = vrot.slane %v632, 4
        %v639 = vld [vmem:[#allocation2] sm:$0xf]
        %v640 = vsel %vm516, %v635, %v639
        %641 = vst [vmem:[#allocation2] sm:$0xf] %v640
        %v642 = vld [vmem:[#allocation2 + $0x4] sm:$0x1]
        %v643 = vsel %vm225, %v636, %v642
        %644 = vst [vmem:[#allocation2 + $0x4] sm:$0x1] %v643
      $region44: #{resblock_body_forward.4} parent=35 // pred_fallthru
        _
      // Predicated region
      $region45: #{resblock_body_forward.4} parent=35 // pred_check
        %p645 = pneg %p613
      $region46: #{resblock_body_forward.4} parent=35 // pred_check_branch
        %647 = sbr.rel (%p645) target = $region48
      $region47: #{resblock_body_forward.4} parent=35 // pred_region
        %s648 = scalar_lea.vmem [#allocation2], 136
        %vm649 = vcmask 60416
        %650 = vst.msk [vmem:[%s648] sm:$0xf] %vm649, 0
        %vm651 = vcmask 57344
        %652 = vst.msk [vmem:[%s648 + $0x4] sm:$0x1] %vm651, 0
      $region48: #{resblock_body_forward.4} parent=35 // pred_fallthru
        _
      %p653 = scmp.lt.s32.totalorder %s20, 0
      // Predicated region
      $region49: #{resblock_body_forward.4} parent=35 // pred_check
        %p654 = pneg %p653
      $region50: #{resblock_body_forward.4} parent=35 // pred_check_branch
        %656 = sbr.rel (%p654) target = $region52
      $region51: #{resblock_body_forward.4} parent=35 // pred_region
        %s657 = sadd.s32 %s222, 16
        %s658 = smul.addr %s657, 4
        %s659 = scalar_lea.vmem %s210, %s658
        %v660 = vld [vmem:[%s659] sm:$0xf]
        %v662 = vshrl.u32 %v660, 16
        %v664 = vrot.slane %v662, 7
        %v665 = vshll.u32 %v660, 16
        %v667 = vor.u32 %v664, %v665
        %v668 = vrot.slane %v664, 4
        %s671 = scalar_lea.vmem [#allocation2], 136
        %v672 = vld [vmem:[%s671] sm:$0xf]
        %v673 = vsel %vm516, %v667, %v672
        %674 = vst [vmem:[%s671] sm:$0xf] %v673
        %v675 = vld [vmem:[%s671 + $0x4] sm:$0x1]
        %v676 = vsel %vm225, %v668, %v675
        %677 = vst [vmem:[%s671 + $0x4] sm:$0x1] %v676
      $region52: #{resblock_body_forward.4} parent=35 // pred_fallthru
        _
      %v678 = vld [vmem:[#allocation2] sm:$0xf]
      %v679 = vld [vmem:[#allocation2 + $0x8] sm:$0xf]
      %v680 = vld [vmem:[#allocation2 + $0x10] sm:$0xf]
      %v681 = vld [vmem:[#allocation2 + $0x18] sm:$0xf]
      %v682 = vld [vmem:[#allocation2 + $0x20] sm:$0xf]
      %v683 = vld [vmem:[#allocation2 + $0x28] sm:$0xf]
      %v684 = vld [vmem:[#allocation2 + $0x30] sm:$0xf]
      %v685 = vld [vmem:[#allocation2 + $0x38] sm:$0xf]
      %v686 = vld [vmem:[#allocation2 + $0x40] sm:$0xf]
      %v687 = vld [vmem:[#allocation2 + $0x48] sm:$0xf]
      %v688 = vld [vmem:[#allocation2 + $0x50] sm:$0xf]
      %v689 = vld [vmem:[#allocation2 + $0x58] sm:$0xf]
      %v690 = vld [vmem:[#allocation2 + $0x60] sm:$0xf]
      %v691 = vld [vmem:[#allocation2 + $0x68] sm:$0xf]
      %v692 = vld [vmem:[#allocation2 + $0x70] sm:$0xf]
      %v693 = vld [vmem:[#allocation2 + $0x78] sm:$0xf]
      %vm694 = vcmask 60416
      %695 = vst.msk [vmem:[#allocation3] sm:$0xf] %vm694, %v678
      %696 = vst.msk [vmem:[#allocation3 + $0x4] sm:$0xf] %vm694, %v679
      %697 = vst.msk [vmem:[#allocation3 + $0x8] sm:$0xf] %vm694, %v680
      %698 = vst.msk [vmem:[#allocation3 + $0xc] sm:$0xf] %vm694, %v681
      %699 = vst.msk [vmem:[#allocation3 + $0x10] sm:$0xf] %vm694, %v682
      %700 = vst.msk [vmem:[#allocation3 + $0x14] sm:$0xf] %vm694, %v683
      %701 = vst.msk [vmem:[#allocation3 + $0x18] sm:$0xf] %vm694, %v684
      %702 = vst.msk [vmem:[#allocation3 + $0x1c] sm:$0xf] %vm694, %v685
      %703 = vst.msk [vmem:[#allocation3 + $0x20] sm:$0xf] %vm694, %v686
      %704 = vst.msk [vmem:[#allocation3 + $0x24] sm:$0xf] %vm694, %v687
      %705 = vst.msk [vmem:[#allocation3 + $0x28] sm:$0xf] %vm694, %v688
      %706 = vst.msk [vmem:[#allocation3 + $0x2c] sm:$0xf] %vm694, %v689
      %707 = vst.msk [vmem:[#allocation3 + $0x30] sm:$0xf] %vm694, %v690
      %708 = vst.msk [vmem:[#allocation3 + $0x34] sm:$0xf] %vm694, %v691
      %709 = vst.msk [vmem:[#allocation3 + $0x38] sm:$0xf] %vm694, %v692
      %710 = vst.msk [vmem:[#allocation3 + $0x3c] sm:$0xf] %vm694, %v693
      %v711 = vld [vmem:[#allocation2] sm:$0xf]
      %v712 = vld [vmem:[#allocation2 + $0x4] sm:$0x1]
      %v713 = vld [vmem:[#allocation2 + $0x8] sm:$0xf]
      %v714 = vld [vmem:[#allocation2 + $0xc] sm:$0x1]
      %v715 = vld [vmem:[#allocation2 + $0x10] sm:$0xf]
      %v716 = vld [vmem:[#allocation2 + $0x14] sm:$0x1]
      %v717 = vld [vmem:[#allocation2 + $0x18] sm:$0xf]
      %v718 = vld [vmem:[#allocation2 + $0x1c] sm:$0x1]
      %v719 = vld [vmem:[#allocation2 + $0x20] sm:$0xf]
      %v720 = vld [vmem:[#allocation2 + $0x24] sm:$0x1]
      %v721 = vld [vmem:[#allocation2 + $0x28] sm:$0xf]
      %v722 = vld [vmem:[#allocation2 + $0x2c] sm:$0x1]
      %v723 = vld [vmem:[#allocation2 + $0x30] sm:$0xf]
      %v724 = vld [vmem:[#allocation2 + $0x34] sm:$0x1]
      %v725 = vld [vmem:[#allocation2 + $0x38] sm:$0xf]
      %v726 = vld [vmem:[#allocation2 + $0x3c] sm:$0x1]
      %v727 = vld [vmem:[#allocation2 + $0x40] sm:$0xf]
      %v728 = vld [vmem:[#allocation2 + $0x44] sm:$0x1]
      %v729 = vld [vmem:[#allocation2 + $0x48] sm:$0xf]
      %v730 = vld [vmem:[#allocation2 + $0x4c] sm:$0x1]
      %v731 = vld [vmem:[#allocation2 + $0x50] sm:$0xf]
      %v732 = vld [vmem:[#allocation2 + $0x54] sm:$0x1]
      %v733 = vld [vmem:[#allocation2 + $0x58] sm:$0xf]
      %v734 = vld [vmem:[#allocation2 + $0x5c] sm:$0x1]
      %v735 = vld [vmem:[#allocation2 + $0x60] sm:$0xf]
      %v736 = vld [vmem:[#allocation2 + $0x64] sm:$0x1]
      %v737 = vld [vmem:[#allocation2 + $0x68] sm:$0xf]
      %v738 = vld [vmem:[#allocation2 + $0x6c] sm:$0x1]
      %v739 = vld [vmem:[#allocation2 + $0x70] sm:$0xf]
      %v740 = vld [vmem:[#allocation2 + $0x74] sm:$0x1]
      %v741 = vld [vmem:[#allocation2 + $0x78] sm:$0xf]
      %v742 = vld [vmem:[#allocation2 + $0x7c] sm:$0x1]
      %vm743 = vsmask.f32 3328
      %vm744 = vsmask.f32 7440
      %vm745 = vmor %vm743, %vm744
      %v747 = vshrl.u32 %v711, 16
      %v749 = vrot.slane %v747, 4
      %v750 = vshll.u32 %v711, 16
      %v752 = vrot.slane %v750, 5
      %v753 = vor.u32 %v749, %v752
      %v754 = vrot.slane %v753, 4
      %v756 = vshll.u32 %v712, 16
      %v758 = vrot.slane %v756, 5
      %v759 = vsel %vm745, %v754, %v758
      %v761 = vshrl.u32 %v713, 16
      %v763 = vrot.slane %v761, 4
      %v764 = vshll.u32 %v713, 16
      %v766 = vrot.slane %v764, 5
      %v767 = vor.u32 %v763, %v766
      %v768 = vrot.slane %v767, 4
      %v770 = vshll.u32 %v714, 16
      %v772 = vrot.slane %v770, 5
      %v773 = vsel %vm745, %v768, %v772
      %v775 = vshrl.u32 %v715, 16
      %v777 = vrot.slane %v775, 4
      %v778 = vshll.u32 %v715, 16
      %v780 = vrot.slane %v778, 5
      %v781 = vor.u32 %v777, %v780
      %v782 = vrot.slane %v781, 4
      %v784 = vshll.u32 %v716, 16
      %v786 = vrot.slane %v784, 5
      %v787 = vsel %vm745, %v782, %v786
      %v789 = vshrl.u32 %v717, 16
      %v791 = vrot.slane %v789, 4
      %v792 = vshll.u32 %v717, 16
      %v794 = vrot.slane %v792, 5
      %v795 = vor.u32 %v791, %v794
      %v796 = vrot.slane %v795, 4
      %v798 = vshll.u32 %v718, 16
      %v800 = vrot.slane %v798, 5
      %v801 = vsel %vm745, %v796, %v800
      %v803 = vshrl.u32 %v719, 16
      %v805 = vrot.slane %v803, 4
      %v806 = vshll.u32 %v719, 16
      %v808 = vrot.slane %v806, 5
      %v809 = vor.u32 %v805, %v808
      %v810 = vrot.slane %v809, 4
      %v812 = vshll.u32 %v720, 16
      %v814 = vrot.slane %v812, 5
      %v815 = vsel %vm745, %v810, %v814
      %v817 = vshrl.u32 %v721, 16
      %v819 = vrot.slane %v817, 4
      %v820 = vshll.u32 %v721, 16
      %v822 = vrot.slane %v820, 5
      %v823 = vor.u32 %v819, %v822
      %v824 = vrot.slane %v823, 4
      %v826 = vshll.u32 %v722, 16
      %v828 = vrot.slane %v826, 5
      %v829 = vsel %vm745, %v824, %v828
      %v831 = vshrl.u32 %v723, 16
      %v833 = vrot.slane %v831, 4
      %v834 = vshll.u32 %v723, 16
      %v836 = vrot.slane %v834, 5
      %v837 = vor.u32 %v833, %v836
      %v838 = vrot.slane %v837, 4
      %v840 = vshll.u32 %v724, 16
      %v842 = vrot.slane %v840, 5
      %v843 = vsel %vm745, %v838, %v842
      %v845 = vshrl.u32 %v725, 16
      %v847 = vrot.slane %v845, 4
      %v848 = vshll.u32 %v725, 16
      %v850 = vrot.slane %v848, 5
      %v851 = vor.u32 %v847, %v850
      %v852 = vrot.slane %v851, 4
      %v854 = vshll.u32 %v726, 16
      %v856 = vrot.slane %v854, 5
      %v857 = vsel %vm745, %v852, %v856
      %v859 = vshrl.u32 %v727, 16
      %v861 = vrot.slane %v859, 4
      %v862 = vshll.u32 %v727, 16
      %v864 = vrot.slane %v862, 5
      %v865 = vor.u32 %v861, %v864
      %v866 = vrot.slane %v865, 4
      %v868 = vshll.u32 %v728, 16
      %v870 = vrot.slane %v868, 5
      %v871 = vsel %vm745, %v866, %v870
      %v873 = vshrl.u32 %v729, 16
      %v875 = vrot.slane %v873, 4
      %v876 = vshll.u32 %v729, 16
      %v878 = vrot.slane %v876, 5
      %v879 = vor.u32 %v875, %v878
      %v880 = vrot.slane %v879, 4
      %v882 = vshll.u32 %v730, 16
      %v884 = vrot.slane %v882, 5
      %v885 = vsel %vm745, %v880, %v884
      %v887 = vshrl.u32 %v731, 16
      %v889 = vrot.slane %v887, 4
      %v890 = vshll.u32 %v731, 16
      %v892 = vrot.slane %v890, 5
      %v893 = vor.u32 %v889, %v892
      %v894 = vrot.slane %v893, 4
      %v896 = vshll.u32 %v732, 16
      %v898 = vrot.slane %v896, 5
      %v899 = vsel %vm745, %v894, %v898
      %v901 = vshrl.u32 %v733, 16
      %v903 = vrot.slane %v901, 4
      %v904 = vshll.u32 %v733, 16
      %v906 = vrot.slane %v904, 5
      %v907 = vor.u32 %v903, %v906
      %v908 = vrot.slane %v907, 4
      %v910 = vshll.u32 %v734, 16
      %v912 = vrot.slane %v910, 5
      %v913 = vsel %vm745, %v908, %v912
      %v915 = vshrl.u32 %v735, 16
      %v917 = vrot.slane %v915, 4
      %v918 = vshll.u32 %v735, 16
      %v920 = vrot.slane %v918, 5
      %v921 = vor.u32 %v917, %v920
      %v922 = vrot.slane %v921, 4
      %v924 = vshll.u32 %v736, 16
      %v926 = vrot.slane %v924, 5
      %v927 = vsel %vm745, %v922, %v926
      %v929 = vshrl.u32 %v737, 16
      %v931 = vrot.slane %v929, 4
      %v932 = vshll.u32 %v737, 16
      %v934 = vrot.slane %v932, 5
      %v935 = vor.u32 %v931, %v934
      %v936 = vrot.slane %v935, 4
      %v938 = vshll.u32 %v738, 16
      %v940 = vrot.slane %v938, 5
      %v941 = vsel %vm745, %v936, %v940
      %v943 = vshrl.u32 %v739, 16
      %v945 = vrot.slane %v943, 4
      %v946 = vshll.u32 %v739, 16
      %v948 = vrot.slane %v946, 5
      %v949 = vor.u32 %v945, %v948
      %v950 = vrot.slane %v949, 4
      %v952 = vshll.u32 %v740, 16
      %v954 = vrot.slane %v952, 5
      %v955 = vsel %vm745, %v950, %v954
      %v957 = vshrl.u32 %v741, 16
      %v959 = vrot.slane %v957, 4
      %v960 = vshll.u32 %v741, 16
      %v962 = vrot.slane %v960, 5
      %v963 = vor.u32 %v959, %v962
      %v964 = vrot.slane %v963, 4
      %v966 = vshll.u32 %v742, 16
      %v968 = vrot.slane %v966, 5
      %v969 = vsel %vm745, %v964, %v968
      %970 = vrot.lane.b32.xlu0 %v759, 8
      %v971 = vpop.permute.xlu0 %970
      %972 = vrot.lane.b32.xlu0 %v773, 8
      %v973 = vpop.permute.xlu0 %972
      %974 = vrot.lane.b32.xlu0 %v787, 8
      %v975 = vpop.permute.xlu0 %974
      %976 = vrot.lane.b32.xlu0 %v801, 8
      %v977 = vpop.permute.xlu0 %976
      %978 = vrot.lane.b32.xlu0 %v815, 8
      %v979 = vpop.permute.xlu0 %978
      %980 = vrot.lane.b32.xlu0 %v829, 8
      %v981 = vpop.permute.xlu0 %980
      %982 = vrot.lane.b32.xlu0 %v843, 8
      %v983 = vpop.permute.xlu0 %982
      %984 = vrot.lane.b32.xlu0 %v857, 8
      %v985 = vpop.permute.xlu0 %984
      %986 = vrot.lane.b32.xlu0 %v871, 8
      %v987 = vpop.permute.xlu0 %986
      %988 = vrot.lane.b32.xlu0 %v885, 8
      %v989 = vpop.permute.xlu0 %988
      %990 = vrot.lane.b32.xlu0 %v899, 8
      %v991 = vpop.permute.xlu0 %990
      %992 = vrot.lane.b32.xlu0 %v913, 8
      %v993 = vpop.permute.xlu0 %992
      %994 = vrot.lane.b32.xlu0 %v927, 8
      %v995 = vpop.permute.xlu0 %994
      %996 = vrot.lane.b32.xlu0 %v941, 8
      %v997 = vpop.permute.xlu0 %996
      %998 = vrot.lane.b32.xlu0 %v955, 8
      %v999 = vpop.permute.xlu0 %998
      %1000 = vrot.lane.b32.xlu0 %v969, 8
      %v1001 = vpop.permute.xlu0 %1000
      %vm1018 = vcmask 126016
      %1019 = vst.msk [vmem:[#allocation3] sm:$0xf] %vm1018, %v971
      %1020 = vst.msk [vmem:[#allocation3 + $0x4] sm:$0xf] %vm1018, %v973
      %1021 = vst.msk [vmem:[#allocation3 + $0x8] sm:$0xf] %vm1018, %v975
      %1022 = vst.msk [vmem:[#allocation3 + $0xc] sm:$0xf] %vm1018, %v977
      %1023 = vst.msk [vmem:[#allocation3 + $0x10] sm:$0xf] %vm1018, %v979
      %1024 = vst.msk [vmem:[#allocation3 + $0x14] sm:$0xf] %vm1018, %v981
      %1025 = vst.msk [vmem:[#allocation3 + $0x18] sm:$0xf] %vm1018, %v983
      %1026 = vst.msk [vmem:[#allocation3 + $0x1c] sm:$0xf] %vm1018, %v985
      %1027 = vst.msk [vmem:[#allocation3 + $0x20] sm:$0xf] %vm1018, %v987
      %1028 = vst.msk [vmem:[#allocation3 + $0x24] sm:$0xf] %vm1018, %v989
      %1029 = vst.msk [vmem:[#allocation3 + $0x28] sm:$0xf] %vm1018, %v991
      %1030 = vst.msk [vmem:[#allocation3 + $0x2c] sm:$0xf] %vm1018, %v993
      %1031 = vst.msk [vmem:[#allocation3 + $0x30] sm:$0xf] %vm1018, %v995
      %1032 = vst.msk [vmem:[#allocation3 + $0x34] sm:$0xf] %vm1018, %v997
      %1033 = vst.msk [vmem:[#allocation3 + $0x38] sm:$0xf] %vm1018, %v999
      %1034 = vst.msk [vmem:[#allocation3 + $0x3c] sm:$0xf] %vm1018, %v1001
      %v1035 = vld [vmem:[#allocation2] sm:$0xe]
      %v1036 = vld [vmem:[#allocation2 + $0x4] sm:$0x1]
      %v1037 = vld [vmem:[#allocation2 + $0x8] sm:$0xe]
      %v1038 = vld [vmem:[#allocation2 + $0xc] sm:$0x1]
      %v1039 = vld [vmem:[#allocation2 + $0x10] sm:$0xe]
      %v1040 = vld [vmem:[#allocation2 + $0x14] sm:$0x1]
      %v1041 = vld [vmem:[#allocation2 + $0x18] sm:$0xe]
      %v1042 = vld [vmem:[#allocation2 + $0x1c] sm:$0x1]
      %v1043 = vld [vmem:[#allocation2 + $0x20] sm:$0xe]
      %v1044 = vld [vmem:[#allocation2 + $0x24] sm:$0x1]
      %v1045 = vld [vmem:[#allocation2 + $0x28] sm:$0xe]
      %v1046 = vld [vmem:[#allocation2 + $0x2c] sm:$0x1]
      %v1047 = vld [vmem:[#allocation2 + $0x30] sm:$0xe]
      %v1048 = vld [vmem:[#allocation2 + $0x34] sm:$0x1]
      %v1049 = vld [vmem:[#allocation2 + $0x38] sm:$0xe]
      %v1050 = vld [vmem:[#allocation2 + $0x3c] sm:$0x1]
      %v1051 = vld [vmem:[#allocation2 + $0x40] sm:$0xe]
      %v1052 = vld [vmem:[#allocation2 + $0x44] sm:$0x1]
      %v1053 = vld [vmem:[#allocation2 + $0x48] sm:$0xe]
      %v1054 = vld [vmem:[#allocation2 + $0x4c] sm:$0x1]
      %v1055 = vld [vmem:[#allocation2 + $0x50] sm:$0xe]
      %v1056 = vld [vmem:[#allocation2 + $0x54] sm:$0x1]
      %v1057 = vld [vmem:[#allocation2 + $0x58] sm:$0xe]
      %v1058 = vld [vmem:[#allocation2 + $0x5c] sm:$0x1]
      %v1059 = vld [vmem:[#allocation2 + $0x60] sm:$0xe]
      %v1060 = vld [vmem:[#allocation2 + $0x64] sm:$0x1]
      %v1061 = vld [vmem:[#allocation2 + $0x68] sm:$0xe]
      %v1062 = vld [vmem:[#allocation2 + $0x6c] sm:$0x1]
      %v1063 = vld [vmem:[#allocation2 + $0x70] sm:$0xe]
      %v1064 = vld [vmem:[#allocation2 + $0x74] sm:$0x1]
      %v1065 = vld [vmem:[#allocation2 + $0x78] sm:$0xe]
      %v1066 = vld [vmem:[#allocation2 + $0x7c] sm:$0x1]
      %vm1099 = vcmask 1042432
      %vm1100 = vcmask 1046532
      %vm1101 = vmor %vm1099, %vm1100
      %v1102 = vrot.slane %v1035, 5
      %v1103 = vrot.slane %v1102, 4
      %v1104 = vrot.slane %v1036, 5
      %v1105 = vsel %vm1101, %v1103, %v1104
      %v1106 = vrot.slane %v1037, 5
      %v1107 = vrot.slane %v1106, 4
      %v1108 = vrot.slane %v1038, 5
      %v1109 = vsel %vm1101, %v1107, %v1108
      %v1110 = vrot.slane %v1039, 5
      %v1111 = vrot.slane %v1110, 4
      %v1112 = vrot.slane %v1040, 5
      %v1113 = vsel %vm1101, %v1111, %v1112
      %v1114 = vrot.slane %v1041, 5
      %v1115 = vrot.slane %v1114, 4
      %v1116 = vrot.slane %v1042, 5
      %v1117 = vsel %vm1101, %v1115, %v1116
      %v1118 = vrot.slane %v1043, 5
      %v1119 = vrot.slane %v1118, 4
      %v1120 = vrot.slane %v1044, 5
      %v1121 = vsel %vm1101, %v1119, %v1120
      %v1122 = vrot.slane %v1045, 5
      %v1123 = vrot.slane %v1122, 4
      %v1124 = vrot.slane %v1046, 5
      %v1125 = vsel %vm1101, %v1123, %v1124
      %v1126 = vrot.slane %v1047, 5
      %v1127 = vrot.slane %v1126, 4
      %v1128 = vrot.slane %v1048, 5
      %v1129 = vsel %vm1101, %v1127, %v1128
      %v1130 = vrot.slane %v1049, 5
      %v1131 = vrot.slane %v1130, 4
      %v1132 = vrot.slane %v1050, 5
      %v1133 = vsel %vm1101, %v1131, %v1132
      %v1134 = vrot.slane %v1051, 5
      %v1135 = vrot.slane %v1134, 4
      %v1136 = vrot.slane %v1052, 5
      %v1137 = vsel %vm1101, %v1135, %v1136
      %v1138 = vrot.slane %v1053, 5
      %v1139 = vrot.slane %v1138, 4
      %v1140 = vrot.slane %v1054, 5
      %v1141 = vsel %vm1101, %v1139, %v1140
      %v1142 = vrot.slane %v1055, 5
      %v1143 = vrot.slane %v1142, 4
      %v1144 = vrot.slane %v1056, 5
      %v1145 = vsel %vm1101, %v1143, %v1144
      %v1146 = vrot.slane %v1057, 5
      %v1147 = vrot.slane %v1146, 4
      %v1148 = vrot.slane %v1058, 5
      %v1149 = vsel %vm1101, %v1147, %v1148
      %v1150 = vrot.slane %v1059, 5
      %v1151 = vrot.slane %v1150, 4
      %v1152 = vrot.slane %v1060, 5
      %v1153 = vsel %vm1101, %v1151, %v1152
      %v1154 = vrot.slane %v1061, 5
      %v1155 = vrot.slane %v1154, 4
      %v1156 = vrot.slane %v1062, 5
      %v1157 = vsel %vm1101, %v1155, %v1156
      %v1158 = vrot.slane %v1063, 5
      %v1159 = vrot.slane %v1158, 4
      %v1160 = vrot.slane %v1064, 5
      %v1161 = vsel %vm1101, %v1159, %v1160
      %v1162 = vrot.slane %v1065, 5
      %v1163 = vrot.slane %v1162, 4
      %v1164 = vrot.slane %v1066, 5
      %v1165 = vsel %vm1101, %v1163, %v1164
      %1166 = vrot.lane.b32.xlu0 %v1105, 16
      %v1167 = vpop.permute.xlu0 %1166
      %1168 = vrot.lane.b32.xlu0 %v1109, 16
      %v1169 = vpop.permute.xlu0 %1168
      %1170 = vrot.lane.b32.xlu0 %v1113, 16
      %v1171 = vpop.permute.xlu0 %1170
      %1172 = vrot.lane.b32.xlu0 %v1117, 16
      %v1173 = vpop.permute.xlu0 %1172
      %1174 = vrot.lane.b32.xlu0 %v1121, 16
      %v1175 = vpop.permute.xlu0 %1174
      %1176 = vrot.lane.b32.xlu0 %v1125, 16
      %v1177 = vpop.permute.xlu0 %1176
      %1178 = vrot.lane.b32.xlu0 %v1129, 16
      %v1179 = vpop.permute.xlu0 %1178
      %1180 = vrot.lane.b32.xlu0 %v1133, 16
      %v1181 = vpop.permute.xlu0 %1180
      %1182 = vrot.lane.b32.xlu0 %v1137, 16
      %v1183 = vpop.permute.xlu0 %1182
      %1184 = vrot.lane.b32.xlu0 %v1141, 16
      %v1185 = vpop.permute.xlu0 %1184
      %1186 = vrot.lane.b32.xlu0 %v1145, 16
      %v1187 = vpop.permute.xlu0 %1186
      %1188 = vrot.lane.b32.xlu0 %v1149, 16
      %v1189 = vpop.permute.xlu0 %1188
      %1190 = vrot.lane.b32.xlu0 %v1153, 16
      %v1191 = vpop.permute.xlu0 %1190
      %1192 = vrot.lane.b32.xlu0 %v1157, 16
      %v1193 = vpop.permute.xlu0 %1192
      %1194 = vrot.lane.b32.xlu0 %v1161, 16
      %v1195 = vpop.permute.xlu0 %1194
      %1196 = vrot.lane.b32.xlu0 %v1165, 16
      %v1197 = vpop.permute.xlu0 %1196
      %vm1214 = vcmask 191616
      %1215 = vst.msk [vmem:[#allocation3] sm:$0xf] %vm1214, %v1167
      %1216 = vst.msk [vmem:[#allocation3 + $0x4] sm:$0xf] %vm1214, %v1169
      %1217 = vst.msk [vmem:[#allocation3 + $0x8] sm:$0xf] %vm1214, %v1171
      %1218 = vst.msk [vmem:[#allocation3 + $0xc] sm:$0xf] %vm1214, %v1173
      %1219 = vst.msk [vmem:[#allocation3 + $0x10] sm:$0xf] %vm1214, %v1175
      %1220 = vst.msk [vmem:[#allocation3 + $0x14] sm:$0xf] %vm1214, %v1177
      %1221 = vst.msk [vmem:[#allocation3 + $0x18] sm:$0xf] %vm1214, %v1179
      %1222 = vst.msk [vmem:[#allocation3 + $0x1c] sm:$0xf] %vm1214, %v1181
      %1223 = vst.msk [vmem:[#allocation3 + $0x20] sm:$0xf] %vm1214, %v1183
      %1224 = vst.msk [vmem:[#allocation3 + $0x24] sm:$0xf] %vm1214, %v1185
      %1225 = vst.msk [vmem:[#allocation3 + $0x28] sm:$0xf] %vm1214, %v1187
      %1226 = vst.msk [vmem:[#allocation3 + $0x2c] sm:$0xf] %vm1214, %v1189
      %1227 = vst.msk [vmem:[#allocation3 + $0x30] sm:$0xf] %vm1214, %v1191
      %1228 = vst.msk [vmem:[#allocation3 + $0x34] sm:$0xf] %vm1214, %v1193
      %1229 = vst.msk [vmem:[#allocation3 + $0x38] sm:$0xf] %vm1214, %v1195
      %1230 = vst.msk [vmem:[#allocation3 + $0x3c] sm:$0xf] %vm1214, %v1197
      %v1231 = vld [vmem:[%s514] sm:$0xf]
      %v1232 = vld [vmem:[%s514 + $0x8] sm:$0xf]
      %v1233 = vld [vmem:[%s514 + $0x10] sm:$0xf]
      %v1234 = vld [vmem:[%s514 + $0x18] sm:$0xf]
      %v1235 = vld [vmem:[%s514 + $0x20] sm:$0xf]
      %v1236 = vld [vmem:[%s514 + $0x28] sm:$0xf]
      %v1237 = vld [vmem:[%s514 + $0x30] sm:$0xf]
      %v1238 = vld [vmem:[%s514 + $0x38] sm:$0xf]
      %v1239 = vld [vmem:[%s514 + $0x40] sm:$0xf]
      %v1240 = vld [vmem:[%s514 + $0x48] sm:$0xf]
      %v1241 = vld [vmem:[%s514 + $0x50] sm:$0xf]
      %v1242 = vld [vmem:[%s514 + $0x58] sm:$0xf]
      %v1243 = vld [vmem:[%s514 + $0x60] sm:$0xf]
      %v1244 = vld [vmem:[%s514 + $0x68] sm:$0xf]
      %v1245 = vld [vmem:[%s514 + $0x70] sm:$0xf]
      %v1246 = vld [vmem:[%s514 + $0x78] sm:$0xf]
      %1263 = vrot.lane.b32.xlu0 %v1231, 24
      %v1264 = vpop.permute.xlu0 %1263
      %1265 = vrot.lane.b32.xlu0 %v1232, 24
      %v1266 = vpop.permute.xlu0 %1265
      %1267 = vrot.lane.b32.xlu0 %v1233, 24
      %v1268 = vpop.permute.xlu0 %1267
      %1269 = vrot.lane.b32.xlu0 %v1234, 24
      %v1270 = vpop.permute.xlu0 %1269
      %1271 = vrot.lane.b32.xlu0 %v1235, 24
      %v1272 = vpop.permute.xlu0 %1271
      %1273 = vrot.lane.b32.xlu0 %v1236, 24
      %v1274 = vpop.permute.xlu0 %1273
      %1275 = vrot.lane.b32.xlu0 %v1237, 24
      %v1276 = vpop.permute.xlu0 %1275
      %1277 = vrot.lane.b32.xlu0 %v1238, 24
      %v1278 = vpop.permute.xlu0 %1277
      %1279 = vrot.lane.b32.xlu0 %v1239, 24
      %v1280 = vpop.permute.xlu0 %1279
      %1281 = vrot.lane.b32.xlu0 %v1240, 24
      %v1282 = vpop.permute.xlu0 %1281
      %1283 = vrot.lane.b32.xlu0 %v1241, 24
      %v1284 = vpop.permute.xlu0 %1283
      %1285 = vrot.lane.b32.xlu0 %v1242, 24
      %v1286 = vpop.permute.xlu0 %1285
      %1287 = vrot.lane.b32.xlu0 %v1243, 24
      %v1288 = vpop.permute.xlu0 %1287
      %1289 = vrot.lane.b32.xlu0 %v1244, 24
      %v1290 = vpop.permute.xlu0 %1289
      %1291 = vrot.lane.b32.xlu0 %v1245, 24
      %v1292 = vpop.permute.xlu0 %1291
      %1293 = vrot.lane.b32.xlu0 %v1246, 24
      %v1294 = vpop.permute.xlu0 %1293
      %vm1311 = vcmask 257216
      %1312 = vst.msk [vmem:[#allocation3] sm:$0xf] %vm1311, %v1264
      %1313 = vst.msk [vmem:[#allocation3 + $0x4] sm:$0xf] %vm1311, %v1266
      %1314 = vst.msk [vmem:[#allocation3 + $0x8] sm:$0xf] %vm1311, %v1268
      %1315 = vst.msk [vmem:[#allocation3 + $0xc] sm:$0xf] %vm1311, %v1270
      %1316 = vst.msk [vmem:[#allocation3 + $0x10] sm:$0xf] %vm1311, %v1272
      %1317 = vst.msk [vmem:[#allocation3 + $0x14] sm:$0xf] %vm1311, %v1274
      %1318 = vst.msk [vmem:[#allocation3 + $0x18] sm:$0xf] %vm1311, %v1276
      %1319 = vst.msk [vmem:[#allocation3 + $0x1c] sm:$0xf] %vm1311, %v1278
      %1320 = vst.msk [vmem:[#allocation3 + $0x20] sm:$0xf] %vm1311, %v1280
      %1321 = vst.msk [vmem:[#allocation3 + $0x24] sm:$0xf] %vm1311, %v1282
      %1322 = vst.msk [vmem:[#allocation3 + $0x28] sm:$0xf] %vm1311, %v1284
      %1323 = vst.msk [vmem:[#allocation3 + $0x2c] sm:$0xf] %vm1311, %v1286
      %1324 = vst.msk [vmem:[#allocation3 + $0x30] sm:$0xf] %vm1311, %v1288
      %1325 = vst.msk [vmem:[#allocation3 + $0x34] sm:$0xf] %vm1311, %v1290
      %1326 = vst.msk [vmem:[#allocation3 + $0x38] sm:$0xf] %vm1311, %v1292
      %1327 = vst.msk [vmem:[#allocation3 + $0x3c] sm:$0xf] %vm1311, %v1294
      %v1328 = vld [vmem:[%s514] sm:$0xf]
      %v1329 = vld [vmem:[%s514 + $0x4] sm:$0x1]
      %v1330 = vld [vmem:[%s514 + $0x8] sm:$0xf]
      %v1331 = vld [vmem:[%s514 + $0xc] sm:$0x1]
      %v1332 = vld [vmem:[%s514 + $0x10] sm:$0xf]
      %v1333 = vld [vmem:[%s514 + $0x14] sm:$0x1]
      %v1334 = vld [vmem:[%s514 + $0x18] sm:$0xf]
      %v1335 = vld [vmem:[%s514 + $0x1c] sm:$0x1]
      %v1336 = vld [vmem:[%s514 + $0x20] sm:$0xf]
      %v1337 = vld [vmem:[%s514 + $0x24] sm:$0x1]
      %v1338 = vld [vmem:[%s514 + $0x28] sm:$0xf]
      %v1339 = vld [vmem:[%s514 + $0x2c] sm:$0x1]
      %v1340 = vld [vmem:[%s514 + $0x30] sm:$0xf]
      %v1341 = vld [vmem:[%s514 + $0x34] sm:$0x1]
      %v1342 = vld [vmem:[%s514 + $0x38] sm:$0xf]
      %v1343 = vld [vmem:[%s514 + $0x3c] sm:$0x1]
      %v1344 = vld [vmem:[%s514 + $0x40] sm:$0xf]
      %v1345 = vld [vmem:[%s514 + $0x44] sm:$0x1]
      %v1346 = vld [vmem:[%s514 + $0x48] sm:$0xf]
      %v1347 = vld [vmem:[%s514 + $0x4c] sm:$0x1]
      %v1348 = vld [vmem:[%s514 + $0x50] sm:$0xf]
      %v1349 = vld [vmem:[%s514 + $0x54] sm:$0x1]
      %v1350 = vld [vmem:[%s514 + $0x58] sm:$0xf]
      %v1351 = vld [vmem:[%s514 + $0x5c] sm:$0x1]
      %v1352 = vld [vmem:[%s514 + $0x60] sm:$0xf]
      %v1353 = vld [vmem:[%s514 + $0x64] sm:$0x1]
      %v1354 = vld [vmem:[%s514 + $0x68] sm:$0xf]
      %v1355 = vld [vmem:[%s514 + $0x6c] sm:$0x1]
      %v1356 = vld [vmem:[%s514 + $0x70] sm:$0xf]
      %v1357 = vld [vmem:[%s514 + $0x74] sm:$0x1]
      %v1358 = vld [vmem:[%s514 + $0x78] sm:$0xf]
      %v1359 = vld [vmem:[%s514 + $0x7c] sm:$0x1]
      %v1361 = vshrl.u32 %v1328, 16
      %v1363 = vrot.slane %v1361, 4
      %v1364 = vshll.u32 %v1328, 16
      %v1366 = vrot.slane %v1364, 5
      %v1367 = vor.u32 %v1363, %v1366
      %v1368 = vrot.slane %v1367, 4
      %v1370 = vshll.u32 %v1329, 16
      %v1372 = vrot.slane %v1370, 5
      %v1373 = vsel %vm745, %v1368, %v1372
      %v1375 = vshrl.u32 %v1330, 16
      %v1377 = vrot.slane %v1375, 4
      %v1378 = vshll.u32 %v1330, 16
      %v1380 = vrot.slane %v1378, 5
      %v1381 = vor.u32 %v1377, %v1380
      %v1382 = vrot.slane %v1381, 4
      %v1384 = vshll.u32 %v1331, 16
      %v1386 = vrot.slane %v1384, 5
      %v1387 = vsel %vm745, %v1382, %v1386
      %v1389 = vshrl.u32 %v1332, 16
      %v1391 = vrot.slane %v1389, 4
      %v1392 = vshll.u32 %v1332, 16
      %v1394 = vrot.slane %v1392, 5
      %v1395 = vor.u32 %v1391, %v1394
      %v1396 = vrot.slane %v1395, 4
      %v1398 = vshll.u32 %v1333, 16
      %v1400 = vrot.slane %v1398, 5
      %v1401 = vsel %vm745, %v1396, %v1400
      %v1403 = vshrl.u32 %v1334, 16
      %v1405 = vrot.slane %v1403, 4
      %v1406 = vshll.u32 %v1334, 16
      %v1408 = vrot.slane %v1406, 5
      %v1409 = vor.u32 %v1405, %v1408
      %v1410 = vrot.slane %v1409, 4
      %v1412 = vshll.u32 %v1335, 16
      %v1414 = vrot.slane %v1412, 5
      %v1415 = vsel %vm745, %v1410, %v1414
      %v1417 = vshrl.u32 %v1336, 16
      %v1419 = vrot.slane %v1417, 4
      %v1420 = vshll.u32 %v1336, 16
      %v1422 = vrot.slane %v1420, 5
      %v1423 = vor.u32 %v1419, %v1422
      %v1424 = vrot.slane %v1423, 4
      %v1426 = vshll.u32 %v1337, 16
      %v1428 = vrot.slane %v1426, 5
      %v1429 = vsel %vm745, %v1424, %v1428
      %v1431 = vshrl.u32 %v1338, 16
      %v1433 = vrot.slane %v1431, 4
      %v1434 = vshll.u32 %v1338, 16
      %v1436 = vrot.slane %v1434, 5
      %v1437 = vor.u32 %v1433, %v1436
      %v1438 = vrot.slane %v1437, 4
      %v1440 = vshll.u32 %v1339, 16
      %v1442 = vrot.slane %v1440, 5
      %v1443 = vsel %vm745, %v1438, %v1442
      %v1445 = vshrl.u32 %v1340, 16
      %v1447 = vrot.slane %v1445, 4
      %v1448 = vshll.u32 %v1340, 16
      %v1450 = vrot.slane %v1448, 5
      %v1451 = vor.u32 %v1447, %v1450
      %v1452 = vrot.slane %v1451, 4
      %v1454 = vshll.u32 %v1341, 16
      %v1456 = vrot.slane %v1454, 5
      %v1457 = vsel %vm745, %v1452, %v1456
      %v1459 = vshrl.u32 %v1342, 16
      %v1461 = vrot.slane %v1459, 4
      %v1462 = vshll.u32 %v1342, 16
      %v1464 = vrot.slane %v1462, 5
      %v1465 = vor.u32 %v1461, %v1464
      %v1466 = vrot.slane %v1465, 4
      %v1468 = vshll.u32 %v1343, 16
      %v1470 = vrot.slane %v1468, 5
      %v1471 = vsel %vm745, %v1466, %v1470
      %v1473 = vshrl.u32 %v1344, 16
      %v1475 = vrot.slane %v1473, 4
      %v1476 = vshll.u32 %v1344, 16
      %v1478 = vrot.slane %v1476, 5
      %v1479 = vor.u32 %v1475, %v1478
      %v1480 = vrot.slane %v1479, 4
      %v1482 = vshll.u32 %v1345, 16
      %v1484 = vrot.slane %v1482, 5
      %v1485 = vsel %vm745, %v1480, %v1484
      %v1487 = vshrl.u32 %v1346, 16
      %v1489 = vrot.slane %v1487, 4
      %v1490 = vshll.u32 %v1346, 16
      %v1492 = vrot.slane %v1490, 5
      %v1493 = vor.u32 %v1489, %v1492
      %v1494 = vrot.slane %v1493, 4
      %v1496 = vshll.u32 %v1347, 16
      %v1498 = vrot.slane %v1496, 5
      %v1499 = vsel %vm745, %v1494, %v1498
      %v1501 = vshrl.u32 %v1348, 16
      %v1503 = vrot.slane %v1501, 4
      %v1504 = vshll.u32 %v1348, 16
      %v1506 = vrot.slane %v1504, 5
      %v1507 = vor.u32 %v1503, %v1506
      %v1508 = vrot.slane %v1507, 4
      %v1510 = vshll.u32 %v1349, 16
      %v1512 = vrot.slane %v1510, 5
      %v1513 = vsel %vm745, %v1508, %v1512
      %v1515 = vshrl.u32 %v1350, 16
      %v1517 = vrot.slane %v1515, 4
      %v1518 = vshll.u32 %v1350, 16
      %v1520 = vrot.slane %v1518, 5
      %v1521 = vor.u32 %v1517, %v1520
      %v1522 = vrot.slane %v1521, 4
      %v1524 = vshll.u32 %v1351, 16
      %v1526 = vrot.slane %v1524, 5
      %v1527 = vsel %vm745, %v1522, %v1526
      %v1529 = vshrl.u32 %v1352, 16
      %v1531 = vrot.slane %v1529, 4
      %v1532 = vshll.u32 %v1352, 16
      %v1534 = vrot.slane %v1532, 5
      %v1535 = vor.u32 %v1531, %v1534
      %v1536 = vrot.slane %v1535, 4
      %v1538 = vshll.u32 %v1353, 16
      %v1540 = vrot.slane %v1538, 5
      %v1541 = vsel %vm745, %v1536, %v1540
      %v1543 = vshrl.u32 %v1354, 16
      %v1545 = vrot.slane %v1543, 4
      %v1546 = vshll.u32 %v1354, 16
      %v1548 = vrot.slane %v1546, 5
      %v1549 = vor.u32 %v1545, %v1548
      %v1550 = vrot.slane %v1549, 4
      %v1552 = vshll.u32 %v1355, 16
      %v1554 = vrot.slane %v1552, 5
      %v1555 = vsel %vm745, %v1550, %v1554
      %v1557 = vshrl.u32 %v1356, 16
      %v1559 = vrot.slane %v1557, 4
      %v1560 = vshll.u32 %v1356, 16
      %v1562 = vrot.slane %v1560, 5
      %v1563 = vor.u32 %v1559, %v1562
      %v1564 = vrot.slane %v1563, 4
      %v1566 = vshll.u32 %v1357, 16
      %v1568 = vrot.slane %v1566, 5
      %v1569 = vsel %vm745, %v1564, %v1568
      %v1571 = vshrl.u32 %v1358, 16
      %v1573 = vrot.slane %v1571, 4
      %v1574 = vshll.u32 %v1358, 16
      %v1576 = vrot.slane %v1574, 5
      %v1577 = vor.u32 %v1573, %v1576
      %v1578 = vrot.slane %v1577, 4
      %v1580 = vshll.u32 %v1359, 16
      %v1582 = vrot.slane %v1580, 5
      %v1583 = vsel %vm745, %v1578, %v1582
      %1584 = vrot.lane.b32.xlu0 %v1373, 32
      %v1585 = vpop.permute.xlu0 %1584
      %1586 = vrot.lane.b32.xlu0 %v1387, 32
      %v1587 = vpop.permute.xlu0 %1586
      %1588 = vrot.lane.b32.xlu0 %v1401, 32
      %v1589 = vpop.permute.xlu0 %1588
      %1590 = vrot.lane.b32.xlu0 %v1415, 32
      %v1591 = vpop.permute.xlu0 %1590
      %1592 = vrot.lane.b32.xlu0 %v1429, 32
      %v1593 = vpop.permute.xlu0 %1592
      %1594 = vrot.lane.b32.xlu0 %v1443, 32
      %v1595 = vpop.permute.xlu0 %1594
      %1596 = vrot.lane.b32.xlu0 %v1457, 32
      %v1597 = vpop.permute.xlu0 %1596
      %1598 = vrot.lane.b32.xlu0 %v1471, 32
      %v1599 = vpop.permute.xlu0 %1598
      %1600 = vrot.lane.b32.xlu0 %v1485, 32
      %v1601 = vpop.permute.xlu0 %1600
      %1602 = vrot.lane.b32.xlu0 %v1499, 32
      %v1603 = vpop.permute.xlu0 %1602
      %1604 = vrot.lane.b32.xlu0 %v1513, 32
      %v1605 = vpop.permute.xlu0 %1604
      %1606 = vrot.lane.b32.xlu0 %v1527, 32
      %v1607 = vpop.permute.xlu0 %1606
      %1608 = vrot.lane.b32.xlu0 %v1541, 32
      %v1609 = vpop.permute.xlu0 %1608
      %1610 = vrot.lane.b32.xlu0 %v1555, 32
      %v1611 = vpop.permute.xlu0 %1610
      %1612 = vrot.lane.b32.xlu0 %v1569, 32
      %v1613 = vpop.permute.xlu0 %1612
      %1614 = vrot.lane.b32.xlu0 %v1583, 32
      %v1615 = vpop.permute.xlu0 %1614
      %vm1632 = vcmask 322816
      %1633 = vst.msk [vmem:[#allocation3] sm:$0xf] %vm1632, %v1585
      %1634 = vst.msk [vmem:[#allocation3 + $0x4] sm:$0xf] %vm1632, %v1587
      %1635 = vst.msk [vmem:[#allocation3 + $0x8] sm:$0xf] %vm1632, %v1589
      %1636 = vst.msk [vmem:[#allocation3 + $0xc] sm:$0xf] %vm1632, %v1591
      %1637 = vst.msk [vmem:[#allocation3 + $0x10] sm:$0xf] %vm1632, %v1593
      %1638 = vst.msk [vmem:[#allocation3 + $0x14] sm:$0xf] %vm1632, %v1595
      %1639 = vst.msk [vmem:[#allocation3 + $0x18] sm:$0xf] %vm1632, %v1597
      %1640 = vst.msk [vmem:[#allocation3 + $0x1c] sm:$0xf] %vm1632, %v1599
      %1641 = vst.msk [vmem:[#allocation3 + $0x20] sm:$0xf] %vm1632, %v1601
      %1642 = vst.msk [vmem:[#allocation3 + $0x24] sm:$0xf] %vm1632, %v1603
      %1643 = vst.msk [vmem:[#allocation3 + $0x28] sm:$0xf] %vm1632, %v1605
      %1644 = vst.msk [vmem:[#allocation3 + $0x2c] sm:$0xf] %vm1632, %v1607
      %1645 = vst.msk [vmem:[#allocation3 + $0x30] sm:$0xf] %vm1632, %v1609
      %1646 = vst.msk [vmem:[#allocation3 + $0x34] sm:$0xf] %vm1632, %v1611
      %1647 = vst.msk [vmem:[#allocation3 + $0x38] sm:$0xf] %vm1632, %v1613
      %1648 = vst.msk [vmem:[#allocation3 + $0x3c] sm:$0xf] %vm1632, %v1615
      %v1649 = vld [vmem:[%s514] sm:$0xe]
      %v1650 = vld [vmem:[%s514 + $0x4] sm:$0x1]
      %v1651 = vld [vmem:[%s514 + $0x8] sm:$0xe]
      %v1652 = vld [vmem:[%s514 + $0xc] sm:$0x1]
      %v1653 = vld [vmem:[%s514 + $0x10] sm:$0xe]
      %v1654 = vld [vmem:[%s514 + $0x14] sm:$0x1]
      %v1655 = vld [vmem:[%s514 + $0x18] sm:$0xe]
      %v1656 = vld [vmem:[%s514 + $0x1c] sm:$0x1]
      %v1657 = vld [vmem:[%s514 + $0x20] sm:$0xe]
      %v1658 = vld [vmem:[%s514 + $0x24] sm:$0x1]
      %v1659 = vld [vmem:[%s514 + $0x28] sm:$0xe]
      %v1660 = vld [vmem:[%s514 + $0x2c] sm:$0x1]
      %v1661 = vld [vmem:[%s514 + $0x30] sm:$0xe]
      %v1662 = vld [vmem:[%s514 + $0x34] sm:$0x1]
      %v1663 = vld [vmem:[%s514 + $0x38] sm:$0xe]
      %v1664 = vld [vmem:[%s514 + $0x3c] sm:$0x1]
      %v1665 = vld [vmem:[%s514 + $0x40] sm:$0xe]
      %v1666 = vld [vmem:[%s514 + $0x44] sm:$0x1]
      %v1667 = vld [vmem:[%s514 + $0x48] sm:$0xe]
      %v1668 = vld [vmem:[%s514 + $0x4c] sm:$0x1]
      %v1669 = vld [vmem:[%s514 + $0x50] sm:$0xe]
      %v1670 = vld [vmem:[%s514 + $0x54] sm:$0x1]
      %v1671 = vld [vmem:[%s514 + $0x58] sm:$0xe]
      %v1672 = vld [vmem:[%s514 + $0x5c] sm:$0x1]
      %v1673 = vld [vmem:[%s514 + $0x60] sm:$0xe]
      %v1674 = vld [vmem:[%s514 + $0x64] sm:$0x1]
      %v1675 = vld [vmem:[%s514 + $0x68] sm:$0xe]
      %v1676 = vld [vmem:[%s514 + $0x6c] sm:$0x1]
      %v1677 = vld [vmem:[%s514 + $0x70] sm:$0xe]
      %v1678 = vld [vmem:[%s514 + $0x74] sm:$0x1]
      %v1679 = vld [vmem:[%s514 + $0x78] sm:$0xe]
      %v1680 = vld [vmem:[%s514 + $0x7c] sm:$0x1]
      %v1713 = vrot.slane %v1649, 5
      %v1714 = vrot.slane %v1713, 4
      %v1715 = vrot.slane %v1650, 5
      %v1716 = vsel %vm1101, %v1714, %v1715
      %v1717 = vrot.slane %v1651, 5
      %v1718 = vrot.slane %v1717, 4
      %v1719 = vrot.slane %v1652, 5
      %v1720 = vsel %vm1101, %v1718, %v1719
      %v1721 = vrot.slane %v1653, 5
      %v1722 = vrot.slane %v1721, 4
      %v1723 = vrot.slane %v1654, 5
      %v1724 = vsel %vm1101, %v1722, %v1723
      %v1725 = vrot.slane %v1655, 5
      %v1726 = vrot.slane %v1725, 4
      %v1727 = vrot.slane %v1656, 5
      %v1728 = vsel %vm1101, %v1726, %v1727
      %v1729 = vrot.slane %v1657, 5
      %v1730 = vrot.slane %v1729, 4
      %v1731 = vrot.slane %v1658, 5
      %v1732 = vsel %vm1101, %v1730, %v1731
      %v1733 = vrot.slane %v1659, 5
      %v1734 = vrot.slane %v1733, 4
      %v1735 = vrot.slane %v1660, 5
      %v1736 = vsel %vm1101, %v1734, %v1735
      %v1737 = vrot.slane %v1661, 5
      %v1738 = vrot.slane %v1737, 4
      %v1739 = vrot.slane %v1662, 5
      %v1740 = vsel %vm1101, %v1738, %v1739
      %v1741 = vrot.slane %v1663, 5
      %v1742 = vrot.slane %v1741, 4
      %v1743 = vrot.slane %v1664, 5
      %v1744 = vsel %vm1101, %v1742, %v1743
      %v1745 = vrot.slane %v1665, 5
      %v1746 = vrot.slane %v1745, 4
      %v1747 = vrot.slane %v1666, 5
      %v1748 = vsel %vm1101, %v1746, %v1747
      %v1749 = vrot.slane %v1667, 5
      %v1750 = vrot.slane %v1749, 4
      %v1751 = vrot.slane %v1668, 5
      %v1752 = vsel %vm1101, %v1750, %v1751
      %v1753 = vrot.slane %v1669, 5
      %v1754 = vrot.slane %v1753, 4
      %v1755 = vrot.slane %v1670, 5
      %v1756 = vsel %vm1101, %v1754, %v1755
      %v1757 = vrot.slane %v1671, 5
      %v1758 = vrot.slane %v1757, 4
      %v1759 = vrot.slane %v1672, 5
      %v1760 = vsel %vm1101, %v1758, %v1759
      %v1761 = vrot.slane %v1673, 5
      %v1762 = vrot.slane %v1761, 4
      %v1763 = vrot.slane %v1674, 5
      %v1764 = vsel %vm1101, %v1762, %v1763
      %v1765 = vrot.slane %v1675, 5
      %v1766 = vrot.slane %v1765, 4
      %v1767 = vrot.slane %v1676, 5
      %v1768 = vsel %vm1101, %v1766, %v1767
      %v1769 = vrot.slane %v1677, 5
      %v1770 = vrot.slane %v1769, 4
      %v1771 = vrot.slane %v1678, 5
      %v1772 = vsel %vm1101, %v1770, %v1771
      %v1773 = vrot.slane %v1679, 5
      %v1774 = vrot.slane %v1773, 4
      %v1775 = vrot.slane %v1680, 5
      %v1776 = vsel %vm1101, %v1774, %v1775
      %1777 = vrot.lane.b32.xlu0 %v1716, 40
      %v1778 = vpop.permute.xlu0 %1777
      %1779 = vrot.lane.b32.xlu0 %v1720, 40
      %v1780 = vpop.permute.xlu0 %1779
      %1781 = vrot.lane.b32.xlu0 %v1724, 40
      %v1782 = vpop.permute.xlu0 %1781
      %1783 = vrot.lane.b32.xlu0 %v1728, 40
      %v1784 = vpop.permute.xlu0 %1783
      %1785 = vrot.lane.b32.xlu0 %v1732, 40
      %v1786 = vpop.permute.xlu0 %1785
      %1787 = vrot.lane.b32.xlu0 %v1736, 40
      %v1788 = vpop.permute.xlu0 %1787
      %1789 = vrot.lane.b32.xlu0 %v1740, 40
      %v1790 = vpop.permute.xlu0 %1789
      %1791 = vrot.lane.b32.xlu0 %v1744, 40
      %v1792 = vpop.permute.xlu0 %1791
      %1793 = vrot.lane.b32.xlu0 %v1748, 40
      %v1794 = vpop.permute.xlu0 %1793
      %1795 = vrot.lane.b32.xlu0 %v1752, 40
      %v1796 = vpop.permute.xlu0 %1795
      %1797 = vrot.lane.b32.xlu0 %v1756, 40
      %v1798 = vpop.permute.xlu0 %1797
      %1799 = vrot.lane.b32.xlu0 %v1760, 40
      %v1800 = vpop.permute.xlu0 %1799
      %1801 = vrot.lane.b32.xlu0 %v1764, 40
      %v1802 = vpop.permute.xlu0 %1801
      %1803 = vrot.lane.b32.xlu0 %v1768, 40
      %v1804 = vpop.permute.xlu0 %1803
      %1805 = vrot.lane.b32.xlu0 %v1772, 40
      %v1806 = vpop.permute.xlu0 %1805
      %1807 = vrot.lane.b32.xlu0 %v1776, 40
      %v1808 = vpop.permute.xlu0 %1807
      %vm1825 = vcmask 388416
      %1826 = vst.msk [vmem:[#allocation3] sm:$0xf] %vm1825, %v1778
      %1827 = vst.msk [vmem:[#allocation3 + $0x4] sm:$0xf] %vm1825, %v1780
      %1828 = vst.msk [vmem:[#allocation3 + $0x8] sm:$0xf] %vm1825, %v1782
      %1829 = vst.msk [vmem:[#allocation3 + $0xc] sm:$0xf] %vm1825, %v1784
      %1830 = vst.msk [vmem:[#allocation3 + $0x10] sm:$0xf] %vm1825, %v1786
      %1831 = vst.msk [vmem:[#allocation3 + $0x14] sm:$0xf] %vm1825, %v1788
      %1832 = vst.msk [vmem:[#allocation3 + $0x18] sm:$0xf] %vm1825, %v1790
      %1833 = vst.msk [vmem:[#allocation3 + $0x1c] sm:$0xf] %vm1825, %v1792
      %1834 = vst.msk [vmem:[#allocation3 + $0x20] sm:$0xf] %vm1825, %v1794
      %1835 = vst.msk [vmem:[#allocation3 + $0x24] sm:$0xf] %vm1825, %v1796
      %1836 = vst.msk [vmem:[#allocation3 + $0x28] sm:$0xf] %vm1825, %v1798
      %1837 = vst.msk [vmem:[#allocation3 + $0x2c] sm:$0xf] %vm1825, %v1800
      %1838 = vst.msk [vmem:[#allocation3 + $0x30] sm:$0xf] %vm1825, %v1802
      %1839 = vst.msk [vmem:[#allocation3 + $0x34] sm:$0xf] %vm1825, %v1804
      %1840 = vst.msk [vmem:[#allocation3 + $0x38] sm:$0xf] %vm1825, %v1806
      %1841 = vst.msk [vmem:[#allocation3 + $0x3c] sm:$0xf] %vm1825, %v1808
      %s1842 = scalar_lea.vmem [#allocation2], 16
      %v1843 = vld [vmem:[%s1842] sm:$0xf]
      %v1844 = vld [vmem:[%s1842 + $0x8] sm:$0xf]
      %v1845 = vld [vmem:[%s1842 + $0x10] sm:$0xf]
      %v1846 = vld [vmem:[%s1842 + $0x18] sm:$0xf]
      %v1847 = vld [vmem:[%s1842 + $0x20] sm:$0xf]
      %v1848 = vld [vmem:[%s1842 + $0x28] sm:$0xf]
      %v1849 = vld [vmem:[%s1842 + $0x30] sm:$0xf]
      %v1850 = vld [vmem:[%s1842 + $0x38] sm:$0xf]
      %v1851 = vld [vmem:[%s1842 + $0x40] sm:$0xf]
      %v1852 = vld [vmem:[%s1842 + $0x48] sm:$0xf]
      %v1853 = vld [vmem:[%s1842 + $0x50] sm:$0xf]
      %v1854 = vld [vmem:[%s1842 + $0x58] sm:$0xf]
      %v1855 = vld [vmem:[%s1842 + $0x60] sm:$0xf]
      %v1856 = vld [vmem:[%s1842 + $0x68] sm:$0xf]
      %v1857 = vld [vmem:[%s1842 + $0x70] sm:$0xf]
      %v1858 = vld [vmem:[%s1842 + $0x78] sm:$0xf]
      %1875 = vrot.lane.b32.xlu0 %v1843, 48
      %v1876 = vpop.permute.xlu0 %1875
      %1877 = vrot.lane.b32.xlu0 %v1844, 48
      %v1878 = vpop.permute.xlu0 %1877
      %1879 = vrot.lane.b32.xlu0 %v1845, 48
      %v1880 = vpop.permute.xlu0 %1879
      %1881 = vrot.lane.b32.xlu0 %v1846, 48
      %v1882 = vpop.permute.xlu0 %1881
      %1883 = vrot.lane.b32.xlu0 %v1847, 48
      %v1884 = vpop.permute.xlu0 %1883
      %1885 = vrot.lane.b32.xlu0 %v1848, 48
      %v1886 = vpop.permute.xlu0 %1885
      %1887 = vrot.lane.b32.xlu0 %v1849, 48
      %v1888 = vpop.permute.xlu0 %1887
      %1889 = vrot.lane.b32.xlu0 %v1850, 48
      %v1890 = vpop.permute.xlu0 %1889
      %1891 = vrot.lane.b32.xlu0 %v1851, 48
      %v1892 = vpop.permute.xlu0 %1891
      %1893 = vrot.lane.b32.xlu0 %v1852, 48
      %v1894 = vpop.permute.xlu0 %1893
      %1895 = vrot.lane.b32.xlu0 %v1853, 48
      %v1896 = vpop.permute.xlu0 %1895
      %1897 = vrot.lane.b32.xlu0 %v1854, 48
      %v1898 = vpop.permute.xlu0 %1897
      %1899 = vrot.lane.b32.xlu0 %v1855, 48
      %v1900 = vpop.permute.xlu0 %1899
      %1901 = vrot.lane.b32.xlu0 %v1856, 48
      %v1902 = vpop.permute.xlu0 %1901
      %1903 = vrot.lane.b32.xlu0 %v1857, 48
      %v1904 = vpop.permute.xlu0 %1903
      %1905 = vrot.lane.b32.xlu0 %v1858, 48
      %v1906 = vpop.permute.xlu0 %1905
      %vm1923 = vcmask 454016
      %1924 = vst.msk [vmem:[#allocation3] sm:$0xf] %vm1923, %v1876
      %1925 = vst.msk [vmem:[#allocation3 + $0x4] sm:$0xf] %vm1923, %v1878
      %1926 = vst.msk [vmem:[#allocation3 + $0x8] sm:$0xf] %vm1923, %v1880
      %1927 = vst.msk [vmem:[#allocation3 + $0xc] sm:$0xf] %vm1923, %v1882
      %1928 = vst.msk [vmem:[#allocation3 + $0x10] sm:$0xf] %vm1923, %v1884
      %1929 = vst.msk [vmem:[#allocation3 + $0x14] sm:$0xf] %vm1923, %v1886
      %1930 = vst.msk [vmem:[#allocation3 + $0x18] sm:$0xf] %vm1923, %v1888
      %1931 = vst.msk [vmem:[#allocation3 + $0x1c] sm:$0xf] %vm1923, %v1890
      %1932 = vst.msk [vmem:[#allocation3 + $0x20] sm:$0xf] %vm1923, %v1892
      %1933 = vst.msk [vmem:[#allocation3 + $0x24] sm:$0xf] %vm1923, %v1894
      %1934 = vst.msk [vmem:[#allocation3 + $0x28] sm:$0xf] %vm1923, %v1896
      %1935 = vst.msk [vmem:[#allocation3 + $0x2c] sm:$0xf] %vm1923, %v1898
      %1936 = vst.msk [vmem:[#allocation3 + $0x30] sm:$0xf] %vm1923, %v1900
      %1937 = vst.msk [vmem:[#allocation3 + $0x34] sm:$0xf] %vm1923, %v1902
      %1938 = vst.msk [vmem:[#allocation3 + $0x38] sm:$0xf] %vm1923, %v1904
      %1939 = vst.msk [vmem:[#allocation3 + $0x3c] sm:$0xf] %vm1923, %v1906
      %v1940 = vld [vmem:[%s1842] sm:$0xf]
      %v1941 = vld [vmem:[%s1842 + $0x4] sm:$0x1]
      %v1942 = vld [vmem:[%s1842 + $0x8] sm:$0xf]
      %v1943 = vld [vmem:[%s1842 + $0xc] sm:$0x1]
      %v1944 = vld [vmem:[%s1842 + $0x10] sm:$0xf]
      %v1945 = vld [vmem:[%s1842 + $0x14] sm:$0x1]
      %v1946 = vld [vmem:[%s1842 + $0x18] sm:$0xf]
      %v1947 = vld [vmem:[%s1842 + $0x1c] sm:$0x1]
      %v1948 = vld [vmem:[%s1842 + $0x20] sm:$0xf]
      %v1949 = vld [vmem:[%s1842 + $0x24] sm:$0x1]
      %v1950 = vld [vmem:[%s1842 + $0x28] sm:$0xf]
      %v1951 = vld [vmem:[%s1842 + $0x2c] sm:$0x1]
      %v1952 = vld [vmem:[%s1842 + $0x30] sm:$0xf]
      %v1953 = vld [vmem:[%s1842 + $0x34] sm:$0x1]
      %v1954 = vld [vmem:[%s1842 + $0x38] sm:$0xf]
      %v1955 = vld [vmem:[%s1842 + $0x3c] sm:$0x1]
      %v1956 = vld [vmem:[%s1842 + $0x40] sm:$0xf]
      %v1957 = vld [vmem:[%s1842 + $0x44] sm:$0x1]
      %v1958 = vld [vmem:[%s1842 + $0x48] sm:$0xf]
      %v1959 = vld [vmem:[%s1842 + $0x4c] sm:$0x1]
      %v1960 = vld [vmem:[%s1842 + $0x50] sm:$0xf]
      %v1961 = vld [vmem:[%s1842 + $0x54] sm:$0x1]
      %v1962 = vld [vmem:[%s1842 + $0x58] sm:$0xf]
      %v1963 = vld [vmem:[%s1842 + $0x5c] sm:$0x1]
      %v1964 = vld [vmem:[%s1842 + $0x60] sm:$0xf]
      %v1965 = vld [vmem:[%s1842 + $0x64] sm:$0x1]
      %v1966 = vld [vmem:[%s1842 + $0x68] sm:$0xf]
      %v1967 = vld [vmem:[%s1842 + $0x6c] sm:$0x1]
      %v1968 = vld [vmem:[%s1842 + $0x70] sm:$0xf]
      %v1969 = vld [vmem:[%s1842 + $0x74] sm:$0x1]
      %v1970 = vld [vmem:[%s1842 + $0x78] sm:$0xf]
      %v1971 = vld [vmem:[%s1842 + $0x7c] sm:$0x1]
      %v1973 = vshrl.u32 %v1940, 16
      %v1975 = vrot.slane %v1973, 4
      %v1976 = vshll.u32 %v1940, 16
      %v1978 = vrot.slane %v1976, 5
      %v1979 = vor.u32 %v1975, %v1978
      %v1980 = vrot.slane %v1979, 4
      %v1982 = vshll.u32 %v1941, 16
      %v1984 = vrot.slane %v1982, 5
      %v1985 = vsel %vm745, %v1980, %v1984
      %v1987 = vshrl.u32 %v1942, 16
      %v1989 = vrot.slane %v1987, 4
      %v1990 = vshll.u32 %v1942, 16
      %v1992 = vrot.slane %v1990, 5
      %v1993 = vor.u32 %v1989, %v1992
      %v1994 = vrot.slane %v1993, 4
      %v1996 = vshll.u32 %v1943, 16
      %v1998 = vrot.slane %v1996, 5
      %v1999 = vsel %vm745, %v1994, %v1998
      %v2001 = vshrl.u32 %v1944, 16
      %v2003 = vrot.slane %v2001, 4
      %v2004 = vshll.u32 %v1944, 16
      %v2006 = vrot.slane %v2004, 5
      %v2007 = vor.u32 %v2003, %v2006
      %v2008 = vrot.slane %v2007, 4
      %v2010 = vshll.u32 %v1945, 16
      %v2012 = vrot.slane %v2010, 5
      %v2013 = vsel %vm745, %v2008, %v2012
      %v2015 = vshrl.u32 %v1946, 16
      %v2017 = vrot.slane %v2015, 4
      %v2018 = vshll.u32 %v1946, 16
      %v2020 = vrot.slane %v2018, 5
      %v2021 = vor.u32 %v2017, %v2020
      %v2022 = vrot.slane %v2021, 4
      %v2024 = vshll.u32 %v1947, 16
      %v2026 = vrot.slane %v2024, 5
      %v2027 = vsel %vm745, %v2022, %v2026
      %v2029 = vshrl.u32 %v1948, 16
      %v2031 = vrot.slane %v2029, 4
      %v2032 = vshll.u32 %v1948, 16
      %v2034 = vrot.slane %v2032, 5
      %v2035 = vor.u32 %v2031, %v2034
      %v2036 = vrot.slane %v2035, 4
      %v2038 = vshll.u32 %v1949, 16
      %v2040 = vrot.slane %v2038, 5
      %v2041 = vsel %vm745, %v2036, %v2040
      %v2043 = vshrl.u32 %v1950, 16
      %v2045 = vrot.slane %v2043, 4
      %v2046 = vshll.u32 %v1950, 16
      %v2048 = vrot.slane %v2046, 5
      %v2049 = vor.u32 %v2045, %v2048
      %v2050 = vrot.slane %v2049, 4
      %v2052 = vshll.u32 %v1951, 16
      %v2054 = vrot.slane %v2052, 5
      %v2055 = vsel %vm745, %v2050, %v2054
      %v2057 = vshrl.u32 %v1952, 16
      %v2059 = vrot.slane %v2057, 4
      %v2060 = vshll.u32 %v1952, 16
      %v2062 = vrot.slane %v2060, 5
      %v2063 = vor.u32 %v2059, %v2062
      %v2064 = vrot.slane %v2063, 4
      %v2066 = vshll.u32 %v1953, 16
      %v2068 = vrot.slane %v2066, 5
      %v2069 = vsel %vm745, %v2064, %v2068
      %v2071 = vshrl.u32 %v1954, 16
      %v2073 = vrot.slane %v2071, 4
      %v2074 = vshll.u32 %v1954, 16
      %v2076 = vrot.slane %v2074, 5
      %v2077 = vor.u32 %v2073, %v2076
      %v2078 = vrot.slane %v2077, 4
      %v2080 = vshll.u32 %v1955, 16
      %v2082 = vrot.slane %v2080, 5
      %v2083 = vsel %vm745, %v2078, %v2082
      %v2085 = vshrl.u32 %v1956, 16
      %v2087 = vrot.slane %v2085, 4
      %v2088 = vshll.u32 %v1956, 16
      %v2090 = vrot.slane %v2088, 5
      %v2091 = vor.u32 %v2087, %v2090
      %v2092 = vrot.slane %v2091, 4
      %v2094 = vshll.u32 %v1957, 16
      %v2096 = vrot.slane %v2094, 5
      %v2097 = vsel %vm745, %v2092, %v2096
      %v2099 = vshrl.u32 %v1958, 16
      %v2101 = vrot.slane %v2099, 4
      %v2102 = vshll.u32 %v1958, 16
      %v2104 = vrot.slane %v2102, 5
      %v2105 = vor.u32 %v2101, %v2104
      %v2106 = vrot.slane %v2105, 4
      %v2108 = vshll.u32 %v1959, 16
      %v2110 = vrot.slane %v2108, 5
      %v2111 = vsel %vm745, %v2106, %v2110
      %v2113 = vshrl.u32 %v1960, 16
      %v2115 = vrot.slane %v2113, 4
      %v2116 = vshll.u32 %v1960, 16
      %v2118 = vrot.slane %v2116, 5
      %v2119 = vor.u32 %v2115, %v2118
      %v2120 = vrot.slane %v2119, 4
      %v2122 = vshll.u32 %v1961, 16
      %v2124 = vrot.slane %v2122, 5
      %v2125 = vsel %vm745, %v2120, %v2124
      %v2127 = vshrl.u32 %v1962, 16
      %v2129 = vrot.slane %v2127, 4
      %v2130 = vshll.u32 %v1962, 16
      %v2132 = vrot.slane %v2130, 5
      %v2133 = vor.u32 %v2129, %v2132
      %v2134 = vrot.slane %v2133, 4
      %v2136 = vshll.u32 %v1963, 16
      %v2138 = vrot.slane %v2136, 5
      %v2139 = vsel %vm745, %v2134, %v2138
      %v2141 = vshrl.u32 %v1964, 16
      %v2143 = vrot.slane %v2141, 4
      %v2144 = vshll.u32 %v1964, 16
      %v2146 = vrot.slane %v2144, 5
      %v2147 = vor.u32 %v2143, %v2146
      %v2148 = vrot.slane %v2147, 4
      %v2150 = vshll.u32 %v1965, 16
      %v2152 = vrot.slane %v2150, 5
      %v2153 = vsel %vm745, %v2148, %v2152
      %v2155 = vshrl.u32 %v1966, 16
      %v2157 = vrot.slane %v2155, 4
      %v2158 = vshll.u32 %v1966, 16
      %v2160 = vrot.slane %v2158, 5
      %v2161 = vor.u32 %v2157, %v2160
      %v2162 = vrot.slane %v2161, 4
      %v2164 = vshll.u32 %v1967, 16
      %v2166 = vrot.slane %v2164, 5
      %v2167 = vsel %vm745, %v2162, %v2166
      %v2169 = vshrl.u32 %v1968, 16
      %v2171 = vrot.slane %v2169, 4
      %v2172 = vshll.u32 %v1968, 16
      %v2174 = vrot.slane %v2172, 5
      %v2175 = vor.u32 %v2171, %v2174
      %v2176 = vrot.slane %v2175, 4
      %v2178 = vshll.u32 %v1969, 16
      %v2180 = vrot.slane %v2178, 5
      %v2181 = vsel %vm745, %v2176, %v2180
      %v2183 = vshrl.u32 %v1970, 16
      %v2185 = vrot.slane %v2183, 4
      %v2186 = vshll.u32 %v1970, 16
      %v2188 = vrot.slane %v2186, 5
      %v2189 = vor.u32 %v2185, %v2188
      %v2190 = vrot.slane %v2189, 4
      %v2192 = vshll.u32 %v1971, 16
      %v2194 = vrot.slane %v2192, 5
      %v2195 = vsel %vm745, %v2190, %v2194
      %2196 = vrot.lane.b32.xlu0 %v1985, 56
      %v2197 = vpop.permute.xlu0 %2196
      %2198 = vrot.lane.b32.xlu0 %v1999, 56
      %v2199 = vpop.permute.xlu0 %2198
      %2200 = vrot.lane.b32.xlu0 %v2013, 56
      %v2201 = vpop.permute.xlu0 %2200
      %2202 = vrot.lane.b32.xlu0 %v2027, 56
      %v2203 = vpop.permute.xlu0 %2202
      %2204 = vrot.lane.b32.xlu0 %v2041, 56
      %v2205 = vpop.permute.xlu0 %2204
      %2206 = vrot.lane.b32.xlu0 %v2055, 56
      %v2207 = vpop.permute.xlu0 %2206
      %2208 = vrot.lane.b32.xlu0 %v2069, 56
      %v2209 = vpop.permute.xlu0 %2208
      %2210 = vrot.lane.b32.xlu0 %v2083, 56
      %v2211 = vpop.permute.xlu0 %2210
      %2212 = vrot.lane.b32.xlu0 %v2097, 56
      %v2213 = vpop.permute.xlu0 %2212
      %2214 = vrot.lane.b32.xlu0 %v2111, 56
      %v2215 = vpop.permute.xlu0 %2214
      %2216 = vrot.lane.b32.xlu0 %v2125, 56
      %v2217 = vpop.permute.xlu0 %2216
      %2218 = vrot.lane.b32.xlu0 %v2139, 56
      %v2219 = vpop.permute.xlu0 %2218
      %2220 = vrot.lane.b32.xlu0 %v2153, 56
      %v2221 = vpop.permute.xlu0 %2220
      %2222 = vrot.lane.b32.xlu0 %v2167, 56
      %v2223 = vpop.permute.xlu0 %2222
      %2224 = vrot.lane.b32.xlu0 %v2181, 56
      %v2225 = vpop.permute.xlu0 %2224
      %2226 = vrot.lane.b32.xlu0 %v2195, 56
      %v2227 = vpop.permute.xlu0 %2226
      %vm2244 = vcmask 519616
      %2245 = vst.msk [vmem:[#allocation3] sm:$0xf] %vm2244, %v2197
      %2246 = vst.msk [vmem:[#allocation3 + $0x4] sm:$0xf] %vm2244, %v2199
      %2247 = vst.msk [vmem:[#allocation3 + $0x8] sm:$0xf] %vm2244, %v2201
      %2248 = vst.msk [vmem:[#allocation3 + $0xc] sm:$0xf] %vm2244, %v2203
      %2249 = vst.msk [vmem:[#allocation3 + $0x10] sm:$0xf] %vm2244, %v2205
      %2250 = vst.msk [vmem:[#allocation3 + $0x14] sm:$0xf] %vm2244, %v2207
      %2251 = vst.msk [vmem:[#allocation3 + $0x18] sm:$0xf] %vm2244, %v2209
      %2252 = vst.msk [vmem:[#allocation3 + $0x1c] sm:$0xf] %vm2244, %v2211
      %2253 = vst.msk [vmem:[#allocation3 + $0x20] sm:$0xf] %vm2244, %v2213
      %2254 = vst.msk [vmem:[#allocation3 + $0x24] sm:$0xf] %vm2244, %v2215
      %2255 = vst.msk [vmem:[#allocation3 + $0x28] sm:$0xf] %vm2244, %v2217
      %2256 = vst.msk [vmem:[#allocation3 + $0x2c] sm:$0xf] %vm2244, %v2219
      %2257 = vst.msk [vmem:[#allocation3 + $0x30] sm:$0xf] %vm2244, %v2221
      %2258 = vst.msk [vmem:[#allocation3 + $0x34] sm:$0xf] %vm2244, %v2223
      %2259 = vst.msk [vmem:[#allocation3 + $0x38] sm:$0xf] %vm2244, %v2225
      %2260 = vst.msk [vmem:[#allocation3 + $0x3c] sm:$0xf] %vm2244, %v2227
      %v2261 = vld [vmem:[%s1842] sm:$0xe]
      %v2262 = vld [vmem:[%s1842 + $0x4] sm:$0x1]
      %v2263 = vld [vmem:[%s1842 + $0x8] sm:$0xe]
      %v2264 = vld [vmem:[%s1842 + $0xc] sm:$0x1]
      %v2265 = vld [vmem:[%s1842 + $0x10] sm:$0xe]
      %v2266 = vld [vmem:[%s1842 + $0x14] sm:$0x1]
      %v2267 = vld [vmem:[%s1842 + $0x18] sm:$0xe]
      %v2268 = vld [vmem:[%s1842 + $0x1c] sm:$0x1]
      %v2269 = vld [vmem:[%s1842 + $0x20] sm:$0xe]
      %v2270 = vld [vmem:[%s1842 + $0x24] sm:$0x1]
      %v2271 = vld [vmem:[%s1842 + $0x28] sm:$0xe]
      %v2272 = vld [vmem:[%s1842 + $0x2c] sm:$0x1]
      %v2273 = vld [vmem:[%s1842 + $0x30] sm:$0xe]
      %v2274 = vld [vmem:[%s1842 + $0x34] sm:$0x1]
      %v2275 = vld [vmem:[%s1842 + $0x38] sm:$0xe]
      %v2276 = vld [vmem:[%s1842 + $0x3c] sm:$0x1]
      %v2277 = vld [vmem:[%s1842 + $0x40] sm:$0xe]
      %v2278 = vld [vmem:[%s1842 + $0x44] sm:$0x1]
      %v2279 = vld [vmem:[%s1842 + $0x48] sm:$0xe]
      %v2280 = vld [vmem:[%s1842 + $0x4c] sm:$0x1]
      %v2281 = vld [vmem:[%s1842 + $0x50] sm:$0xe]
      %v2282 = vld [vmem:[%s1842 + $0x54] sm:$0x1]
      %v2283 = vld [vmem:[%s1842 + $0x58] sm:$0xe]
      %v2284 = vld [vmem:[%s1842 + $0x5c] sm:$0x1]
      %v2285 = vld [vmem:[%s1842 + $0x60] sm:$0xe]
      %v2286 = vld [vmem:[%s1842 + $0x64] sm:$0x1]
      %v2287 = vld [vmem:[%s1842 + $0x68] sm:$0xe]
      %v2288 = vld [vmem:[%s1842 + $0x6c] sm:$0x1]
      %v2289 = vld [vmem:[%s1842 + $0x70] sm:$0xe]
      %v2290 = vld [vmem:[%s1842 + $0x74] sm:$0x1]
      %v2291 = vld [vmem:[%s1842 + $0x78] sm:$0xe]
      %v2292 = vld [vmem:[%s1842 + $0x7c] sm:$0x1]
      %v2325 = vrot.slane %v2261, 5
      %v2326 = vrot.slane %v2325, 4
      %v2327 = vrot.slane %v2262, 5
      %v2328 = vsel %vm1101, %v2326, %v2327
      %v2329 = vrot.slane %v2263, 5
      %v2330 = vrot.slane %v2329, 4
      %v2331 = vrot.slane %v2264, 5
      %v2332 = vsel %vm1101, %v2330, %v2331
      %v2333 = vrot.slane %v2265, 5
      %v2334 = vrot.slane %v2333, 4
      %v2335 = vrot.slane %v2266, 5
      %v2336 = vsel %vm1101, %v2334, %v2335
      %v2337 = vrot.slane %v2267, 5
      %v2338 = vrot.slane %v2337, 4
      %v2339 = vrot.slane %v2268, 5
      %v2340 = vsel %vm1101, %v2338, %v2339
      %v2341 = vrot.slane %v2269, 5
      %v2342 = vrot.slane %v2341, 4
      %v2343 = vrot.slane %v2270, 5
      %v2344 = vsel %vm1101, %v2342, %v2343
      %v2345 = vrot.slane %v2271, 5
      %v2346 = vrot.slane %v2345, 4
      %v2347 = vrot.slane %v2272, 5
      %v2348 = vsel %vm1101, %v2346, %v2347
      %v2349 = vrot.slane %v2273, 5
      %v2350 = vrot.slane %v2349, 4
      %v2351 = vrot.slane %v2274, 5
      %v2352 = vsel %vm1101, %v2350, %v2351
      %v2353 = vrot.slane %v2275, 5
      %v2354 = vrot.slane %v2353, 4
      %v2355 = vrot.slane %v2276, 5
      %v2356 = vsel %vm1101, %v2354, %v2355
      %v2357 = vrot.slane %v2277, 5
      %v2358 = vrot.slane %v2357, 4
      %v2359 = vrot.slane %v2278, 5
      %v2360 = vsel %vm1101, %v2358, %v2359
      %v2361 = vrot.slane %v2279, 5
      %v2362 = vrot.slane %v2361, 4
      %v2363 = vrot.slane %v2280, 5
      %v2364 = vsel %vm1101, %v2362, %v2363
      %v2365 = vrot.slane %v2281, 5
      %v2366 = vrot.slane %v2365, 4
      %v2367 = vrot.slane %v2282, 5
      %v2368 = vsel %vm1101, %v2366, %v2367
      %v2369 = vrot.slane %v2283, 5
      %v2370 = vrot.slane %v2369, 4
      %v2371 = vrot.slane %v2284, 5
      %v2372 = vsel %vm1101, %v2370, %v2371
      %v2373 = vrot.slane %v2285, 5
      %v2374 = vrot.slane %v2373, 4
      %v2375 = vrot.slane %v2286, 5
      %v2376 = vsel %vm1101, %v2374, %v2375
      %v2377 = vrot.slane %v2287, 5
      %v2378 = vrot.slane %v2377, 4
      %v2379 = vrot.slane %v2288, 5
      %v2380 = vsel %vm1101, %v2378, %v2379
      %v2381 = vrot.slane %v2289, 5
      %v2382 = vrot.slane %v2381, 4
      %v2383 = vrot.slane %v2290, 5
      %v2384 = vsel %vm1101, %v2382, %v2383
      %v2385 = vrot.slane %v2291, 5
      %v2386 = vrot.slane %v2385, 4
      %v2387 = vrot.slane %v2292, 5
      %v2388 = vsel %vm1101, %v2386, %v2387
      %2389 = vrot.lane.b32.xlu0 %v2328, 64
      %v2390 = vpop.permute.xlu0 %2389
      %2391 = vrot.lane.b32.xlu0 %v2332, 64
      %v2392 = vpop.permute.xlu0 %2391
      %2393 = vrot.lane.b32.xlu0 %v2336, 64
      %v2394 = vpop.permute.xlu0 %2393
      %2395 = vrot.lane.b32.xlu0 %v2340, 64
      %v2396 = vpop.permute.xlu0 %2395
      %2397 = vrot.lane.b32.xlu0 %v2344, 64
      %v2398 = vpop.permute.xlu0 %2397
      %2399 = vrot.lane.b32.xlu0 %v2348, 64
      %v2400 = vpop.permute.xlu0 %2399
      %2401 = vrot.lane.b32.xlu0 %v2352, 64
      %v2402 = vpop.permute.xlu0 %2401
      %2403 = vrot.lane.b32.xlu0 %v2356, 64
      %v2404 = vpop.permute.xlu0 %2403
      %2405 = vrot.lane.b32.xlu0 %v2360, 64
      %v2406 = vpop.permute.xlu0 %2405
      %2407 = vrot.lane.b32.xlu0 %v2364, 64
      %v2408 = vpop.permute.xlu0 %2407
      %2409 = vrot.lane.b32.xlu0 %v2368, 64
      %v2410 = vpop.permute.xlu0 %2409
      %2411 = vrot.lane.b32.xlu0 %v2372, 64
      %v2412 = vpop.permute.xlu0 %2411
      %2413 = vrot.lane.b32.xlu0 %v2376, 64
      %v2414 = vpop.permute.xlu0 %2413
      %2415 = vrot.lane.b32.xlu0 %v2380, 64
      %v2416 = vpop.permute.xlu0 %2415
      %2417 = vrot.lane.b32.xlu0 %v2384, 64
      %v2418 = vpop.permute.xlu0 %2417
      %2419 = vrot.lane.b32.xlu0 %v2388, 64
      %v2420 = vpop.permute.xlu0 %2419
      %vm2437 = vcmask 585216
      %2438 = vst.msk [vmem:[#allocation3] sm:$0xf] %vm2437, %v2390
      %2439 = vst.msk [vmem:[#allocation3 + $0x4] sm:$0xf] %vm2437, %v2392
      %2440 = vst.msk [vmem:[#allocation3 + $0x8] sm:$0xf] %vm2437, %v2394
      %2441 = vst.msk [vmem:[#allocation3 + $0xc] sm:$0xf] %vm2437, %v2396
      %2442 = vst.msk [vmem:[#allocation3 + $0x10] sm:$0xf] %vm2437, %v2398
      %2443 = vst.msk [vmem:[#allocation3 + $0x14] sm:$0xf] %vm2437, %v2400
      %2444 = vst.msk [vmem:[#allocation3 + $0x18] sm:$0xf] %vm2437, %v2402
      %2445 = vst.msk [vmem:[#allocation3 + $0x1c] sm:$0xf] %vm2437, %v2404
      %2446 = vst.msk [vmem:[#allocation3 + $0x20] sm:$0xf] %vm2437, %v2406
      %2447 = vst.msk [vmem:[#allocation3 + $0x24] sm:$0xf] %vm2437, %v2408
      %2448 = vst.msk [vmem:[#allocation3 + $0x28] sm:$0xf] %vm2437, %v2410
      %2449 = vst.msk [vmem:[#allocation3 + $0x2c] sm:$0xf] %vm2437, %v2412
      %2450 = vst.msk [vmem:[#allocation3 + $0x30] sm:$0xf] %vm2437, %v2414
      %2451 = vst.msk [vmem:[#allocation3 + $0x34] sm:$0xf] %vm2437, %v2416
      %2452 = vst.msk [vmem:[#allocation3 + $0x38] sm:$0xf] %vm2437, %v2418
      %2453 = vst.msk [vmem:[#allocation3 + $0x3c] sm:$0xf] %vm2437, %v2420
      %v2454 = vld [vmem:[#allocation3] sm:$0xf]
      %v2455 = vld [vmem:[#allocation3 + $0x4] sm:$0xf]
      %v2456 = vld [vmem:[#allocation3 + $0x8] sm:$0xf]
      %v2457 = vld [vmem:[#allocation3 + $0xc] sm:$0xf]
      %v2458 = vld [vmem:[#allocation3 + $0x10] sm:$0xf]
      %v2459 = vld [vmem:[#allocation3 + $0x14] sm:$0xf]
      %v2460 = vld [vmem:[#allocation3 + $0x18] sm:$0xf]
      %v2461 = vld [vmem:[#allocation3 + $0x1c] sm:$0xf]
      %v2462 = vld [vmem:[#allocation3 + $0x20] sm:$0xf]
      %v2463 = vld [vmem:[#allocation3 + $0x24] sm:$0xf]
      %v2464 = vld [vmem:[#allocation3 + $0x28] sm:$0xf]
      %v2465 = vld [vmem:[#allocation3 + $0x2c] sm:$0xf]
      %v2466 = vld [vmem:[#allocation3 + $0x30] sm:$0xf]
      %v2467 = vld [vmem:[#allocation3 + $0x34] sm:$0xf]
      %v2468 = vld [vmem:[#allocation3 + $0x38] sm:$0xf]
      %v2469 = vld [vmem:[#allocation3 + $0x3c] sm:$0xf]
      %v2470 = vld [vmem:[%s1] sm:$0xf]
      %v2471 = vld [vmem:[%s1 + $0x4] sm:$0xf]
      %v2472 = vld [vmem:[%s1 + $0x8] sm:$0xf]
      %v2473 = vld [vmem:[%s1 + $0xc] sm:$0xf]
      %v2474 = vld [vmem:[%s1 + $0x10] sm:$0xf]
      %v2475 = vld [vmem:[%s1 + $0x14] sm:$0xf]
      %v2476 = vld [vmem:[%s1 + $0x18] sm:$0xf]
      %v2477 = vld [vmem:[%s1 + $0x1c] sm:$0xf]
      %v2478 = vld [vmem:[%s1 + $0x20] sm:$0xf]
      %v2495 = vunpack.c.l.b16 %v2454
      %v2496 = vunpack.c.l.b16 %v2455
      %v2497 = vunpack.c.l.b16 %v2456
      %v2498 = vunpack.c.l.b16 %v2457
      %v2499 = vunpack.c.l.b16 %v2458
      %v2500 = vunpack.c.l.b16 %v2459
      %v2501 = vunpack.c.l.b16 %v2460
      %v2502 = vunpack.c.l.b16 %v2461
      %v2503 = vunpack.c.l.b16 %v2462
      %v2504 = vunpack.c.l.b16 %v2463
      %v2505 = vunpack.c.l.b16 %v2464
      %v2506 = vunpack.c.l.b16 %v2465
      %v2507 = vunpack.c.l.b16 %v2466
      %v2508 = vunpack.c.l.b16 %v2467
      %v2509 = vunpack.c.l.b16 %v2468
      %v2510 = vunpack.c.l.b16 %v2469
      %v2511 = vpack.c.b16 %v2496, %v2495
      %v2512 = vpack.c.b16 %v2498, %v2497
      %v2513 = vpack.c.b16 %v2500, %v2499
      %v2514 = vpack.c.b16 %v2502, %v2501
      %v2515 = vpack.c.b16 %v2504, %v2503
      %v2516 = vpack.c.b16 %v2506, %v2505
      %v2517 = vpack.c.b16 %v2508, %v2507
      %v2518 = vpack.c.b16 %v2510, %v2509
      %v2528 = vunpack.c.l.b16 %v2470
      %v2529 = vunpack.c.l.b16 %v2471
      %v2530 = vunpack.c.l.b16 %v2472
      %v2531 = vunpack.c.l.b16 %v2473
      %v2532 = vunpack.c.l.b16 %v2474
      %v2533 = vunpack.c.l.b16 %v2475
      %v2534 = vunpack.c.l.b16 %v2476
      %v2535 = vunpack.c.l.b16 %v2477
      %v2536 = vunpack.c.l.b16 %v2478
      %v2537 = vpack.c.b16 %v2529, %v2528
      %v2538 = vpack.c.b16 %v2531, %v2530
      %v2539 = vpack.c.b16 %v2533, %v2532
      %v2540 = vpack.c.b16 %v2535, %v2534
      %v2541 = vpack.c.b16 %v2536, %v2536
      %vm2546 = vcmask 588800
      %v2548 = vsel %vm2546, %v2511, 0
      %v2551 = vsel %vm2546, %v2512, 0
      %v2554 = vsel %vm2546, %v2513, 0
      %v2557 = vsel %vm2546, %v2514, 0
      %v2560 = vsel %vm2546, %v2515, 0
      %v2563 = vsel %vm2546, %v2516, 0
      %v2566 = vsel %vm2546, %v2517, 0
      %v2569 = vsel %vm2546, %v2518, 0
      %vm2571 = vcmask 1043456
      %v2573 = vsel %vm2571, %v2541, 0
      %2575 = vmatpush.bf16.msra.mxu0 0
      %2576 = vmatpush.bf16.msra.mxu0 0
      %2577 = vmatpush.bf16.msra.mxu0 0
      %2578 = vmatpush.bf16.msra.mxu0 %v2573
      %2579 = vmatpush.bf16.msra.mxu0 %v2540
      %2580 = vmatpush.bf16.msra.mxu0 %v2539
      %2581 = vmatpush.bf16.msra.mxu0 %v2538
      %2582 = vmatpush.bf16.msra.mxu0 %v2537
      %2583 = vmatmul.bf16.gmra.mxu0 %v2548
      %v2584 = vpop.f32.mrf.mxu0
      %v2585 = vadd.f32 0.0, %v2584
      %v2586 = vpop.f32.mrf.mxu0
      %v2587 = vadd.f32 0.0, %v2586
      %2588 = vmatmul.bf16.gmra.mxu0 %v2551
      %v2589 = vpop.f32.mrf.mxu0
      %v2590 = vadd.f32 0.0, %v2589
      %v2591 = vpop.f32.mrf.mxu0
      %v2592 = vadd.f32 0.0, %v2591
      %2593 = vmatmul.bf16.gmra.mxu0 %v2554
      %v2594 = vpop.f32.mrf.mxu0
      %v2595 = vadd.f32 0.0, %v2594
      %v2596 = vpop.f32.mrf.mxu0
      %v2597 = vadd.f32 0.0, %v2596
      %2598 = vmatmul.bf16.gmra.mxu0 %v2557
      %v2599 = vpop.f32.mrf.mxu0
      %v2600 = vadd.f32 0.0, %v2599
      %v2601 = vpop.f32.mrf.mxu0
      %v2602 = vadd.f32 0.0, %v2601
      %2603 = vmatmul.bf16.gmra.mxu0 %v2560
      %v2604 = vpop.f32.mrf.mxu0
      %v2605 = vadd.f32 0.0, %v2604
      %v2606 = vpop.f32.mrf.mxu0
      %v2607 = vadd.f32 0.0, %v2606
      %2608 = vmatmul.bf16.gmra.mxu0 %v2563
      %v2609 = vpop.f32.mrf.mxu0
      %v2610 = vadd.f32 0.0, %v2609
      %v2611 = vpop.f32.mrf.mxu0
      %v2612 = vadd.f32 0.0, %v2611
      %2613 = vmatmul.bf16.gmra.mxu0 %v2566
      %v2614 = vpop.f32.mrf.mxu0
      %v2615 = vadd.f32 0.0, %v2614
      %v2616 = vpop.f32.mrf.mxu0
      %v2617 = vadd.f32 0.0, %v2616
      %2618 = vmatmul.bf16.gmra.mxu0 %v2569
      %v2619 = vpop.f32.mrf.mxu0
      %v2620 = vadd.f32 0.0, %v2619
      %v2621 = vpop.f32.mrf.mxu0
      %v2622 = vadd.f32 0.0, %v2621
      %2623 = vdwg.mxu0
      %v2624 = vld [vmem:[%s2] sm:$0x1]
      %v2626 = vperm.slane %v2624, 0
      %v2628 = vmul.f32 %v2585, %v2626
      %v2629 = vmul.f32 %v2587, %v2626
      %v2630 = vmul.f32 %v2590, %v2626
      %v2631 = vmul.f32 %v2592, %v2626
      %v2632 = vmul.f32 %v2595, %v2626
      %v2633 = vmul.f32 %v2597, %v2626
      %v2634 = vmul.f32 %v2600, %v2626
      %v2635 = vmul.f32 %v2602, %v2626
      %v2636 = vmul.f32 %v2605, %v2626
      %v2637 = vmul.f32 %v2607, %v2626
      %v2638 = vmul.f32 %v2610, %v2626
      %v2639 = vmul.f32 %v2612, %v2626
      %v2640 = vmul.f32 %v2615, %v2626
      %v2641 = vmul.f32 %v2617, %v2626
      %v2642 = vmul.f32 %v2620, %v2626
      %v2643 = vmul.f32 %v2622, %v2626
      %v2644 = vld [vmem:[%s3] sm:$0x1]
      %v2646 = vperm.slane %v2644, 0
      %v2648 = vadd.f32 %v2628, %v2646
      %v2649 = vadd.f32 %v2629, %v2646
      %v2650 = vadd.f32 %v2630, %v2646
      %v2651 = vadd.f32 %v2631, %v2646
      %v2652 = vadd.f32 %v2632, %v2646
      %v2653 = vadd.f32 %v2633, %v2646
      %v2654 = vadd.f32 %v2634, %v2646
      %v2655 = vadd.f32 %v2635, %v2646
      %v2656 = vadd.f32 %v2636, %v2646
      %v2657 = vadd.f32 %v2637, %v2646
      %v2658 = vadd.f32 %v2638, %v2646
      %v2659 = vadd.f32 %v2639, %v2646
      %v2660 = vadd.f32 %v2640, %v2646
      %v2661 = vadd.f32 %v2641, %v2646
      %v2662 = vadd.f32 %v2642, %v2646
      %v2663 = vadd.f32 %v2643, %v2646
      %vm2664 = vcmp.gt.f32.partialorder %v2648, 0.0
      %vm2665 = vcmp.gt.f32.partialorder %v2649, 0.0
      %vm2666 = vcmp.gt.f32.partialorder %v2650, 0.0
      %vm2667 = vcmp.gt.f32.partialorder %v2651, 0.0
      %vm2668 = vcmp.gt.f32.partialorder %v2652, 0.0
      %vm2669 = vcmp.gt.f32.partialorder %v2653, 0.0
      %vm2670 = vcmp.gt.f32.partialorder %v2654, 0.0
      %vm2671 = vcmp.gt.f32.partialorder %v2655, 0.0
      %vm2672 = vcmp.gt.f32.partialorder %v2656, 0.0
      %vm2673 = vcmp.gt.f32.partialorder %v2657, 0.0
      %vm2674 = vcmp.gt.f32.partialorder %v2658, 0.0
      %vm2675 = vcmp.gt.f32.partialorder %v2659, 0.0
      %vm2676 = vcmp.gt.f32.partialorder %v2660, 0.0
      %vm2677 = vcmp.gt.f32.partialorder %v2661, 0.0
      %vm2678 = vcmp.gt.f32.partialorder %v2662, 0.0
      %vm2679 = vcmp.gt.f32.partialorder %v2663, 0.0
      %v2680 = vmul.f32 %v2648, 0.1
      %v2681 = vmul.f32 %v2649, 0.1
      %v2682 = vmul.f32 %v2650, 0.1
      %v2683 = vmul.f32 %v2651, 0.1
      %v2684 = vmul.f32 %v2652, 0.1
      %v2685 = vmul.f32 %v2653, 0.1
      %v2686 = vmul.f32 %v2654, 0.1
      %v2687 = vmul.f32 %v2655, 0.1
      %v2688 = vmul.f32 %v2656, 0.1
      %v2689 = vmul.f32 %v2657, 0.1
      %v2690 = vmul.f32 %v2658, 0.1
      %v2691 = vmul.f32 %v2659, 0.1
      %v2692 = vmul.f32 %v2660, 0.1
      %v2693 = vmul.f32 %v2661, 0.1
      %v2694 = vmul.f32 %v2662, 0.1
      %v2695 = vmul.f32 %v2663, 0.1
      %v2696 = vsel %vm2664, %v2648, %v2680
      %v2697 = vsel %vm2665, %v2649, %v2681
      %v2698 = vsel %vm2666, %v2650, %v2682
      %v2699 = vsel %vm2667, %v2651, %v2683
      %v2700 = vsel %vm2668, %v2652, %v2684
      %v2701 = vsel %vm2669, %v2653, %v2685
      %v2702 = vsel %vm2670, %v2654, %v2686
      %v2703 = vsel %vm2671, %v2655, %v2687
      %v2704 = vsel %vm2672, %v2656, %v2688
      %v2705 = vsel %vm2673, %v2657, %v2689
      %v2706 = vsel %vm2674, %v2658, %v2690
      %v2707 = vsel %vm2675, %v2659, %v2691
      %v2708 = vsel %vm2676, %v2660, %v2692
      %v2709 = vsel %vm2677, %v2661, %v2693
      %v2710 = vsel %vm2678, %v2662, %v2694
      %v2711 = vsel %vm2679, %v2663, %v2695
      %v2712 = vpack.c.bf16 %v2696, %v2696
      %v2713 = vpack.c.bf16 %v2697, %v2697
      %v2714 = vpack.c.bf16 %v2698, %v2698
      %v2715 = vpack.c.bf16 %v2699, %v2699
      %v2716 = vpack.c.bf16 %v2700, %v2700
      %v2717 = vpack.c.bf16 %v2701, %v2701
      %v2718 = vpack.c.bf16 %v2702, %v2702
      %v2719 = vpack.c.bf16 %v2703, %v2703
      %v2720 = vpack.c.bf16 %v2704, %v2704
      %v2721 = vpack.c.bf16 %v2705, %v2705
      %v2722 = vpack.c.bf16 %v2706, %v2706
      %v2723 = vpack.c.bf16 %v2707, %v2707
      %v2724 = vpack.c.bf16 %v2708, %v2708
      %v2725 = vpack.c.bf16 %v2709, %v2709
      %v2726 = vpack.c.bf16 %v2710, %v2710
      %v2727 = vpack.c.bf16 %v2711, %v2711
      %vm2728 = vcmask 125952
      %2729 = vst.msk [vmem:[%s219] sm:$0xf] %vm2728, %v2712
      %2730 = vst.msk [vmem:[%s219 + $0x4] sm:$0xf] %vm2728, %v2713
      %2731 = vst.msk [vmem:[%s219 + $0x8] sm:$0xf] %vm2728, %v2714
      %2732 = vst.msk [vmem:[%s219 + $0xc] sm:$0xf] %vm2728, %v2715
      %2733 = vst.msk [vmem:[%s219 + $0x10] sm:$0xf] %vm2728, %v2716
      %2734 = vst.msk [vmem:[%s219 + $0x14] sm:$0xf] %vm2728, %v2717
      %2735 = vst.msk [vmem:[%s219 + $0x18] sm:$0xf] %vm2728, %v2718
      %2736 = vst.msk [vmem:[%s219 + $0x1c] sm:$0xf] %vm2728, %v2719
      %2737 = vst.msk [vmem:[%s219 + $0x20] sm:$0xf] %vm2728, %v2720
      %2738 = vst.msk [vmem:[%s219 + $0x24] sm:$0xf] %vm2728, %v2721
      %2739 = vst.msk [vmem:[%s219 + $0x28] sm:$0xf] %vm2728, %v2722
      %2740 = vst.msk [vmem:[%s219 + $0x2c] sm:$0xf] %vm2728, %v2723
      %2741 = vst.msk [vmem:[%s219 + $0x30] sm:$0xf] %vm2728, %v2724
      %2742 = vst.msk [vmem:[%s219 + $0x34] sm:$0xf] %vm2728, %v2725
      %2743 = vst.msk [vmem:[%s219 + $0x38] sm:$0xf] %vm2728, %v2726
      %2744 = vst.msk [vmem:[%s219 + $0x3c] sm:$0xf] %vm2728, %v2727
      %s2745 = smul.u32 16, %s20
      %p2746 = scmp.lt.s32.totalorder %s19, 1
      %s2747 = scalar_select %p2746, %s19, 1
      %p2748 = scmp.lt.s32.totalorder %s2745, 15
      %s2749 = scalar_select %p2748, %s2745, 15
      %s2750 = smul.addr %s2747, 16
      %s2751 = sadd.s32 %s2749, %s2750
      %s2752 = smul.addr %s2751, 4
      %s2753 = scalar_lea.vmem %s4, %s2752
      // Predicated region
      $region53: #{resblock_body_forward.4} parent=35 // pred_check
        %p2754 = pneg %p136
      $region54: #{resblock_body_forward.4} parent=35 // pred_check_branch
        %2756 = sbr.rel (%p2754) target = $region56
      $region55: #{resblock_body_forward.4} parent=35 // pred_region
        %s2757 = smul.u32 16, %s20
      $region56: #{resblock_body_forward.4} parent=35 // pred_fallthru
        _
    $region36: #{resblock_body_forward.4} parent=5 // pred_fallthru
      _
    %p2758 = scmp.le.s32.totalorder 2, %s10
    // Predicated region
    $region57: #{resblock_body_forward.4} parent=5 // pred_check
      %p2759 = pneg %p2758
    $region58: #{resblock_body_forward.4} parent=5 // pred_check_branch
      %2761 = sbr.rel (%p2759) target = $region60
    $region59: #{resblock_body_forward.4} parent=5 // pred_region
      %s2762 = ssub.s32 %s10, 2
      // Predicated region
      $region61: #{resblock_body_forward.4} parent=59 // pred_check
        %p2763 = pneg %p142
      $region62: #{resblock_body_forward.4} parent=59 // pred_check_branch
        %2765 = sbr.rel (%p2763) target = $region64
      $region63: #{resblock_body_forward.4} parent=59 // pred_region
        %s2766 = smul.u32 16, %s22
        %p2767 = scmp.lt.s32.totalorder %s21, 1
        %s2768 = scalar_select %p2767, %s21, 1
        %p2769 = scmp.lt.s32.totalorder %s2766, 15
        %s2770 = scalar_select %p2769, %s2766, 15
        %s2771 = smul.addr %s2768, 16
        %s2772 = sadd.s32 %s2770, %s2771
        %s2773 = smul.addr %s2772, 4
        %s2774 = scalar_lea.vmem %s4, %s2773
      $region64: #{resblock_body_forward.4} parent=59 // pred_fallthru
        _
    $region60: #{resblock_body_forward.4} parent=5 // pred_fallthru
      _
  $region6: #{resblock_body_forward.4} parent=0 // loop_footer
    %s14 = sadd.s32 1, %s10
  $region7: #{resblock_body_forward.4} parent=0 // loop_footer_branch
    %9 = sbr.rel target = $region3
  $region8: #{resblock_body_forward.4} parent=0 // loop_exit
    _

// kernel: resblock_body_forward.5
$region0: #{resblock_body_forward.5}
  #allocation0 [shape = 'u32[]', space=smem, size = 0x4, offset = 0x4, fixed_abs, tag = 'smem constant byte address 0x4 - core index']
  #allocation1 [shape = 'u32[72,128]{1,0:T(1,128)}', space=vmem, size = 0x9000, scoped, tag = 'internal scratch']
  #allocation2 [shape = 'bf16[18,10,8]{2,1,0:T(8,128)(2,1)}', space=vmem, size = 0x12000, scoped, tag = 'scratch operand']
  #allocation3 [shape = 'bf16[128,72]{1,0:T(8,128)(2,1)}', space=vmem, size = 0x8000, scoped, tag = 'scratch operand']
  %s0 = inlined_call_operand.vmem [shape: bf16[2,16,8,16], index: 0, kind: input, shape index: {}]
  %s1 = inlined_call_operand.vmem [shape: bf16[72,8], index: 1, kind: input, shape index: {}]
  %s2 = inlined_call_operand.vmem [shape: f32[1,8], index: 2, kind: input, shape index: {}]
  %s3 = inlined_call_operand.vmem [shape: f32[1,8], index: 3, kind: input, shape index: {}]
  %s4 = inlined_call_operand.vmem [shape: bf16[2,16,8,8], index: 4, kind: output, shape index: {}]
  %s5 = sld [smem:[#allocation0]]
  $region65: #{resblock_body_forward.5} parent=0
    _
  %s7 = ssub.s32 1, %s5
  %s8 = scalar_select 0, %s7, %s5
  loop: start=0, step=1, limit=4
  $region2: #{resblock_body_forward.5} parent=0 // loop_pre_header
    _
  $region3: #{resblock_body_forward.5} parent=0 // loop_header
    %s10 = sphi 0, %s14
    %p11 = scmp.ge.s32.totalorder %s10, 4
    %s17 = sphi 0, %s29
    %s18 = sphi 0, %s25
    %s19 = sphi 0, %s17
    %s20 = sphi 0, %s18
    %s21 = sphi 0, %s19
    %s22 = sphi 0, %s20
    %s32 = sphi 0, %s34
    %s35 = sphi 0, %s32
    %s36 = sphi 0, %s35
    %s52 = sphi 0, %s36
    %s56 = sphi 0, %s56
    %s58 = sphi 0, %s56
    %s59 = sphi 0, %s58
    %s73 = sphi 0, %s59
    %s77 = sphi 0, %s77
    %s79 = sphi 0, %s77
    %s80 = sphi 0, %s79
    %s94 = sphi 0, %s80
    %s98 = sphi 0, %s98
    %s100 = sphi 0, %s98
    %s101 = sphi 0, %s100
    %s115 = sphi 0, %s101
    %s123 = sphi 0, %s125
    %s126 = sphi 0, %s123
    %s127 = sphi 0, %s126
    %s143 = sphi 0, %s127
  $region4: #{resblock_body_forward.5} parent=0 // loop_header_branch
    %13 = sbr.rel (%p11) target = $region8
  $region5: #{resblock_body_forward.5} parent=0 // loop_body
    %s15 = ssub.s32 %s10, 1
    %s16 = ssub.s32 %s10, 2
    %s23 = sadd.s32 1, %s18
    %p24 = scmp.ge.s32.totalorder %s23, 1
    %s25 = scalar_select %p24, 0, %s23
    %s26 = sadd.s32 1, %s17
    %s27 = scalar_select %p24, %s26, %s17
    %p28 = scmp.ge.s32.totalorder %s27, 2
    %s29 = scalar_select %p28, 0, %s27
    %s30 = ssub.s32 %s17, %s29
    %p31 = scmp.eq.s32.totalorder %s30, 0
    %s33 = sadd.s32 %s32, 1
    %s34 = scalar_select %p31, %s32, %s33
    %p37 = pneg %p31
    %p38 = scmp.eq.s32.totalorder %s10, 1
    %p39 = por %p37, %p38
    %p40 = scmp.ne.s32.totalorder %s32, %s35
    %p41 = scmp.eq.s32.totalorder %s10, 0
    %p42 = por %p40, %p41
    %p43 = scmp.ne.s32.totalorder %s32, %s35
    %p44 = scmp.eq.s32.totalorder %s15, 1
    %p45 = por %p43, %p44
    %p46 = scmp.ne.s32.totalorder %s35, %s36
    %p47 = scmp.eq.s32.totalorder %s15, 0
    %p48 = por %p46, %p47
    %p49 = scmp.ne.s32.totalorder %s35, %s36
    %p50 = scmp.eq.s32.totalorder %s16, 1
    %p51 = por %p49, %p50
    %p53 = scmp.ne.s32.totalorder %s36, %s52
    %p54 = scmp.eq.s32.totalorder %s16, 0
    %p55 = por %p53, %p54
    %s57 = sadd.s32 %s56, 1
    %p60 = scmp.eq.s32.totalorder %s10, 1
    %p61 = scmp.ne.s32.totalorder %s56, %s58
    %p62 = scmp.eq.s32.totalorder %s10, 0
    %p63 = por %p61, %p62
    %p64 = scmp.ne.s32.totalorder %s56, %s58
    %p65 = scmp.eq.s32.totalorder %s15, 1
    %p66 = por %p64, %p65
    %p67 = scmp.ne.s32.totalorder %s58, %s59
    %p68 = scmp.eq.s32.totalorder %s15, 0
    %p69 = por %p67, %p68
    %p70 = scmp.ne.s32.totalorder %s58, %s59
    %p71 = scmp.eq.s32.totalorder %s16, 1
    %p72 = por %p70, %p71
    %p74 = scmp.ne.s32.totalorder %s59, %s73
    %p75 = scmp.eq.s32.totalorder %s16, 0
    %p76 = por %p74, %p75
    %s78 = sadd.s32 %s77, 1
    %p81 = scmp.eq.s32.totalorder %s10, 1
    %p82 = scmp.ne.s32.totalorder %s77, %s79
    %p83 = scmp.eq.s32.totalorder %s10, 0
    %p84 = por %p82, %p83
    %p85 = scmp.ne.s32.totalorder %s77, %s79
    %p86 = scmp.eq.s32.totalorder %s15, 1
    %p87 = por %p85, %p86
    %p88 = scmp.ne.s32.totalorder %s79, %s80
    %p89 = scmp.eq.s32.totalorder %s15, 0
    %p90 = por %p88, %p89
    %p91 = scmp.ne.s32.totalorder %s79, %s80
    %p92 = scmp.eq.s32.totalorder %s16, 1
    %p93 = por %p91, %p92
    %p95 = scmp.ne.s32.totalorder %s80, %s94
    %p96 = scmp.eq.s32.totalorder %s16, 0
    %p97 = por %p95, %p96
    %s99 = sadd.s32 %s98, 1
    %p102 = scmp.eq.s32.totalorder %s10, 1
    %p103 = scmp.ne.s32.totalorder %s98, %s100
    %p104 = scmp.eq.s32.totalorder %s10, 0
    %p105 = por %p103, %p104
    %p106 = scmp.ne.s32.totalorder %s98, %s100
    %p107 = scmp.eq.s32.totalorder %s15, 1
    %p108 = por %p106, %p107
    %p109 = scmp.ne.s32.totalorder %s100, %s101
    %p110 = scmp.eq.s32.totalorder %s15, 0
    %p111 = por %p109, %p110
    %p112 = scmp.ne.s32.totalorder %s100, %s101
    %p113 = scmp.eq.s32.totalorder %s16, 1
    %p114 = por %p112, %p113
    %p116 = scmp.ne.s32.totalorder %s101, %s115
    %p117 = scmp.eq.s32.totalorder %s16, 0
    %p118 = por %p116, %p117
    %s119 = ssub.s32 %s17, %s29
    %s120 = ssub.s32 %s18, %s25
    %s121 = sor.u32 %s119, %s120
    %p122 = scmp.eq.s32.totalorder %s121, 0
    %s124 = sadd.s32 %s123, 1
    %s125 = scalar_select %p122, %s123, %s124
    %p128 = pneg %p122
    %p129 = scmp.eq.s32.totalorder %s10, 1
    %p130 = por %p128, %p129
    %p131 = scmp.ne.s32.totalorder %s123, %s126
    %p132 = scmp.eq.s32.totalorder %s10, 0
    %p133 = por %p131, %p132
    %p134 = scmp.ne.s32.totalorder %s123, %s126
    %p135 = scmp.eq.s32.totalorder %s15, 1
    %p136 = por %p134, %p135
    %p137 = scmp.ne.s32.totalorder %s126, %s127
    %p138 = scmp.eq.s32.totalorder %s15, 0
    %p139 = por %p137, %p138
    %p140 = scmp.ne.s32.totalorder %s126, %s127
    %p141 = scmp.eq.s32.totalorder %s16, 1
    %p142 = por %p140, %p141
    %p144 = scmp.ne.s32.totalorder %s127, %s143
    %p145 = scmp.eq.s32.totalorder %s16, 0
    %p146 = por %p144, %p145
    %p147 = scmp.le.s32.totalorder 1, %s10
    %p148 = scmp.lt.s32.totalorder %s10, 3
    %p149 = pnand %p147, %p148
    %p150 = pneg %p149
    // Predicated region
    $region9: #{resblock_body_forward.5} parent=5 // pred_check
      _
    $region10: #{resblock_body_forward.5} parent=5 // pred_check_branch
      %152 = sbr.rel (%p149) target = $region12
    $region11: #{resblock_body_forward.5} parent=5 // pred_region
      %s153 = ssub.s32 %s10, 1
      // Predicated region
      $region13: #{resblock_body_forward.5} parent=11 // pred_check
        %p154 = pneg %p69
      $region14: #{resblock_body_forward.5} parent=11 // pred_check_branch
        %156 = sbr.rel (%p154) target = $region16
      $region15: #{resblock_body_forward.5} parent=11 // pred_region
        _
      $region16: #{resblock_body_forward.5} parent=11 // pred_fallthru
        _
      // Predicated region
      $region17: #{resblock_body_forward.5} parent=11 // pred_check
        %p157 = pneg %p90
      $region18: #{resblock_body_forward.5} parent=11 // pred_check_branch
        %159 = sbr.rel (%p157) target = $region20
      $region19: #{resblock_body_forward.5} parent=11 // pred_region
        _
      $region20: #{resblock_body_forward.5} parent=11 // pred_fallthru
        _
      // Predicated region
      $region21: #{resblock_body_forward.5} parent=11 // pred_check
        %p160 = pneg %p111
      $region22: #{resblock_body_forward.5} parent=11 // pred_check_branch
        %162 = sbr.rel (%p160) target = $region24
      $region23: #{resblock_body_forward.5} parent=11 // pred_region
        _
      $region24: #{resblock_body_forward.5} parent=11 // pred_fallthru
        _
    $region12: #{resblock_body_forward.5} parent=5 // pred_fallthru
      _
    %p163 = scmp.lt.s32.totalorder %s10, 2
    // Predicated region
    $region25: #{resblock_body_forward.5} parent=5 // pred_check
      %p164 = pneg %p163
    $region26: #{resblock_body_forward.5} parent=5 // pred_check_branch
      %166 = sbr.rel (%p164) target = $region28
    $region27: #{resblock_body_forward.5} parent=5 // pred_region
      // Predicated region
      $region29: #{resblock_body_forward.5} parent=27 // pred_check
        %p167 = pneg %p42
      $region30: #{resblock_body_forward.5} parent=27 // pred_check_branch
        %169 = sbr.rel (%p167) target = $region32
      $region31: #{resblock_body_forward.5} parent=27 // pred_region
        %p170 = scmp.lt.s32.totalorder %s17, 1
        %s171 = scalar_select %p170, %s17, 1
        %s172 = smul.addr %s171, 16
        %s173 = smul.addr %s172, 4
        %s174 = scalar_lea.vmem %s0, %s173
      $region32: #{resblock_body_forward.5} parent=27 // pred_fallthru
        _
    $region28: #{resblock_body_forward.5} parent=5 // pred_fallthru
      _
    %p175 = scmp.le.s32.totalorder 1, %s10
    %p176 = scmp.lt.s32.totalorder %s10, 3
    %p177 = pnand %p175, %p176
    %p178 = pneg %p177
    // Predicated region
    $region33: #{resblock_body_forward.5} parent=5 // pred_check
      _
    $region34: #{resblock_body_forward.5} parent=5 // pred_check_branch
      %180 = sbr.rel (%p177) target = $region36
    $region35: #{resblock_body_forward.5} parent=5 // pred_region
      %s181 = ssub.s32 %s10, 1
      %p182 = scmp.lt.s32.totalorder %s19, 1
      %s183 = scalar_select %p182, %s19, 1
      %s184 = smul.addr %s183, 16
      %s185 = smul.addr %s184, 4
      %s186 = scalar_lea.vmem %s0, %s185
      %p187 = pneg %p48
      %p188 = pneg %p45
      %p189 = pneg %p69
      %p190 = pneg %p66
      %p191 = pneg %p90
      %p192 = pneg %p87
      %p193 = pneg %p111
      %p194 = pneg %p108
      %p195 = pneg %p139
      %p196 = pneg %p136
      %s197 = smul.u32 16, %s20
      %p198 = scmp.lt.s32.totalorder %s19, 1
      %s199 = scalar_select %p198, %s19, 1
      %p200 = scmp.lt.s32.totalorder %s197, 15
      %s201 = scalar_select %p200, %s197, 15
      %s202 = smul.addr %s199, 16
      %s203 = sadd.s32 %s201, %s202
      %s204 = smul.addr %s203, 4
      %s205 = scalar_lea.vmem %s4, %s204
      %p206 = scmp.lt.s32.totalorder %s19, 1
      %s207 = scalar_select %p206, %s19, 1
      %s208 = smul.addr %s207, 16
      %s209 = smul.addr %s208, 4
      %s210 = scalar_lea.vmem %s0, %s209
      %s211 = smul.u32 16, %s20
      %p212 = scmp.lt.s32.totalorder %s19, 1
      %s213 = scalar_select %p212, %s19, 1
      %p214 = scmp.lt.s32.totalorder %s211, 15
      %s215 = scalar_select %p214, %s211, 15
      %s216 = smul.addr %s213, 16
      %s217 = sadd.s32 %s215, %s216
      %s218 = smul.addr %s217, 4
      %s219 = scalar_lea.vmem %s4, %s218
      %s220 = smul.u32 16, %s20
      %s222 = smul.u32 %s20, 16
      %vm223 = vcmask 57344
      %vm224 = vsmask.f32 256
      %vm225 = vmand %vm223, %vm224
      %v226 = vld [vmem:[#allocation2] sm:$0x1]
      %v227 = vsel %vm225, 0, %v226
      %228 = vst [vmem:[#allocation2] sm:$0x1] %v227
      %v229 = vld [vmem:[#allocation2 + $0x8] sm:$0x1]
      %v230 = vsel %vm225, 0, %v229
      %231 = vst [vmem:[#allocation2 + $0x8] sm:$0x1] %v230
      %v232 = vld [vmem:[#allocation2 + $0x10] sm:$0x1]
      %v233 = vsel %vm225, 0, %v232
      %234 = vst [vmem:[#allocation2 + $0x10] sm:$0x1] %v233
      %v235 = vld [vmem:[#allocation2 + $0x18] sm:$0x1]
      %v236 = vsel %vm225, 0, %v235
      %237 = vst [vmem:[#allocation2 + $0x18] sm:$0x1] %v236
      %v238 = vld [vmem:[#allocation2 + $0x20] sm:$0x1]
      %v239 = vsel %vm225, 0, %v238
      %240 = vst [vmem:[#allocation2 + $0x20] sm:$0x1] %v239
      %v241 = vld [vmem:[#allocation2 + $0x28] sm:$0x1]
      %v242 = vsel %vm225, 0, %v241
      %243 = vst [vmem:[#allocation2 + $0x28] sm:$0x1] %v242
      %v244 = vld [vmem:[#allocation2 + $0x30] sm:$0x1]
      %v245 = vsel %vm225, 0, %v244
      %246 = vst [vmem:[#allocation2 + $0x30] sm:$0x1] %v245
      %v247 = vld [vmem:[#allocation2 + $0x38] sm:$0x1]
      %v248 = vsel %vm225, 0, %v247
      %249 = vst [vmem:[#allocation2 + $0x38] sm:$0x1] %v248
      %v250 = vld [vmem:[#allocation2 + $0x40] sm:$0x1]
      %v251 = vsel %vm225, 0, %v250
      %252 = vst [vmem:[#allocation2 + $0x40] sm:$0x1] %v251
      %v253 = vld [vmem:[#allocation2 + $0x48] sm:$0x1]
      %v254 = vsel %vm225, 0, %v253
      %255 = vst [vmem:[#allocation2 + $0x48] sm:$0x1] %v254
      %v256 = vld [vmem:[#allocation2 + $0x50] sm:$0x1]
      %v257 = vsel %vm225, 0, %v256
      %258 = vst [vmem:[#allocation2 + $0x50] sm:$0x1] %v257
      %v259 = vld [vmem:[#allocation2 + $0x58] sm:$0x1]
      %v260 = vsel %vm225, 0, %v259
      %261 = vst [vmem:[#allocation2 + $0x58] sm:$0x1] %v260
      %v262 = vld [vmem:[#allocation2 + $0x60] sm:$0x1]
      %v263 = vsel %vm225, 0, %v262
      %264 = vst [vmem:[#allocation2 + $0x60] sm:$0x1] %v263
      %v265 = vld [vmem:[#allocation2 + $0x68] sm:$0x1]
      %v266 = vsel %vm225, 0, %v265
      %267 = vst [vmem:[#allocation2 + $0x68] sm:$0x1] %v266
      %v268 = vld [vmem:[#allocation2 + $0x70] sm:$0x1]
      %v269 = vsel %vm225, 0, %v268
      %270 = vst [vmem:[#allocation2 + $0x70] sm:$0x1] %v269
      %v271 = vld [vmem:[#allocation2 + $0x78] sm:$0x1]
      %v272 = vsel %vm225, 0, %v271
      %273 = vst [vmem:[#allocation2 + $0x78] sm:$0x1] %v272
      %v274 = vld [vmem:[#allocation2 + $0x80] sm:$0x1]
      %v275 = vsel %vm225, 0, %v274
      %276 = vst [vmem:[#allocation2 + $0x80] sm:$0x1] %v275
      %v277 = vld [vmem:[#allocation2 + $0x88] sm:$0x1]
      %v278 = vsel %vm225, 0, %v277
      %279 = vst [vmem:[#allocation2 + $0x88] sm:$0x1] %v278
      %vm280 = vsmask.f32 7938
      %vm281 = vmand %vm223, %vm280
      %v282 = vld [vmem:[#allocation2 + $0x4] sm:$0x1]
      %v283 = vsel %vm281, 0, %v282
      %284 = vst [vmem:[#allocation2 + $0x4] sm:$0x1] %v283
      %v285 = vld [vmem:[#allocation2 + $0xc] sm:$0x1]
      %v286 = vsel %vm281, 0, %v285
      %287 = vst [vmem:[#allocation2 + $0xc] sm:$0x1] %v286
      %v288 = vld [vmem:[#allocation2 + $0x14] sm:$0x1]
      %v289 = vsel %vm281, 0, %v288
      %290 = vst [vmem:[#allocation2 + $0x14] sm:$0x1] %v289
      %v291 = vld [vmem:[#allocation2 + $0x1c] sm:$0x1]
      %v292 = vsel %vm281, 0, %v291
      %293 = vst [vmem:[#allocation2 + $0x1c] sm:$0x1] %v292
      %v294 = vld [vmem:[#allocation2 + $0x24] sm:$0x1]
      %v295 = vsel %vm281, 0, %v294
      %296 = vst [vmem:[#allocation2 + $0x24] sm:$0x1] %v295
      %v297 = vld [vmem:[#allocation2 + $0x2c] sm:$0x1]
      %v298 = vsel %vm281, 0, %v297
      %299 = vst [vmem:[#allocation2 + $0x2c] sm:$0x1] %v298
      %v300 = vld [vmem:[#allocation2 + $0x34] sm:$0x1]
      %v301 = vsel %vm281, 0, %v300
      %302 = vst [vmem:[#allocation2 + $0x34] sm:$0x1] %v301
      %v303 = vld [vmem:[#allocation2 + $0x3c] sm:$0x1]
      %v304 = vsel %vm281, 0, %v303
      %305 = vst [vmem:[#allocation2 + $0x3c] sm:$0x1] %v304
      %v306 = vld [vmem:[#allocation2 + $0x44] sm:$0x1]
      %v307 = vsel %vm281, 0, %v306
      %308 = vst [vmem:[#allocation2 + $0x44] sm:$0x1] %v307
      %v309 = vld [vmem:[#allocation2 + $0x4c] sm:$0x1]
      %v310 = vsel %vm281, 0, %v309
      %311 = vst [vmem:[#allocation2 + $0x4c] sm:$0x1] %v310
      %v312 = vld [vmem:[#allocation2 + $0x54] sm:$0x1]
      %v313 = vsel %vm281, 0, %v312
      %314 = vst [vmem:[#allocation2 + $0x54] sm:$0x1] %v313
      %v315 = vld [vmem:[#allocation2 + $0x5c] sm:$0x1]
      %v316 = vsel %vm281, 0, %v315
      %317 = vst [vmem:[#allocation2 + $0x5c] sm:$0x1] %v316
      %v318 = vld [vmem:[#allocation2 + $0x64] sm:$0x1]
      %v319 = vsel %vm281, 0, %v318
      %320 = vst [vmem:[#allocation2 + $0x64] sm:$0x1] %v319
      %v321 = vld [vmem:[#allocation2 + $0x6c] sm:$0x1]
      %v322 = vsel %vm281, 0, %v321
      %323 = vst [vmem:[#allocation2 + $0x6c] sm:$0x1] %v322
      %v324 = vld [vmem:[#allocation2 + $0x74] sm:$0x1]
      %v325 = vsel %vm281, 0, %v324
      %326 = vst [vmem:[#allocation2 + $0x74] sm:$0x1] %v325
      %v327 = vld [vmem:[#allocation2 + $0x7c] sm:$0x1]
      %v328 = vsel %vm281, 0, %v327
      %329 = vst [vmem:[#allocation2 + $0x7c] sm:$0x1] %v328
      %v330 = vld [vmem:[#allocation2 + $0x84] sm:$0x1]
      %v331 = vsel %vm281, 0, %v330
      %332 = vst [vmem:[#allocation2 + $0x84] sm:$0x1] %v331
      %v333 = vld [vmem:[#allocation2 + $0x8c] sm:$0x1]
      %v334 = vsel %vm281, 0, %v333
      %335 = vst [vmem:[#allocation2 + $0x8c] sm:$0x1] %v334
      %s336 = smul.addr %s222, 4
      %s337 = scalar_lea.vmem %s210, %s336
      %v338 = vld [vmem:[%s337] sm:$0xf]
      %v339 = vld [vmem:[%s337 + $0x4] sm:$0xf]
      %v340 = vld [vmem:[%s337 + $0x8] sm:$0xf]
      %v341 = vld [vmem:[%s337 + $0xc] sm:$0xf]
      %v342 = vld [vmem:[%s337 + $0x10] sm:$0xf]
      %v343 = vld [vmem:[%s337 + $0x14] sm:$0xf]
      %v344 = vld [vmem:[%s337 + $0x18] sm:$0xf]
      %v345 = vld [vmem:[%s337 + $0x1c] sm:$0xf]
      %v346 = vld [vmem:[%s337 + $0x20] sm:$0xf]
      %v347 = vld [vmem:[%s337 + $0x24] sm:$0xf]
      %v348 = vld [vmem:[%s337 + $0x28] sm:$0xf]
      %v349 = vld [vmem:[%s337 + $0x2c] sm:$0xf]
      %v350 = vld [vmem:[%s337 + $0x30] sm:$0xf]
      %v351 = vld [vmem:[%s337 + $0x34] sm:$0xf]
      %v352 = vld [vmem:[%s337 + $0x38] sm:$0xf]
      %v353 = vld [vmem:[%s337 + $0x3c] sm:$0xf]
      %v355 = vshrl.u32 %v338, 16
      %v357 = vrot.slane %v355, 7
      %v358 = vshll.u32 %v338, 16
      %v360 = vor.u32 %v357, %v358
      %v361 = vrot.slane %v357, 4
      %v363 = vshrl.u32 %v339, 16
      %v365 = vrot.slane %v363, 7
      %v366 = vshll.u32 %v339, 16
      %v368 = vor.u32 %v365, %v366
      %v369 = vrot.slane %v365, 4
      %v371 = vshrl.u32 %v340, 16
      %v373 = vrot.slane %v371, 7
      %v374 = vshll.u32 %v340, 16
      %v376 = vor.u32 %v373, %v374
      %v377 = vrot.slane %v373, 4
      %v379 = vshrl.u32 %v341, 16
      %v381 = vrot.slane %v379, 7
      %v382 = vshll.u32 %v341, 16
      %v384 = vor.u32 %v381, %v382
      %v385 = vrot.slane %v381, 4
      %v387 = vshrl.u32 %v342, 16
      %v389 = vrot.slane %v387, 7
      %v390 = vshll.u32 %v342, 16
      %v392 = vor.u32 %v389, %v390
      %v393 = vrot.slane %v389, 4
      %v395 = vshrl.u32 %v343, 16
      %v397 = vrot.slane %v395, 7
      %v398 = vshll.u32 %v343, 16
      %v400 = vor.u32 %v397, %v398
      %v401 = vrot.slane %v397, 4
      %v403 = vshrl.u32 %v344, 16
      %v405 = vrot.slane %v403, 7
      %v406 = vshll.u32 %v344, 16
      %v408 = vor.u32 %v405, %v406
      %v409 = vrot.slane %v405, 4
      %v411 = vshrl.u32 %v345, 16
      %v413 = vrot.slane %v411, 7
      %v414 = vshll.u32 %v345, 16
      %v416 = vor.u32 %v413, %v414
      %v417 = vrot.slane %v413, 4
      %v419 = vshrl.u32 %v346, 16
      %v421 = vrot.slane %v419, 7
      %v422 = vshll.u32 %v346, 16
      %v424 = vor.u32 %v421, %v422
      %v425 = vrot.slane %v421, 4
      %v427 = vshrl.u32 %v347, 16
      %v429 = vrot.slane %v427, 7
      %v430 = vshll.u32 %v347, 16
      %v432 = vor.u32 %v429, %v430
      %v433 = vrot.slane %v429, 4
      %v435 = vshrl.u32 %v348, 16
      %v437 = vrot.slane %v435, 7
      %v438 = vshll.u32 %v348, 16
      %v440 = vor.u32 %v437, %v438
      %v441 = vrot.slane %v437, 4
      %v443 = vshrl.u32 %v349, 16
      %v445 = vrot.slane %v443, 7
      %v446 = vshll.u32 %v349, 16
      %v448 = vor.u32 %v445, %v446
      %v449 = vrot.slane %v445, 4
      %v451 = vshrl.u32 %v350, 16
      %v453 = vrot.slane %v451, 7
      %v454 = vshll.u32 %v350, 16
      %v456 = vor.u32 %v453, %v454
      %v457 = vrot.slane %v453, 4
      %v459 = vshrl.u32 %v351, 16
      %v461 = vrot.slane %v459, 7
      %v462 = vshll.u32 %v351, 16
      %v464 = vor.u32 %v461, %v462
      %v465 = vrot.slane %v461, 4
      %v467 = vshrl.u32 %v352, 16
      %v469 = vrot.slane %v467, 7
      %v470 = vshll.u32 %v352, 16
      %v472 = vor.u32 %v469, %v470
      %v473 = vrot.slane %v469, 4
      %v475 = vshrl.u32 %v353, 16
      %v477 = vrot.slane %v475, 7
      %v478 = vshll.u32 %v353, 16
      %v480 = vor.u32 %v477, %v478
      %v481 = vrot.slane %v477, 4
      %482 = vrot.lane.b32.xlu0 %v360, 124
      %v483 = vpop.permute.xlu0 %482
      %484 = vrot.lane.b32.xlu0 %v361, 124
      %v485 = vpop.permute.xlu0 %484
      %486 = vrot.lane.b32.xlu0 %v368, 124
      %v487 = vpop.permute.xlu0 %486
      %488 = vrot.lane.b32.xlu0 %v369, 124
      %v489 = vpop.permute.xlu0 %488
      %490 = vrot.lane.b32.xlu0 %v376, 124
      %v491 = vpop.permute.xlu0 %490
      %492 = vrot.lane.b32.xlu0 %v377, 124
      %v493 = vpop.permute.xlu0 %492
      %494 = vrot.lane.b32.xlu0 %v384, 124
      %v495 = vpop.permute.xlu0 %494
      %496 = vrot.lane.b32.xlu0 %v385, 124
      %v497 = vpop.permute.xlu0 %496
      %498 = vrot.lane.b32.xlu0 %v392, 124
      %v499 = vpop.permute.xlu0 %498
      %500 = vrot.lane.b32.xlu0 %v393, 124
      %v501 = vpop.permute.xlu0 %500
      %502 = vrot.lane.b32.xlu0 %v400, 124
      %v503 = vpop.permute.xlu0 %502
      %504 = vrot.lane.b32.xlu0 %v401, 124
      %v505 = vpop.permute.xlu0 %504
      %506 = vrot.lane.b32.xlu0 %v408, 124
      %v507 = vpop.permute.xlu0 %506
      %508 = vrot.lane.b32.xlu0 %v409, 124
      %v509 = vpop.permute.xlu0 %508
      %510 = vrot.lane.b32.xlu0 %v416, 124
      %v511 = vpop.permute.xlu0 %510
      %512 = vrot.lane.b32.xlu0 %v417, 124
      %v513 = vpop.permute.xlu0 %512
      %514 = vrot.lane.b32.xlu0 %v424, 124
      %v515 = vpop.permute.xlu0 %514
      %516 = vrot.lane.b32.xlu0 %v425, 124
      %v517 = vpop.permute.xlu0 %516
      %518 = vrot.lane.b32.xlu0 %v432, 124
      %v519 = vpop.permute.xlu0 %518
      %520 = vrot.lane.b32.xlu0 %v433, 124
      %v521 = vpop.permute.xlu0 %520
      %522 = vrot.lane.b32.xlu0 %v440, 124
      %v523 = vpop.permute.xlu0 %522
      %524 = vrot.lane.b32.xlu0 %v441, 124
      %v525 = vpop.permute.xlu0 %524
      %526 = vrot.lane.b32.xlu0 %v448, 124
      %v527 = vpop.permute.xlu0 %526
      %528 = vrot.lane.b32.xlu0 %v449, 124
      %v529 = vpop.permute.xlu0 %528
      %530 = vrot.lane.b32.xlu0 %v456, 124
      %v531 = vpop.permute.xlu0 %530
      %532 = vrot.lane.b32.xlu0 %v457, 124
      %v533 = vpop.permute.xlu0 %532
      %534 = vrot.lane.b32.xlu0 %v464, 124
      %v535 = vpop.permute.xlu0 %534
      %536 = vrot.lane.b32.xlu0 %v465, 124
      %v537 = vpop.permute.xlu0 %536
      %538 = vrot.lane.b32.xlu0 %v472, 124
      %v539 = vpop.permute.xlu0 %538
      %540 = vrot.lane.b32.xlu0 %v473, 124
      %v541 = vpop.permute.xlu0 %540
      %542 = vrot.lane.b32.xlu0 %v480, 124
      %v543 = vpop.permute.xlu0 %542
      %544 = vrot.lane.b32.xlu0 %v481, 124
      %v545 = vpop.permute.xlu0 %544
      %s578 = scalar_lea.vmem [#allocation2], 8
      %vm579 = vcmask 27648
      %vm580 = vmand %vm579, %vm280
      %v581 = vld [vmem:[%s578] sm:$0xf]
      %v582 = vsel %vm580, %v483, %v581
      %583 = vst [vmem:[%s578] sm:$0xf] %v582
      %vm584 = vcmask 24576
      %vm585 = vmand %vm584, %vm224
      %v586 = vld [vmem:[%s578 + $0x4] sm:$0x1]
      %v587 = vsel %vm585, %v485, %v586
      %588 = vst [vmem:[%s578 + $0x4] sm:$0x1] %v587
      %v589 = vld [vmem:[%s578 + $0x8] sm:$0xf]
      %v590 = vsel %vm580, %v487, %v589
      %591 = vst [vmem:[%s578 + $0x8] sm:$0xf] %v590
      %v592 = vld [vmem:[%s578 + $0xc] sm:$0x1]
      %v593 = vsel %vm585, %v489, %v592
      %594 = vst [vmem:[%s578 + $0xc] sm:$0x1] %v593
      %v595 = vld [vmem:[%s578 + $0x10] sm:$0xf]
      %v596 = vsel %vm580, %v491, %v595
      %597 = vst [vmem:[%s578 + $0x10] sm:$0xf] %v596
      %v598 = vld [vmem:[%s578 + $0x14] sm:$0x1]
      %v599 = vsel %vm585, %v493, %v598
      %600 = vst [vmem:[%s578 + $0x14] sm:$0x1] %v599
      %v601 = vld [vmem:[%s578 + $0x18] sm:$0xf]
      %v602 = vsel %vm580, %v495, %v601
      %603 = vst [vmem:[%s578 + $0x18] sm:$0xf] %v602
      %v604 = vld [vmem:[%s578 + $0x1c] sm:$0x1]
      %v605 = vsel %vm585, %v497, %v604
      %606 = vst [vmem:[%s578 + $0x1c] sm:$0x1] %v605
      %v607 = vld [vmem:[%s578 + $0x20] sm:$0xf]
      %v608 = vsel %vm580, %v499, %v607
      %609 = vst [vmem:[%s578 + $0x20] sm:$0xf] %v608
      %v610 = vld [vmem:[%s578 + $0x24] sm:$0x1]
      %v611 = vsel %vm585, %v501, %v610
      %612 = vst [vmem:[%s578 + $0x24] sm:$0x1] %v611
      %v613 = vld [vmem:[%s578 + $0x28] sm:$0xf]
      %v614 = vsel %vm580, %v503, %v613
      %615 = vst [vmem:[%s578 + $0x28] sm:$0xf] %v614
      %v616 = vld [vmem:[%s578 + $0x2c] sm:$0x1]
      %v617 = vsel %vm585, %v505, %v616
      %618 = vst [vmem:[%s578 + $0x2c] sm:$0x1] %v617
      %v619 = vld [vmem:[%s578 + $0x30] sm:$0xf]
      %v620 = vsel %vm580, %v507, %v619
      %621 = vst [vmem:[%s578 + $0x30] sm:$0xf] %v620
      %v622 = vld [vmem:[%s578 + $0x34] sm:$0x1]
      %v623 = vsel %vm585, %v509, %v622
      %624 = vst [vmem:[%s578 + $0x34] sm:$0x1] %v623
      %v625 = vld [vmem:[%s578 + $0x38] sm:$0xf]
      %v626 = vsel %vm580, %v511, %v625
      %627 = vst [vmem:[%s578 + $0x38] sm:$0xf] %v626
      %v628 = vld [vmem:[%s578 + $0x3c] sm:$0x1]
      %v629 = vsel %vm585, %v513, %v628
      %630 = vst [vmem:[%s578 + $0x3c] sm:$0x1] %v629
      %v631 = vld [vmem:[%s578 + $0x40] sm:$0xf]
      %v632 = vsel %vm580, %v515, %v631
      %633 = vst [vmem:[%s578 + $0x40] sm:$0xf] %v632
      %v634 = vld [vmem:[%s578 + $0x44] sm:$0x1]
      %v635 = vsel %vm585, %v517, %v634
      %636 = vst [vmem:[%s578 + $0x44] sm:$0x1] %v635
      %v637 = vld [vmem:[%s578 + $0x48] sm:$0xf]
      %v638 = vsel %vm580, %v519, %v637
      %639 = vst [vmem:[%s578 + $0x48] sm:$0xf] %v638
      %v640 = vld [vmem:[%s578 + $0x4c] sm:$0x1]
      %v641 = vsel %vm585, %v521, %v640
      %642 = vst [vmem:[%s578 + $0x4c] sm:$0x1] %v641
      %v643 = vld [vmem:[%s578 + $0x50] sm:$0xf]
      %v644 = vsel %vm580, %v523, %v643
      %645 = vst [vmem:[%s578 + $0x50] sm:$0xf] %v644
      %v646 = vld [vmem:[%s578 + $0x54] sm:$0x1]
      %v647 = vsel %vm585, %v525, %v646
      %648 = vst [vmem:[%s578 + $0x54] sm:$0x1] %v647
      %v649 = vld [vmem:[%s578 + $0x58] sm:$0xf]
      %v650 = vsel %vm580, %v527, %v649
      %651 = vst [vmem:[%s578 + $0x58] sm:$0xf] %v650
      %v652 = vld [vmem:[%s578 + $0x5c] sm:$0x1]
      %v653 = vsel %vm585, %v529, %v652
      %654 = vst [vmem:[%s578 + $0x5c] sm:$0x1] %v653
      %v655 = vld [vmem:[%s578 + $0x60] sm:$0xf]
      %v656 = vsel %vm580, %v531, %v655
      %657 = vst [vmem:[%s578 + $0x60] sm:$0xf] %v656
      %v658 = vld [vmem:[%s578 + $0x64] sm:$0x1]
      %v659 = vsel %vm585, %v533, %v658
      %660 = vst [vmem:[%s578 + $0x64] sm:$0x1] %v659
      %v661 = vld [vmem:[%s578 + $0x68] sm:$0xf]
      %v662 = vsel %vm580, %v535, %v661
      %663 = vst [vmem:[%s578 + $0x68] sm:$0xf] %v662
      %v664 = vld [vmem:[%s578 + $0x6c] sm:$0x1]
      %v665 = vsel %vm585, %v537, %v664
      %666 = vst [vmem:[%s578 + $0x6c] sm:$0x1] %v665
      %v667 = vld [vmem:[%s578 + $0x70] sm:$0xf]
      %v668 = vsel %vm580, %v539, %v667
      %669 = vst [vmem:[%s578 + $0x70] sm:$0xf] %v668
      %v670 = vld [vmem:[%s578 + $0x74] sm:$0x1]
      %v671 = vsel %vm585, %v541, %v670
      %672 = vst [vmem:[%s578 + $0x74] sm:$0x1] %v671
      %v673 = vld [vmem:[%s578 + $0x78] sm:$0xf]
      %v674 = vsel %vm580, %v543, %v673
      %675 = vst [vmem:[%s578 + $0x78] sm:$0xf] %v674
      %v676 = vld [vmem:[%s578 + $0x7c] sm:$0x1]
      %v677 = vsel %vm585, %v545, %v676
      %678 = vst [vmem:[%s578 + $0x7c] sm:$0x1] %v677
      %v679 = vld [vmem:[%s337] sm:$0xf]
      %v680 = vld [vmem:[%s337 + $0x4] sm:$0xf]
      %v681 = vld [vmem:[%s337 + $0x8] sm:$0xf]
      %v682 = vld [vmem:[%s337 + $0xc] sm:$0xf]
      %v683 = vld [vmem:[%s337 + $0x10] sm:$0xf]
      %v684 = vld [vmem:[%s337 + $0x14] sm:$0xf]
      %v685 = vld [vmem:[%s337 + $0x18] sm:$0xf]
      %v686 = vld [vmem:[%s337 + $0x1c] sm:$0xf]
      %v687 = vld [vmem:[%s337 + $0x20] sm:$0xf]
      %v688 = vld [vmem:[%s337 + $0x24] sm:$0xf]
      %v689 = vld [vmem:[%s337 + $0x28] sm:$0xf]
      %v690 = vld [vmem:[%s337 + $0x2c] sm:$0xf]
      %v691 = vld [vmem:[%s337 + $0x30] sm:$0xf]
      %v692 = vld [vmem:[%s337 + $0x34] sm:$0xf]
      %v693 = vld [vmem:[%s337 + $0x38] sm:$0xf]
      %v694 = vld [vmem:[%s337 + $0x3c] sm:$0xf]
      %v696 = vshrl.u32 %v679, 16
      %v698 = vrot.slane %v696, 7
      %v699 = vshll.u32 %v679, 16
      %v701 = vor.u32 %v698, %v699
      %v702 = vrot.slane %v698, 4
      %v704 = vshrl.u32 %v680, 16
      %v706 = vrot.slane %v704, 7
      %v707 = vshll.u32 %v680, 16
      %v709 = vor.u32 %v706, %v707
      %v710 = vrot.slane %v706, 4
      %v712 = vshrl.u32 %v681, 16
      %v714 = vrot.slane %v712, 7
      %v715 = vshll.u32 %v681, 16
      %v717 = vor.u32 %v714, %v715
      %v718 = vrot.slane %v714, 4
      %v720 = vshrl.u32 %v682, 16
      %v722 = vrot.slane %v720, 7
      %v723 = vshll.u32 %v682, 16
      %v725 = vor.u32 %v722, %v723
      %v726 = vrot.slane %v722, 4
      %v728 = vshrl.u32 %v683, 16
      %v730 = vrot.slane %v728, 7
      %v731 = vshll.u32 %v683, 16
      %v733 = vor.u32 %v730, %v731
      %v734 = vrot.slane %v730, 4
      %v736 = vshrl.u32 %v684, 16
      %v738 = vrot.slane %v736, 7
      %v739 = vshll.u32 %v684, 16
      %v741 = vor.u32 %v738, %v739
      %v742 = vrot.slane %v738, 4
      %v744 = vshrl.u32 %v685, 16
      %v746 = vrot.slane %v744, 7
      %v747 = vshll.u32 %v685, 16
      %v749 = vor.u32 %v746, %v747
      %v750 = vrot.slane %v746, 4
      %v752 = vshrl.u32 %v686, 16
      %v754 = vrot.slane %v752, 7
      %v755 = vshll.u32 %v686, 16
      %v757 = vor.u32 %v754, %v755
      %v758 = vrot.slane %v754, 4
      %v760 = vshrl.u32 %v687, 16
      %v762 = vrot.slane %v760, 7
      %v763 = vshll.u32 %v687, 16
      %v765 = vor.u32 %v762, %v763
      %v766 = vrot.slane %v762, 4
      %v768 = vshrl.u32 %v688, 16
      %v770 = vrot.slane %v768, 7
      %v771 = vshll.u32 %v688, 16
      %v773 = vor.u32 %v770, %v771
      %v774 = vrot.slane %v770, 4
      %v776 = vshrl.u32 %v689, 16
      %v778 = vrot.slane %v776, 7
      %v779 = vshll.u32 %v689, 16
      %v781 = vor.u32 %v778, %v779
      %v782 = vrot.slane %v778, 4
      %v784 = vshrl.u32 %v690, 16
      %v786 = vrot.slane %v784, 7
      %v787 = vshll.u32 %v690, 16
      %v789 = vor.u32 %v786, %v787
      %v790 = vrot.slane %v786, 4
      %v792 = vshrl.u32 %v691, 16
      %v794 = vrot.slane %v792, 7
      %v795 = vshll.u32 %v691, 16
      %v797 = vor.u32 %v794, %v795
      %v798 = vrot.slane %v794, 4
      %v800 = vshrl.u32 %v692, 16
      %v802 = vrot.slane %v800, 7
      %v803 = vshll.u32 %v692, 16
      %v805 = vor.u32 %v802, %v803
      %v806 = vrot.slane %v802, 4
      %v808 = vshrl.u32 %v693, 16
      %v810 = vrot.slane %v808, 7
      %v811 = vshll.u32 %v693, 16
      %v813 = vor.u32 %v810, %v811
      %v814 = vrot.slane %v810, 4
      %v816 = vshrl.u32 %v694, 16
      %v818 = vrot.slane %v816, 7
      %v819 = vshll.u32 %v694, 16
      %v821 = vor.u32 %v818, %v819
      %v822 = vrot.slane %v818, 4
      %823 = vrot.lane.b32.xlu0 %v701, 120
      %v824 = vpop.permute.xlu0 %823
      %825 = vrot.lane.b32.xlu0 %v702, 120
      %v826 = vpop.permute.xlu0 %825
      %827 = vrot.lane.b32.xlu0 %v709, 120
      %v828 = vpop.permute.xlu0 %827
      %829 = vrot.lane.b32.xlu0 %v710, 120
      %v830 = vpop.permute.xlu0 %829
      %831 = vrot.lane.b32.xlu0 %v717, 120
      %v832 = vpop.permute.xlu0 %831
      %833 = vrot.lane.b32.xlu0 %v718, 120
      %v834 = vpop.permute.xlu0 %833
      %835 = vrot.lane.b32.xlu0 %v725, 120
      %v836 = vpop.permute.xlu0 %835
      %837 = vrot.lane.b32.xlu0 %v726, 120
      %v838 = vpop.permute.xlu0 %837
      %839 = vrot.lane.b32.xlu0 %v733, 120
      %v840 = vpop.permute.xlu0 %839
      %841 = vrot.lane.b32.xlu0 %v734, 120
      %v842 = vpop.permute.xlu0 %841
      %843 = vrot.lane.b32.xlu0 %v741, 120
      %v844 = vpop.permute.xlu0 %843
      %845 = vrot.lane.b32.xlu0 %v742, 120
      %v846 = vpop.permute.xlu0 %845
      %847 = vrot.lane.b32.xlu0 %v749, 120
      %v848 = vpop.permute.xlu0 %847
      %849 = vrot.lane.b32.xlu0 %v750, 120
      %v850 = vpop.permute.xlu0 %849
      %851 = vrot.lane.b32.xlu0 %v757, 120
      %v852 = vpop.permute.xlu0 %851
      %853 = vrot.lane.b32.xlu0 %v758, 120
      %v854 = vpop.permute.xlu0 %853
      %855 = vrot.lane.b32.xlu0 %v765, 120
      %v856 = vpop.permute.xlu0 %855
      %857 = vrot.lane.b32.xlu0 %v766, 120
      %v858 = vpop.permute.xlu0 %857
      %859 = vrot.lane.b32.xlu0 %v773, 120
      %v860 = vpop.permute.xlu0 %859
      %861 = vrot.lane.b32.xlu0 %v774, 120
      %v862 = vpop.permute.xlu0 %861
      %863 = vrot.lane.b32.xlu0 %v781, 120
      %v864 = vpop.permute.xlu0 %863
      %865 = vrot.lane.b32.xlu0 %v782, 120
      %v866 = vpop.permute.xlu0 %865
      %867 = vrot.lane.b32.xlu0 %v789, 120
      %v868 = vpop.permute.xlu0 %867
      %869 = vrot.lane.b32.xlu0 %v790, 120
      %v870 = vpop.permute.xlu0 %869
      %871 = vrot.lane.b32.xlu0 %v797, 120
      %v872 = vpop.permute.xlu0 %871
      %873 = vrot.lane.b32.xlu0 %v798, 120
      %v874 = vpop.permute.xlu0 %873
      %875 = vrot.lane.b32.xlu0 %v805, 120
      %v876 = vpop.permute.xlu0 %875
      %877 = vrot.lane.b32.xlu0 %v806, 120
      %v878 = vpop.permute.xlu0 %877
      %879 = vrot.lane.b32.xlu0 %v813, 120
      %v880 = vpop.permute.xlu0 %879
      %881 = vrot.lane.b32.xlu0 %v814, 120
      %v882 = vpop.permute.xlu0 %881
      %883 = vrot.lane.b32.xlu0 %v821, 120
      %v884 = vpop.permute.xlu0 %883
      %885 = vrot.lane.b32.xlu0 %v822, 120
      %v886 = vpop.permute.xlu0 %885
      %vm919 = vcmask 60448
      %vm920 = vmand %vm919, %vm280
      %v921 = vld [vmem:[%s578] sm:$0xf]
      %v922 = vsel %vm920, %v824, %v921
      %923 = vst [vmem:[%s578] sm:$0xf] %v922
      %vm924 = vcmask 57376
      %vm925 = vmand %vm924, %vm224
      %v926 = vld [vmem:[%s578 + $0x4] sm:$0x1]
      %v927 = vsel %vm925, %v826, %v926
      %928 = vst [vmem:[%s578 + $0x4] sm:$0x1] %v927
      %v929 = vld [vmem:[%s578 + $0x8] sm:$0xf]
      %v930 = vsel %vm920, %v828, %v929
      %931 = vst [vmem:[%s578 + $0x8] sm:$0xf] %v930
      %v932 = vld [vmem:[%s578 + $0xc] sm:$0x1]
      %v933 = vsel %vm925, %v830, %v932
      %934 = vst [vmem:[%s578 + $0xc] sm:$0x1] %v933
      %v935 = vld [vmem:[%s578 + $0x10] sm:$0xf]
      %v936 = vsel %vm920, %v832, %v935
      %937 = vst [vmem:[%s578 + $0x10] sm:$0xf] %v936
      %v938 = vld [vmem:[%s578 + $0x14] sm:$0x1]
      %v939 = vsel %vm925, %v834, %v938
      %940 = vst [vmem:[%s578 + $0x14] sm:$0x1] %v939
      %v941 = vld [vmem:[%s578 + $0x18] sm:$0xf]
      %v942 = vsel %vm920, %v836, %v941
      %943 = vst [vmem:[%s578 + $0x18] sm:$0xf] %v942
      %v944 = vld [vmem:[%s578 + $0x1c] sm:$0x1]
      %v945 = vsel %vm925, %v838, %v944
      %946 = vst [vmem:[%s578 + $0x1c] sm:$0x1] %v945
      %v947 = vld [vmem:[%s578 + $0x20] sm:$0xf]
      %v948 = vsel %vm920, %v840, %v947
      %949 = vst [vmem:[%s578 + $0x20] sm:$0xf] %v948
      %v950 = vld [vmem:[%s578 + $0x24] sm:$0x1]
      %v951 = vsel %vm925, %v842, %v950
      %952 = vst [vmem:[%s578 + $0x24] sm:$0x1] %v951
      %v953 = vld [vmem:[%s578 + $0x28] sm:$0xf]
      %v954 = vsel %vm920, %v844, %v953
      %955 = vst [vmem:[%s578 + $0x28] sm:$0xf] %v954
      %v956 = vld [vmem:[%s578 + $0x2c] sm:$0x1]
      %v957 = vsel %vm925, %v846, %v956
      %958 = vst [vmem:[%s578 + $0x2c] sm:$0x1] %v957
      %v959 = vld [vmem:[%s578 + $0x30] sm:$0xf]
      %v960 = vsel %vm920, %v848, %v959
      %961 = vst [vmem:[%s578 + $0x30] sm:$0xf] %v960
      %v962 = vld [vmem:[%s578 + $0x34] sm:$0x1]
      %v963 = vsel %vm925, %v850, %v962
      %964 = vst [vmem:[%s578 + $0x34] sm:$0x1] %v963
      %v965 = vld [vmem:[%s578 + $0x38] sm:$0xf]
      %v966 = vsel %vm920, %v852, %v965
      %967 = vst [vmem:[%s578 + $0x38] sm:$0xf] %v966
      %v968 = vld [vmem:[%s578 + $0x3c] sm:$0x1]
      %v969 = vsel %vm925, %v854, %v968
      %970 = vst [vmem:[%s578 + $0x3c] sm:$0x1] %v969
      %v971 = vld [vmem:[%s578 + $0x40] sm:$0xf]
      %v972 = vsel %vm920, %v856, %v971
      %973 = vst [vmem:[%s578 + $0x40] sm:$0xf] %v972
      %v974 = vld [vmem:[%s578 + $0x44] sm:$0x1]
      %v975 = vsel %vm925, %v858, %v974
      %976 = vst [vmem:[%s578 + $0x44] sm:$0x1] %v975
      %v977 = vld [vmem:[%s578 + $0x48] sm:$0xf]
      %v978 = vsel %vm920, %v860, %v977
      %979 = vst [vmem:[%s578 + $0x48] sm:$0xf] %v978
      %v980 = vld [vmem:[%s578 + $0x4c] sm:$0x1]
      %v981 = vsel %vm925, %v862, %v980
      %982 = vst [vmem:[%s578 + $0x4c] sm:$0x1] %v981
      %v983 = vld [vmem:[%s578 + $0x50] sm:$0xf]
      %v984 = vsel %vm920, %v864, %v983
      %985 = vst [vmem:[%s578 + $0x50] sm:$0xf] %v984
      %v986 = vld [vmem:[%s578 + $0x54] sm:$0x1]
      %v987 = vsel %vm925, %v866, %v986
      %988 = vst [vmem:[%s578 + $0x54] sm:$0x1] %v987
      %v989 = vld [vmem:[%s578 + $0x58] sm:$0xf]
      %v990 = vsel %vm920, %v868, %v989
      %991 = vst [vmem:[%s578 + $0x58] sm:$0xf] %v990
      %v992 = vld [vmem:[%s578 + $0x5c] sm:$0x1]
      %v993 = vsel %vm925, %v870, %v992
      %994 = vst [vmem:[%s578 + $0x5c] sm:$0x1] %v993
      %v995 = vld [vmem:[%s578 + $0x60] sm:$0xf]
      %v996 = vsel %vm920, %v872, %v995
      %997 = vst [vmem:[%s578 + $0x60] sm:$0xf] %v996
      %v998 = vld [vmem:[%s578 + $0x64] sm:$0x1]
      %v999 = vsel %vm925, %v874, %v998
      %1000 = vst [vmem:[%s578 + $0x64] sm:$0x1] %v999
      %v1001 = vld [vmem:[%s578 + $0x68] sm:$0xf]
      %v1002 = vsel %vm920, %v876, %v1001
      %1003 = vst [vmem:[%s578 + $0x68] sm:$0xf] %v1002
      %v1004 = vld [vmem:[%s578 + $0x6c] sm:$0x1]
      %v1005 = vsel %vm925, %v878, %v1004
      %1006 = vst [vmem:[%s578 + $0x6c] sm:$0x1] %v1005
      %v1007 = vld [vmem:[%s578 + $0x70] sm:$0xf]
      %v1008 = vsel %vm920, %v880, %v1007
      %1009 = vst [vmem:[%s578 + $0x70] sm:$0xf] %v1008
      %v1010 = vld [vmem:[%s578 + $0x74] sm:$0x1]
      %v1011 = vsel %vm925, %v882, %v1010
      %1012 = vst [vmem:[%s578 + $0x74] sm:$0x1] %v1011
      %v1013 = vld [vmem:[%s578 + $0x78] sm:$0xf]
      %v1014 = vsel %vm920, %v884, %v1013
      %1015 = vst [vmem:[%s578 + $0x78] sm:$0xf] %v1014
      %v1016 = vld [vmem:[%s578 + $0x7c] sm:$0x1]
      %v1017 = vsel %vm925, %v886, %v1016
      %1018 = vst [vmem:[%s578 + $0x7c] sm:$0x1] %v1017
      %p1019 = scmp.eq.s32.totalorder %s20, 0
      // Predicated region
      $region37: #{resblock_body_forward.5} parent=35 // pred_check
        %p1020 = pneg %p1019
      $region38: #{resblock_body_forward.5} parent=35 // pred_check_branch
        %1022 = sbr.rel (%p1020) target = $region40
      $region39: #{resblock_body_forward.5} parent=35 // pred_region
        %vm1023 = vcmask 60416
        %1024 = vst.msk [vmem:[#allocation2] sm:$0xf] %vm1023, 0
        %vm1025 = vcmask 57344
        %1026 = vst.msk [vmem:[#allocation2 + $0x4] sm:$0x1] %vm1025, 0
      $region40: #{resblock_body_forward.5} parent=35 // pred_fallthru
        _
      %p1027 = scmp.gt.s32.totalorder %s20, 0
      // Predicated region
      $region41: #{resblock_body_forward.5} parent=35 // pred_check
        %p1028 = pneg %p1027
      $region42: #{resblock_body_forward.5} parent=35 // pred_check_branch
        %1030 = sbr.rel (%p1028) target = $region44
      $region43: #{resblock_body_forward.5} parent=35 // pred_region
        %s1031 = ssub.s32 %s222, 1
        %s1032 = smul.addr %s1031, 4
        %s1033 = scalar_lea.vmem %s210, %s1032
        %v1034 = vld [vmem:[%s1033] sm:$0xf]
        %v1036 = vshrl.u32 %v1034, 16
        %v1038 = vrot.slane %v1036, 7
        %v1039 = vshll.u32 %v1034, 16
        %v1041 = vor.u32 %v1038, %v1039
        %v1042 = vrot.slane %v1038, 4
        %1043 = vrot.lane.b32.xlu0 %v1041, 124
        %v1044 = vpop.permute.xlu0 %1043
        %1045 = vrot.lane.b32.xlu0 %v1042, 124
        %v1046 = vpop.permute.xlu0 %1045
        %v1049 = vld [vmem:[#allocation2] sm:$0xf]
        %v1050 = vsel %vm580, %v1044, %v1049
        %1051 = vst [vmem:[#allocation2] sm:$0xf] %v1050
        %v1052 = vld [vmem:[#allocation2 + $0x4] sm:$0x1]
        %v1053 = vsel %vm585, %v1046, %v1052
        %1054 = vst [vmem:[#allocation2 + $0x4] sm:$0x1] %v1053
        %v1055 = vld [vmem:[%s1033] sm:$0xf]
        %v1057 = vshrl.u32 %v1055, 16
        %v1059 = vrot.slane %v1057, 7
        %v1060 = vshll.u32 %v1055, 16
        %v1062 = vor.u32 %v1059, %v1060
        %v1063 = vrot.slane %v1059, 4
        %1064 = vrot.lane.b32.xlu0 %v1062, 120
        %v1065 = vpop.permute.xlu0 %1064
        %1066 = vrot.lane.b32.xlu0 %v1063, 120
        %v1067 = vpop.permute.xlu0 %1066
        %v1070 = vld [vmem:[#allocation2] sm:$0xf]
        %v1071 = vsel %vm920, %v1065, %v1070
        %1072 = vst [vmem:[#allocation2] sm:$0xf] %v1071
        %v1073 = vld [vmem:[#allocation2 + $0x4] sm:$0x1]
        %v1074 = vsel %vm925, %v1067, %v1073
        %1075 = vst [vmem:[#allocation2 + $0x4] sm:$0x1] %v1074
      $region44: #{resblock_body_forward.5} parent=35 // pred_fallthru
        _
      // Predicated region
      $region45: #{resblock_body_forward.5} parent=35 // pred_check
        %p1076 = pneg %p1019
      $region46: #{resblock_body_forward.5} parent=35 // pred_check_branch
        %1078 = sbr.rel (%p1076) target = $region48
      $region47: #{resblock_body_forward.5} parent=35 // pred_region
        %s1079 = scalar_lea.vmem [#allocation2], 136
        %vm1080 = vcmask 60416
        %1081 = vst.msk [vmem:[%s1079] sm:$0xf] %vm1080, 0
        %vm1082 = vcmask 57344
        %1083 = vst.msk [vmem:[%s1079 + $0x4] sm:$0x1] %vm1082, 0
      $region48: #{resblock_body_forward.5} parent=35 // pred_fallthru
        _
      %p1084 = scmp.lt.s32.totalorder %s20, 0
      // Predicated region
      $region49: #{resblock_body_forward.5} parent=35 // pred_check
        %p1085 = pneg %p1084
      $region50: #{resblock_body_forward.5} parent=35 // pred_check_branch
        %1087 = sbr.rel (%p1085) target = $region52
      $region51: #{resblock_body_forward.5} parent=35 // pred_region
        %s1088 = sadd.s32 %s222, 16
        %s1089 = smul.addr %s1088, 4
        %s1090 = scalar_lea.vmem %s210, %s1089
        %v1091 = vld [vmem:[%s1090] sm:$0xf]
        %v1093 = vshrl.u32 %v1091, 16
        %v1095 = vrot.slane %v1093, 7
        %v1096 = vshll.u32 %v1091, 16
        %v1098 = vor.u32 %v1095, %v1096
        %v1099 = vrot.slane %v1095, 4
        %1100 = vrot.lane.b32.xlu0 %v1098, 124
        %v1101 = vpop.permute.xlu0 %1100
        %1102 = vrot.lane.b32.xlu0 %v1099, 124
        %v1103 = vpop.permute.xlu0 %1102
        %s1106 = scalar_lea.vmem [#allocation2], 136
        %v1107 = vld [vmem:[%s1106] sm:$0xf]
        %v1108 = vsel %vm580, %v1101, %v1107
        %1109 = vst [vmem:[%s1106] sm:$0xf] %v1108
        %v1110 = vld [vmem:[%s1106 + $0x4] sm:$0x1]
        %v1111 = vsel %vm585, %v1103, %v1110
        %1112 = vst [vmem:[%s1106 + $0x4] sm:$0x1] %v1111
        %v1113 = vld [vmem:[%s1090] sm:$0xf]
        %v1115 = vshrl.u32 %v1113, 16
        %v1117 = vrot.slane %v1115, 7
        %v1118 = vshll.u32 %v1113, 16
        %v1120 = vor.u32 %v1117, %v1118
        %v1121 = vrot.slane %v1117, 4
        %1122 = vrot.lane.b32.xlu0 %v1120, 120
        %v1123 = vpop.permute.xlu0 %1122
        %1124 = vrot.lane.b32.xlu0 %v1121, 120
        %v1125 = vpop.permute.xlu0 %1124
        %v1128 = vld [vmem:[%s1106] sm:$0xf]
        %v1129 = vsel %vm920, %v1123, %v1128
        %1130 = vst [vmem:[%s1106] sm:$0xf] %v1129
        %v1131 = vld [vmem:[%s1106 + $0x4] sm:$0x1]
        %v1132 = vsel %vm925, %v1125, %v1131
        %1133 = vst [vmem:[%s1106 + $0x4] sm:$0x1] %v1132
      $region52: #{resblock_body_forward.5} parent=35 // pred_fallthru
        _
      %v1134 = vld [vmem:[#allocation2] sm:$0xf]
      %v1135 = vld [vmem:[#allocation2 + $0x8] sm:$0xf]
      %v1136 = vld [vmem:[#allocation2 + $0x10] sm:$0xf]
      %v1137 = vld [vmem:[#allocation2 + $0x18] sm:$0xf]
      %v1138 = vld [vmem:[#allocation2 + $0x20] sm:$0xf]
      %v1139 = vld [vmem:[#allocation2 + $0x28] sm:$0xf]
      %v1140 = vld [vmem:[#allocation2 + $0x30] sm:$0xf]
      %v1141 = vld [vmem:[#allocation2 + $0x38] sm:$0xf]
      %v1142 = vld [vmem:[#allocation2 + $0x40] sm:$0xf]
      %v1143 = vld [vmem:[#allocation2 + $0x48] sm:$0xf]
      %v1144 = vld [vmem:[#allocation2 + $0x50] sm:$0xf]
      %v1145 = vld [vmem:[#allocation2 + $0x58] sm:$0xf]
      %v1146 = vld [vmem:[#allocation2 + $0x60] sm:$0xf]
      %v1147 = vld [vmem:[#allocation2 + $0x68] sm:$0xf]
      %v1148 = vld [vmem:[#allocation2 + $0x70] sm:$0xf]
      %v1149 = vld [vmem:[#allocation2 + $0x78] sm:$0xf]
      %vm1150 = vcmask 60416
      %1151 = vst.msk [vmem:[#allocation3] sm:$0xf] %vm1150, %v1134
      %1152 = vst.msk [vmem:[#allocation3 + $0x4] sm:$0xf] %vm1150, %v1135
      %1153 = vst.msk [vmem:[#allocation3 + $0x8] sm:$0xf] %vm1150, %v1136
      %1154 = vst.msk [vmem:[#allocation3 + $0xc] sm:$0xf] %vm1150, %v1137
      %1155 = vst.msk [vmem:[#allocation3 + $0x10] sm:$0xf] %vm1150, %v1138
      %1156 = vst.msk [vmem:[#allocation3 + $0x14] sm:$0xf] %vm1150, %v1139
      %1157 = vst.msk [vmem:[#allocation3 + $0x18] sm:$0xf] %vm1150, %v1140
      %1158 = vst.msk [vmem:[#allocation3 + $0x1c] sm:$0xf] %vm1150, %v1141
      %1159 = vst.msk [vmem:[#allocation3 + $0x20] sm:$0xf] %vm1150, %v1142
      %1160 = vst.msk [vmem:[#allocation3 + $0x24] sm:$0xf] %vm1150, %v1143
      %1161 = vst.msk [vmem:[#allocation3 + $0x28] sm:$0xf] %vm1150, %v1144
      %1162 = vst.msk [vmem:[#allocation3 + $0x2c] sm:$0xf] %vm1150, %v1145
      %1163 = vst.msk [vmem:[#allocation3 + $0x30] sm:$0xf] %vm1150, %v1146
      %1164 = vst.msk [vmem:[#allocation3 + $0x34] sm:$0xf] %vm1150, %v1147
      %1165 = vst.msk [vmem:[#allocation3 + $0x38] sm:$0xf] %vm1150, %v1148
      %1166 = vst.msk [vmem:[#allocation3 + $0x3c] sm:$0xf] %vm1150, %v1149
      %v1167 = vld [vmem:[#allocation2] sm:$0xf]
      %v1168 = vld [vmem:[#allocation2 + $0x4] sm:$0x1]
      %v1169 = vld [vmem:[#allocation2 + $0x8] sm:$0xf]
      %v1170 = vld [vmem:[#allocation2 + $0xc] sm:$0x1]
      %v1171 = vld [vmem:[#allocation2 + $0x10] sm:$0xf]
      %v1172 = vld [vmem:[#allocation2 + $0x14] sm:$0x1]
      %v1173 = vld [vmem:[#allocation2 + $0x18] sm:$0xf]
      %v1174 = vld [vmem:[#allocation2 + $0x1c] sm:$0x1]
      %v1175 = vld [vmem:[#allocation2 + $0x20] sm:$0xf]
      %v1176 = vld [vmem:[#allocation2 + $0x24] sm:$0x1]
      %v1177 = vld [vmem:[#allocation2 + $0x28] sm:$0xf]
      %v1178 = vld [vmem:[#allocation2 + $0x2c] sm:$0x1]
      %v1179 = vld [vmem:[#allocation2 + $0x30] sm:$0xf]
      %v1180 = vld [vmem:[#allocation2 + $0x34] sm:$0x1]
      %v1181 = vld [vmem:[#allocation2 + $0x38] sm:$0xf]
      %v1182 = vld [vmem:[#allocation2 + $0x3c] sm:$0x1]
      %v1183 = vld [vmem:[#allocation2 + $0x40] sm:$0xf]
      %v1184 = vld [vmem:[#allocation2 + $0x44] sm:$0x1]
      %v1185 = vld [vmem:[#allocation2 + $0x48] sm:$0xf]
      %v1186 = vld [vmem:[#allocation2 + $0x4c] sm:$0x1]
      %v1187 = vld [vmem:[#allocation2 + $0x50] sm:$0xf]
      %v1188 = vld [vmem:[#allocation2 + $0x54] sm:$0x1]
      %v1189 = vld [vmem:[#allocation2 + $0x58] sm:$0xf]
      %v1190 = vld [vmem:[#allocation2 + $0x5c] sm:$0x1]
      %v1191 = vld [vmem:[#allocation2 + $0x60] sm:$0xf]
      %v1192 = vld [vmem:[#allocation2 + $0x64] sm:$0x1]
      %v1193 = vld [vmem:[#allocation2 + $0x68] sm:$0xf]
      %v1194 = vld [vmem:[#allocation2 + $0x6c] sm:$0x1]
      %v1195 = vld [vmem:[#allocation2 + $0x70] sm:$0xf]
      %v1196 = vld [vmem:[#allocation2 + $0x74] sm:$0x1]
      %v1197 = vld [vmem:[#allocation2 + $0x78] sm:$0xf]
      %v1198 = vld [vmem:[#allocation2 + $0x7c] sm:$0x1]
      %vm1199 = vsmask.f32 3328
      %vm1200 = vsmask.f32 7440
      %vm1201 = vmor %vm1199, %vm1200
      %v1203 = vshrl.u32 %v1167, 16
      %v1205 = vrot.slane %v1203, 4
      %v1206 = vshll.u32 %v1167, 16
      %v1208 = vrot.slane %v1206, 5
      %v1209 = vor.u32 %v1205, %v1208
      %v1210 = vrot.slane %v1209, 4
      %v1212 = vshll.u32 %v1168, 16
      %v1214 = vrot.slane %v1212, 5
      %v1215 = vsel %vm1201, %v1210, %v1214
      %v1217 = vshrl.u32 %v1169, 16
      %v1219 = vrot.slane %v1217, 4
      %v1220 = vshll.u32 %v1169, 16
      %v1222 = vrot.slane %v1220, 5
      %v1223 = vor.u32 %v1219, %v1222
      %v1224 = vrot.slane %v1223, 4
      %v1226 = vshll.u32 %v1170, 16
      %v1228 = vrot.slane %v1226, 5
      %v1229 = vsel %vm1201, %v1224, %v1228
      %v1231 = vshrl.u32 %v1171, 16
      %v1233 = vrot.slane %v1231, 4
      %v1234 = vshll.u32 %v1171, 16
      %v1236 = vrot.slane %v1234, 5
      %v1237 = vor.u32 %v1233, %v1236
      %v1238 = vrot.slane %v1237, 4
      %v1240 = vshll.u32 %v1172, 16
      %v1242 = vrot.slane %v1240, 5
      %v1243 = vsel %vm1201, %v1238, %v1242
      %v1245 = vshrl.u32 %v1173, 16
      %v1247 = vrot.slane %v1245, 4
      %v1248 = vshll.u32 %v1173, 16
      %v1250 = vrot.slane %v1248, 5
      %v1251 = vor.u32 %v1247, %v1250
      %v1252 = vrot.slane %v1251, 4
      %v1254 = vshll.u32 %v1174, 16
      %v1256 = vrot.slane %v1254, 5
      %v1257 = vsel %vm1201, %v1252, %v1256
      %v1259 = vshrl.u32 %v1175, 16
      %v1261 = vrot.slane %v1259, 4
      %v1262 = vshll.u32 %v1175, 16
      %v1264 = vrot.slane %v1262, 5
      %v1265 = vor.u32 %v1261, %v1264
      %v1266 = vrot.slane %v1265, 4
      %v1268 = vshll.u32 %v1176, 16
      %v1270 = vrot.slane %v1268, 5
      %v1271 = vsel %vm1201, %v1266, %v1270
      %v1273 = vshrl.u32 %v1177, 16
      %v1275 = vrot.slane %v1273, 4
      %v1276 = vshll.u32 %v1177, 16
      %v1278 = vrot.slane %v1276, 5
      %v1279 = vor.u32 %v1275, %v1278
      %v1280 = vrot.slane %v1279, 4
      %v1282 = vshll.u32 %v1178, 16
      %v1284 = vrot.slane %v1282, 5
      %v1285 = vsel %vm1201, %v1280, %v1284
      %v1287 = vshrl.u32 %v1179, 16
      %v1289 = vrot.slane %v1287, 4
      %v1290 = vshll.u32 %v1179, 16
      %v1292 = vrot.slane %v1290, 5
      %v1293 = vor.u32 %v1289, %v1292
      %v1294 = vrot.slane %v1293, 4
      %v1296 = vshll.u32 %v1180, 16
      %v1298 = vrot.slane %v1296, 5
      %v1299 = vsel %vm1201, %v1294, %v1298
      %v1301 = vshrl.u32 %v1181, 16
      %v1303 = vrot.slane %v1301, 4
      %v1304 = vshll.u32 %v1181, 16
      %v1306 = vrot.slane %v1304, 5
      %v1307 = vor.u32 %v1303, %v1306
      %v1308 = vrot.slane %v1307, 4
      %v1310 = vshll.u32 %v1182, 16
      %v1312 = vrot.slane %v1310, 5
      %v1313 = vsel %vm1201, %v1308, %v1312
      %v1315 = vshrl.u32 %v1183, 16
      %v1317 = vrot.slane %v1315, 4
      %v1318 = vshll.u32 %v1183, 16
      %v1320 = vrot.slane %v1318, 5
      %v1321 = vor.u32 %v1317, %v1320
      %v1322 = vrot.slane %v1321, 4
      %v1324 = vshll.u32 %v1184, 16
      %v1326 = vrot.slane %v1324, 5
      %v1327 = vsel %vm1201, %v1322, %v1326
      %v1329 = vshrl.u32 %v1185, 16
      %v1331 = vrot.slane %v1329, 4
      %v1332 = vshll.u32 %v1185, 16
      %v1334 = vrot.slane %v1332, 5
      %v1335 = vor.u32 %v1331, %v1334
      %v1336 = vrot.slane %v1335, 4
      %v1338 = vshll.u32 %v1186, 16
      %v1340 = vrot.slane %v1338, 5
      %v1341 = vsel %vm1201, %v1336, %v1340
      %v1343 = vshrl.u32 %v1187, 16
      %v1345 = vrot.slane %v1343, 4
      %v1346 = vshll.u32 %v1187, 16
      %v1348 = vrot.slane %v1346, 5
      %v1349 = vor.u32 %v1345, %v1348
      %v1350 = vrot.slane %v1349, 4
      %v1352 = vshll.u32 %v1188, 16
      %v1354 = vrot.slane %v1352, 5
      %v1355 = vsel %vm1201, %v1350, %v1354
      %v1357 = vshrl.u32 %v1189, 16
      %v1359 = vrot.slane %v1357, 4
      %v1360 = vshll.u32 %v1189, 16
      %v1362 = vrot.slane %v1360, 5
      %v1363 = vor.u32 %v1359, %v1362
      %v1364 = vrot.slane %v1363, 4
      %v1366 = vshll.u32 %v1190, 16
      %v1368 = vrot.slane %v1366, 5
      %v1369 = vsel %vm1201, %v1364, %v1368
      %v1371 = vshrl.u32 %v1191, 16
      %v1373 = vrot.slane %v1371, 4
      %v1374 = vshll.u32 %v1191, 16
      %v1376 = vrot.slane %v1374, 5
      %v1377 = vor.u32 %v1373, %v1376
      %v1378 = vrot.slane %v1377, 4
      %v1380 = vshll.u32 %v1192, 16
      %v1382 = vrot.slane %v1380, 5
      %v1383 = vsel %vm1201, %v1378, %v1382
      %v1385 = vshrl.u32 %v1193, 16
      %v1387 = vrot.slane %v1385, 4
      %v1388 = vshll.u32 %v1193, 16
      %v1390 = vrot.slane %v1388, 5
      %v1391 = vor.u32 %v1387, %v1390
      %v1392 = vrot.slane %v1391, 4
      %v1394 = vshll.u32 %v1194, 16
      %v1396 = vrot.slane %v1394, 5
      %v1397 = vsel %vm1201, %v1392, %v1396
      %v1399 = vshrl.u32 %v1195, 16
      %v1401 = vrot.slane %v1399, 4
      %v1402 = vshll.u32 %v1195, 16
      %v1404 = vrot.slane %v1402, 5
      %v1405 = vor.u32 %v1401, %v1404
      %v1406 = vrot.slane %v1405, 4
      %v1408 = vshll.u32 %v1196, 16
      %v1410 = vrot.slane %v1408, 5
      %v1411 = vsel %vm1201, %v1406, %v1410
      %v1413 = vshrl.u32 %v1197, 16
      %v1415 = vrot.slane %v1413, 4
      %v1416 = vshll.u32 %v1197, 16
      %v1418 = vrot.slane %v1416, 5
      %v1419 = vor.u32 %v1415, %v1418
      %v1420 = vrot.slane %v1419, 4
      %v1422 = vshll.u32 %v1198, 16
      %v1424 = vrot.slane %v1422, 5
      %v1425 = vsel %vm1201, %v1420, %v1424
      %1426 = vrot.lane.b32.xlu0 %v1215, 8
      %v1427 = vpop.permute.xlu0 %1426
      %1428 = vrot.lane.b32.xlu0 %v1229, 8
      %v1429 = vpop.permute.xlu0 %1428
      %1430 = vrot.lane.b32.xlu0 %v1243, 8
      %v1431 = vpop.permute.xlu0 %1430
      %1432 = vrot.lane.b32.xlu0 %v1257, 8
      %v1433 = vpop.permute.xlu0 %1432
      %1434 = vrot.lane.b32.xlu0 %v1271, 8
      %v1435 = vpop.permute.xlu0 %1434
      %1436 = vrot.lane.b32.xlu0 %v1285, 8
      %v1437 = vpop.permute.xlu0 %1436
      %1438 = vrot.lane.b32.xlu0 %v1299, 8
      %v1439 = vpop.permute.xlu0 %1438
      %1440 = vrot.lane.b32.xlu0 %v1313, 8
      %v1441 = vpop.permute.xlu0 %1440
      %1442 = vrot.lane.b32.xlu0 %v1327, 8
      %v1443 = vpop.permute.xlu0 %1442
      %1444 = vrot.lane.b32.xlu0 %v1341, 8
      %v1445 = vpop.permute.xlu0 %1444
      %1446 = vrot.lane.b32.xlu0 %v1355, 8
      %v1447 = vpop.permute.xlu0 %1446
      %1448 = vrot.lane.b32.xlu0 %v1369, 8
      %v1449 = vpop.permute.xlu0 %1448
      %1450 = vrot.lane.b32.xlu0 %v1383, 8
      %v1451 = vpop.permute.xlu0 %1450
      %1452 = vrot.lane.b32.xlu0 %v1397, 8
      %v1453 = vpop.permute.xlu0 %1452
      %1454 = vrot.lane.b32.xlu0 %v1411, 8
      %v1455 = vpop.permute.xlu0 %1454
      %1456 = vrot.lane.b32.xlu0 %v1425, 8
      %v1457 = vpop.permute.xlu0 %1456
      %vm1474 = vcmask 126016
      %1475 = vst.msk [vmem:[#allocation3] sm:$0xf] %vm1474, %v1427
      %1476 = vst.msk [vmem:[#allocation3 + $0x4] sm:$0xf] %vm1474, %v1429
      %1477 = vst.msk [vmem:[#allocation3 + $0x8] sm:$0xf] %vm1474, %v1431
      %1478 = vst.msk [vmem:[#allocation3 + $0xc] sm:$0xf] %vm1474, %v1433
      %1479 = vst.msk [vmem:[#allocation3 + $0x10] sm:$0xf] %vm1474, %v1435
      %1480 = vst.msk [vmem:[#allocation3 + $0x14] sm:$0xf] %vm1474, %v1437
      %1481 = vst.msk [vmem:[#allocation3 + $0x18] sm:$0xf] %vm1474, %v1439
      %1482 = vst.msk [vmem:[#allocation3 + $0x1c] sm:$0xf] %vm1474, %v1441
      %1483 = vst.msk [vmem:[#allocation3 + $0x20] sm:$0xf] %vm1474, %v1443
      %1484 = vst.msk [vmem:[#allocation3 + $0x24] sm:$0xf] %vm1474, %v1445
      %1485 = vst.msk [vmem:[#allocation3 + $0x28] sm:$0xf] %vm1474, %v1447
      %1486 = vst.msk [vmem:[#allocation3 + $0x2c] sm:$0xf] %vm1474, %v1449
      %1487 = vst.msk [vmem:[#allocation3 + $0x30] sm:$0xf] %vm1474, %v1451
      %1488 = vst.msk [vmem:[#allocation3 + $0x34] sm:$0xf] %vm1474, %v1453
      %1489 = vst.msk [vmem:[#allocation3 + $0x38] sm:$0xf] %vm1474, %v1455
      %1490 = vst.msk [vmem:[#allocation3 + $0x3c] sm:$0xf] %vm1474, %v1457
      %v1491 = vld [vmem:[#allocation2] sm:$0xe]
      %v1492 = vld [vmem:[#allocation2 + $0x4] sm:$0x1]
      %v1493 = vld [vmem:[#allocation2 + $0x8] sm:$0xe]
      %v1494 = vld [vmem:[#allocation2 + $0xc] sm:$0x1]
      %v1495 = vld [vmem:[#allocation2 + $0x10] sm:$0xe]
      %v1496 = vld [vmem:[#allocation2 + $0x14] sm:$0x1]
      %v1497 = vld [vmem:[#allocation2 + $0x18] sm:$0xe]
      %v1498 = vld [vmem:[#allocation2 + $0x1c] sm:$0x1]
      %v1499 = vld [vmem:[#allocation2 + $0x20] sm:$0xe]
      %v1500 = vld [vmem:[#allocation2 + $0x24] sm:$0x1]
      %v1501 = vld [vmem:[#allocation2 + $0x28] sm:$0xe]
      %v1502 = vld [vmem:[#allocation2 + $0x2c] sm:$0x1]
      %v1503 = vld [vmem:[#allocation2 + $0x30] sm:$0xe]
      %v1504 = vld [vmem:[#allocation2 + $0x34] sm:$0x1]
      %v1505 = vld [vmem:[#allocation2 + $0x38] sm:$0xe]
      %v1506 = vld [vmem:[#allocation2 + $0x3c] sm:$0x1]
      %v1507 = vld [vmem:[#allocation2 + $0x40] sm:$0xe]
      %v1508 = vld [vmem:[#allocation2 + $0x44] sm:$0x1]
      %v1509 = vld [vmem:[#allocation2 + $0x48] sm:$0xe]
      %v1510 = vld [vmem:[#allocation2 + $0x4c] sm:$0x1]
      %v1511 = vld [vmem:[#allocation2 + $0x50] sm:$0xe]
      %v1512 = vld [vmem:[#allocation2 + $0x54] sm:$0x1]
      %v1513 = vld [vmem:[#allocation2 + $0x58] sm:$0xe]
      %v1514 = vld [vmem:[#allocation2 + $0x5c] sm:$0x1]
      %v1515 = vld [vmem:[#allocation2 + $0x60] sm:$0xe]
      %v1516 = vld [vmem:[#allocation2 + $0x64] sm:$0x1]
      %v1517 = vld [vmem:[#allocation2 + $0x68] sm:$0xe]
      %v1518 = vld [vmem:[#allocation2 + $0x6c] sm:$0x1]
      %v1519 = vld [vmem:[#allocation2 + $0x70] sm:$0xe]
      %v1520 = vld [vmem:[#allocation2 + $0x74] sm:$0x1]
      %v1521 = vld [vmem:[#allocation2 + $0x78] sm:$0xe]
      %v1522 = vld [vmem:[#allocation2 + $0x7c] sm:$0x1]
      %vm1555 = vcmask 1042432
      %vm1556 = vcmask 1046532
      %vm1557 = vmor %vm1555, %vm1556
      %v1558 = vrot.slane %v1491, 5
      %v1559 = vrot.slane %v1558, 4
      %v1560 = vrot.slane %v1492, 5
      %v1561 = vsel %vm1557, %v1559, %v1560
      %v1562 = vrot.slane %v1493, 5
      %v1563 = vrot.slane %v1562, 4
      %v1564 = vrot.slane %v1494, 5
      %v1565 = vsel %vm1557, %v1563, %v1564
      %v1566 = vrot.slane %v1495, 5
      %v1567 = vrot.slane %v1566, 4
      %v1568 = vrot.slane %v1496, 5
      %v1569 = vsel %vm1557, %v1567, %v1568
      %v1570 = vrot.slane %v1497, 5
      %v1571 = vrot.slane %v1570, 4
      %v1572 = vrot.slane %v1498, 5
      %v1573 = vsel %vm1557, %v1571, %v1572
      %v1574 = vrot.slane %v1499, 5
      %v1575 = vrot.slane %v1574, 4
      %v1576 = vrot.slane %v1500, 5
      %v1577 = vsel %vm1557, %v1575, %v1576
      %v1578 = vrot.slane %v1501, 5
      %v1579 = vrot.slane %v1578, 4
      %v1580 = vrot.slane %v1502, 5
      %v1581 = vsel %vm1557, %v1579, %v1580
      %v1582 = vrot.slane %v1503, 5
      %v1583 = vrot.slane %v1582, 4
      %v1584 = vrot.slane %v1504, 5
      %v1585 = vsel %vm1557, %v1583, %v1584
      %v1586 = vrot.slane %v1505, 5
      %v1587 = vrot.slane %v1586, 4
      %v1588 = vrot.slane %v1506, 5
      %v1589 = vsel %vm1557, %v1587, %v1588
      %v1590 = vrot.slane %v1507, 5
      %v1591 = vrot.slane %v1590, 4
      %v1592 = vrot.slane %v1508, 5
      %v1593 = vsel %vm1557, %v1591, %v1592
      %v1594 = vrot.slane %v1509, 5
      %v1595 = vrot.slane %v1594, 4
      %v1596 = vrot.slane %v1510, 5
      %v1597 = vsel %vm1557, %v1595, %v1596
      %v1598 = vrot.slane %v1511, 5
      %v1599 = vrot.slane %v1598, 4
      %v1600 = vrot.slane %v1512, 5
      %v1601 = vsel %vm1557, %v1599, %v1600
      %v1602 = vrot.slane %v1513, 5
      %v1603 = vrot.slane %v1602, 4
      %v1604 = vrot.slane %v1514, 5
      %v1605 = vsel %vm1557, %v1603, %v1604
      %v1606 = vrot.slane %v1515, 5
      %v1607 = vrot.slane %v1606, 4
      %v1608 = vrot.slane %v1516, 5
      %v1609 = vsel %vm1557, %v1607, %v1608
      %v1610 = vrot.slane %v1517, 5
      %v1611 = vrot.slane %v1610, 4
      %v1612 = vrot.slane %v1518, 5
      %v1613 = vsel %vm1557, %v1611, %v1612
      %v1614 = vrot.slane %v1519, 5
      %v1615 = vrot.slane %v1614, 4
      %v1616 = vrot.slane %v1520, 5
      %v1617 = vsel %vm1557, %v1615, %v1616
      %v1618 = vrot.slane %v1521, 5
      %v1619 = vrot.slane %v1618, 4
      %v1620 = vrot.slane %v1522, 5
      %v1621 = vsel %vm1557, %v1619, %v1620
      %1622 = vrot.lane.b32.xlu0 %v1561, 16
      %v1623 = vpop.permute.xlu0 %1622
      %1624 = vrot.lane.b32.xlu0 %v1565, 16
      %v1625 = vpop.permute.xlu0 %1624
      %1626 = vrot.lane.b32.xlu0 %v1569, 16
      %v1627 = vpop.permute.xlu0 %1626
      %1628 = vrot.lane.b32.xlu0 %v1573, 16
      %v1629 = vpop.permute.xlu0 %1628
      %1630 = vrot.lane.b32.xlu0 %v1577, 16
      %v1631 = vpop.permute.xlu0 %1630
      %1632 = vrot.lane.b32.xlu0 %v1581, 16
      %v1633 = vpop.permute.xlu0 %1632
      %1634 = vrot.lane.b32.xlu0 %v1585, 16
      %v1635 = vpop.permute.xlu0 %1634
      %1636 = vrot.lane.b32.xlu0 %v1589, 16
      %v1637 = vpop.permute.xlu0 %1636
      %1638 = vrot.lane.b32.xlu0 %v1593, 16
      %v1639 = vpop.permute.xlu0 %1638
      %1640 = vrot.lane.b32.xlu0 %v1597, 16
      %v1641 = vpop.permute.xlu0 %1640
      %1642 = vrot.lane.b32.xlu0 %v1601, 16
      %v1643 = vpop.permute.xlu0 %1642
      %1644 = vrot.lane.b32.xlu0 %v1605, 16
      %v1645 = vpop.permute.xlu0 %1644
      %1646 = vrot.lane.b32.xlu0 %v1609, 16
      %v1647 = vpop.permute.xlu0 %1646
      %1648 = vrot.lane.b32.xlu0 %v1613, 16
      %v1649 = vpop.permute.xlu0 %1648
      %1650 = vrot.lane.b32.xlu0 %v1617, 16
      %v1651 = vpop.permute.xlu0 %1650
      %1652 = vrot.lane.b32.xlu0 %v1621, 16
      %v1653 = vpop.permute.xlu0 %1652
      %vm1670 = vcmask 191616
      %1671 = vst.msk [vmem:[#allocation3] sm:$0xf] %vm1670, %v1623
      %1672 = vst.msk [vmem:[#allocation3 + $0x4] sm:$0xf] %vm1670, %v1625
      %1673 = vst.msk [vmem:[#allocation3 + $0x8] sm:$0xf] %vm1670, %v1627
      %1674 = vst.msk [vmem:[#allocation3 + $0xc] sm:$0xf] %vm1670, %v1629
      %1675 = vst.msk [vmem:[#allocation3 + $0x10] sm:$0xf] %vm1670, %v1631
      %1676 = vst.msk [vmem:[#allocation3 + $0x14] sm:$0xf] %vm1670, %v1633
      %1677 = vst.msk [vmem:[#allocation3 + $0x18] sm:$0xf] %vm1670, %v1635
      %1678 = vst.msk [vmem:[#allocation3 + $0x1c] sm:$0xf] %vm1670, %v1637
      %1679 = vst.msk [vmem:[#allocation3 + $0x20] sm:$0xf] %vm1670, %v1639
      %1680 = vst.msk [vmem:[#allocation3 + $0x24] sm:$0xf] %vm1670, %v1641
      %1681 = vst.msk [vmem:[#allocation3 + $0x28] sm:$0xf] %vm1670, %v1643
      %1682 = vst.msk [vmem:[#allocation3 + $0x2c] sm:$0xf] %vm1670, %v1645
      %1683 = vst.msk [vmem:[#allocation3 + $0x30] sm:$0xf] %vm1670, %v1647
      %1684 = vst.msk [vmem:[#allocation3 + $0x34] sm:$0xf] %vm1670, %v1649
      %1685 = vst.msk [vmem:[#allocation3 + $0x38] sm:$0xf] %vm1670, %v1651
      %1686 = vst.msk [vmem:[#allocation3 + $0x3c] sm:$0xf] %vm1670, %v1653
      %v1687 = vld [vmem:[%s578] sm:$0xf]
      %v1688 = vld [vmem:[%s578 + $0x8] sm:$0xf]
      %v1689 = vld [vmem:[%s578 + $0x10] sm:$0xf]
      %v1690 = vld [vmem:[%s578 + $0x18] sm:$0xf]
      %v1691 = vld [vmem:[%s578 + $0x20] sm:$0xf]
      %v1692 = vld [vmem:[%s578 + $0x28] sm:$0xf]
      %v1693 = vld [vmem:[%s578 + $0x30] sm:$0xf]
      %v1694 = vld [vmem:[%s578 + $0x38] sm:$0xf]
      %v1695 = vld [vmem:[%s578 + $0x40] sm:$0xf]
      %v1696 = vld [vmem:[%s578 + $0x48] sm:$0xf]
      %v1697 = vld [vmem:[%s578 + $0x50] sm:$0xf]
      %v1698 = vld [vmem:[%s578 + $0x58] sm:$0xf]
      %v1699 = vld [vmem:[%s578 + $0x60] sm:$0xf]
      %v1700 = vld [vmem:[%s578 + $0x68] sm:$0xf]
      %v1701 = vld [vmem:[%s578 + $0x70] sm:$0xf]
      %v1702 = vld [vmem:[%s578 + $0x78] sm:$0xf]
      %1719 = vrot.lane.b32.xlu0 %v1687, 24
      %v1720 = vpop.permute.xlu0 %1719
      %1721 = vrot.lane.b32.xlu0 %v1688, 24
      %v1722 = vpop.permute.xlu0 %1721
      %1723 = vrot.lane.b32.xlu0 %v1689, 24
      %v1724 = vpop.permute.xlu0 %1723
      %1725 = vrot.lane.b32.xlu0 %v1690, 24
      %v1726 = vpop.permute.xlu0 %1725
      %1727 = vrot.lane.b32.xlu0 %v1691, 24
      %v1728 = vpop.permute.xlu0 %1727
      %1729 = vrot.lane.b32.xlu0 %v1692, 24
      %v1730 = vpop.permute.xlu0 %1729
      %1731 = vrot.lane.b32.xlu0 %v1693, 24
      %v1732 = vpop.permute.xlu0 %1731
      %1733 = vrot.lane.b32.xlu0 %v1694, 24
      %v1734 = vpop.permute.xlu0 %1733
      %1735 = vrot.lane.b32.xlu0 %v1695, 24
      %v1736 = vpop.permute.xlu0 %1735
      %1737 = vrot.lane.b32.xlu0 %v1696, 24
      %v1738 = vpop.permute.xlu0 %1737
      %1739 = vrot.lane.b32.xlu0 %v1697, 24
      %v1740 = vpop.permute.xlu0 %1739
      %1741 = vrot.lane.b32.xlu0 %v1698, 24
      %v1742 = vpop.permute.xlu0 %1741
      %1743 = vrot.lane.b32.xlu0 %v1699, 24
      %v1744 = vpop.permute.xlu0 %1743
      %1745 = vrot.lane.b32.xlu0 %v1700, 24
      %v1746 = vpop.permute.xlu0 %1745
      %1747 = vrot.lane.b32.xlu0 %v1701, 24
      %v1748 = vpop.permute.xlu0 %1747
      %1749 = vrot.lane.b32.xlu0 %v1702, 24
      %v1750 = vpop.permute.xlu0 %1749
      %vm1767 = vcmask 257216
      %1768 = vst.msk [vmem:[#allocation3] sm:$0xf] %vm1767, %v1720
      %1769 = vst.msk [vmem:[#allocation3 + $0x4] sm:$0xf] %vm1767, %v1722
      %1770 = vst.msk [vmem:[#allocation3 + $0x8] sm:$0xf] %vm1767, %v1724
      %1771 = vst.msk [vmem:[#allocation3 + $0xc] sm:$0xf] %vm1767, %v1726
      %1772 = vst.msk [vmem:[#allocation3 + $0x10] sm:$0xf] %vm1767, %v1728
      %1773 = vst.msk [vmem:[#allocation3 + $0x14] sm:$0xf] %vm1767, %v1730
      %1774 = vst.msk [vmem:[#allocation3 + $0x18] sm:$0xf] %vm1767, %v1732
      %1775 = vst.msk [vmem:[#allocation3 + $0x1c] sm:$0xf] %vm1767, %v1734
      %1776 = vst.msk [vmem:[#allocation3 + $0x20] sm:$0xf] %vm1767, %v1736
      %1777 = vst.msk [vmem:[#allocation3 + $0x24] sm:$0xf] %vm1767, %v1738
      %1778 = vst.msk [vmem:[#allocation3 + $0x28] sm:$0xf] %vm1767, %v1740
      %1779 = vst.msk [vmem:[#allocation3 + $0x2c] sm:$0xf] %vm1767, %v1742
      %1780 = vst.msk [vmem:[#allocation3 + $0x30] sm:$0xf] %vm1767, %v1744
      %1781 = vst.msk [vmem:[#allocation3 + $0x34] sm:$0xf] %vm1767, %v1746
      %1782 = vst.msk [vmem:[#allocation3 + $0x38] sm:$0xf] %vm1767, %v1748
      %1783 = vst.msk [vmem:[#allocation3 + $0x3c] sm:$0xf] %vm1767, %v1750
      %v1784 = vld [vmem:[%s578] sm:$0xf]
      %v1785 = vld [vmem:[%s578 + $0x4] sm:$0x1]
      %v1786 = vld [vmem:[%s578 + $0x8] sm:$0xf]
      %v1787 = vld [vmem:[%s578 + $0xc] sm:$0x1]
      %v1788 = vld [vmem:[%s578 + $0x10] sm:$0xf]
      %v1789 = vld [vmem:[%s578 + $0x14] sm:$0x1]
      %v1790 = vld [vmem:[%s578 + $0x18] sm:$0xf]
      %v1791 = vld [vmem:[%s578 + $0x1c] sm:$0x1]
      %v1792 = vld [vmem:[%s578 + $0x20] sm:$0xf]
      %v1793 = vld [vmem:[%s578 + $0x24] sm:$0x1]
      %v1794 = vld [vmem:[%s578 + $0x28] sm:$0xf]
      %v1795 = vld [vmem:[%s578 + $0x2c] sm:$0x1]
      %v1796 = vld [vmem:[%s578 + $0x30] sm:$0xf]
      %v1797 = vld [vmem:[%s578 + $0x34] sm:$0x1]
      %v1798 = vld [vmem:[%s578 + $0x38] sm:$0xf]
      %v1799 = vld [vmem:[%s578 + $0x3c] sm:$0x1]
      %v1800 = vld [vmem:[%s578 + $0x40] sm:$0xf]
      %v1801 = vld [vmem:[%s578 + $0x44] sm:$0x1]
      %v1802 = vld [vmem:[%s578 + $0x48] sm:$0xf]
      %v1803 = vld [vmem:[%s578 + $0x4c] sm:$0x1]
      %v1804 = vld [vmem:[%s578 + $0x50] sm:$0xf]
      %v1805 = vld [vmem:[%s578 + $0x54] sm:$0x1]
      %v1806 = vld [vmem:[%s578 + $0x58] sm:$0xf]
      %v1807 = vld [vmem:[%s578 + $0x5c] sm:$0x1]
      %v1808 = vld [vmem:[%s578 + $0x60] sm:$0xf]
      %v1809 = vld [vmem:[%s578 + $0x64] sm:$0x1]
      %v1810 = vld [vmem:[%s578 + $0x68] sm:$0xf]
      %v1811 = vld [vmem:[%s578 + $0x6c] sm:$0x1]
      %v1812 = vld [vmem:[%s578 + $0x70] sm:$0xf]
      %v1813 = vld [vmem:[%s578 + $0x74] sm:$0x1]
      %v1814 = vld [vmem:[%s578 + $0x78] sm:$0xf]
      %v1815 = vld [vmem:[%s578 + $0x7c] sm:$0x1]
      %v1817 = vshrl.u32 %v1784, 16
      %v1819 = vrot.slane %v1817, 4
      %v1820 = vshll.u32 %v1784, 16
      %v1822 = vrot.slane %v1820, 5
      %v1823 = vor.u32 %v1819, %v1822
      %v1824 = vrot.slane %v1823, 4
      %v1826 = vshll.u32 %v1785, 16
      %v1828 = vrot.slane %v1826, 5
      %v1829 = vsel %vm1201, %v1824, %v1828
      %v1831 = vshrl.u32 %v1786, 16
      %v1833 = vrot.slane %v1831, 4
      %v1834 = vshll.u32 %v1786, 16
      %v1836 = vrot.slane %v1834, 5
      %v1837 = vor.u32 %v1833, %v1836
      %v1838 = vrot.slane %v1837, 4
      %v1840 = vshll.u32 %v1787, 16
      %v1842 = vrot.slane %v1840, 5
      %v1843 = vsel %vm1201, %v1838, %v1842
      %v1845 = vshrl.u32 %v1788, 16
      %v1847 = vrot.slane %v1845, 4
      %v1848 = vshll.u32 %v1788, 16
      %v1850 = vrot.slane %v1848, 5
      %v1851 = vor.u32 %v1847, %v1850
      %v1852 = vrot.slane %v1851, 4
      %v1854 = vshll.u32 %v1789, 16
      %v1856 = vrot.slane %v1854, 5
      %v1857 = vsel %vm1201, %v1852, %v1856
      %v1859 = vshrl.u32 %v1790, 16
      %v1861 = vrot.slane %v1859, 4
      %v1862 = vshll.u32 %v1790, 16
      %v1864 = vrot.slane %v1862, 5
      %v1865 = vor.u32 %v1861, %v1864
      %v1866 = vrot.slane %v1865, 4
      %v1868 = vshll.u32 %v1791, 16
      %v1870 = vrot.slane %v1868, 5
      %v1871 = vsel %vm1201, %v1866, %v1870
      %v1873 = vshrl.u32 %v1792, 16
      %v1875 = vrot.slane %v1873, 4
      %v1876 = vshll.u32 %v1792, 16
      %v1878 = vrot.slane %v1876, 5
      %v1879 = vor.u32 %v1875, %v1878
      %v1880 = vrot.slane %v1879, 4
      %v1882 = vshll.u32 %v1793, 16
      %v1884 = vrot.slane %v1882, 5
      %v1885 = vsel %vm1201, %v1880, %v1884
      %v1887 = vshrl.u32 %v1794, 16
      %v1889 = vrot.slane %v1887, 4
      %v1890 = vshll.u32 %v1794, 16
      %v1892 = vrot.slane %v1890, 5
      %v1893 = vor.u32 %v1889, %v1892
      %v1894 = vrot.slane %v1893, 4
      %v1896 = vshll.u32 %v1795, 16
      %v1898 = vrot.slane %v1896, 5
      %v1899 = vsel %vm1201, %v1894, %v1898
      %v1901 = vshrl.u32 %v1796, 16
      %v1903 = vrot.slane %v1901, 4
      %v1904 = vshll.u32 %v1796, 16
      %v1906 = vrot.slane %v1904, 5
      %v1907 = vor.u32 %v1903, %v1906
      %v1908 = vrot.slane %v1907, 4
      %v1910 = vshll.u32 %v1797, 16
      %v1912 = vrot.slane %v1910, 5
      %v1913 = vsel %vm1201, %v1908, %v1912
      %v1915 = vshrl.u32 %v1798, 16
      %v1917 = vrot.slane %v1915, 4
      %v1918 = vshll.u32 %v1798, 16
      %v1920 = vrot.slane %v1918, 5
      %v1921 = vor.u32 %v1917, %v1920
      %v1922 = vrot.slane %v1921, 4
      %v1924 = vshll.u32 %v1799, 16
      %v1926 = vrot.slane %v1924, 5
      %v1927 = vsel %vm1201, %v1922, %v1926
      %v1929 = vshrl.u32 %v1800, 16
      %v1931 = vrot.slane %v1929, 4
      %v1932 = vshll.u32 %v1800, 16
      %v1934 = vrot.slane %v1932, 5
      %v1935 = vor.u32 %v1931, %v1934
      %v1936 = vrot.slane %v1935, 4
      %v1938 = vshll.u32 %v1801, 16
      %v1940 = vrot.slane %v1938, 5
      %v1941 = vsel %vm1201, %v1936, %v1940
      %v1943 = vshrl.u32 %v1802, 16
      %v1945 = vrot.slane %v1943, 4
      %v1946 = vshll.u32 %v1802, 16
      %v1948 = vrot.slane %v1946, 5
      %v1949 = vor.u32 %v1945, %v1948
      %v1950 = vrot.slane %v1949, 4
      %v1952 = vshll.u32 %v1803, 16
      %v1954 = vrot.slane %v1952, 5
      %v1955 = vsel %vm1201, %v1950, %v1954
      %v1957 = vshrl.u32 %v1804, 16
      %v1959 = vrot.slane %v1957, 4
      %v1960 = vshll.u32 %v1804, 16
      %v1962 = vrot.slane %v1960, 5
      %v1963 = vor.u32 %v1959, %v1962
      %v1964 = vrot.slane %v1963, 4
      %v1966 = vshll.u32 %v1805, 16
      %v1968 = vrot.slane %v1966, 5
      %v1969 = vsel %vm1201, %v1964, %v1968
      %v1971 = vshrl.u32 %v1806, 16
      %v1973 = vrot.slane %v1971, 4
      %v1974 = vshll.u32 %v1806, 16
      %v1976 = vrot.slane %v1974, 5
      %v1977 = vor.u32 %v1973, %v1976
      %v1978 = vrot.slane %v1977, 4
      %v1980 = vshll.u32 %v1807, 16
      %v1982 = vrot.slane %v1980, 5
      %v1983 = vsel %vm1201, %v1978, %v1982
      %v1985 = vshrl.u32 %v1808, 16
      %v1987 = vrot.slane %v1985, 4
      %v1988 = vshll.u32 %v1808, 16
      %v1990 = vrot.slane %v1988, 5
      %v1991 = vor.u32 %v1987, %v1990
      %v1992 = vrot.slane %v1991, 4
      %v1994 = vshll.u32 %v1809, 16
      %v1996 = vrot.slane %v1994, 5
      %v1997 = vsel %vm1201, %v1992, %v1996
      %v1999 = vshrl.u32 %v1810, 16
      %v2001 = vrot.slane %v1999, 4
      %v2002 = vshll.u32 %v1810, 16
      %v2004 = vrot.slane %v2002, 5
      %v2005 = vor.u32 %v2001, %v2004
      %v2006 = vrot.slane %v2005, 4
      %v2008 = vshll.u32 %v1811, 16
      %v2010 = vrot.slane %v2008, 5
      %v2011 = vsel %vm1201, %v2006, %v2010
      %v2013 = vshrl.u32 %v1812, 16
      %v2015 = vrot.slane %v2013, 4
      %v2016 = vshll.u32 %v1812, 16
      %v2018 = vrot.slane %v2016, 5
      %v2019 = vor.u32 %v2015, %v2018
      %v2020 = vrot.slane %v2019, 4
      %v2022 = vshll.u32 %v1813, 16
      %v2024 = vrot.slane %v2022, 5
      %v2025 = vsel %vm1201, %v2020, %v2024
      %v2027 = vshrl.u32 %v1814, 16
      %v2029 = vrot.slane %v2027, 4
      %v2030 = vshll.u32 %v1814, 16
      %v2032 = vrot.slane %v2030, 5
      %v2033 = vor.u32 %v2029, %v2032
      %v2034 = vrot.slane %v2033, 4
      %v2036 = vshll.u32 %v1815, 16
      %v2038 = vrot.slane %v2036, 5
      %v2039 = vsel %vm1201, %v2034, %v2038
      %2040 = vrot.lane.b32.xlu0 %v1829, 32
      %v2041 = vpop.permute.xlu0 %2040
      %2042 = vrot.lane.b32.xlu0 %v1843, 32
      %v2043 = vpop.permute.xlu0 %2042
      %2044 = vrot.lane.b32.xlu0 %v1857, 32
      %v2045 = vpop.permute.xlu0 %2044
      %2046 = vrot.lane.b32.xlu0 %v1871, 32
      %v2047 = vpop.permute.xlu0 %2046
      %2048 = vrot.lane.b32.xlu0 %v1885, 32
      %v2049 = vpop.permute.xlu0 %2048
      %2050 = vrot.lane.b32.xlu0 %v1899, 32
      %v2051 = vpop.permute.xlu0 %2050
      %2052 = vrot.lane.b32.xlu0 %v1913, 32
      %v2053 = vpop.permute.xlu0 %2052
      %2054 = vrot.lane.b32.xlu0 %v1927, 32
      %v2055 = vpop.permute.xlu0 %2054
      %2056 = vrot.lane.b32.xlu0 %v1941, 32
      %v2057 = vpop.permute.xlu0 %2056
      %2058 = vrot.lane.b32.xlu0 %v1955, 32
      %v2059 = vpop.permute.xlu0 %2058
      %2060 = vrot.lane.b32.xlu0 %v1969, 32
      %v2061 = vpop.permute.xlu0 %2060
      %2062 = vrot.lane.b32.xlu0 %v1983, 32
      %v2063 = vpop.permute.xlu0 %2062
      %2064 = vrot.lane.b32.xlu0 %v1997, 32
      %v2065 = vpop.permute.xlu0 %2064
      %2066 = vrot.lane.b32.xlu0 %v2011, 32
      %v2067 = vpop.permute.xlu0 %2066
      %2068 = vrot.lane.b32.xlu0 %v2025, 32
      %v2069 = vpop.permute.xlu0 %2068
      %2070 = vrot.lane.b32.xlu0 %v2039, 32
      %v2071 = vpop.permute.xlu0 %2070
      %vm2088 = vcmask 322816
      %2089 = vst.msk [vmem:[#allocation3] sm:$0xf] %vm2088, %v2041
      %2090 = vst.msk [vmem:[#allocation3 + $0x4] sm:$0xf] %vm2088, %v2043
      %2091 = vst.msk [vmem:[#allocation3 + $0x8] sm:$0xf] %vm2088, %v2045
      %2092 = vst.msk [vmem:[#allocation3 + $0xc] sm:$0xf] %vm2088, %v2047
      %2093 = vst.msk [vmem:[#allocation3 + $0x10] sm:$0xf] %vm2088, %v2049
      %2094 = vst.msk [vmem:[#allocation3 + $0x14] sm:$0xf] %vm2088, %v2051
      %2095 = vst.msk [vmem:[#allocation3 + $0x18] sm:$0xf] %vm2088, %v2053
      %2096 = vst.msk [vmem:[#allocation3 + $0x1c] sm:$0xf] %vm2088, %v2055
      %2097 = vst.msk [vmem:[#allocation3 + $0x20] sm:$0xf] %vm2088, %v2057
      %2098 = vst.msk [vmem:[#allocation3 + $0x24] sm:$0xf] %vm2088, %v2059
      %2099 = vst.msk [vmem:[#allocation3 + $0x28] sm:$0xf] %vm2088, %v2061
      %2100 = vst.msk [vmem:[#allocation3 + $0x2c] sm:$0xf] %vm2088, %v2063
      %2101 = vst.msk [vmem:[#allocation3 + $0x30] sm:$0xf] %vm2088, %v2065
      %2102 = vst.msk [vmem:[#allocation3 + $0x34] sm:$0xf] %vm2088, %v2067
      %2103 = vst.msk [vmem:[#allocation3 + $0x38] sm:$0xf] %vm2088, %v2069
      %2104 = vst.msk [vmem:[#allocation3 + $0x3c] sm:$0xf] %vm2088, %v2071
      %v2105 = vld [vmem:[%s578] sm:$0xe]
      %v2106 = vld [vmem:[%s578 + $0x4] sm:$0x1]
      %v2107 = vld [vmem:[%s578 + $0x8] sm:$0xe]
      %v2108 = vld [vmem:[%s578 + $0xc] sm:$0x1]
      %v2109 = vld [vmem:[%s578 + $0x10] sm:$0xe]
      %v2110 = vld [vmem:[%s578 + $0x14] sm:$0x1]
      %v2111 = vld [vmem:[%s578 + $0x18] sm:$0xe]
      %v2112 = vld [vmem:[%s578 + $0x1c] sm:$0x1]
      %v2113 = vld [vmem:[%s578 + $0x20] sm:$0xe]
      %v2114 = vld [vmem:[%s578 + $0x24] sm:$0x1]
      %v2115 = vld [vmem:[%s578 + $0x28] sm:$0xe]
      %v2116 = vld [vmem:[%s578 + $0x2c] sm:$0x1]
      %v2117 = vld [vmem:[%s578 + $0x30] sm:$0xe]
      %v2118 = vld [vmem:[%s578 + $0x34] sm:$0x1]
      %v2119 = vld [vmem:[%s578 + $0x38] sm:$0xe]
      %v2120 = vld [vmem:[%s578 + $0x3c] sm:$0x1]
      %v2121 = vld [vmem:[%s578 + $0x40] sm:$0xe]
      %v2122 = vld [vmem:[%s578 + $0x44] sm:$0x1]
      %v2123 = vld [vmem:[%s578 + $0x48] sm:$0xe]
      %v2124 = vld [vmem:[%s578 + $0x4c] sm:$0x1]
      %v2125 = vld [vmem:[%s578 + $0x50] sm:$0xe]
      %v2126 = vld [vmem:[%s578 + $0x54] sm:$0x1]
      %v2127 = vld [vmem:[%s578 + $0x58] sm:$0xe]
      %v2128 = vld [vmem:[%s578 + $0x5c] sm:$0x1]
      %v2129 = vld [vmem:[%s578 + $0x60] sm:$0xe]
      %v2130 = vld [vmem:[%s578 + $0x64] sm:$0x1]
      %v2131 = vld [vmem:[%s578 + $0x68] sm:$0xe]
      %v2132 = vld [vmem:[%s578 + $0x6c] sm:$0x1]
      %v2133 = vld [vmem:[%s578 + $0x70] sm:$0xe]
      %v2134 = vld [vmem:[%s578 + $0x74] sm:$0x1]
      %v2135 = vld [vmem:[%s578 + $0x78] sm:$0xe]
      %v2136 = vld [vmem:[%s578 + $0x7c] sm:$0x1]
      %v2169 = vrot.slane %v2105, 5
      %v2170 = vrot.slane %v2169, 4
      %v2171 = vrot.slane %v2106, 5
      %v2172 = vsel %vm1557, %v2170, %v2171
      %v2173 = vrot.slane %v2107, 5
      %v2174 = vrot.slane %v2173, 4
      %v2175 = vrot.slane %v2108, 5
      %v2176 = vsel %vm1557, %v2174, %v2175
      %v2177 = vrot.slane %v2109, 5
      %v2178 = vrot.slane %v2177, 4
      %v2179 = vrot.slane %v2110, 5
      %v2180 = vsel %vm1557, %v2178, %v2179
      %v2181 = vrot.slane %v2111, 5
      %v2182 = vrot.slane %v2181, 4
      %v2183 = vrot.slane %v2112, 5
      %v2184 = vsel %vm1557, %v2182, %v2183
      %v2185 = vrot.slane %v2113, 5
      %v2186 = vrot.slane %v2185, 4
      %v2187 = vrot.slane %v2114, 5
      %v2188 = vsel %vm1557, %v2186, %v2187
      %v2189 = vrot.slane %v2115, 5
      %v2190 = vrot.slane %v2189, 4
      %v2191 = vrot.slane %v2116, 5
      %v2192 = vsel %vm1557, %v2190, %v2191
      %v2193 = vrot.slane %v2117, 5
      %v2194 = vrot.slane %v2193, 4
      %v2195 = vrot.slane %v2118, 5
      %v2196 = vsel %vm1557, %v2194, %v2195
      %v2197 = vrot.slane %v2119, 5
      %v2198 = vrot.slane %v2197, 4
      %v2199 = vrot.slane %v2120, 5
      %v2200 = vsel %vm1557, %v2198, %v2199
      %v2201 = vrot.slane %v2121, 5
      %v2202 = vrot.slane %v2201, 4
      %v2203 = vrot.slane %v2122, 5
      %v2204 = vsel %vm1557, %v2202, %v2203
      %v2205 = vrot.slane %v2123, 5
      %v2206 = vrot.slane %v2205, 4
      %v2207 = vrot.slane %v2124, 5
      %v2208 = vsel %vm1557, %v2206, %v2207
      %v2209 = vrot.slane %v2125, 5
      %v2210 = vrot.slane %v2209, 4
      %v2211 = vrot.slane %v2126, 5
      %v2212 = vsel %vm1557, %v2210, %v2211
      %v2213 = vrot.slane %v2127, 5
      %v2214 = vrot.slane %v2213, 4
      %v2215 = vrot.slane %v2128, 5
      %v2216 = vsel %vm1557, %v2214, %v2215
      %v2217 = vrot.slane %v2129, 5
      %v2218 = vrot.slane %v2217, 4
      %v2219 = vrot.slane %v2130, 5
      %v2220 = vsel %vm1557, %v2218, %v2219
      %v2221 = vrot.slane %v2131, 5
      %v2222 = vrot.slane %v2221, 4
      %v2223 = vrot.slane %v2132, 5
      %v2224 = vsel %vm1557, %v2222, %v2223
      %v2225 = vrot.slane %v2133, 5
      %v2226 = vrot.slane %v2225, 4
      %v2227 = vrot.slane %v2134, 5
      %v2228 = vsel %vm1557, %v2226, %v2227
      %v2229 = vrot.slane %v2135, 5
      %v2230 = vrot.slane %v2229, 4
      %v2231 = vrot.slane %v2136, 5
      %v2232 = vsel %vm1557, %v2230, %v2231
      %2233 = vrot.lane.b32.xlu0 %v2172, 40
      %v2234 = vpop.permute.xlu0 %2233
      %2235 = vrot.lane.b32.xlu0 %v2176, 40
      %v2236 = vpop.permute.xlu0 %2235
      %2237 = vrot.lane.b32.xlu0 %v2180, 40
      %v2238 = vpop.permute.xlu0 %2237
      %2239 = vrot.lane.b32.xlu0 %v2184, 40
      %v2240 = vpop.permute.xlu0 %2239
      %2241 = vrot.lane.b32.xlu0 %v2188, 40
      %v2242 = vpop.permute.xlu0 %2241
      %2243 = vrot.lane.b32.xlu0 %v2192, 40
      %v2244 = vpop.permute.xlu0 %2243
      %2245 = vrot.lane.b32.xlu0 %v2196, 40
      %v2246 = vpop.permute.xlu0 %2245
      %2247 = vrot.lane.b32.xlu0 %v2200, 40
      %v2248 = vpop.permute.xlu0 %2247
      %2249 = vrot.lane.b32.xlu0 %v2204, 40
      %v2250 = vpop.permute.xlu0 %2249
      %2251 = vrot.lane.b32.xlu0 %v2208, 40
      %v2252 = vpop.permute.xlu0 %2251
      %2253 = vrot.lane.b32.xlu0 %v2212, 40
      %v2254 = vpop.permute.xlu0 %2253
      %2255 = vrot.lane.b32.xlu0 %v2216, 40
      %v2256 = vpop.permute.xlu0 %2255
      %2257 = vrot.lane.b32.xlu0 %v2220, 40
      %v2258 = vpop.permute.xlu0 %2257
      %2259 = vrot.lane.b32.xlu0 %v2224, 40
      %v2260 = vpop.permute.xlu0 %2259
      %2261 = vrot.lane.b32.xlu0 %v2228, 40
      %v2262 = vpop.permute.xlu0 %2261
      %2263 = vrot.lane.b32.xlu0 %v2232, 40
      %v2264 = vpop.permute.xlu0 %2263
      %vm2281 = vcmask 388416
      %2282 = vst.msk [vmem:[#allocation3] sm:$0xf] %vm2281, %v2234
      %2283 = vst.msk [vmem:[#allocation3 + $0x4] sm:$0xf] %vm2281, %v2236
      %2284 = vst.msk [vmem:[#allocation3 + $0x8] sm:$0xf] %vm2281, %v2238
      %2285 = vst.msk [vmem:[#allocation3 + $0xc] sm:$0xf] %vm2281, %v2240
      %2286 = vst.msk [vmem:[#allocation3 + $0x10] sm:$0xf] %vm2281, %v2242
      %2287 = vst.msk [vmem:[#allocation3 + $0x14] sm:$0xf] %vm2281, %v2244
      %2288 = vst.msk [vmem:[#allocation3 + $0x18] sm:$0xf] %vm2281, %v2246
      %2289 = vst.msk [vmem:[#allocation3 + $0x1c] sm:$0xf] %vm2281, %v2248
      %2290 = vst.msk [vmem:[#allocation3 + $0x20] sm:$0xf] %vm2281, %v2250
      %2291 = vst.msk [vmem:[#allocation3 + $0x24] sm:$0xf] %vm2281, %v2252
      %2292 = vst.msk [vmem:[#allocation3 + $0x28] sm:$0xf] %vm2281, %v2254
      %2293 = vst.msk [vmem:[#allocation3 + $0x2c] sm:$0xf] %vm2281, %v2256
      %2294 = vst.msk [vmem:[#allocation3 + $0x30] sm:$0xf] %vm2281, %v2258
      %2295 = vst.msk [vmem:[#allocation3 + $0x34] sm:$0xf] %vm2281, %v2260
      %2296 = vst.msk [vmem:[#allocation3 + $0x38] sm:$0xf] %vm2281, %v2262
      %2297 = vst.msk [vmem:[#allocation3 + $0x3c] sm:$0xf] %vm2281, %v2264
      %s2298 = scalar_lea.vmem [#allocation2], 16
      %v2299 = vld [vmem:[%s2298] sm:$0xf]
      %v2300 = vld [vmem:[%s2298 + $0x8] sm:$0xf]
      %v2301 = vld [vmem:[%s2298 + $0x10] sm:$0xf]
      %v2302 = vld [vmem:[%s2298 + $0x18] sm:$0xf]
      %v2303 = vld [vmem:[%s2298 + $0x20] sm:$0xf]
      %v2304 = vld [vmem:[%s2298 + $0x28] sm:$0xf]
      %v2305 = vld [vmem:[%s2298 + $0x30] sm:$0xf]
      %v2306 = vld [vmem:[%s2298 + $0x38] sm:$0xf]
      %v2307 = vld [vmem:[%s2298 + $0x40] sm:$0xf]
      %v2308 = vld [vmem:[%s2298 + $0x48] sm:$0xf]
      %v2309 = vld [vmem:[%s2298 + $0x50] sm:$0xf]
      %v2310 = vld [vmem:[%s2298 + $0x58] sm:$0xf]
      %v2311 = vld [vmem:[%s2298 + $0x60] sm:$0xf]
      %v2312 = vld [vmem:[%s2298 + $0x68] sm:$0xf]
      %v2313 = vld [vmem:[%s2298 + $0x70] sm:$0xf]
      %v2314 = vld [vmem:[%s2298 + $0x78] sm:$0xf]
      %2331 = vrot.lane.b32.xlu0 %v2299, 48
      %v2332 = vpop.permute.xlu0 %2331
      %2333 = vrot.lane.b32.xlu0 %v2300, 48
      %v2334 = vpop.permute.xlu0 %2333
      %2335 = vrot.lane.b32.xlu0 %v2301, 48
      %v2336 = vpop.permute.xlu0 %2335
      %2337 = vrot.lane.b32.xlu0 %v2302, 48
      %v2338 = vpop.permute.xlu0 %2337
      %2339 = vrot.lane.b32.xlu0 %v2303, 48
      %v2340 = vpop.permute.xlu0 %2339
      %2341 = vrot.lane.b32.xlu0 %v2304, 48
      %v2342 = vpop.permute.xlu0 %2341
      %2343 = vrot.lane.b32.xlu0 %v2305, 48
      %v2344 = vpop.permute.xlu0 %2343
      %2345 = vrot.lane.b32.xlu0 %v2306, 48
      %v2346 = vpop.permute.xlu0 %2345
      %2347 = vrot.lane.b32.xlu0 %v2307, 48
      %v2348 = vpop.permute.xlu0 %2347
      %2349 = vrot.lane.b32.xlu0 %v2308, 48
      %v2350 = vpop.permute.xlu0 %2349
      %2351 = vrot.lane.b32.xlu0 %v2309, 48
      %v2352 = vpop.permute.xlu0 %2351
      %2353 = vrot.lane.b32.xlu0 %v2310, 48
      %v2354 = vpop.permute.xlu0 %2353
      %2355 = vrot.lane.b32.xlu0 %v2311, 48
      %v2356 = vpop.permute.xlu0 %2355
      %2357 = vrot.lane.b32.xlu0 %v2312, 48
      %v2358 = vpop.permute.xlu0 %2357
      %2359 = vrot.lane.b32.xlu0 %v2313, 48
      %v2360 = vpop.permute.xlu0 %2359
      %2361 = vrot.lane.b32.xlu0 %v2314, 48
      %v2362 = vpop.permute.xlu0 %2361
      %vm2379 = vcmask 454016
      %2380 = vst.msk [vmem:[#allocation3] sm:$0xf] %vm2379, %v2332
      %2381 = vst.msk [vmem:[#allocation3 + $0x4] sm:$0xf] %vm2379, %v2334
      %2382 = vst.msk [vmem:[#allocation3 + $0x8] sm:$0xf] %vm2379, %v2336
      %2383 = vst.msk [vmem:[#allocation3 + $0xc] sm:$0xf] %vm2379, %v2338
      %2384 = vst.msk [vmem:[#allocation3 + $0x10] sm:$0xf] %vm2379, %v2340
      %2385 = vst.msk [vmem:[#allocation3 + $0x14] sm:$0xf] %vm2379, %v2342
      %2386 = vst.msk [vmem:[#allocation3 + $0x18] sm:$0xf] %vm2379, %v2344
      %2387 = vst.msk [vmem:[#allocation3 + $0x1c] sm:$0xf] %vm2379, %v2346
      %2388 = vst.msk [vmem:[#allocation3 + $0x20] sm:$0xf] %vm2379, %v2348
      %2389 = vst.msk [vmem:[#allocation3 + $0x24] sm:$0xf] %vm2379, %v2350
      %2390 = vst.msk [vmem:[#allocation3 + $0x28] sm:$0xf] %vm2379, %v2352
      %2391 = vst.msk [vmem:[#allocation3 + $0x2c] sm:$0xf] %vm2379, %v2354
      %2392 = vst.msk [vmem:[#allocation3 + $0x30] sm:$0xf] %vm2379, %v2356
      %2393 = vst.msk [vmem:[#allocation3 + $0x34] sm:$0xf] %vm2379, %v2358
      %2394 = vst.msk [vmem:[#allocation3 + $0x38] sm:$0xf] %vm2379, %v2360
      %2395 = vst.msk [vmem:[#allocation3 + $0x3c] sm:$0xf] %vm2379, %v2362
      %v2396 = vld [vmem:[%s2298] sm:$0xf]
      %v2397 = vld [vmem:[%s2298 + $0x4] sm:$0x1]
      %v2398 = vld [vmem:[%s2298 + $0x8] sm:$0xf]
      %v2399 = vld [vmem:[%s2298 + $0xc] sm:$0x1]
      %v2400 = vld [vmem:[%s2298 + $0x10] sm:$0xf]
      %v2401 = vld [vmem:[%s2298 + $0x14] sm:$0x1]
      %v2402 = vld [vmem:[%s2298 + $0x18] sm:$0xf]
      %v2403 = vld [vmem:[%s2298 + $0x1c] sm:$0x1]
      %v2404 = vld [vmem:[%s2298 + $0x20] sm:$0xf]
      %v2405 = vld [vmem:[%s2298 + $0x24] sm:$0x1]
      %v2406 = vld [vmem:[%s2298 + $0x28] sm:$0xf]
      %v2407 = vld [vmem:[%s2298 + $0x2c] sm:$0x1]
      %v2408 = vld [vmem:[%s2298 + $0x30] sm:$0xf]
      %v2409 = vld [vmem:[%s2298 + $0x34] sm:$0x1]
      %v2410 = vld [vmem:[%s2298 + $0x38] sm:$0xf]
      %v2411 = vld [vmem:[%s2298 + $0x3c] sm:$0x1]
      %v2412 = vld [vmem:[%s2298 + $0x40] sm:$0xf]
      %v2413 = vld [vmem:[%s2298 + $0x44] sm:$0x1]
      %v2414 = vld [vmem:[%s2298 + $0x48] sm:$0xf]
      %v2415 = vld [vmem:[%s2298 + $0x4c] sm:$0x1]
      %v2416 = vld [vmem:[%s2298 + $0x50] sm:$0xf]
      %v2417 = vld [vmem:[%s2298 + $0x54] sm:$0x1]
      %v2418 = vld [vmem:[%s2298 + $0x58] sm:$0xf]
      %v2419 = vld [vmem:[%s2298 + $0x5c] sm:$0x1]
      %v2420 = vld [vmem:[%s2298 + $0x60] sm:$0xf]
      %v2421 = vld [vmem:[%s2298 + $0x64] sm:$0x1]
      %v2422 = vld [vmem:[%s2298 + $0x68] sm:$0xf]
      %v2423 = vld [vmem:[%s2298 + $0x6c] sm:$0x1]
      %v2424 = vld [vmem:[%s2298 + $0x70] sm:$0xf]
      %v2425 = vld [vmem:[%s2298 + $0x74] sm:$0x1]
      %v2426 = vld [vmem:[%s2298 + $0x78] sm:$0xf]
      %v2427 = vld [vmem:[%s2298 + $0x7c] sm:$0x1]
      %v2429 = vshrl.u32 %v2396, 16
      %v2431 = vrot.slane %v2429, 4
      %v2432 = vshll.u32 %v2396, 16
      %v2434 = vrot.slane %v2432, 5
      %v2435 = vor.u32 %v2431, %v2434
      %v2436 = vrot.slane %v2435, 4
      %v2438 = vshll.u32 %v2397, 16
      %v2440 = vrot.slane %v2438, 5
      %v2441 = vsel %vm1201, %v2436, %v2440
      %v2443 = vshrl.u32 %v2398, 16
      %v2445 = vrot.slane %v2443, 4
      %v2446 = vshll.u32 %v2398, 16
      %v2448 = vrot.slane %v2446, 5
      %v2449 = vor.u32 %v2445, %v2448
      %v2450 = vrot.slane %v2449, 4
      %v2452 = vshll.u32 %v2399, 16
      %v2454 = vrot.slane %v2452, 5
      %v2455 = vsel %vm1201, %v2450, %v2454
      %v2457 = vshrl.u32 %v2400, 16
      %v2459 = vrot.slane %v2457, 4
      %v2460 = vshll.u32 %v2400, 16
      %v2462 = vrot.slane %v2460, 5
      %v2463 = vor.u32 %v2459, %v2462
      %v2464 = vrot.slane %v2463, 4
      %v2466 = vshll.u32 %v2401, 16
      %v2468 = vrot.slane %v2466, 5
      %v2469 = vsel %vm1201, %v2464, %v2468
      %v2471 = vshrl.u32 %v2402, 16
      %v2473 = vrot.slane %v2471, 4
      %v2474 = vshll.u32 %v2402, 16
      %v2476 = vrot.slane %v2474, 5
      %v2477 = vor.u32 %v2473, %v2476
      %v2478 = vrot.slane %v2477, 4
      %v2480 = vshll.u32 %v2403, 16
      %v2482 = vrot.slane %v2480, 5
      %v2483 = vsel %vm1201, %v2478, %v2482
      %v2485 = vshrl.u32 %v2404, 16
      %v2487 = vrot.slane %v2485, 4
      %v2488 = vshll.u32 %v2404, 16
      %v2490 = vrot.slane %v2488, 5
      %v2491 = vor.u32 %v2487, %v2490
      %v2492 = vrot.slane %v2491, 4
      %v2494 = vshll.u32 %v2405, 16
      %v2496 = vrot.slane %v2494, 5
      %v2497 = vsel %vm1201, %v2492, %v2496
      %v2499 = vshrl.u32 %v2406, 16
      %v2501 = vrot.slane %v2499, 4
      %v2502 = vshll.u32 %v2406, 16
      %v2504 = vrot.slane %v2502, 5
      %v2505 = vor.u32 %v2501, %v2504
      %v2506 = vrot.slane %v2505, 4
      %v2508 = vshll.u32 %v2407, 16
      %v2510 = vrot.slane %v2508, 5
      %v2511 = vsel %vm1201, %v2506, %v2510
      %v2513 = vshrl.u32 %v2408, 16
      %v2515 = vrot.slane %v2513, 4
      %v2516 = vshll.u32 %v2408, 16
      %v2518 = vrot.slane %v2516, 5
      %v2519 = vor.u32 %v2515, %v2518
      %v2520 = vrot.slane %v2519, 4
      %v2522 = vshll.u32 %v2409, 16
      %v2524 = vrot.slane %v2522, 5
      %v2525 = vsel %vm1201, %v2520, %v2524
      %v2527 = vshrl.u32 %v2410, 16
      %v2529 = vrot.slane %v2527, 4
      %v2530 = vshll.u32 %v2410, 16
      %v2532 = vrot.slane %v2530, 5
      %v2533 = vor.u32 %v2529, %v2532
      %v2534 = vrot.slane %v2533, 4
      %v2536 = vshll.u32 %v2411, 16
      %v2538 = vrot.slane %v2536, 5
      %v2539 = vsel %vm1201, %v2534, %v2538
      %v2541 = vshrl.u32 %v2412, 16
      %v2543 = vrot.slane %v2541, 4
      %v2544 = vshll.u32 %v2412, 16
      %v2546 = vrot.slane %v2544, 5
      %v2547 = vor.u32 %v2543, %v2546
      %v2548 = vrot.slane %v2547, 4
      %v2550 = vshll.u32 %v2413, 16
      %v2552 = vrot.slane %v2550, 5
      %v2553 = vsel %vm1201, %v2548, %v2552
      %v2555 = vshrl.u32 %v2414, 16
      %v2557 = vrot.slane %v2555, 4
      %v2558 = vshll.u32 %v2414, 16
      %v2560 = vrot.slane %v2558, 5
      %v2561 = vor.u32 %v2557, %v2560
      %v2562 = vrot.slane %v2561, 4
      %v2564 = vshll.u32 %v2415, 16
      %v2566 = vrot.slane %v2564, 5
      %v2567 = vsel %vm1201, %v2562, %v2566
      %v2569 = vshrl.u32 %v2416, 16
      %v2571 = vrot.slane %v2569, 4
      %v2572 = vshll.u32 %v2416, 16
      %v2574 = vrot.slane %v2572, 5
      %v2575 = vor.u32 %v2571, %v2574
      %v2576 = vrot.slane %v2575, 4
      %v2578 = vshll.u32 %v2417, 16
      %v2580 = vrot.slane %v2578, 5
      %v2581 = vsel %vm1201, %v2576, %v2580
      %v2583 = vshrl.u32 %v2418, 16
      %v2585 = vrot.slane %v2583, 4
      %v2586 = vshll.u32 %v2418, 16
      %v2588 = vrot.slane %v2586, 5
      %v2589 = vor.u32 %v2585, %v2588
      %v2590 = vrot.slane %v2589, 4
      %v2592 = vshll.u32 %v2419, 16
      %v2594 = vrot.slane %v2592, 5
      %v2595 = vsel %vm1201, %v2590, %v2594
      %v2597 = vshrl.u32 %v2420, 16
      %v2599 = vrot.slane %v2597, 4
      %v2600 = vshll.u32 %v2420, 16
      %v2602 = vrot.slane %v2600, 5
      %v2603 = vor.u32 %v2599, %v2602
      %v2604 = vrot.slane %v2603, 4
      %v2606 = vshll.u32 %v2421, 16
      %v2608 = vrot.slane %v2606, 5
      %v2609 = vsel %vm1201, %v2604, %v2608
      %v2611 = vshrl.u32 %v2422, 16
      %v2613 = vrot.slane %v2611, 4
      %v2614 = vshll.u32 %v2422, 16
      %v2616 = vrot.slane %v2614, 5
      %v2617 = vor.u32 %v2613, %v2616
      %v2618 = vrot.slane %v2617, 4
      %v2620 = vshll.u32 %v2423, 16
      %v2622 = vrot.slane %v2620, 5
      %v2623 = vsel %vm1201, %v2618, %v2622
      %v2625 = vshrl.u32 %v2424, 16
      %v2627 = vrot.slane %v2625, 4
      %v2628 = vshll.u32 %v2424, 16
      %v2630 = vrot.slane %v2628, 5
      %v2631 = vor.u32 %v2627, %v2630
      %v2632 = vrot.slane %v2631, 4
      %v2634 = vshll.u32 %v2425, 16
      %v2636 = vrot.slane %v2634, 5
      %v2637 = vsel %vm1201, %v2632, %v2636
      %v2639 = vshrl.u32 %v2426, 16
      %v2641 = vrot.slane %v2639, 4
      %v2642 = vshll.u32 %v2426, 16
      %v2644 = vrot.slane %v2642, 5
      %v2645 = vor.u32 %v2641, %v2644
      %v2646 = vrot.slane %v2645, 4
      %v2648 = vshll.u32 %v2427, 16
      %v2650 = vrot.slane %v2648, 5
      %v2651 = vsel %vm1201, %v2646, %v2650
      %2652 = vrot.lane.b32.xlu0 %v2441, 56
      %v2653 = vpop.permute.xlu0 %2652
      %2654 = vrot.lane.b32.xlu0 %v2455, 56
      %v2655 = vpop.permute.xlu0 %2654
      %2656 = vrot.lane.b32.xlu0 %v2469, 56
      %v2657 = vpop.permute.xlu0 %2656
      %2658 = vrot.lane.b32.xlu0 %v2483, 56
      %v2659 = vpop.permute.xlu0 %2658
      %2660 = vrot.lane.b32.xlu0 %v2497, 56
      %v2661 = vpop.permute.xlu0 %2660
      %2662 = vrot.lane.b32.xlu0 %v2511, 56
      %v2663 = vpop.permute.xlu0 %2662
      %2664 = vrot.lane.b32.xlu0 %v2525, 56
      %v2665 = vpop.permute.xlu0 %2664
      %2666 = vrot.lane.b32.xlu0 %v2539, 56
      %v2667 = vpop.permute.xlu0 %2666
      %2668 = vrot.lane.b32.xlu0 %v2553, 56
      %v2669 = vpop.permute.xlu0 %2668
      %2670 = vrot.lane.b32.xlu0 %v2567, 56
      %v2671 = vpop.permute.xlu0 %2670
      %2672 = vrot.lane.b32.xlu0 %v2581, 56
      %v2673 = vpop.permute.xlu0 %2672
      %2674 = vrot.lane.b32.xlu0 %v2595, 56
      %v2675 = vpop.permute.xlu0 %2674
      %2676 = vrot.lane.b32.xlu0 %v2609, 56
      %v2677 = vpop.permute.xlu0 %2676
      %2678 = vrot.lane.b32.xlu0 %v2623, 56
      %v2679 = vpop.permute.xlu0 %2678
      %2680 = vrot.lane.b32.xlu0 %v2637, 56
      %v2681 = vpop.permute.xlu0 %2680
      %2682 = vrot.lane.b32.xlu0 %v2651, 56
      %v2683 = vpop.permute.xlu0 %2682
      %vm2700 = vcmask 519616
      %2701 = vst.msk [vmem:[#allocation3] sm:$0xf] %vm2700, %v2653
      %2702 = vst.msk [vmem:[#allocation3 + $0x4] sm:$0xf] %vm2700, %v2655
      %2703 = vst.msk [vmem:[#allocation3 + $0x8] sm:$0xf] %vm2700, %v2657
      %2704 = vst.msk [vmem:[#allocation3 + $0xc] sm:$0xf] %vm2700, %v2659
      %2705 = vst.msk [vmem:[#allocation3 + $0x10] sm:$0xf] %vm2700, %v2661
      %2706 = vst.msk [vmem:[#allocation3 + $0x14] sm:$0xf] %vm2700, %v2663
      %2707 = vst.msk [vmem:[#allocation3 + $0x18] sm:$0xf] %vm2700, %v2665
      %2708 = vst.msk [vmem:[#allocation3 + $0x1c] sm:$0xf] %vm2700, %v2667
      %2709 = vst.msk [vmem:[#allocation3 + $0x20] sm:$0xf] %vm2700, %v2669
      %2710 = vst.msk [vmem:[#allocation3 + $0x24] sm:$0xf] %vm2700, %v2671
      %2711 = vst.msk [vmem:[#allocation3 + $0x28] sm:$0xf] %vm2700, %v2673
      %2712 = vst.msk [vmem:[#allocation3 + $0x2c] sm:$0xf] %vm2700, %v2675
      %2713 = vst.msk [vmem:[#allocation3 + $0x30] sm:$0xf] %vm2700, %v2677
      %2714 = vst.msk [vmem:[#allocation3 + $0x34] sm:$0xf] %vm2700, %v2679
      %2715 = vst.msk [vmem:[#allocation3 + $0x38] sm:$0xf] %vm2700, %v2681
      %2716 = vst.msk [vmem:[#allocation3 + $0x3c] sm:$0xf] %vm2700, %v2683
      %v2717 = vld [vmem:[%s2298] sm:$0xe]
      %v2718 = vld [vmem:[%s2298 + $0x4] sm:$0x1]
      %v2719 = vld [vmem:[%s2298 + $0x8] sm:$0xe]
      %v2720 = vld [vmem:[%s2298 + $0xc] sm:$0x1]
      %v2721 = vld [vmem:[%s2298 + $0x10] sm:$0xe]
      %v2722 = vld [vmem:[%s2298 + $0x14] sm:$0x1]
      %v2723 = vld [vmem:[%s2298 + $0x18] sm:$0xe]
      %v2724 = vld [vmem:[%s2298 + $0x1c] sm:$0x1]
      %v2725 = vld [vmem:[%s2298 + $0x20] sm:$0xe]
      %v2726 = vld [vmem:[%s2298 + $0x24] sm:$0x1]
      %v2727 = vld [vmem:[%s2298 + $0x28] sm:$0xe]
      %v2728 = vld [vmem:[%s2298 + $0x2c] sm:$0x1]
      %v2729 = vld [vmem:[%s2298 + $0x30] sm:$0xe]
      %v2730 = vld [vmem:[%s2298 + $0x34] sm:$0x1]
      %v2731 = vld [vmem:[%s2298 + $0x38] sm:$0xe]
      %v2732 = vld [vmem:[%s2298 + $0x3c] sm:$0x1]
      %v2733 = vld [vmem:[%s2298 + $0x40] sm:$0xe]
      %v2734 = vld [vmem:[%s2298 + $0x44] sm:$0x1]
      %v2735 = vld [vmem:[%s2298 + $0x48] sm:$0xe]
      %v2736 = vld [vmem:[%s2298 + $0x4c] sm:$0x1]
      %v2737 = vld [vmem:[%s2298 + $0x50] sm:$0xe]
      %v2738 = vld [vmem:[%s2298 + $0x54] sm:$0x1]
      %v2739 = vld [vmem:[%s2298 + $0x58] sm:$0xe]
      %v2740 = vld [vmem:[%s2298 + $0x5c] sm:$0x1]
      %v2741 = vld [vmem:[%s2298 + $0x60] sm:$0xe]
      %v2742 = vld [vmem:[%s2298 + $0x64] sm:$0x1]
      %v2743 = vld [vmem:[%s2298 + $0x68] sm:$0xe]
      %v2744 = vld [vmem:[%s2298 + $0x6c] sm:$0x1]
      %v2745 = vld [vmem:[%s2298 + $0x70] sm:$0xe]
      %v2746 = vld [vmem:[%s2298 + $0x74] sm:$0x1]
      %v2747 = vld [vmem:[%s2298 + $0x78] sm:$0xe]
      %v2748 = vld [vmem:[%s2298 + $0x7c] sm:$0x1]
      %v2781 = vrot.slane %v2717, 5
      %v2782 = vrot.slane %v2781, 4
      %v2783 = vrot.slane %v2718, 5
      %v2784 = vsel %vm1557, %v2782, %v2783
      %v2785 = vrot.slane %v2719, 5
      %v2786 = vrot.slane %v2785, 4
      %v2787 = vrot.slane %v2720, 5
      %v2788 = vsel %vm1557, %v2786, %v2787
      %v2789 = vrot.slane %v2721, 5
      %v2790 = vrot.slane %v2789, 4
      %v2791 = vrot.slane %v2722, 5
      %v2792 = vsel %vm1557, %v2790, %v2791
      %v2793 = vrot.slane %v2723, 5
      %v2794 = vrot.slane %v2793, 4
      %v2795 = vrot.slane %v2724, 5
      %v2796 = vsel %vm1557, %v2794, %v2795
      %v2797 = vrot.slane %v2725, 5
      %v2798 = vrot.slane %v2797, 4
      %v2799 = vrot.slane %v2726, 5
      %v2800 = vsel %vm1557, %v2798, %v2799
      %v2801 = vrot.slane %v2727, 5
      %v2802 = vrot.slane %v2801, 4
      %v2803 = vrot.slane %v2728, 5
      %v2804 = vsel %vm1557, %v2802, %v2803
      %v2805 = vrot.slane %v2729, 5
      %v2806 = vrot.slane %v2805, 4
      %v2807 = vrot.slane %v2730, 5
      %v2808 = vsel %vm1557, %v2806, %v2807
      %v2809 = vrot.slane %v2731, 5
      %v2810 = vrot.slane %v2809, 4
      %v2811 = vrot.slane %v2732, 5
      %v2812 = vsel %vm1557, %v2810, %v2811
      %v2813 = vrot.slane %v2733, 5
      %v2814 = vrot.slane %v2813, 4
      %v2815 = vrot.slane %v2734, 5
      %v2816 = vsel %vm1557, %v2814, %v2815
      %v2817 = vrot.slane %v2735, 5
      %v2818 = vrot.slane %v2817, 4
      %v2819 = vrot.slane %v2736, 5
      %v2820 = vsel %vm1557, %v2818, %v2819
      %v2821 = vrot.slane %v2737, 5
      %v2822 = vrot.slane %v2821, 4
      %v2823 = vrot.slane %v2738, 5
      %v2824 = vsel %vm1557, %v2822, %v2823
      %v2825 = vrot.slane %v2739, 5
      %v2826 = vrot.slane %v2825, 4
      %v2827 = vrot.slane %v2740, 5
      %v2828 = vsel %vm1557, %v2826, %v2827
      %v2829 = vrot.slane %v2741, 5
      %v2830 = vrot.slane %v2829, 4
      %v2831 = vrot.slane %v2742, 5
      %v2832 = vsel %vm1557, %v2830, %v2831
      %v2833 = vrot.slane %v2743, 5
      %v2834 = vrot.slane %v2833, 4
      %v2835 = vrot.slane %v2744, 5
      %v2836 = vsel %vm1557, %v2834, %v2835
      %v2837 = vrot.slane %v2745, 5
      %v2838 = vrot.slane %v2837, 4
      %v2839 = vrot.slane %v2746, 5
      %v2840 = vsel %vm1557, %v2838, %v2839
      %v2841 = vrot.slane %v2747, 5
      %v2842 = vrot.slane %v2841, 4
      %v2843 = vrot.slane %v2748, 5
      %v2844 = vsel %vm1557, %v2842, %v2843
      %2845 = vrot.lane.b32.xlu0 %v2784, 64
      %v2846 = vpop.permute.xlu0 %2845
      %2847 = vrot.lane.b32.xlu0 %v2788, 64
      %v2848 = vpop.permute.xlu0 %2847
      %2849 = vrot.lane.b32.xlu0 %v2792, 64
      %v2850 = vpop.permute.xlu0 %2849
      %2851 = vrot.lane.b32.xlu0 %v2796, 64
      %v2852 = vpop.permute.xlu0 %2851
      %2853 = vrot.lane.b32.xlu0 %v2800, 64
      %v2854 = vpop.permute.xlu0 %2853
      %2855 = vrot.lane.b32.xlu0 %v2804, 64
      %v2856 = vpop.permute.xlu0 %2855
      %2857 = vrot.lane.b32.xlu0 %v2808, 64
      %v2858 = vpop.permute.xlu0 %2857
      %2859 = vrot.lane.b32.xlu0 %v2812, 64
      %v2860 = vpop.permute.xlu0 %2859
      %2861 = vrot.lane.b32.xlu0 %v2816, 64
      %v2862 = vpop.permute.xlu0 %2861
      %2863 = vrot.lane.b32.xlu0 %v2820, 64
      %v2864 = vpop.permute.xlu0 %2863
      %2865 = vrot.lane.b32.xlu0 %v2824, 64
      %v2866 = vpop.permute.xlu0 %2865
      %2867 = vrot.lane.b32.xlu0 %v2828, 64
      %v2868 = vpop.permute.xlu0 %2867
      %2869 = vrot.lane.b32.xlu0 %v2832, 64
      %v2870 = vpop.permute.xlu0 %2869
      %2871 = vrot.lane.b32.xlu0 %v2836, 64
      %v2872 = vpop.permute.xlu0 %2871
      %2873 = vrot.lane.b32.xlu0 %v2840, 64
      %v2874 = vpop.permute.xlu0 %2873
      %2875 = vrot.lane.b32.xlu0 %v2844, 64
      %v2876 = vpop.permute.xlu0 %2875
      %vm2893 = vcmask 585216
      %2894 = vst.msk [vmem:[#allocation3] sm:$0xf] %vm2893, %v2846
      %2895 = vst.msk [vmem:[#allocation3 + $0x4] sm:$0xf] %vm2893, %v2848
      %2896 = vst.msk [vmem:[#allocation3 + $0x8] sm:$0xf] %vm2893, %v2850
      %2897 = vst.msk [vmem:[#allocation3 + $0xc] sm:$0xf] %vm2893, %v2852
      %2898 = vst.msk [vmem:[#allocation3 + $0x10] sm:$0xf] %vm2893, %v2854
      %2899 = vst.msk [vmem:[#allocation3 + $0x14] sm:$0xf] %vm2893, %v2856
      %2900 = vst.msk [vmem:[#allocation3 + $0x18] sm:$0xf] %vm2893, %v2858
      %2901 = vst.msk [vmem:[#allocation3 + $0x1c] sm:$0xf] %vm2893, %v2860
      %2902 = vst.msk [vmem:[#allocation3 + $0x20] sm:$0xf] %vm2893, %v2862
      %2903 = vst.msk [vmem:[#allocation3 + $0x24] sm:$0xf] %vm2893, %v2864
      %2904 = vst.msk [vmem:[#allocation3 + $0x28] sm:$0xf] %vm2893, %v2866
      %2905 = vst.msk [vmem:[#allocation3 + $0x2c] sm:$0xf] %vm2893, %v2868
      %2906 = vst.msk [vmem:[#allocation3 + $0x30] sm:$0xf] %vm2893, %v2870
      %2907 = vst.msk [vmem:[#allocation3 + $0x34] sm:$0xf] %vm2893, %v2872
      %2908 = vst.msk [vmem:[#allocation3 + $0x38] sm:$0xf] %vm2893, %v2874
      %2909 = vst.msk [vmem:[#allocation3 + $0x3c] sm:$0xf] %vm2893, %v2876
      %v2910 = vld [vmem:[#allocation3] sm:$0xf]
      %v2911 = vld [vmem:[#allocation3 + $0x4] sm:$0xf]
      %v2912 = vld [vmem:[#allocation3 + $0x8] sm:$0xf]
      %v2913 = vld [vmem:[#allocation3 + $0xc] sm:$0xf]
      %v2914 = vld [vmem:[#allocation3 + $0x10] sm:$0xf]
      %v2915 = vld [vmem:[#allocation3 + $0x14] sm:$0xf]
      %v2916 = vld [vmem:[#allocation3 + $0x18] sm:$0xf]
      %v2917 = vld [vmem:[#allocation3 + $0x1c] sm:$0xf]
      %v2918 = vld [vmem:[#allocation3 + $0x20] sm:$0xf]
      %v2919 = vld [vmem:[#allocation3 + $0x24] sm:$0xf]
      %v2920 = vld [vmem:[#allocation3 + $0x28] sm:$0xf]
      %v2921 = vld [vmem:[#allocation3 + $0x2c] sm:$0xf]
      %v2922 = vld [vmem:[#allocation3 + $0x30] sm:$0xf]
      %v2923 = vld [vmem:[#allocation3 + $0x34] sm:$0xf]
      %v2924 = vld [vmem:[#allocation3 + $0x38] sm:$0xf]
      %v2925 = vld [vmem:[#allocation3 + $0x3c] sm:$0xf]
      %v2926 = vld [vmem:[%s1] sm:$0xf]
      %v2927 = vld [vmem:[%s1 + $0x4] sm:$0xf]
      %v2928 = vld [vmem:[%s1 + $0x8] sm:$0xf]
      %v2929 = vld [vmem:[%s1 + $0xc] sm:$0xf]
      %v2930 = vld [vmem:[%s1 + $0x10] sm:$0xf]
      %v2931 = vld [vmem:[%s1 + $0x14] sm:$0xf]
      %v2932 = vld [vmem:[%s1 + $0x18] sm:$0xf]
      %v2933 = vld [vmem:[%s1 + $0x1c] sm:$0xf]
      %v2934 = vld [vmem:[%s1 + $0x20] sm:$0xf]
      %v2951 = vunpack.c.l.b16 %v2910
      %v2952 = vunpack.c.l.b16 %v2911
      %v2953 = vunpack.c.l.b16 %v2912
      %v2954 = vunpack.c.l.b16 %v2913
      %v2955 = vunpack.c.l.b16 %v2914
      %v2956 = vunpack.c.l.b16 %v2915
      %v2957 = vunpack.c.l.b16 %v2916
      %v2958 = vunpack.c.l.b16 %v2917
      %v2959 = vunpack.c.l.b16 %v2918
      %v2960 = vunpack.c.l.b16 %v2919
      %v2961 = vunpack.c.l.b16 %v2920
      %v2962 = vunpack.c.l.b16 %v2921
      %v2963 = vunpack.c.l.b16 %v2922
      %v2964 = vunpack.c.l.b16 %v2923
      %v2965 = vunpack.c.l.b16 %v2924
      %v2966 = vunpack.c.l.b16 %v2925
      %v2967 = vpack.c.b16 %v2952, %v2951
      %v2968 = vpack.c.b16 %v2954, %v2953
      %v2969 = vpack.c.b16 %v2956, %v2955
      %v2970 = vpack.c.b16 %v2958, %v2957
      %v2971 = vpack.c.b16 %v2960, %v2959
      %v2972 = vpack.c.b16 %v2962, %v2961
      %v2973 = vpack.c.b16 %v2964, %v2963
      %v2974 = vpack.c.b16 %v2966, %v2965
      %v2984 = vunpack.c.l.b16 %v2926
      %v2985 = vunpack.c.l.b16 %v2927
      %v2986 = vunpack.c.l.b16 %v2928
      %v2987 = vunpack.c.l.b16 %v2929
      %v2988 = vunpack.c.l.b16 %v2930
      %v2989 = vunpack.c.l.b16 %v2931
      %v2990 = vunpack.c.l.b16 %v2932
      %v2991 = vunpack.c.l.b16 %v2933
      %v2992 = vunpack.c.l.b16 %v2934
      %v2993 = vpack.c.b16 %v2985, %v2984
      %v2994 = vpack.c.b16 %v2987, %v2986
      %v2995 = vpack.c.b16 %v2989, %v2988
      %v2996 = vpack.c.b16 %v2991, %v2990
      %v2997 = vpack.c.b16 %v2992, %v2992
      %vm3002 = vcmask 588800
      %v3004 = vsel %vm3002, %v2967, 0
      %v3007 = vsel %vm3002, %v2968, 0
      %v3010 = vsel %vm3002, %v2969, 0
      %v3013 = vsel %vm3002, %v2970, 0
      %v3016 = vsel %vm3002, %v2971, 0
      %v3019 = vsel %vm3002, %v2972, 0
      %v3022 = vsel %vm3002, %v2973, 0
      %v3025 = vsel %vm3002, %v2974, 0
      %vm3027 = vcmask 1043456
      %v3029 = vsel %vm3027, %v2997, 0
      %3031 = vmatpush.bf16.msra.mxu0 0
      %3032 = vmatpush.bf16.msra.mxu0 0
      %3033 = vmatpush.bf16.msra.mxu0 0
      %3034 = vmatpush.bf16.msra.mxu0 %v3029
      %3035 = vmatpush.bf16.msra.mxu0 %v2996
      %3036 = vmatpush.bf16.msra.mxu0 %v2995
      %3037 = vmatpush.bf16.msra.mxu0 %v2994
      %3038 = vmatpush.bf16.msra.mxu0 %v2993
      %3039 = vmatmul.bf16.gmra.mxu0 %v3004
      %v3040 = vpop.f32.mrf.mxu0
      %v3041 = vadd.f32 0.0, %v3040
      %v3042 = vpop.f32.mrf.mxu0
      %v3043 = vadd.f32 0.0, %v3042
      %3044 = vmatmul.bf16.gmra.mxu0 %v3007
      %v3045 = vpop.f32.mrf.mxu0
      %v3046 = vadd.f32 0.0, %v3045
      %v3047 = vpop.f32.mrf.mxu0
      %v3048 = vadd.f32 0.0, %v3047
      %3049 = vmatmul.bf16.gmra.mxu0 %v3010
      %v3050 = vpop.f32.mrf.mxu0
      %v3051 = vadd.f32 0.0, %v3050
      %v3052 = vpop.f32.mrf.mxu0
      %v3053 = vadd.f32 0.0, %v3052
      %3054 = vmatmul.bf16.gmra.mxu0 %v3013
      %v3055 = vpop.f32.mrf.mxu0
      %v3056 = vadd.f32 0.0, %v3055
      %v3057 = vpop.f32.mrf.mxu0
      %v3058 = vadd.f32 0.0, %v3057
      %3059 = vmatmul.bf16.gmra.mxu0 %v3016
      %v3060 = vpop.f32.mrf.mxu0
      %v3061 = vadd.f32 0.0, %v3060
      %v3062 = vpop.f32.mrf.mxu0
      %v3063 = vadd.f32 0.0, %v3062
      %3064 = vmatmul.bf16.gmra.mxu0 %v3019
      %v3065 = vpop.f32.mrf.mxu0
      %v3066 = vadd.f32 0.0, %v3065
      %v3067 = vpop.f32.mrf.mxu0
      %v3068 = vadd.f32 0.0, %v3067
      %3069 = vmatmul.bf16.gmra.mxu0 %v3022
      %v3070 = vpop.f32.mrf.mxu0
      %v3071 = vadd.f32 0.0, %v3070
      %v3072 = vpop.f32.mrf.mxu0
      %v3073 = vadd.f32 0.0, %v3072
      %3074 = vmatmul.bf16.gmra.mxu0 %v3025
      %v3075 = vpop.f32.mrf.mxu0
      %v3076 = vadd.f32 0.0, %v3075
      %v3077 = vpop.f32.mrf.mxu0
      %v3078 = vadd.f32 0.0, %v3077
      %3079 = vdwg.mxu0
      %v3080 = vld [vmem:[%s2] sm:$0x1]
      %v3082 = vperm.slane %v3080, 0
      %v3084 = vmul.f32 %v3041, %v3082
      %v3085 = vmul.f32 %v3043, %v3082
      %v3086 = vmul.f32 %v3046, %v3082
      %v3087 = vmul.f32 %v3048, %v3082
      %v3088 = vmul.f32 %v3051, %v3082
      %v3089 = vmul.f32 %v3053, %v3082
      %v3090 = vmul.f32 %v3056, %v3082
      %v3091 = vmul.f32 %v3058, %v3082
      %v3092 = vmul.f32 %v3061, %v3082
      %v3093 = vmul.f32 %v3063, %v3082
      %v3094 = vmul.f32 %v3066, %v3082
      %v3095 = vmul.f32 %v3068, %v3082
      %v3096 = vmul.f32 %v3071, %v3082
      %v3097 = vmul.f32 %v3073, %v3082
      %v3098 = vmul.f32 %v3076, %v3082
      %v3099 = vmul.f32 %v3078, %v3082
      %v3100 = vld [vmem:[%s3] sm:$0x1]
      %v3102 = vperm.slane %v3100, 0
      %v3104 = vadd.f32 %v3084, %v3102
      %v3105 = vadd.f32 %v3085, %v3102
      %v3106 = vadd.f32 %v3086, %v3102
      %v3107 = vadd.f32 %v3087, %v3102
      %v3108 = vadd.f32 %v3088, %v3102
      %v3109 = vadd.f32 %v3089, %v3102
      %v3110 = vadd.f32 %v3090, %v3102
      %v3111 = vadd.f32 %v3091, %v3102
      %v3112 = vadd.f32 %v3092, %v3102
      %v3113 = vadd.f32 %v3093, %v3102
      %v3114 = vadd.f32 %v3094, %v3102
      %v3115 = vadd.f32 %v3095, %v3102
      %v3116 = vadd.f32 %v3096, %v3102
      %v3117 = vadd.f32 %v3097, %v3102
      %v3118 = vadd.f32 %v3098, %v3102
      %v3119 = vadd.f32 %v3099, %v3102
      %vm3120 = vcmp.gt.f32.partialorder %v3104, 0.0
      %vm3121 = vcmp.gt.f32.partialorder %v3105, 0.0
      %vm3122 = vcmp.gt.f32.partialorder %v3106, 0.0
      %vm3123 = vcmp.gt.f32.partialorder %v3107, 0.0
      %vm3124 = vcmp.gt.f32.partialorder %v3108, 0.0
      %vm3125 = vcmp.gt.f32.partialorder %v3109, 0.0
      %vm3126 = vcmp.gt.f32.partialorder %v3110, 0.0
      %vm3127 = vcmp.gt.f32.partialorder %v3111, 0.0
      %vm3128 = vcmp.gt.f32.partialorder %v3112, 0.0
      %vm3129 = vcmp.gt.f32.partialorder %v3113, 0.0
      %vm3130 = vcmp.gt.f32.partialorder %v3114, 0.0
      %vm3131 = vcmp.gt.f32.partialorder %v3115, 0.0
      %vm3132 = vcmp.gt.f32.partialorder %v3116, 0.0
      %vm3133 = vcmp.gt.f32.partialorder %v3117, 0.0
      %vm3134 = vcmp.gt.f32.partialorder %v3118, 0.0
      %vm3135 = vcmp.gt.f32.partialorder %v3119, 0.0
      %v3136 = vmul.f32 %v3104, 0.1
      %v3137 = vmul.f32 %v3105, 0.1
      %v3138 = vmul.f32 %v3106, 0.1
      %v3139 = vmul.f32 %v3107, 0.1
      %v3140 = vmul.f32 %v3108, 0.1
      %v3141 = vmul.f32 %v3109, 0.1
      %v3142 = vmul.f32 %v3110, 0.1
      %v3143 = vmul.f32 %v3111, 0.1
      %v3144 = vmul.f32 %v3112, 0.1
      %v3145 = vmul.f32 %v3113, 0.1
      %v3146 = vmul.f32 %v3114, 0.1
      %v3147 = vmul.f32 %v3115, 0.1
      %v3148 = vmul.f32 %v3116, 0.1
      %v3149 = vmul.f32 %v3117, 0.1
      %v3150 = vmul.f32 %v3118, 0.1
      %v3151 = vmul.f32 %v3119, 0.1
      %v3152 = vsel %vm3120, %v3104, %v3136
      %v3153 = vsel %vm3121, %v3105, %v3137
      %v3154 = vsel %vm3122, %v3106, %v3138
      %v3155 = vsel %vm3123, %v3107, %v3139
      %v3156 = vsel %vm3124, %v3108, %v3140
      %v3157 = vsel %vm3125, %v3109, %v3141
      %v3158 = vsel %vm3126, %v3110, %v3142
      %v3159 = vsel %vm3127, %v3111, %v3143
      %v3160 = vsel %vm3128, %v3112, %v3144
      %v3161 = vsel %vm3129, %v3113, %v3145
      %v3162 = vsel %vm3130, %v3114, %v3146
      %v3163 = vsel %vm3131, %v3115, %v3147
      %v3164 = vsel %vm3132, %v3116, %v3148
      %v3165 = vsel %vm3133, %v3117, %v3149
      %v3166 = vsel %vm3134, %v3118, %v3150
      %v3167 = vsel %vm3135, %v3119, %v3151
      %v3168 = vpack.c.bf16 %v3152, %v3152
      %v3169 = vpack.c.bf16 %v3153, %v3153
      %v3170 = vpack.c.bf16 %v3154, %v3154
      %v3171 = vpack.c.bf16 %v3155, %v3155
      %v3172 = vpack.c.bf16 %v3156, %v3156
      %v3173 = vpack.c.bf16 %v3157, %v3157
      %v3174 = vpack.c.bf16 %v3158, %v3158
      %v3175 = vpack.c.bf16 %v3159, %v3159
      %v3176 = vpack.c.bf16 %v3160, %v3160
      %v3177 = vpack.c.bf16 %v3161, %v3161
      %v3178 = vpack.c.bf16 %v3162, %v3162
      %v3179 = vpack.c.bf16 %v3163, %v3163
      %v3180 = vpack.c.bf16 %v3164, %v3164
      %v3181 = vpack.c.bf16 %v3165, %v3165
      %v3182 = vpack.c.bf16 %v3166, %v3166
      %v3183 = vpack.c.bf16 %v3167, %v3167
      %3184 = vst.msk [vmem:[%s219] sm:$0xf] %vm1150, %v3168
      %3185 = vst.msk [vmem:[%s219 + $0x4] sm:$0xf] %vm1150, %v3169
      %3186 = vst.msk [vmem:[%s219 + $0x8] sm:$0xf] %vm1150, %v3170
      %3187 = vst.msk [vmem:[%s219 + $0xc] sm:$0xf] %vm1150, %v3171
      %3188 = vst.msk [vmem:[%s219 + $0x10] sm:$0xf] %vm1150, %v3172
      %3189 = vst.msk [vmem:[%s219 + $0x14] sm:$0xf] %vm1150, %v3173
      %3190 = vst.msk [vmem:[%s219 + $0x18] sm:$0xf] %vm1150, %v3174
      %3191 = vst.msk [vmem:[%s219 + $0x1c] sm:$0xf] %vm1150, %v3175
      %3192 = vst.msk [vmem:[%s219 + $0x20] sm:$0xf] %vm1150, %v3176
      %3193 = vst.msk [vmem:[%s219 + $0x24] sm:$0xf] %vm1150, %v3177
      %3194 = vst.msk [vmem:[%s219 + $0x28] sm:$0xf] %vm1150, %v3178
      %3195 = vst.msk [vmem:[%s219 + $0x2c] sm:$0xf] %vm1150, %v3179
      %3196 = vst.msk [vmem:[%s219 + $0x30] sm:$0xf] %vm1150, %v3180
      %3197 = vst.msk [vmem:[%s219 + $0x34] sm:$0xf] %vm1150, %v3181
      %3198 = vst.msk [vmem:[%s219 + $0x38] sm:$0xf] %vm1150, %v3182
      %3199 = vst.msk [vmem:[%s219 + $0x3c] sm:$0xf] %vm1150, %v3183
      %s3200 = smul.u32 16, %s20
      %p3201 = scmp.lt.s32.totalorder %s19, 1
      %s3202 = scalar_select %p3201, %s19, 1
      %p3203 = scmp.lt.s32.totalorder %s3200, 15
      %s3204 = scalar_select %p3203, %s3200, 15
      %s3205 = smul.addr %s3202, 16
      %s3206 = sadd.s32 %s3204, %s3205
      %s3207 = smul.addr %s3206, 4
      %s3208 = scalar_lea.vmem %s4, %s3207
      // Predicated region
      $region53: #{resblock_body_forward.5} parent=35 // pred_check
        %p3209 = pneg %p136
      $region54: #{resblock_body_forward.5} parent=35 // pred_check_branch
        %3211 = sbr.rel (%p3209) target = $region56
      $region55: #{resblock_body_forward.5} parent=35 // pred_region
        %s3212 = smul.u32 16, %s20
      $region56: #{resblock_body_forward.5} parent=35 // pred_fallthru
        _
    $region36: #{resblock_body_forward.5} parent=5 // pred_fallthru
      _
    %p3213 = scmp.le.s32.totalorder 2, %s10
    // Predicated region
    $region57: #{resblock_body_forward.5} parent=5 // pred_check
      %p3214 = pneg %p3213
    $region58: #{resblock_body_forward.5} parent=5 // pred_check_branch
      %3216 = sbr.rel (%p3214) target = $region60
    $region59: #{resblock_body_forward.5} parent=5 // pred_region
      %s3217 = ssub.s32 %s10, 2
      // Predicated region
      $region61: #{resblock_body_forward.5} parent=59 // pred_check
        %p3218 = pneg %p142
      $region62: #{resblock_body_forward.5} parent=59 // pred_check_branch
        %3220 = sbr.rel (%p3218) target = $region64
      $region63: #{resblock_body_forward.5} parent=59 // pred_region
        %s3221 = smul.u32 16, %s22
        %p3222 = scmp.lt.s32.totalorder %s21, 1
        %s3223 = scalar_select %p3222, %s21, 1
        %p3224 = scmp.lt.s32.totalorder %s3221, 15
        %s3225 = scalar_select %p3224, %s3221, 15
        %s3226 = smul.addr %s3223, 16
        %s3227 = sadd.s32 %s3225, %s3226
        %s3228 = smul.addr %s3227, 4
        %s3229 = scalar_lea.vmem %s4, %s3228
      $region64: #{resblock_body_forward.5} parent=59 // pred_fallthru
        _
    $region60: #{resblock_body_forward.5} parent=5 // pred_fallthru
      _
  $region6: #{resblock_body_forward.5} parent=0 // loop_footer
    %s14 = sadd.s32 1, %s10
  $region7: #{resblock_body_forward.5} parent=0 // loop_footer_branch
    %9 = sbr.rel target = $region3
  $region8: #{resblock_body_forward.5} parent=0 // loop_exit
    _

// kernel: resblock_body_forward.6
$region0: #{resblock_body_forward.6}
  #allocation0 [shape = 'u32[]', space=smem, size = 0x4, offset = 0x4, fixed_abs, tag = 'smem constant byte address 0x4 - core index']
  #allocation1 [shape = 'u32[72,128]{1,0:T(1,128)}', space=vmem, size = 0x9000, scoped, tag = 'internal scratch']
  #allocation2 [shape = 'bf16[18,10,8]{2,1,0:T(8,128)(2,1)}', space=vmem, size = 0x12000, scoped, tag = 'scratch operand']
  #allocation3 [shape = 'bf16[128,72]{1,0:T(8,128)(2,1)}', space=vmem, size = 0x8000, scoped, tag = 'scratch operand']
  %s0 = inlined_call_operand.vmem [shape: bf16[2,16,8,8], index: 0, kind: input, shape index: {}]
  %s1 = inlined_call_operand.vmem [shape: bf16[72,8], index: 1, kind: input, shape index: {}]
  %s2 = inlined_call_operand.vmem [shape: f32[1,8], index: 2, kind: input, shape index: {}]
  %s3 = inlined_call_operand.vmem [shape: f32[1,8], index: 3, kind: input, shape index: {}]
  %s4 = inlined_call_operand.vmem [shape: bf16[2,16,8,8], index: 4, kind: output, shape index: {}]
  %s5 = sld [smem:[#allocation0]]
  $region65: #{resblock_body_forward.6} parent=0
    _
  %s7 = ssub.s32 1, %s5
  %s8 = scalar_select 0, %s7, %s5
  loop: start=0, step=1, limit=4
  $region2: #{resblock_body_forward.6} parent=0 // loop_pre_header
    _
  $region3: #{resblock_body_forward.6} parent=0 // loop_header
    %s10 = sphi 0, %s14
    %p11 = scmp.ge.s32.totalorder %s10, 4
    %s17 = sphi 0, %s29
    %s18 = sphi 0, %s25
    %s19 = sphi 0, %s17
    %s20 = sphi 0, %s18
    %s21 = sphi 0, %s19
    %s22 = sphi 0, %s20
    %s32 = sphi 0, %s34
    %s35 = sphi 0, %s32
    %s36 = sphi 0, %s35
    %s52 = sphi 0, %s36
    %s56 = sphi 0, %s56
    %s58 = sphi 0, %s56
    %s59 = sphi 0, %s58
    %s73 = sphi 0, %s59
    %s77 = sphi 0, %s77
    %s79 = sphi 0, %s77
    %s80 = sphi 0, %s79
    %s94 = sphi 0, %s80
    %s98 = sphi 0, %s98
    %s100 = sphi 0, %s98
    %s101 = sphi 0, %s100
    %s115 = sphi 0, %s101
    %s123 = sphi 0, %s125
    %s126 = sphi 0, %s123
    %s127 = sphi 0, %s126
    %s143 = sphi 0, %s127
  $region4: #{resblock_body_forward.6} parent=0 // loop_header_branch
    %13 = sbr.rel (%p11) target = $region8
  $region5: #{resblock_body_forward.6} parent=0 // loop_body
    %s15 = ssub.s32 %s10, 1
    %s16 = ssub.s32 %s10, 2
    %s23 = sadd.s32 1, %s18
    %p24 = scmp.ge.s32.totalorder %s23, 1
    %s25 = scalar_select %p24, 0, %s23
    %s26 = sadd.s32 1, %s17
    %s27 = scalar_select %p24, %s26, %s17
    %p28 = scmp.ge.s32.totalorder %s27, 2
    %s29 = scalar_select %p28, 0, %s27
    %s30 = ssub.s32 %s17, %s29
    %p31 = scmp.eq.s32.totalorder %s30, 0
    %s33 = sadd.s32 %s32, 1
    %s34 = scalar_select %p31, %s32, %s33
    %p37 = pneg %p31
    %p38 = scmp.eq.s32.totalorder %s10, 1
    %p39 = por %p37, %p38
    %p40 = scmp.ne.s32.totalorder %s32, %s35
    %p41 = scmp.eq.s32.totalorder %s10, 0
    %p42 = por %p40, %p41
    %p43 = scmp.ne.s32.totalorder %s32, %s35
    %p44 = scmp.eq.s32.totalorder %s15, 1
    %p45 = por %p43, %p44
    %p46 = scmp.ne.s32.totalorder %s35, %s36
    %p47 = scmp.eq.s32.totalorder %s15, 0
    %p48 = por %p46, %p47
    %p49 = scmp.ne.s32.totalorder %s35, %s36
    %p50 = scmp.eq.s32.totalorder %s16, 1
    %p51 = por %p49, %p50
    %p53 = scmp.ne.s32.totalorder %s36, %s52
    %p54 = scmp.eq.s32.totalorder %s16, 0
    %p55 = por %p53, %p54
    %s57 = sadd.s32 %s56, 1
    %p60 = scmp.eq.s32.totalorder %s10, 1
    %p61 = scmp.ne.s32.totalorder %s56, %s58
    %p62 = scmp.eq.s32.totalorder %s10, 0
    %p63 = por %p61, %p62
    %p64 = scmp.ne.s32.totalorder %s56, %s58
    %p65 = scmp.eq.s32.totalorder %s15, 1
    %p66 = por %p64, %p65
    %p67 = scmp.ne.s32.totalorder %s58, %s59
    %p68 = scmp.eq.s32.totalorder %s15, 0
    %p69 = por %p67, %p68
    %p70 = scmp.ne.s32.totalorder %s58, %s59
    %p71 = scmp.eq.s32.totalorder %s16, 1
    %p72 = por %p70, %p71
    %p74 = scmp.ne.s32.totalorder %s59, %s73
    %p75 = scmp.eq.s32.totalorder %s16, 0
    %p76 = por %p74, %p75
    %s78 = sadd.s32 %s77, 1
    %p81 = scmp.eq.s32.totalorder %s10, 1
    %p82 = scmp.ne.s32.totalorder %s77, %s79
    %p83 = scmp.eq.s32.totalorder %s10, 0
    %p84 = por %p82, %p83
    %p85 = scmp.ne.s32.totalorder %s77, %s79
    %p86 = scmp.eq.s32.totalorder %s15, 1
    %p87 = por %p85, %p86
    %p88 = scmp.ne.s32.totalorder %s79, %s80
    %p89 = scmp.eq.s32.totalorder %s15, 0
    %p90 = por %p88, %p89
    %p91 = scmp.ne.s32.totalorder %s79, %s80
    %p92 = scmp.eq.s32.totalorder %s16, 1
    %p93 = por %p91, %p92
    %p95 = scmp.ne.s32.totalorder %s80, %s94
    %p96 = scmp.eq.s32.totalorder %s16, 0
    %p97 = por %p95, %p96
    %s99 = sadd.s32 %s98, 1
    %p102 = scmp.eq.s32.totalorder %s10, 1
    %p103 = scmp.ne.s32.totalorder %s98, %s100
    %p104 = scmp.eq.s32.totalorder %s10, 0
    %p105 = por %p103, %p104
    %p106 = scmp.ne.s32.totalorder %s98, %s100
    %p107 = scmp.eq.s32.totalorder %s15, 1
    %p108 = por %p106, %p107
    %p109 = scmp.ne.s32.totalorder %s100, %s101
    %p110 = scmp.eq.s32.totalorder %s15, 0
    %p111 = por %p109, %p110
    %p112 = scmp.ne.s32.totalorder %s100, %s101
    %p113 = scmp.eq.s32.totalorder %s16, 1
    %p114 = por %p112, %p113
    %p116 = scmp.ne.s32.totalorder %s101, %s115
    %p117 = scmp.eq.s32.totalorder %s16, 0
    %p118 = por %p116, %p117
    %s119 = ssub.s32 %s17, %s29
    %s120 = ssub.s32 %s18, %s25
    %s121 = sor.u32 %s119, %s120
    %p122 = scmp.eq.s32.totalorder %s121, 0
    %s124 = sadd.s32 %s123, 1
    %s125 = scalar_select %p122, %s123, %s124
    %p128 = pneg %p122
    %p129 = scmp.eq.s32.totalorder %s10, 1
    %p130 = por %p128, %p129
    %p131 = scmp.ne.s32.totalorder %s123, %s126
    %p132 = scmp.eq.s32.totalorder %s10, 0
    %p133 = por %p131, %p132
    %p134 = scmp.ne.s32.totalorder %s123, %s126
    %p135 = scmp.eq.s32.totalorder %s15, 1
    %p136 = por %p134, %p135
    %p137 = scmp.ne.s32.totalorder %s126, %s127
    %p138 = scmp.eq.s32.totalorder %s15, 0
    %p139 = por %p137, %p138
    %p140 = scmp.ne.s32.totalorder %s126, %s127
    %p141 = scmp.eq.s32.totalorder %s16, 1
    %p142 = por %p140, %p141
    %p144 = scmp.ne.s32.totalorder %s127, %s143
    %p145 = scmp.eq.s32.totalorder %s16, 0
    %p146 = por %p144, %p145
    %p147 = scmp.le.s32.totalorder 1, %s10
    %p148 = scmp.lt.s32.totalorder %s10, 3
    %p149 = pnand %p147, %p148
    %p150 = pneg %p149
    // Predicated region
    $region9: #{resblock_body_forward.6} parent=5 // pred_check
      _
    $region10: #{resblock_body_forward.6} parent=5 // pred_check_branch
      %152 = sbr.rel (%p149) target = $region12
    $region11: #{resblock_body_forward.6} parent=5 // pred_region
      %s153 = ssub.s32 %s10, 1
      // Predicated region
      $region13: #{resblock_body_forward.6} parent=11 // pred_check
        %p154 = pneg %p69
      $region14: #{resblock_body_forward.6} parent=11 // pred_check_branch
        %156 = sbr.rel (%p154) target = $region16
      $region15: #{resblock_body_forward.6} parent=11 // pred_region
        _
      $region16: #{resblock_body_forward.6} parent=11 // pred_fallthru
        _
      // Predicated region
      $region17: #{resblock_body_forward.6} parent=11 // pred_check
        %p157 = pneg %p90
      $region18: #{resblock_body_forward.6} parent=11 // pred_check_branch
        %159 = sbr.rel (%p157) target = $region20
      $region19: #{resblock_body_forward.6} parent=11 // pred_region
        _
      $region20: #{resblock_body_forward.6} parent=11 // pred_fallthru
        _
      // Predicated region
      $region21: #{resblock_body_forward.6} parent=11 // pred_check
        %p160 = pneg %p111
      $region22: #{resblock_body_forward.6} parent=11 // pred_check_branch
        %162 = sbr.rel (%p160) target = $region24
      $region23: #{resblock_body_forward.6} parent=11 // pred_region
        _
      $region24: #{resblock_body_forward.6} parent=11 // pred_fallthru
        _
    $region12: #{resblock_body_forward.6} parent=5 // pred_fallthru
      _
    %p163 = scmp.lt.s32.totalorder %s10, 2
    // Predicated region
    $region25: #{resblock_body_forward.6} parent=5 // pred_check
      %p164 = pneg %p163
    $region26: #{resblock_body_forward.6} parent=5 // pred_check_branch
      %166 = sbr.rel (%p164) target = $region28
    $region27: #{resblock_body_forward.6} parent=5 // pred_region
      // Predicated region
      $region29: #{resblock_body_forward.6} parent=27 // pred_check
        %p167 = pneg %p42
      $region30: #{resblock_body_forward.6} parent=27 // pred_check_branch
        %169 = sbr.rel (%p167) target = $region32
      $region31: #{resblock_body_forward.6} parent=27 // pred_region
        %p170 = scmp.lt.s32.totalorder %s17, 1
        %s171 = scalar_select %p170, %s17, 1
        %s172 = smul.addr %s171, 16
        %s173 = smul.addr %s172, 4
        %s174 = scalar_lea.vmem %s0, %s173
      $region32: #{resblock_body_forward.6} parent=27 // pred_fallthru
        _
    $region28: #{resblock_body_forward.6} parent=5 // pred_fallthru
      _
    %p175 = scmp.le.s32.totalorder 1, %s10
    %p176 = scmp.lt.s32.totalorder %s10, 3
    %p177 = pnand %p175, %p176
    %p178 = pneg %p177
    // Predicated region
    $region33: #{resblock_body_forward.6} parent=5 // pred_check
      _
    $region34: #{resblock_body_forward.6} parent=5 // pred_check_branch
      %180 = sbr.rel (%p177) target = $region36
    $region35: #{resblock_body_forward.6} parent=5 // pred_region
      %s181 = ssub.s32 %s10, 1
      %p182 = scmp.lt.s32.totalorder %s19, 1
      %s183 = scalar_select %p182, %s19, 1
      %s184 = smul.addr %s183, 16
      %s185 = smul.addr %s184, 4
      %s186 = scalar_lea.vmem %s0, %s185
      %p187 = pneg %p48
      %p188 = pneg %p45
      %p189 = pneg %p69
      %p190 = pneg %p66
      %p191 = pneg %p90
      %p192 = pneg %p87
      %p193 = pneg %p111
      %p194 = pneg %p108
      %p195 = pneg %p139
      %p196 = pneg %p136
      %s197 = smul.u32 16, %s20
      %p198 = scmp.lt.s32.totalorder %s19, 1
      %s199 = scalar_select %p198, %s19, 1
      %p200 = scmp.lt.s32.totalorder %s197, 15
      %s201 = scalar_select %p200, %s197, 15
      %s202 = smul.addr %s199, 16
      %s203 = sadd.s32 %s201, %s202
      %s204 = smul.addr %s203, 4
      %s205 = scalar_lea.vmem %s4, %s204
      %p206 = scmp.lt.s32.totalorder %s19, 1
      %s207 = scalar_select %p206, %s19, 1
      %s208 = smul.addr %s207, 16
      %s209 = smul.addr %s208, 4
      %s210 = scalar_lea.vmem %s0, %s209
      %s211 = smul.u32 16, %s20
      %p212 = scmp.lt.s32.totalorder %s19, 1
      %s213 = scalar_select %p212, %s19, 1
      %p214 = scmp.lt.s32.totalorder %s211, 15
      %s215 = scalar_select %p214, %s211, 15
      %s216 = smul.addr %s213, 16
      %s217 = sadd.s32 %s215, %s216
      %s218 = smul.addr %s217, 4
      %s219 = scalar_lea.vmem %s4, %s218
      %s220 = smul.u32 16, %s20
      %s222 = smul.u32 %s20, 16
      %vm223 = vcmask 57344
      %vm224 = vsmask.f32 256
      %vm225 = vmand %vm223, %vm224
      %v226 = vld [vmem:[#allocation2] sm:$0x1]
      %v227 = vsel %vm225, 0, %v226
      %228 = vst [vmem:[#allocation2] sm:$0x1] %v227
      %v229 = vld [vmem:[#allocation2 + $0x8] sm:$0x1]
      %v230 = vsel %vm225, 0, %v229
      %231 = vst [vmem:[#allocation2 + $0x8] sm:$0x1] %v230
      %v232 = vld [vmem:[#allocation2 + $0x10] sm:$0x1]
      %v233 = vsel %vm225, 0, %v232
      %234 = vst [vmem:[#allocation2 + $0x10] sm:$0x1] %v233
      %v235 = vld [vmem:[#allocation2 + $0x18] sm:$0x1]
      %v236 = vsel %vm225, 0, %v235
      %237 = vst [vmem:[#allocation2 + $0x18] sm:$0x1] %v236
      %v238 = vld [vmem:[#allocation2 + $0x20] sm:$0x1]
      %v239 = vsel %vm225, 0, %v238
      %240 = vst [vmem:[#allocation2 + $0x20] sm:$0x1] %v239
      %v241 = vld [vmem:[#allocation2 + $0x28] sm:$0x1]
      %v242 = vsel %vm225, 0, %v241
      %243 = vst [vmem:[#allocation2 + $0x28] sm:$0x1] %v242
      %v244 = vld [vmem:[#allocation2 + $0x30] sm:$0x1]
      %v245 = vsel %vm225, 0, %v244
      %246 = vst [vmem:[#allocation2 + $0x30] sm:$0x1] %v245
      %v247 = vld [vmem:[#allocation2 + $0x38] sm:$0x1]
      %v248 = vsel %vm225, 0, %v247
      %249 = vst [vmem:[#allocation2 + $0x38] sm:$0x1] %v248
      %v250 = vld [vmem:[#allocation2 + $0x40] sm:$0x1]
      %v251 = vsel %vm225, 0, %v250
      %252 = vst [vmem:[#allocation2 + $0x40] sm:$0x1] %v251
      %v253 = vld [vmem:[#allocation2 + $0x48] sm:$0x1]
      %v254 = vsel %vm225, 0, %v253
      %255 = vst [vmem:[#allocation2 + $0x48] sm:$0x1] %v254
      %v256 = vld [vmem:[#allocation2 + $0x50] sm:$0x1]
      %v257 = vsel %vm225, 0, %v256
      %258 = vst [vmem:[#allocation2 + $0x50] sm:$0x1] %v257
      %v259 = vld [vmem:[#allocation2 + $0x58] sm:$0x1]
      %v260 = vsel %vm225, 0, %v259
      %261 = vst [vmem:[#allocation2 + $0x58] sm:$0x1] %v260
      %v262 = vld [vmem:[#allocation2 + $0x60] sm:$0x1]
      %v263 = vsel %vm225, 0, %v262
      %264 = vst [vmem:[#allocation2 + $0x60] sm:$0x1] %v263
      %v265 = vld [vmem:[#allocation2 + $0x68] sm:$0x1]
      %v266 = vsel %vm225, 0, %v265
      %267 = vst [vmem:[#allocation2 + $0x68] sm:$0x1] %v266
      %v268 = vld [vmem:[#allocation2 + $0x70] sm:$0x1]
      %v269 = vsel %vm225, 0, %v268
      %270 = vst [vmem:[#allocation2 + $0x70] sm:$0x1] %v269
      %v271 = vld [vmem:[#allocation2 + $0x78] sm:$0x1]
      %v272 = vsel %vm225, 0, %v271
      %273 = vst [vmem:[#allocation2 + $0x78] sm:$0x1] %v272
      %v274 = vld [vmem:[#allocation2 + $0x80] sm:$0x1]
      %v275 = vsel %vm225, 0, %v274
      %276 = vst [vmem:[#allocation2 + $0x80] sm:$0x1] %v275
      %v277 = vld [vmem:[#allocation2 + $0x88] sm:$0x1]
      %v278 = vsel %vm225, 0, %v277
      %279 = vst [vmem:[#allocation2 + $0x88] sm:$0x1] %v278
      %vm280 = vsmask.f32 7938
      %vm281 = vmand %vm223, %vm280
      %v282 = vld [vmem:[#allocation2 + $0x4] sm:$0x1]
      %v283 = vsel %vm281, 0, %v282
      %284 = vst [vmem:[#allocation2 + $0x4] sm:$0x1] %v283
      %v285 = vld [vmem:[#allocation2 + $0xc] sm:$0x1]
      %v286 = vsel %vm281, 0, %v285
      %287 = vst [vmem:[#allocation2 + $0xc] sm:$0x1] %v286
      %v288 = vld [vmem:[#allocation2 + $0x14] sm:$0x1]
      %v289 = vsel %vm281, 0, %v288
      %290 = vst [vmem:[#allocation2 + $0x14] sm:$0x1] %v289
      %v291 = vld [vmem:[#allocation2 + $0x1c] sm:$0x1]
      %v292 = vsel %vm281, 0, %v291
      %293 = vst [vmem:[#allocation2 + $0x1c] sm:$0x1] %v292
      %v294 = vld [vmem:[#allocation2 + $0x24] sm:$0x1]
      %v295 = vsel %vm281, 0, %v294
      %296 = vst [vmem:[#allocation2 + $0x24] sm:$0x1] %v295
      %v297 = vld [vmem:[#allocation2 + $0x2c] sm:$0x1]
      %v298 = vsel %vm281, 0, %v297
      %299 = vst [vmem:[#allocation2 + $0x2c] sm:$0x1] %v298
      %v300 = vld [vmem:[#allocation2 + $0x34] sm:$0x1]
      %v301 = vsel %vm281, 0, %v300
      %302 = vst [vmem:[#allocation2 + $0x34] sm:$0x1] %v301
      %v303 = vld [vmem:[#allocation2 + $0x3c] sm:$0x1]
      %v304 = vsel %vm281, 0, %v303
      %305 = vst [vmem:[#allocation2 + $0x3c] sm:$0x1] %v304
      %v306 = vld [vmem:[#allocation2 + $0x44] sm:$0x1]
      %v307 = vsel %vm281, 0, %v306
      %308 = vst [vmem:[#allocation2 + $0x44] sm:$0x1] %v307
      %v309 = vld [vmem:[#allocation2 + $0x4c] sm:$0x1]
      %v310 = vsel %vm281, 0, %v309
      %311 = vst [vmem:[#allocation2 + $0x4c] sm:$0x1] %v310
      %v312 = vld [vmem:[#allocation2 + $0x54] sm:$0x1]
      %v313 = vsel %vm281, 0, %v312
      %314 = vst [vmem:[#allocation2 + $0x54] sm:$0x1] %v313
      %v315 = vld [vmem:[#allocation2 + $0x5c] sm:$0x1]
      %v316 = vsel %vm281, 0, %v315
      %317 = vst [vmem:[#allocation2 + $0x5c] sm:$0x1] %v316
      %v318 = vld [vmem:[#allocation2 + $0x64] sm:$0x1]
      %v319 = vsel %vm281, 0, %v318
      %320 = vst [vmem:[#allocation2 + $0x64] sm:$0x1] %v319
      %v321 = vld [vmem:[#allocation2 + $0x6c] sm:$0x1]
      %v322 = vsel %vm281, 0, %v321
      %323 = vst [vmem:[#allocation2 + $0x6c] sm:$0x1] %v322
      %v324 = vld [vmem:[#allocation2 + $0x74] sm:$0x1]
      %v325 = vsel %vm281, 0, %v324
      %326 = vst [vmem:[#allocation2 + $0x74] sm:$0x1] %v325
      %v327 = vld [vmem:[#allocation2 + $0x7c] sm:$0x1]
      %v328 = vsel %vm281, 0, %v327
      %329 = vst [vmem:[#allocation2 + $0x7c] sm:$0x1] %v328
      %v330 = vld [vmem:[#allocation2 + $0x84] sm:$0x1]
      %v331 = vsel %vm281, 0, %v330
      %332 = vst [vmem:[#allocation2 + $0x84] sm:$0x1] %v331
      %v333 = vld [vmem:[#allocation2 + $0x8c] sm:$0x1]
      %v334 = vsel %vm281, 0, %v333
      %335 = vst [vmem:[#allocation2 + $0x8c] sm:$0x1] %v334
      %s336 = smul.addr %s222, 4
      %s337 = scalar_lea.vmem %s210, %s336
      %v338 = vld [vmem:[%s337] sm:$0xf]
      %v339 = vld [vmem:[%s337 + $0x4] sm:$0xf]
      %v340 = vld [vmem:[%s337 + $0x8] sm:$0xf]
      %v341 = vld [vmem:[%s337 + $0xc] sm:$0xf]
      %v342 = vld [vmem:[%s337 + $0x10] sm:$0xf]
      %v343 = vld [vmem:[%s337 + $0x14] sm:$0xf]
      %v344 = vld [vmem:[%s337 + $0x18] sm:$0xf]
      %v345 = vld [vmem:[%s337 + $0x1c] sm:$0xf]
      %v346 = vld [vmem:[%s337 + $0x20] sm:$0xf]
      %v347 = vld [vmem:[%s337 + $0x24] sm:$0xf]
      %v348 = vld [vmem:[%s337 + $0x28] sm:$0xf]
      %v349 = vld [vmem:[%s337 + $0x2c] sm:$0xf]
      %v350 = vld [vmem:[%s337 + $0x30] sm:$0xf]
      %v351 = vld [vmem:[%s337 + $0x34] sm:$0xf]
      %v352 = vld [vmem:[%s337 + $0x38] sm:$0xf]
      %v353 = vld [vmem:[%s337 + $0x3c] sm:$0xf]
      %v355 = vshrl.u32 %v338, 16
      %v357 = vrot.slane %v355, 7
      %v358 = vshll.u32 %v338, 16
      %v360 = vor.u32 %v357, %v358
      %v361 = vrot.slane %v357, 4
      %v363 = vshrl.u32 %v339, 16
      %v365 = vrot.slane %v363, 7
      %v366 = vshll.u32 %v339, 16
      %v368 = vor.u32 %v365, %v366
      %v369 = vrot.slane %v365, 4
      %v371 = vshrl.u32 %v340, 16
      %v373 = vrot.slane %v371, 7
      %v374 = vshll.u32 %v340, 16
      %v376 = vor.u32 %v373, %v374
      %v377 = vrot.slane %v373, 4
      %v379 = vshrl.u32 %v341, 16
      %v381 = vrot.slane %v379, 7
      %v382 = vshll.u32 %v341, 16
      %v384 = vor.u32 %v381, %v382
      %v385 = vrot.slane %v381, 4
      %v387 = vshrl.u32 %v342, 16
      %v389 = vrot.slane %v387, 7
      %v390 = vshll.u32 %v342, 16
      %v392 = vor.u32 %v389, %v390
      %v393 = vrot.slane %v389, 4
      %v395 = vshrl.u32 %v343, 16
      %v397 = vrot.slane %v395, 7
      %v398 = vshll.u32 %v343, 16
      %v400 = vor.u32 %v397, %v398
      %v401 = vrot.slane %v397, 4
      %v403 = vshrl.u32 %v344, 16
      %v405 = vrot.slane %v403, 7
      %v406 = vshll.u32 %v344, 16
      %v408 = vor.u32 %v405, %v406
      %v409 = vrot.slane %v405, 4
      %v411 = vshrl.u32 %v345, 16
      %v413 = vrot.slane %v411, 7
      %v414 = vshll.u32 %v345, 16
      %v416 = vor.u32 %v413, %v414
      %v417 = vrot.slane %v413, 4
      %v419 = vshrl.u32 %v346, 16
      %v421 = vrot.slane %v419, 7
      %v422 = vshll.u32 %v346, 16
      %v424 = vor.u32 %v421, %v422
      %v425 = vrot.slane %v421, 4
      %v427 = vshrl.u32 %v347, 16
      %v429 = vrot.slane %v427, 7
      %v430 = vshll.u32 %v347, 16
      %v432 = vor.u32 %v429, %v430
      %v433 = vrot.slane %v429, 4
      %v435 = vshrl.u32 %v348, 16
      %v437 = vrot.slane %v435, 7
      %v438 = vshll.u32 %v348, 16
      %v440 = vor.u32 %v437, %v438
      %v441 = vrot.slane %v437, 4
      %v443 = vshrl.u32 %v349, 16
      %v445 = vrot.slane %v443, 7
      %v446 = vshll.u32 %v349, 16
      %v448 = vor.u32 %v445, %v446
      %v449 = vrot.slane %v445, 4
      %v451 = vshrl.u32 %v350, 16
      %v453 = vrot.slane %v451, 7
      %v454 = vshll.u32 %v350, 16
      %v456 = vor.u32 %v453, %v454
      %v457 = vrot.slane %v453, 4
      %v459 = vshrl.u32 %v351, 16
      %v461 = vrot.slane %v459, 7
      %v462 = vshll.u32 %v351, 16
      %v464 = vor.u32 %v461, %v462
      %v465 = vrot.slane %v461, 4
      %v467 = vshrl.u32 %v352, 16
      %v469 = vrot.slane %v467, 7
      %v470 = vshll.u32 %v352, 16
      %v472 = vor.u32 %v469, %v470
      %v473 = vrot.slane %v469, 4
      %v475 = vshrl.u32 %v353, 16
      %v477 = vrot.slane %v475, 7
      %v478 = vshll.u32 %v353, 16
      %v480 = vor.u32 %v477, %v478
      %v481 = vrot.slane %v477, 4
      %s514 = scalar_lea.vmem [#allocation2], 8
      %vm515 = vcmask 60416
      %vm516 = vmand %vm515, %vm280
      %v517 = vld [vmem:[%s514] sm:$0xf]
      %v518 = vsel %vm516, %v360, %v517
      %519 = vst [vmem:[%s514] sm:$0xf] %v518
      %v520 = vld [vmem:[%s514 + $0x4] sm:$0x1]
      %v521 = vsel %vm225, %v361, %v520
      %522 = vst [vmem:[%s514 + $0x4] sm:$0x1] %v521
      %v523 = vld [vmem:[%s514 + $0x8] sm:$0xf]
      %v524 = vsel %vm516, %v368, %v523
      %525 = vst [vmem:[%s514 + $0x8] sm:$0xf] %v524
      %v526 = vld [vmem:[%s514 + $0xc] sm:$0x1]
      %v527 = vsel %vm225, %v369, %v526
      %528 = vst [vmem:[%s514 + $0xc] sm:$0x1] %v527
      %v529 = vld [vmem:[%s514 + $0x10] sm:$0xf]
      %v530 = vsel %vm516, %v376, %v529
      %531 = vst [vmem:[%s514 + $0x10] sm:$0xf] %v530
      %v532 = vld [vmem:[%s514 + $0x14] sm:$0x1]
      %v533 = vsel %vm225, %v377, %v532
      %534 = vst [vmem:[%s514 + $0x14] sm:$0x1] %v533
      %v535 = vld [vmem:[%s514 + $0x18] sm:$0xf]
      %v536 = vsel %vm516, %v384, %v535
      %537 = vst [vmem:[%s514 + $0x18] sm:$0xf] %v536
      %v538 = vld [vmem:[%s514 + $0x1c] sm:$0x1]
      %v539 = vsel %vm225, %v385, %v538
      %540 = vst [vmem:[%s514 + $0x1c] sm:$0x1] %v539
      %v541 = vld [vmem:[%s514 + $0x20] sm:$0xf]
      %v542 = vsel %vm516, %v392, %v541
      %543 = vst [vmem:[%s514 + $0x20] sm:$0xf] %v542
      %v544 = vld [vmem:[%s514 + $0x24] sm:$0x1]
      %v545 = vsel %vm225, %v393, %v544
      %546 = vst [vmem:[%s514 + $0x24] sm:$0x1] %v545
      %v547 = vld [vmem:[%s514 + $0x28] sm:$0xf]
      %v548 = vsel %vm516, %v400, %v547
      %549 = vst [vmem:[%s514 + $0x28] sm:$0xf] %v548
      %v550 = vld [vmem:[%s514 + $0x2c] sm:$0x1]
      %v551 = vsel %vm225, %v401, %v550
      %552 = vst [vmem:[%s514 + $0x2c] sm:$0x1] %v551
      %v553 = vld [vmem:[%s514 + $0x30] sm:$0xf]
      %v554 = vsel %vm516, %v408, %v553
      %555 = vst [vmem:[%s514 + $0x30] sm:$0xf] %v554
      %v556 = vld [vmem:[%s514 + $0x34] sm:$0x1]
      %v557 = vsel %vm225, %v409, %v556
      %558 = vst [vmem:[%s514 + $0x34] sm:$0x1] %v557
      %v559 = vld [vmem:[%s514 + $0x38] sm:$0xf]
      %v560 = vsel %vm516, %v416, %v559
      %561 = vst [vmem:[%s514 + $0x38] sm:$0xf] %v560
      %v562 = vld [vmem:[%s514 + $0x3c] sm:$0x1]
      %v563 = vsel %vm225, %v417, %v562
      %564 = vst [vmem:[%s514 + $0x3c] sm:$0x1] %v563
      %v565 = vld [vmem:[%s514 + $0x40] sm:$0xf]
      %v566 = vsel %vm516, %v424, %v565
      %567 = vst [vmem:[%s514 + $0x40] sm:$0xf] %v566
      %v568 = vld [vmem:[%s514 + $0x44] sm:$0x1]
      %v569 = vsel %vm225, %v425, %v568
      %570 = vst [vmem:[%s514 + $0x44] sm:$0x1] %v569
      %v571 = vld [vmem:[%s514 + $0x48] sm:$0xf]
      %v572 = vsel %vm516, %v432, %v571
      %573 = vst [vmem:[%s514 + $0x48] sm:$0xf] %v572
      %v574 = vld [vmem:[%s514 + $0x4c] sm:$0x1]
      %v575 = vsel %vm225, %v433, %v574
      %576 = vst [vmem:[%s514 + $0x4c] sm:$0x1] %v575
      %v577 = vld [vmem:[%s514 + $0x50] sm:$0xf]
      %v578 = vsel %vm516, %v440, %v577
      %579 = vst [vmem:[%s514 + $0x50] sm:$0xf] %v578
      %v580 = vld [vmem:[%s514 + $0x54] sm:$0x1]
      %v581 = vsel %vm225, %v441, %v580
      %582 = vst [vmem:[%s514 + $0x54] sm:$0x1] %v581
      %v583 = vld [vmem:[%s514 + $0x58] sm:$0xf]
      %v584 = vsel %vm516, %v448, %v583
      %585 = vst [vmem:[%s514 + $0x58] sm:$0xf] %v584
      %v586 = vld [vmem:[%s514 + $0x5c] sm:$0x1]
      %v587 = vsel %vm225, %v449, %v586
      %588 = vst [vmem:[%s514 + $0x5c] sm:$0x1] %v587
      %v589 = vld [vmem:[%s514 + $0x60] sm:$0xf]
      %v590 = vsel %vm516, %v456, %v589
      %591 = vst [vmem:[%s514 + $0x60] sm:$0xf] %v590
      %v592 = vld [vmem:[%s514 + $0x64] sm:$0x1]
      %v593 = vsel %vm225, %v457, %v592
      %594 = vst [vmem:[%s514 + $0x64] sm:$0x1] %v593
      %v595 = vld [vmem:[%s514 + $0x68] sm:$0xf]
      %v596 = vsel %vm516, %v464, %v595
      %597 = vst [vmem:[%s514 + $0x68] sm:$0xf] %v596
      %v598 = vld [vmem:[%s514 + $0x6c] sm:$0x1]
      %v599 = vsel %vm225, %v465, %v598
      %600 = vst [vmem:[%s514 + $0x6c] sm:$0x1] %v599
      %v601 = vld [vmem:[%s514 + $0x70] sm:$0xf]
      %v602 = vsel %vm516, %v472, %v601
      %603 = vst [vmem:[%s514 + $0x70] sm:$0xf] %v602
      %v604 = vld [vmem:[%s514 + $0x74] sm:$0x1]
      %v605 = vsel %vm225, %v473, %v604
      %606 = vst [vmem:[%s514 + $0x74] sm:$0x1] %v605
      %v607 = vld [vmem:[%s514 + $0x78] sm:$0xf]
      %v608 = vsel %vm516, %v480, %v607
      %609 = vst [vmem:[%s514 + $0x78] sm:$0xf] %v608
      %v610 = vld [vmem:[%s514 + $0x7c] sm:$0x1]
      %v611 = vsel %vm225, %v481, %v610
      %612 = vst [vmem:[%s514 + $0x7c] sm:$0x1] %v611
      %p613 = scmp.eq.s32.totalorder %s20, 0
      // Predicated region
      $region37: #{resblock_body_forward.6} parent=35 // pred_check
        %p614 = pneg %p613
      $region38: #{resblock_body_forward.6} parent=35 // pred_check_branch
        %616 = sbr.rel (%p614) target = $region40
      $region39: #{resblock_body_forward.6} parent=35 // pred_region
        %vm617 = vcmask 60416
        %618 = vst.msk [vmem:[#allocation2] sm:$0xf] %vm617, 0
        %vm619 = vcmask 57344
        %620 = vst.msk [vmem:[#allocation2 + $0x4] sm:$0x1] %vm619, 0
      $region40: #{resblock_body_forward.6} parent=35 // pred_fallthru
        _
      %p621 = scmp.gt.s32.totalorder %s20, 0
      // Predicated region
      $region41: #{resblock_body_forward.6} parent=35 // pred_check
        %p622 = pneg %p621
      $region42: #{resblock_body_forward.6} parent=35 // pred_check_branch
        %624 = sbr.rel (%p622) target = $region44
      $region43: #{resblock_body_forward.6} parent=35 // pred_region
        %s625 = ssub.s32 %s222, 1
        %s626 = smul.addr %s625, 4
        %s627 = scalar_lea.vmem %s210, %s626
        %v628 = vld [vmem:[%s627] sm:$0xf]
        %v630 = vshrl.u32 %v628, 16
        %v632 = vrot.slane %v630, 7
        %v633 = vshll.u32 %v628, 16
        %v635 = vor.u32 %v632, %v633
        %v636 = vrot.slane %v632, 4
        %v639 = vld [vmem:[#allocation2] sm:$0xf]
        %v640 = vsel %vm516, %v635, %v639
        %641 = vst [vmem:[#allocation2] sm:$0xf] %v640
        %v642 = vld [vmem:[#allocation2 + $0x4] sm:$0x1]
        %v643 = vsel %vm225, %v636, %v642
        %644 = vst [vmem:[#allocation2 + $0x4] sm:$0x1] %v643
      $region44: #{resblock_body_forward.6} parent=35 // pred_fallthru
        _
      // Predicated region
      $region45: #{resblock_body_forward.6} parent=35 // pred_check
        %p645 = pneg %p613
      $region46: #{resblock_body_forward.6} parent=35 // pred_check_branch
        %647 = sbr.rel (%p645) target = $region48
      $region47: #{resblock_body_forward.6} parent=35 // pred_region
        %s648 = scalar_lea.vmem [#allocation2], 136
        %vm649 = vcmask 60416
        %650 = vst.msk [vmem:[%s648] sm:$0xf] %vm649, 0
        %vm651 = vcmask 57344
        %652 = vst.msk [vmem:[%s648 + $0x4] sm:$0x1] %vm651, 0
      $region48: #{resblock_body_forward.6} parent=35 // pred_fallthru
        _
      %p653 = scmp.lt.s32.totalorder %s20, 0
      // Predicated region
      $region49: #{resblock_body_forward.6} parent=35 // pred_check
        %p654 = pneg %p653
      $region50: #{resblock_body_forward.6} parent=35 // pred_check_branch
        %656 = sbr.rel (%p654) target = $region52
      $region51: #{resblock_body_forward.6} parent=35 // pred_region
        %s657 = sadd.s32 %s222, 16
        %s658 = smul.addr %s657, 4
        %s659 = scalar_lea.vmem %s210, %s658
        %v660 = vld [vmem:[%s659] sm:$0xf]
        %v662 = vshrl.u32 %v660, 16
        %v664 = vrot.slane %v662, 7
        %v665 = vshll.u32 %v660, 16
        %v667 = vor.u32 %v664, %v665
        %v668 = vrot.slane %v664, 4
        %s671 = scalar_lea.vmem [#allocation2], 136
        %v672 = vld [vmem:[%s671] sm:$0xf]
        %v673 = vsel %vm516, %v667, %v672
        %674 = vst [vmem:[%s671] sm:$0xf] %v673
        %v675 = vld [vmem:[%s671 + $0x4] sm:$0x1]
        %v676 = vsel %vm225, %v668, %v675
        %677 = vst [vmem:[%s671 + $0x4] sm:$0x1] %v676
      $region52: #{resblock_body_forward.6} parent=35 // pred_fallthru
        _
      %v678 = vld [vmem:[#allocation2] sm:$0xf]
      %v679 = vld [vmem:[#allocation2 + $0x8] sm:$0xf]
      %v680 = vld [vmem:[#allocation2 + $0x10] sm:$0xf]
      %v681 = vld [vmem:[#allocation2 + $0x18] sm:$0xf]
      %v682 = vld [vmem:[#allocation2 + $0x20] sm:$0xf]
      %v683 = vld [vmem:[#allocation2 + $0x28] sm:$0xf]
      %v684 = vld [vmem:[#allocation2 + $0x30] sm:$0xf]
      %v685 = vld [vmem:[#allocation2 + $0x38] sm:$0xf]
      %v686 = vld [vmem:[#allocation2 + $0x40] sm:$0xf]
      %v687 = vld [vmem:[#allocation2 + $0x48] sm:$0xf]
      %v688 = vld [vmem:[#allocation2 + $0x50] sm:$0xf]
      %v689 = vld [vmem:[#allocation2 + $0x58] sm:$0xf]
      %v690 = vld [vmem:[#allocation2 + $0x60] sm:$0xf]
      %v691 = vld [vmem:[#allocation2 + $0x68] sm:$0xf]
      %v692 = vld [vmem:[#allocation2 + $0x70] sm:$0xf]
      %v693 = vld [vmem:[#allocation2 + $0x78] sm:$0xf]
      %vm694 = vcmask 60416
      %695 = vst.msk [vmem:[#allocation3] sm:$0xf] %vm694, %v678
      %696 = vst.msk [vmem:[#allocation3 + $0x4] sm:$0xf] %vm694, %v679
      %697 = vst.msk [vmem:[#allocation3 + $0x8] sm:$0xf] %vm694, %v680
      %698 = vst.msk [vmem:[#allocation3 + $0xc] sm:$0xf] %vm694, %v681
      %699 = vst.msk [vmem:[#allocation3 + $0x10] sm:$0xf] %vm694, %v682
      %700 = vst.msk [vmem:[#allocation3 + $0x14] sm:$0xf] %vm694, %v683
      %701 = vst.msk [vmem:[#allocation3 + $0x18] sm:$0xf] %vm694, %v684
      %702 = vst.msk [vmem:[#allocation3 + $0x1c] sm:$0xf] %vm694, %v685
      %703 = vst.msk [vmem:[#allocation3 + $0x20] sm:$0xf] %vm694, %v686
      %704 = vst.msk [vmem:[#allocation3 + $0x24] sm:$0xf] %vm694, %v687
      %705 = vst.msk [vmem:[#allocation3 + $0x28] sm:$0xf] %vm694, %v688
      %706 = vst.msk [vmem:[#allocation3 + $0x2c] sm:$0xf] %vm694, %v689
      %707 = vst.msk [vmem:[#allocation3 + $0x30] sm:$0xf] %vm694, %v690
      %708 = vst.msk [vmem:[#allocation3 + $0x34] sm:$0xf] %vm694, %v691
      %709 = vst.msk [vmem:[#allocation3 + $0x38] sm:$0xf] %vm694, %v692
      %710 = vst.msk [vmem:[#allocation3 + $0x3c] sm:$0xf] %vm694, %v693
      %v711 = vld [vmem:[#allocation2] sm:$0xf]
      %v712 = vld [vmem:[#allocation2 + $0x4] sm:$0x1]
      %v713 = vld [vmem:[#allocation2 + $0x8] sm:$0xf]
      %v714 = vld [vmem:[#allocation2 + $0xc] sm:$0x1]
      %v715 = vld [vmem:[#allocation2 + $0x10] sm:$0xf]
      %v716 = vld [vmem:[#allocation2 + $0x14] sm:$0x1]
      %v717 = vld [vmem:[#allocation2 + $0x18] sm:$0xf]
      %v718 = vld [vmem:[#allocation2 + $0x1c] sm:$0x1]
      %v719 = vld [vmem:[#allocation2 + $0x20] sm:$0xf]
      %v720 = vld [vmem:[#allocation2 + $0x24] sm:$0x1]
      %v721 = vld [vmem:[#allocation2 + $0x28] sm:$0xf]
      %v722 = vld [vmem:[#allocation2 + $0x2c] sm:$0x1]
      %v723 = vld [vmem:[#allocation2 + $0x30] sm:$0xf]
      %v724 = vld [vmem:[#allocation2 + $0x34] sm:$0x1]
      %v725 = vld [vmem:[#allocation2 + $0x38] sm:$0xf]
      %v726 = vld [vmem:[#allocation2 + $0x3c] sm:$0x1]
      %v727 = vld [vmem:[#allocation2 + $0x40] sm:$0xf]
      %v728 = vld [vmem:[#allocation2 + $0x44] sm:$0x1]
      %v729 = vld [vmem:[#allocation2 + $0x48] sm:$0xf]
      %v730 = vld [vmem:[#allocation2 + $0x4c] sm:$0x1]
      %v731 = vld [vmem:[#allocation2 + $0x50] sm:$0xf]
      %v732 = vld [vmem:[#allocation2 + $0x54] sm:$0x1]
      %v733 = vld [vmem:[#allocation2 + $0x58] sm:$0xf]
      %v734 = vld [vmem:[#allocation2 + $0x5c] sm:$0x1]
      %v735 = vld [vmem:[#allocation2 + $0x60] sm:$0xf]
      %v736 = vld [vmem:[#allocation2 + $0x64] sm:$0x1]
      %v737 = vld [vmem:[#allocation2 + $0x68] sm:$0xf]
      %v738 = vld [vmem:[#allocation2 + $0x6c] sm:$0x1]
      %v739 = vld [vmem:[#allocation2 + $0x70] sm:$0xf]
      %v740 = vld [vmem:[#allocation2 + $0x74] sm:$0x1]
      %v741 = vld [vmem:[#allocation2 + $0x78] sm:$0xf]
      %v742 = vld [vmem:[#allocation2 + $0x7c] sm:$0x1]
      %vm743 = vsmask.f32 3328
      %vm744 = vsmask.f32 7440
      %vm745 = vmor %vm743, %vm744
      %v747 = vshrl.u32 %v711, 16
      %v749 = vrot.slane %v747, 4
      %v750 = vshll.u32 %v711, 16
      %v752 = vrot.slane %v750, 5
      %v753 = vor.u32 %v749, %v752
      %v754 = vrot.slane %v753, 4
      %v756 = vshll.u32 %v712, 16
      %v758 = vrot.slane %v756, 5
      %v759 = vsel %vm745, %v754, %v758
      %v761 = vshrl.u32 %v713, 16
      %v763 = vrot.slane %v761, 4
      %v764 = vshll.u32 %v713, 16
      %v766 = vrot.slane %v764, 5
      %v767 = vor.u32 %v763, %v766
      %v768 = vrot.slane %v767, 4
      %v770 = vshll.u32 %v714, 16
      %v772 = vrot.slane %v770, 5
      %v773 = vsel %vm745, %v768, %v772
      %v775 = vshrl.u32 %v715, 16
      %v777 = vrot.slane %v775, 4
      %v778 = vshll.u32 %v715, 16
      %v780 = vrot.slane %v778, 5
      %v781 = vor.u32 %v777, %v780
      %v782 = vrot.slane %v781, 4
      %v784 = vshll.u32 %v716, 16
      %v786 = vrot.slane %v784, 5
      %v787 = vsel %vm745, %v782, %v786
      %v789 = vshrl.u32 %v717, 16
      %v791 = vrot.slane %v789, 4
      %v792 = vshll.u32 %v717, 16
      %v794 = vrot.slane %v792, 5
      %v795 = vor.u32 %v791, %v794
      %v796 = vrot.slane %v795, 4
      %v798 = vshll.u32 %v718, 16
      %v800 = vrot.slane %v798, 5
      %v801 = vsel %vm745, %v796, %v800
      %v803 = vshrl.u32 %v719, 16
      %v805 = vrot.slane %v803, 4
      %v806 = vshll.u32 %v719, 16
      %v808 = vrot.slane %v806, 5
      %v809 = vor.u32 %v805, %v808
      %v810 = vrot.slane %v809, 4
      %v812 = vshll.u32 %v720, 16
      %v814 = vrot.slane %v812, 5
      %v815 = vsel %vm745, %v810, %v814
      %v817 = vshrl.u32 %v721, 16
      %v819 = vrot.slane %v817, 4
      %v820 = vshll.u32 %v721, 16
      %v822 = vrot.slane %v820, 5
      %v823 = vor.u32 %v819, %v822
      %v824 = vrot.slane %v823, 4
      %v826 = vshll.u32 %v722, 16
      %v828 = vrot.slane %v826, 5
      %v829 = vsel %vm745, %v824, %v828
      %v831 = vshrl.u32 %v723, 16
      %v833 = vrot.slane %v831, 4
      %v834 = vshll.u32 %v723, 16
      %v836 = vrot.slane %v834, 5
      %v837 = vor.u32 %v833, %v836
      %v838 = vrot.slane %v837, 4
      %v840 = vshll.u32 %v724, 16
      %v842 = vrot.slane %v840, 5
      %v843 = vsel %vm745, %v838, %v842
      %v845 = vshrl.u32 %v725, 16
      %v847 = vrot.slane %v845, 4
      %v848 = vshll.u32 %v725, 16
      %v850 = vrot.slane %v848, 5
      %v851 = vor.u32 %v847, %v850
      %v852 = vrot.slane %v851, 4
      %v854 = vshll.u32 %v726, 16
      %v856 = vrot.slane %v854, 5
      %v857 = vsel %vm745, %v852, %v856
      %v859 = vshrl.u32 %v727, 16
      %v861 = vrot.slane %v859, 4
      %v862 = vshll.u32 %v727, 16
      %v864 = vrot.slane %v862, 5
      %v865 = vor.u32 %v861, %v864
      %v866 = vrot.slane %v865, 4
      %v868 = vshll.u32 %v728, 16
      %v870 = vrot.slane %v868, 5
      %v871 = vsel %vm745, %v866, %v870
      %v873 = vshrl.u32 %v729, 16
      %v875 = vrot.slane %v873, 4
      %v876 = vshll.u32 %v729, 16
      %v878 = vrot.slane %v876, 5
      %v879 = vor.u32 %v875, %v878
      %v880 = vrot.slane %v879, 4
      %v882 = vshll.u32 %v730, 16
      %v884 = vrot.slane %v882, 5
      %v885 = vsel %vm745, %v880, %v884
      %v887 = vshrl.u32 %v731, 16
      %v889 = vrot.slane %v887, 4
      %v890 = vshll.u32 %v731, 16
      %v892 = vrot.slane %v890, 5
      %v893 = vor.u32 %v889, %v892
      %v894 = vrot.slane %v893, 4
      %v896 = vshll.u32 %v732, 16
      %v898 = vrot.slane %v896, 5
      %v899 = vsel %vm745, %v894, %v898
      %v901 = vshrl.u32 %v733, 16
      %v903 = vrot.slane %v901, 4
      %v904 = vshll.u32 %v733, 16
      %v906 = vrot.slane %v904, 5
      %v907 = vor.u32 %v903, %v906
      %v908 = vrot.slane %v907, 4
      %v910 = vshll.u32 %v734, 16
      %v912 = vrot.slane %v910, 5
      %v913 = vsel %vm745, %v908, %v912
      %v915 = vshrl.u32 %v735, 16
      %v917 = vrot.slane %v915, 4
      %v918 = vshll.u32 %v735, 16
      %v920 = vrot.slane %v918, 5
      %v921 = vor.u32 %v917, %v920
      %v922 = vrot.slane %v921, 4
      %v924 = vshll.u32 %v736, 16
      %v926 = vrot.slane %v924, 5
      %v927 = vsel %vm745, %v922, %v926
      %v929 = vshrl.u32 %v737, 16
      %v931 = vrot.slane %v929, 4
      %v932 = vshll.u32 %v737, 16
      %v934 = vrot.slane %v932, 5
      %v935 = vor.u32 %v931, %v934
      %v936 = vrot.slane %v935, 4
      %v938 = vshll.u32 %v738, 16
      %v940 = vrot.slane %v938, 5
      %v941 = vsel %vm745, %v936, %v940
      %v943 = vshrl.u32 %v739, 16
      %v945 = vrot.slane %v943, 4
      %v946 = vshll.u32 %v739, 16
      %v948 = vrot.slane %v946, 5
      %v949 = vor.u32 %v945, %v948
      %v950 = vrot.slane %v949, 4
      %v952 = vshll.u32 %v740, 16
      %v954 = vrot.slane %v952, 5
      %v955 = vsel %vm745, %v950, %v954
      %v957 = vshrl.u32 %v741, 16
      %v959 = vrot.slane %v957, 4
      %v960 = vshll.u32 %v741, 16
      %v962 = vrot.slane %v960, 5
      %v963 = vor.u32 %v959, %v962
      %v964 = vrot.slane %v963, 4
      %v966 = vshll.u32 %v742, 16
      %v968 = vrot.slane %v966, 5
      %v969 = vsel %vm745, %v964, %v968
      %970 = vrot.lane.b32.xlu0 %v759, 8
      %v971 = vpop.permute.xlu0 %970
      %972 = vrot.lane.b32.xlu0 %v773, 8
      %v973 = vpop.permute.xlu0 %972
      %974 = vrot.lane.b32.xlu0 %v787, 8
      %v975 = vpop.permute.xlu0 %974
      %976 = vrot.lane.b32.xlu0 %v801, 8
      %v977 = vpop.permute.xlu0 %976
      %978 = vrot.lane.b32.xlu0 %v815, 8
      %v979 = vpop.permute.xlu0 %978
      %980 = vrot.lane.b32.xlu0 %v829, 8
      %v981 = vpop.permute.xlu0 %980
      %982 = vrot.lane.b32.xlu0 %v843, 8
      %v983 = vpop.permute.xlu0 %982
      %984 = vrot.lane.b32.xlu0 %v857, 8
      %v985 = vpop.permute.xlu0 %984
      %986 = vrot.lane.b32.xlu0 %v871, 8
      %v987 = vpop.permute.xlu0 %986
      %988 = vrot.lane.b32.xlu0 %v885, 8
      %v989 = vpop.permute.xlu0 %988
      %990 = vrot.lane.b32.xlu0 %v899, 8
      %v991 = vpop.permute.xlu0 %990
      %992 = vrot.lane.b32.xlu0 %v913, 8
      %v993 = vpop.permute.xlu0 %992
      %994 = vrot.lane.b32.xlu0 %v927, 8
      %v995 = vpop.permute.xlu0 %994
      %996 = vrot.lane.b32.xlu0 %v941, 8
      %v997 = vpop.permute.xlu0 %996
      %998 = vrot.lane.b32.xlu0 %v955, 8
      %v999 = vpop.permute.xlu0 %998
      %1000 = vrot.lane.b32.xlu0 %v969, 8
      %v1001 = vpop.permute.xlu0 %1000
      %vm1018 = vcmask 126016
      %1019 = vst.msk [vmem:[#allocation3] sm:$0xf] %vm1018, %v971
      %1020 = vst.msk [vmem:[#allocation3 + $0x4] sm:$0xf] %vm1018, %v973
      %1021 = vst.msk [vmem:[#allocation3 + $0x8] sm:$0xf] %vm1018, %v975
      %1022 = vst.msk [vmem:[#allocation3 + $0xc] sm:$0xf] %vm1018, %v977
      %1023 = vst.msk [vmem:[#allocation3 + $0x10] sm:$0xf] %vm1018, %v979
      %1024 = vst.msk [vmem:[#allocation3 + $0x14] sm:$0xf] %vm1018, %v981
      %1025 = vst.msk [vmem:[#allocation3 + $0x18] sm:$0xf] %vm1018, %v983
      %1026 = vst.msk [vmem:[#allocation3 + $0x1c] sm:$0xf] %vm1018, %v985
      %1027 = vst.msk [vmem:[#allocation3 + $0x20] sm:$0xf] %vm1018, %v987
      %1028 = vst.msk [vmem:[#allocation3 + $0x24] sm:$0xf] %vm1018, %v989
      %1029 = vst.msk [vmem:[#allocation3 + $0x28] sm:$0xf] %vm1018, %v991
      %1030 = vst.msk [vmem:[#allocation3 + $0x2c] sm:$0xf] %vm1018, %v993
      %1031 = vst.msk [vmem:[#allocation3 + $0x30] sm:$0xf] %vm1018, %v995
      %1032 = vst.msk [vmem:[#allocation3 + $0x34] sm:$0xf] %vm1018, %v997
      %1033 = vst.msk [vmem:[#allocation3 + $0x38] sm:$0xf] %vm1018, %v999
      %1034 = vst.msk [vmem:[#allocation3 + $0x3c] sm:$0xf] %vm1018, %v1001
      %v1035 = vld [vmem:[#allocation2] sm:$0xe]
      %v1036 = vld [vmem:[#allocation2 + $0x4] sm:$0x1]
      %v1037 = vld [vmem:[#allocation2 + $0x8] sm:$0xe]
      %v1038 = vld [vmem:[#allocation2 + $0xc] sm:$0x1]
      %v1039 = vld [vmem:[#allocation2 + $0x10] sm:$0xe]
      %v1040 = vld [vmem:[#allocation2 + $0x14] sm:$0x1]
      %v1041 = vld [vmem:[#allocation2 + $0x18] sm:$0xe]
      %v1042 = vld [vmem:[#allocation2 + $0x1c] sm:$0x1]
      %v1043 = vld [vmem:[#allocation2 + $0x20] sm:$0xe]
      %v1044 = vld [vmem:[#allocation2 + $0x24] sm:$0x1]
      %v1045 = vld [vmem:[#allocation2 + $0x28] sm:$0xe]
      %v1046 = vld [vmem:[#allocation2 + $0x2c] sm:$0x1]
      %v1047 = vld [vmem:[#allocation2 + $0x30] sm:$0xe]
      %v1048 = vld [vmem:[#allocation2 + $0x34] sm:$0x1]
      %v1049 = vld [vmem:[#allocation2 + $0x38] sm:$0xe]
      %v1050 = vld [vmem:[#allocation2 + $0x3c] sm:$0x1]
      %v1051 = vld [vmem:[#allocation2 + $0x40] sm:$0xe]
      %v1052 = vld [vmem:[#allocation2 + $0x44] sm:$0x1]
      %v1053 = vld [vmem:[#allocation2 + $0x48] sm:$0xe]
      %v1054 = vld [vmem:[#allocation2 + $0x4c] sm:$0x1]
      %v1055 = vld [vmem:[#allocation2 + $0x50] sm:$0xe]
      %v1056 = vld [vmem:[#allocation2 + $0x54] sm:$0x1]
      %v1057 = vld [vmem:[#allocation2 + $0x58] sm:$0xe]
      %v1058 = vld [vmem:[#allocation2 + $0x5c] sm:$0x1]
      %v1059 = vld [vmem:[#allocation2 + $0x60] sm:$0xe]
      %v1060 = vld [vmem:[#allocation2 + $0x64] sm:$0x1]
      %v1061 = vld [vmem:[#allocation2 + $0x68] sm:$0xe]
      %v1062 = vld [vmem:[#allocation2 + $0x6c] sm:$0x1]
      %v1063 = vld [vmem:[#allocation2 + $0x70] sm:$0xe]
      %v1064 = vld [vmem:[#allocation2 + $0x74] sm:$0x1]
      %v1065 = vld [vmem:[#allocation2 + $0x78] sm:$0xe]
      %v1066 = vld [vmem:[#allocation2 + $0x7c] sm:$0x1]
      %vm1099 = vcmask 1042432
      %vm1100 = vcmask 1046532
      %vm1101 = vmor %vm1099, %vm1100
      %v1102 = vrot.slane %v1035, 5
      %v1103 = vrot.slane %v1102, 4
      %v1104 = vrot.slane %v1036, 5
      %v1105 = vsel %vm1101, %v1103, %v1104
      %v1106 = vrot.slane %v1037, 5
      %v1107 = vrot.slane %v1106, 4
      %v1108 = vrot.slane %v1038, 5
      %v1109 = vsel %vm1101, %v1107, %v1108
      %v1110 = vrot.slane %v1039, 5
      %v1111 = vrot.slane %v1110, 4
      %v1112 = vrot.slane %v1040, 5
      %v1113 = vsel %vm1101, %v1111, %v1112
      %v1114 = vrot.slane %v1041, 5
      %v1115 = vrot.slane %v1114, 4
      %v1116 = vrot.slane %v1042, 5
      %v1117 = vsel %vm1101, %v1115, %v1116
      %v1118 = vrot.slane %v1043, 5
      %v1119 = vrot.slane %v1118, 4
      %v1120 = vrot.slane %v1044, 5
      %v1121 = vsel %vm1101, %v1119, %v1120
      %v1122 = vrot.slane %v1045, 5
      %v1123 = vrot.slane %v1122, 4
      %v1124 = vrot.slane %v1046, 5
      %v1125 = vsel %vm1101, %v1123, %v1124
      %v1126 = vrot.slane %v1047, 5
      %v1127 = vrot.slane %v1126, 4
      %v1128 = vrot.slane %v1048, 5
      %v1129 = vsel %vm1101, %v1127, %v1128
      %v1130 = vrot.slane %v1049, 5
      %v1131 = vrot.slane %v1130, 4
      %v1132 = vrot.slane %v1050, 5
      %v1133 = vsel %vm1101, %v1131, %v1132
      %v1134 = vrot.slane %v1051, 5
      %v1135 = vrot.slane %v1134, 4
      %v1136 = vrot.slane %v1052, 5
      %v1137 = vsel %vm1101, %v1135, %v1136
      %v1138 = vrot.slane %v1053, 5
      %v1139 = vrot.slane %v1138, 4
      %v1140 = vrot.slane %v1054, 5
      %v1141 = vsel %vm1101, %v1139, %v1140
      %v1142 = vrot.slane %v1055, 5
      %v1143 = vrot.slane %v1142, 4
      %v1144 = vrot.slane %v1056, 5
      %v1145 = vsel %vm1101, %v1143, %v1144
      %v1146 = vrot.slane %v1057, 5
      %v1147 = vrot.slane %v1146, 4
      %v1148 = vrot.slane %v1058, 5
      %v1149 = vsel %vm1101, %v1147, %v1148
      %v1150 = vrot.slane %v1059, 5
      %v1151 = vrot.slane %v1150, 4
      %v1152 = vrot.slane %v1060, 5
      %v1153 = vsel %vm1101, %v1151, %v1152
      %v1154 = vrot.slane %v1061, 5
      %v1155 = vrot.slane %v1154, 4
      %v1156 = vrot.slane %v1062, 5
      %v1157 = vsel %vm1101, %v1155, %v1156
      %v1158 = vrot.slane %v1063, 5
      %v1159 = vrot.slane %v1158, 4
      %v1160 = vrot.slane %v1064, 5
      %v1161 = vsel %vm1101, %v1159, %v1160
      %v1162 = vrot.slane %v1065, 5
      %v1163 = vrot.slane %v1162, 4
      %v1164 = vrot.slane %v1066, 5
      %v1165 = vsel %vm1101, %v1163, %v1164
      %1166 = vrot.lane.b32.xlu0 %v1105, 16
      %v1167 = vpop.permute.xlu0 %1166
      %1168 = vrot.lane.b32.xlu0 %v1109, 16
      %v1169 = vpop.permute.xlu0 %1168
      %1170 = vrot.lane.b32.xlu0 %v1113, 16
      %v1171 = vpop.permute.xlu0 %1170
      %1172 = vrot.lane.b32.xlu0 %v1117, 16
      %v1173 = vpop.permute.xlu0 %1172
      %1174 = vrot.lane.b32.xlu0 %v1121, 16
      %v1175 = vpop.permute.xlu0 %1174
      %1176 = vrot.lane.b32.xlu0 %v1125, 16
      %v1177 = vpop.permute.xlu0 %1176
      %1178 = vrot.lane.b32.xlu0 %v1129, 16
      %v1179 = vpop.permute.xlu0 %1178
      %1180 = vrot.lane.b32.xlu0 %v1133, 16
      %v1181 = vpop.permute.xlu0 %1180
      %1182 = vrot.lane.b32.xlu0 %v1137, 16
      %v1183 = vpop.permute.xlu0 %1182
      %1184 = vrot.lane.b32.xlu0 %v1141, 16
      %v1185 = vpop.permute.xlu0 %1184
      %1186 = vrot.lane.b32.xlu0 %v1145, 16
      %v1187 = vpop.permute.xlu0 %1186
      %1188 = vrot.lane.b32.xlu0 %v1149, 16
      %v1189 = vpop.permute.xlu0 %1188
      %1190 = vrot.lane.b32.xlu0 %v1153, 16
      %v1191 = vpop.permute.xlu0 %1190
      %1192 = vrot.lane.b32.xlu0 %v1157, 16
      %v1193 = vpop.permute.xlu0 %1192
      %1194 = vrot.lane.b32.xlu0 %v1161, 16
      %v1195 = vpop.permute.xlu0 %1194
      %1196 = vrot.lane.b32.xlu0 %v1165, 16
      %v1197 = vpop.permute.xlu0 %1196
      %vm1214 = vcmask 191616
      %1215 = vst.msk [vmem:[#allocation3] sm:$0xf] %vm1214, %v1167
      %1216 = vst.msk [vmem:[#allocation3 + $0x4] sm:$0xf] %vm1214, %v1169
      %1217 = vst.msk [vmem:[#allocation3 + $0x8] sm:$0xf] %vm1214, %v1171
      %1218 = vst.msk [vmem:[#allocation3 + $0xc] sm:$0xf] %vm1214, %v1173
      %1219 = vst.msk [vmem:[#allocation3 + $0x10] sm:$0xf] %vm1214, %v1175
      %1220 = vst.msk [vmem:[#allocation3 + $0x14] sm:$0xf] %vm1214, %v1177
      %1221 = vst.msk [vmem:[#allocation3 + $0x18] sm:$0xf] %vm1214, %v1179
      %1222 = vst.msk [vmem:[#allocation3 + $0x1c] sm:$0xf] %vm1214, %v1181
      %1223 = vst.msk [vmem:[#allocation3 + $0x20] sm:$0xf] %vm1214, %v1183
      %1224 = vst.msk [vmem:[#allocation3 + $0x24] sm:$0xf] %vm1214, %v1185
      %1225 = vst.msk [vmem:[#allocation3 + $0x28] sm:$0xf] %vm1214, %v1187
      %1226 = vst.msk [vmem:[#allocation3 + $0x2c] sm:$0xf] %vm1214, %v1189
      %1227 = vst.msk [vmem:[#allocation3 + $0x30] sm:$0xf] %vm1214, %v1191
      %1228 = vst.msk [vmem:[#allocation3 + $0x34] sm:$0xf] %vm1214, %v1193
      %1229 = vst.msk [vmem:[#allocation3 + $0x38] sm:$0xf] %vm1214, %v1195
      %1230 = vst.msk [vmem:[#allocation3 + $0x3c] sm:$0xf] %vm1214, %v1197
      %v1231 = vld [vmem:[%s514] sm:$0xf]
      %v1232 = vld [vmem:[%s514 + $0x8] sm:$0xf]
      %v1233 = vld [vmem:[%s514 + $0x10] sm:$0xf]
      %v1234 = vld [vmem:[%s514 + $0x18] sm:$0xf]
      %v1235 = vld [vmem:[%s514 + $0x20] sm:$0xf]
      %v1236 = vld [vmem:[%s514 + $0x28] sm:$0xf]
      %v1237 = vld [vmem:[%s514 + $0x30] sm:$0xf]
      %v1238 = vld [vmem:[%s514 + $0x38] sm:$0xf]
      %v1239 = vld [vmem:[%s514 + $0x40] sm:$0xf]
      %v1240 = vld [vmem:[%s514 + $0x48] sm:$0xf]
      %v1241 = vld [vmem:[%s514 + $0x50] sm:$0xf]
      %v1242 = vld [vmem:[%s514 + $0x58] sm:$0xf]
      %v1243 = vld [vmem:[%s514 + $0x60] sm:$0xf]
      %v1244 = vld [vmem:[%s514 + $0x68] sm:$0xf]
      %v1245 = vld [vmem:[%s514 + $0x70] sm:$0xf]
      %v1246 = vld [vmem:[%s514 + $0x78] sm:$0xf]
      %1263 = vrot.lane.b32.xlu0 %v1231, 24
      %v1264 = vpop.permute.xlu0 %1263
      %1265 = vrot.lane.b32.xlu0 %v1232, 24
      %v1266 = vpop.permute.xlu0 %1265
      %1267 = vrot.lane.b32.xlu0 %v1233, 24
      %v1268 = vpop.permute.xlu0 %1267
      %1269 = vrot.lane.b32.xlu0 %v1234, 24
      %v1270 = vpop.permute.xlu0 %1269
      %1271 = vrot.lane.b32.xlu0 %v1235, 24
      %v1272 = vpop.permute.xlu0 %1271
      %1273 = vrot.lane.b32.xlu0 %v1236, 24
      %v1274 = vpop.permute.xlu0 %1273
      %1275 = vrot.lane.b32.xlu0 %v1237, 24
      %v1276 = vpop.permute.xlu0 %1275
      %1277 = vrot.lane.b32.xlu0 %v1238, 24
      %v1278 = vpop.permute.xlu0 %1277
      %1279 = vrot.lane.b32.xlu0 %v1239, 24
      %v1280 = vpop.permute.xlu0 %1279
      %1281 = vrot.lane.b32.xlu0 %v1240, 24
      %v1282 = vpop.permute.xlu0 %1281
      %1283 = vrot.lane.b32.xlu0 %v1241, 24
      %v1284 = vpop.permute.xlu0 %1283
      %1285 = vrot.lane.b32.xlu0 %v1242, 24
      %v1286 = vpop.permute.xlu0 %1285
      %1287 = vrot.lane.b32.xlu0 %v1243, 24
      %v1288 = vpop.permute.xlu0 %1287
      %1289 = vrot.lane.b32.xlu0 %v1244, 24
      %v1290 = vpop.permute.xlu0 %1289
      %1291 = vrot.lane.b32.xlu0 %v1245, 24
      %v1292 = vpop.permute.xlu0 %1291
      %1293 = vrot.lane.b32.xlu0 %v1246, 24
      %v1294 = vpop.permute.xlu0 %1293
      %vm1311 = vcmask 257216
      %1312 = vst.msk [vmem:[#allocation3] sm:$0xf] %vm1311, %v1264
      %1313 = vst.msk [vmem:[#allocation3 + $0x4] sm:$0xf] %vm1311, %v1266
      %1314 = vst.msk [vmem:[#allocation3 + $0x8] sm:$0xf] %vm1311, %v1268
      %1315 = vst.msk [vmem:[#allocation3 + $0xc] sm:$0xf] %vm1311, %v1270
      %1316 = vst.msk [vmem:[#allocation3 + $0x10] sm:$0xf] %vm1311, %v1272
      %1317 = vst.msk [vmem:[#allocation3 + $0x14] sm:$0xf] %vm1311, %v1274
      %1318 = vst.msk [vmem:[#allocation3 + $0x18] sm:$0xf] %vm1311, %v1276
      %1319 = vst.msk [vmem:[#allocation3 + $0x1c] sm:$0xf] %vm1311, %v1278
      %1320 = vst.msk [vmem:[#allocation3 + $0x20] sm:$0xf] %vm1311, %v1280
      %1321 = vst.msk [vmem:[#allocation3 + $0x24] sm:$0xf] %vm1311, %v1282
      %1322 = vst.msk [vmem:[#allocation3 + $0x28] sm:$0xf] %vm1311, %v1284
      %1323 = vst.msk [vmem:[#allocation3 + $0x2c] sm:$0xf] %vm1311, %v1286
      %1324 = vst.msk [vmem:[#allocation3 + $0x30] sm:$0xf] %vm1311, %v1288
      %1325 = vst.msk [vmem:[#allocation3 + $0x34] sm:$0xf] %vm1311, %v1290
      %1326 = vst.msk [vmem:[#allocation3 + $0x38] sm:$0xf] %vm1311, %v1292
      %1327 = vst.msk [vmem:[#allocation3 + $0x3c] sm:$0xf] %vm1311, %v1294
      %v1328 = vld [vmem:[%s514] sm:$0xf]
      %v1329 = vld [vmem:[%s514 + $0x4] sm:$0x1]
      %v1330 = vld [vmem:[%s514 + $0x8] sm:$0xf]
      %v1331 = vld [vmem:[%s514 + $0xc] sm:$0x1]
      %v1332 = vld [vmem:[%s514 + $0x10] sm:$0xf]
      %v1333 = vld [vmem:[%s514 + $0x14] sm:$0x1]
      %v1334 = vld [vmem:[%s514 + $0x18] sm:$0xf]
      %v1335 = vld [vmem:[%s514 + $0x1c] sm:$0x1]
      %v1336 = vld [vmem:[%s514 + $0x20] sm:$0xf]
      %v1337 = vld [vmem:[%s514 + $0x24] sm:$0x1]
      %v1338 = vld [vmem:[%s514 + $0x28] sm:$0xf]
      %v1339 = vld [vmem:[%s514 + $0x2c] sm:$0x1]
      %v1340 = vld [vmem:[%s514 + $0x30] sm:$0xf]
      %v1341 = vld [vmem:[%s514 + $0x34] sm:$0x1]
      %v1342 = vld [vmem:[%s514 + $0x38] sm:$0xf]
      %v1343 = vld [vmem:[%s514 + $0x3c] sm:$0x1]
      %v1344 = vld [vmem:[%s514 + $0x40] sm:$0xf]
      %v1345 = vld [vmem:[%s514 + $0x44] sm:$0x1]
      %v1346 = vld [vmem:[%s514 + $0x48] sm:$0xf]
      %v1347 = vld [vmem:[%s514 + $0x4c] sm:$0x1]
      %v1348 = vld [vmem:[%s514 + $0x50] sm:$0xf]
      %v1349 = vld [vmem:[%s514 + $0x54] sm:$0x1]
      %v1350 = vld [vmem:[%s514 + $0x58] sm:$0xf]
      %v1351 = vld [vmem:[%s514 + $0x5c] sm:$0x1]
      %v1352 = vld [vmem:[%s514 + $0x60] sm:$0xf]
      %v1353 = vld [vmem:[%s514 + $0x64] sm:$0x1]
      %v1354 = vld [vmem:[%s514 + $0x68] sm:$0xf]
      %v1355 = vld [vmem:[%s514 + $0x6c] sm:$0x1]
      %v1356 = vld [vmem:[%s514 + $0x70] sm:$0xf]
      %v1357 = vld [vmem:[%s514 + $0x74] sm:$0x1]
      %v1358 = vld [vmem:[%s514 + $0x78] sm:$0xf]
      %v1359 = vld [vmem:[%s514 + $0x7c] sm:$0x1]
      %v1361 = vshrl.u32 %v1328, 16
      %v1363 = vrot.slane %v1361, 4
      %v1364 = vshll.u32 %v1328, 16
      %v1366 = vrot.slane %v1364, 5
      %v1367 = vor.u32 %v1363, %v1366
      %v1368 = vrot.slane %v1367, 4
      %v1370 = vshll.u32 %v1329, 16
      %v1372 = vrot.slane %v1370, 5
      %v1373 = vsel %vm745, %v1368, %v1372
      %v1375 = vshrl.u32 %v1330, 16
      %v1377 = vrot.slane %v1375, 4
      %v1378 = vshll.u32 %v1330, 16
      %v1380 = vrot.slane %v1378, 5
      %v1381 = vor.u32 %v1377, %v1380
      %v1382 = vrot.slane %v1381, 4
      %v1384 = vshll.u32 %v1331, 16
      %v1386 = vrot.slane %v1384, 5
      %v1387 = vsel %vm745, %v1382, %v1386
      %v1389 = vshrl.u32 %v1332, 16
      %v1391 = vrot.slane %v1389, 4
      %v1392 = vshll.u32 %v1332, 16
      %v1394 = vrot.slane %v1392, 5
      %v1395 = vor.u32 %v1391, %v1394
      %v1396 = vrot.slane %v1395, 4
      %v1398 = vshll.u32 %v1333, 16
      %v1400 = vrot.slane %v1398, 5
      %v1401 = vsel %vm745, %v1396, %v1400
      %v1403 = vshrl.u32 %v1334, 16
      %v1405 = vrot.slane %v1403, 4
      %v1406 = vshll.u32 %v1334, 16
      %v1408 = vrot.slane %v1406, 5
      %v1409 = vor.u32 %v1405, %v1408
      %v1410 = vrot.slane %v1409, 4
      %v1412 = vshll.u32 %v1335, 16
      %v1414 = vrot.slane %v1412, 5
      %v1415 = vsel %vm745, %v1410, %v1414
      %v1417 = vshrl.u32 %v1336, 16
      %v1419 = vrot.slane %v1417, 4
      %v1420 = vshll.u32 %v1336, 16
      %v1422 = vrot.slane %v1420, 5
      %v1423 = vor.u32 %v1419, %v1422
      %v1424 = vrot.slane %v1423, 4
      %v1426 = vshll.u32 %v1337, 16
      %v1428 = vrot.slane %v1426, 5
      %v1429 = vsel %vm745, %v1424, %v1428
      %v1431 = vshrl.u32 %v1338, 16
      %v1433 = vrot.slane %v1431, 4
      %v1434 = vshll.u32 %v1338, 16
      %v1436 = vrot.slane %v1434, 5
      %v1437 = vor.u32 %v1433, %v1436
      %v1438 = vrot.slane %v1437, 4
      %v1440 = vshll.u32 %v1339, 16
      %v1442 = vrot.slane %v1440, 5
      %v1443 = vsel %vm745, %v1438, %v1442
      %v1445 = vshrl.u32 %v1340, 16
      %v1447 = vrot.slane %v1445, 4
      %v1448 = vshll.u32 %v1340, 16
      %v1450 = vrot.slane %v1448, 5
      %v1451 = vor.u32 %v1447, %v1450
      %v1452 = vrot.slane %v1451, 4
      %v1454 = vshll.u32 %v1341, 16
      %v1456 = vrot.slane %v1454, 5
      %v1457 = vsel %vm745, %v1452, %v1456
      %v1459 = vshrl.u32 %v1342, 16
      %v1461 = vrot.slane %v1459, 4
      %v1462 = vshll.u32 %v1342, 16
      %v1464 = vrot.slane %v1462, 5
      %v1465 = vor.u32 %v1461, %v1464
      %v1466 = vrot.slane %v1465, 4
      %v1468 = vshll.u32 %v1343, 16
      %v1470 = vrot.slane %v1468, 5
      %v1471 = vsel %vm745, %v1466, %v1470
      %v1473 = vshrl.u32 %v1344, 16
      %v1475 = vrot.slane %v1473, 4
      %v1476 = vshll.u32 %v1344, 16
      %v1478 = vrot.slane %v1476, 5
      %v1479 = vor.u32 %v1475, %v1478
      %v1480 = vrot.slane %v1479, 4
      %v1482 = vshll.u32 %v1345, 16
      %v1484 = vrot.slane %v1482, 5
      %v1485 = vsel %vm745, %v1480, %v1484
      %v1487 = vshrl.u32 %v1346, 16
      %v1489 = vrot.slane %v1487, 4
      %v1490 = vshll.u32 %v1346, 16
      %v1492 = vrot.slane %v1490, 5
      %v1493 = vor.u32 %v1489, %v1492
      %v1494 = vrot.slane %v1493, 4
      %v1496 = vshll.u32 %v1347, 16
      %v1498 = vrot.slane %v1496, 5
      %v1499 = vsel %vm745, %v1494, %v1498
      %v1501 = vshrl.u32 %v1348, 16
      %v1503 = vrot.slane %v1501, 4
      %v1504 = vshll.u32 %v1348, 16
      %v1506 = vrot.slane %v1504, 5
      %v1507 = vor.u32 %v1503, %v1506
      %v1508 = vrot.slane %v1507, 4
      %v1510 = vshll.u32 %v1349, 16
      %v1512 = vrot.slane %v1510, 5
      %v1513 = vsel %vm745, %v1508, %v1512
      %v1515 = vshrl.u32 %v1350, 16
      %v1517 = vrot.slane %v1515, 4
      %v1518 = vshll.u32 %v1350, 16
      %v1520 = vrot.slane %v1518, 5
      %v1521 = vor.u32 %v1517, %v1520
      %v1522 = vrot.slane %v1521, 4
      %v1524 = vshll.u32 %v1351, 16
      %v1526 = vrot.slane %v1524, 5
      %v1527 = vsel %vm745, %v1522, %v1526
      %v1529 = vshrl.u32 %v1352, 16
      %v1531 = vrot.slane %v1529, 4
      %v1532 = vshll.u32 %v1352, 16
      %v1534 = vrot.slane %v1532, 5
      %v1535 = vor.u32 %v1531, %v1534
      %v1536 = vrot.slane %v1535, 4
      %v1538 = vshll.u32 %v1353, 16
      %v1540 = vrot.slane %v1538, 5
      %v1541 = vsel %vm745, %v1536, %v1540
      %v1543 = vshrl.u32 %v1354, 16
      %v1545 = vrot.slane %v1543, 4
      %v1546 = vshll.u32 %v1354, 16
      %v1548 = vrot.slane %v1546, 5
      %v1549 = vor.u32 %v1545, %v1548
      %v1550 = vrot.slane %v1549, 4
      %v1552 = vshll.u32 %v1355, 16
      %v1554 = vrot.slane %v1552, 5
      %v1555 = vsel %vm745, %v1550, %v1554
      %v1557 = vshrl.u32 %v1356, 16
      %v1559 = vrot.slane %v1557, 4
      %v1560 = vshll.u32 %v1356, 16
      %v1562 = vrot.slane %v1560, 5
      %v1563 = vor.u32 %v1559, %v1562
      %v1564 = vrot.slane %v1563, 4
      %v1566 = vshll.u32 %v1357, 16
      %v1568 = vrot.slane %v1566, 5
      %v1569 = vsel %vm745, %v1564, %v1568
      %v1571 = vshrl.u32 %v1358, 16
      %v1573 = vrot.slane %v1571, 4
      %v1574 = vshll.u32 %v1358, 16
      %v1576 = vrot.slane %v1574, 5
      %v1577 = vor.u32 %v1573, %v1576
      %v1578 = vrot.slane %v1577, 4
      %v1580 = vshll.u32 %v1359, 16
      %v1582 = vrot.slane %v1580, 5
      %v1583 = vsel %vm745, %v1578, %v1582
      %1584 = vrot.lane.b32.xlu0 %v1373, 32
      %v1585 = vpop.permute.xlu0 %1584
      %1586 = vrot.lane.b32.xlu0 %v1387, 32
      %v1587 = vpop.permute.xlu0 %1586
      %1588 = vrot.lane.b32.xlu0 %v1401, 32
      %v1589 = vpop.permute.xlu0 %1588
      %1590 = vrot.lane.b32.xlu0 %v1415, 32
      %v1591 = vpop.permute.xlu0 %1590
      %1592 = vrot.lane.b32.xlu0 %v1429, 32
      %v1593 = vpop.permute.xlu0 %1592
      %1594 = vrot.lane.b32.xlu0 %v1443, 32
      %v1595 = vpop.permute.xlu0 %1594
      %1596 = vrot.lane.b32.xlu0 %v1457, 32
      %v1597 = vpop.permute.xlu0 %1596
      %1598 = vrot.lane.b32.xlu0 %v1471, 32
      %v1599 = vpop.permute.xlu0 %1598
      %1600 = vrot.lane.b32.xlu0 %v1485, 32
      %v1601 = vpop.permute.xlu0 %1600
      %1602 = vrot.lane.b32.xlu0 %v1499, 32
      %v1603 = vpop.permute.xlu0 %1602
      %1604 = vrot.lane.b32.xlu0 %v1513, 32
      %v1605 = vpop.permute.xlu0 %1604
      %1606 = vrot.lane.b32.xlu0 %v1527, 32
      %v1607 = vpop.permute.xlu0 %1606
      %1608 = vrot.lane.b32.xlu0 %v1541, 32
      %v1609 = vpop.permute.xlu0 %1608
      %1610 = vrot.lane.b32.xlu0 %v1555, 32
      %v1611 = vpop.permute.xlu0 %1610
      %1612 = vrot.lane.b32.xlu0 %v1569, 32
      %v1613 = vpop.permute.xlu0 %1612
      %1614 = vrot.lane.b32.xlu0 %v1583, 32
      %v1615 = vpop.permute.xlu0 %1614
      %vm1632 = vcmask 322816
      %1633 = vst.msk [vmem:[#allocation3] sm:$0xf] %vm1632, %v1585
      %1634 = vst.msk [vmem:[#allocation3 + $0x4] sm:$0xf] %vm1632, %v1587
      %1635 = vst.msk [vmem:[#allocation3 + $0x8] sm:$0xf] %vm1632, %v1589
      %1636 = vst.msk [vmem:[#allocation3 + $0xc] sm:$0xf] %vm1632, %v1591
      %1637 = vst.msk [vmem:[#allocation3 + $0x10] sm:$0xf] %vm1632, %v1593
      %1638 = vst.msk [vmem:[#allocation3 + $0x14] sm:$0xf] %vm1632, %v1595
      %1639 = vst.msk [vmem:[#allocation3 + $0x18] sm:$0xf] %vm1632, %v1597
      %1640 = vst.msk [vmem:[#allocation3 + $0x1c] sm:$0xf] %vm1632, %v1599
      %1641 = vst.msk [vmem:[#allocation3 + $0x20] sm:$0xf] %vm1632, %v1601
      %1642 = vst.msk [vmem:[#allocation3 + $0x24] sm:$0xf] %vm1632, %v1603
      %1643 = vst.msk [vmem:[#allocation3 + $0x28] sm:$0xf] %vm1632, %v1605
      %1644 = vst.msk [vmem:[#allocation3 + $0x2c] sm:$0xf] %vm1632, %v1607
      %1645 = vst.msk [vmem:[#allocation3 + $0x30] sm:$0xf] %vm1632, %v1609
      %1646 = vst.msk [vmem:[#allocation3 + $0x34] sm:$0xf] %vm1632, %v1611
      %1647 = vst.msk [vmem:[#allocation3 + $0x38] sm:$0xf] %vm1632, %v1613
      %1648 = vst.msk [vmem:[#allocation3 + $0x3c] sm:$0xf] %vm1632, %v1615
      %v1649 = vld [vmem:[%s514] sm:$0xe]
      %v1650 = vld [vmem:[%s514 + $0x4] sm:$0x1]
      %v1651 = vld [vmem:[%s514 + $0x8] sm:$0xe]
      %v1652 = vld [vmem:[%s514 + $0xc] sm:$0x1]
      %v1653 = vld [vmem:[%s514 + $0x10] sm:$0xe]
      %v1654 = vld [vmem:[%s514 + $0x14] sm:$0x1]
      %v1655 = vld [vmem:[%s514 + $0x18] sm:$0xe]
      %v1656 = vld [vmem:[%s514 + $0x1c] sm:$0x1]
      %v1657 = vld [vmem:[%s514 + $0x20] sm:$0xe]
      %v1658 = vld [vmem:[%s514 + $0x24] sm:$0x1]
      %v1659 = vld [vmem:[%s514 + $0x28] sm:$0xe]
      %v1660 = vld [vmem:[%s514 + $0x2c] sm:$0x1]
      %v1661 = vld [vmem:[%s514 + $0x30] sm:$0xe]
      %v1662 = vld [vmem:[%s514 + $0x34] sm:$0x1]
      %v1663 = vld [vmem:[%s514 + $0x38] sm:$0xe]
      %v1664 = vld [vmem:[%s514 + $0x3c] sm:$0x1]
      %v1665 = vld [vmem:[%s514 + $0x40] sm:$0xe]
      %v1666 = vld [vmem:[%s514 + $0x44] sm:$0x1]
      %v1667 = vld [vmem:[%s514 + $0x48] sm:$0xe]
      %v1668 = vld [vmem:[%s514 + $0x4c] sm:$0x1]
      %v1669 = vld [vmem:[%s514 + $0x50] sm:$0xe]
      %v1670 = vld [vmem:[%s514 + $0x54] sm:$0x1]
      %v1671 = vld [vmem:[%s514 + $0x58] sm:$0xe]
      %v1672 = vld [vmem:[%s514 + $0x5c] sm:$0x1]
      %v1673 = vld [vmem:[%s514 + $0x60] sm:$0xe]
      %v1674 = vld [vmem:[%s514 + $0x64] sm:$0x1]
      %v1675 = vld [vmem:[%s514 + $0x68] sm:$0xe]
      %v1676 = vld [vmem:[%s514 + $0x6c] sm:$0x1]
      %v1677 = vld [vmem:[%s514 + $0x70] sm:$0xe]
      %v1678 = vld [vmem:[%s514 + $0x74] sm:$0x1]
      %v1679 = vld [vmem:[%s514 + $0x78] sm:$0xe]
      %v1680 = vld [vmem:[%s514 + $0x7c] sm:$0x1]
      %v1713 = vrot.slane %v1649, 5
      %v1714 = vrot.slane %v1713, 4
      %v1715 = vrot.slane %v1650, 5
      %v1716 = vsel %vm1101, %v1714, %v1715
      %v1717 = vrot.slane %v1651, 5
      %v1718 = vrot.slane %v1717, 4
      %v1719 = vrot.slane %v1652, 5
      %v1720 = vsel %vm1101, %v1718, %v1719
      %v1721 = vrot.slane %v1653, 5
      %v1722 = vrot.slane %v1721, 4
      %v1723 = vrot.slane %v1654, 5
      %v1724 = vsel %vm1101, %v1722, %v1723
      %v1725 = vrot.slane %v1655, 5
      %v1726 = vrot.slane %v1725, 4
      %v1727 = vrot.slane %v1656, 5
      %v1728 = vsel %vm1101, %v1726, %v1727
      %v1729 = vrot.slane %v1657, 5
      %v1730 = vrot.slane %v1729, 4
      %v1731 = vrot.slane %v1658, 5
      %v1732 = vsel %vm1101, %v1730, %v1731
      %v1733 = vrot.slane %v1659, 5
      %v1734 = vrot.slane %v1733, 4
      %v1735 = vrot.slane %v1660, 5
      %v1736 = vsel %vm1101, %v1734, %v1735
      %v1737 = vrot.slane %v1661, 5
      %v1738 = vrot.slane %v1737, 4
      %v1739 = vrot.slane %v1662, 5
      %v1740 = vsel %vm1101, %v1738, %v1739
      %v1741 = vrot.slane %v1663, 5
      %v1742 = vrot.slane %v1741, 4
      %v1743 = vrot.slane %v1664, 5
      %v1744 = vsel %vm1101, %v1742, %v1743
      %v1745 = vrot.slane %v1665, 5
      %v1746 = vrot.slane %v1745, 4
      %v1747 = vrot.slane %v1666, 5
      %v1748 = vsel %vm1101, %v1746, %v1747
      %v1749 = vrot.slane %v1667, 5
      %v1750 = vrot.slane %v1749, 4
      %v1751 = vrot.slane %v1668, 5
      %v1752 = vsel %vm1101, %v1750, %v1751
      %v1753 = vrot.slane %v1669, 5
      %v1754 = vrot.slane %v1753, 4
      %v1755 = vrot.slane %v1670, 5
      %v1756 = vsel %vm1101, %v1754, %v1755
      %v1757 = vrot.slane %v1671, 5
      %v1758 = vrot.slane %v1757, 4
      %v1759 = vrot.slane %v1672, 5
      %v1760 = vsel %vm1101, %v1758, %v1759
      %v1761 = vrot.slane %v1673, 5
      %v1762 = vrot.slane %v1761, 4
      %v1763 = vrot.slane %v1674, 5
      %v1764 = vsel %vm1101, %v1762, %v1763
      %v1765 = vrot.slane %v1675, 5
      %v1766 = vrot.slane %v1765, 4
      %v1767 = vrot.slane %v1676, 5
      %v1768 = vsel %vm1101, %v1766, %v1767
      %v1769 = vrot.slane %v1677, 5
      %v1770 = vrot.slane %v1769, 4
      %v1771 = vrot.slane %v1678, 5
      %v1772 = vsel %vm1101, %v1770, %v1771
      %v1773 = vrot.slane %v1679, 5
      %v1774 = vrot.slane %v1773, 4
      %v1775 = vrot.slane %v1680, 5
      %v1776 = vsel %vm1101, %v1774, %v1775
      %1777 = vrot.lane.b32.xlu0 %v1716, 40
      %v1778 = vpop.permute.xlu0 %1777
      %1779 = vrot.lane.b32.xlu0 %v1720, 40
      %v1780 = vpop.permute.xlu0 %1779
      %1781 = vrot.lane.b32.xlu0 %v1724, 40
      %v1782 = vpop.permute.xlu0 %1781
      %1783 = vrot.lane.b32.xlu0 %v1728, 40
      %v1784 = vpop.permute.xlu0 %1783
      %1785 = vrot.lane.b32.xlu0 %v1732, 40
      %v1786 = vpop.permute.xlu0 %1785
      %1787 = vrot.lane.b32.xlu0 %v1736, 40
      %v1788 = vpop.permute.xlu0 %1787
      %1789 = vrot.lane.b32.xlu0 %v1740, 40
      %v1790 = vpop.permute.xlu0 %1789
      %1791 = vrot.lane.b32.xlu0 %v1744, 40
      %v1792 = vpop.permute.xlu0 %1791
      %1793 = vrot.lane.b32.xlu0 %v1748, 40
      %v1794 = vpop.permute.xlu0 %1793
      %1795 = vrot.lane.b32.xlu0 %v1752, 40
      %v1796 = vpop.permute.xlu0 %1795
      %1797 = vrot.lane.b32.xlu0 %v1756, 40
      %v1798 = vpop.permute.xlu0 %1797
      %1799 = vrot.lane.b32.xlu0 %v1760, 40
      %v1800 = vpop.permute.xlu0 %1799
      %1801 = vrot.lane.b32.xlu0 %v1764, 40
      %v1802 = vpop.permute.xlu0 %1801
      %1803 = vrot.lane.b32.xlu0 %v1768, 40
      %v1804 = vpop.permute.xlu0 %1803
      %1805 = vrot.lane.b32.xlu0 %v1772, 40
      %v1806 = vpop.permute.xlu0 %1805
      %1807 = vrot.lane.b32.xlu0 %v1776, 40
      %v1808 = vpop.permute.xlu0 %1807
      %vm1825 = vcmask 388416
      %1826 = vst.msk [vmem:[#allocation3] sm:$0xf] %vm1825, %v1778
      %1827 = vst.msk [vmem:[#allocation3 + $0x4] sm:$0xf] %vm1825, %v1780
      %1828 = vst.msk [vmem:[#allocation3 + $0x8] sm:$0xf] %vm1825, %v1782
      %1829 = vst.msk [vmem:[#allocation3 + $0xc] sm:$0xf] %vm1825, %v1784
      %1830 = vst.msk [vmem:[#allocation3 + $0x10] sm:$0xf] %vm1825, %v1786
      %1831 = vst.msk [vmem:[#allocation3 + $0x14] sm:$0xf] %vm1825, %v1788
      %1832 = vst.msk [vmem:[#allocation3 + $0x18] sm:$0xf] %vm1825, %v1790
      %1833 = vst.msk [vmem:[#allocation3 + $0x1c] sm:$0xf] %vm1825, %v1792
      %1834 = vst.msk [vmem:[#allocation3 + $0x20] sm:$0xf] %vm1825, %v1794
      %1835 = vst.msk [vmem:[#allocation3 + $0x24] sm:$0xf] %vm1825, %v1796
      %1836 = vst.msk [vmem:[#allocation3 + $0x28] sm:$0xf] %vm1825, %v1798
      %1837 = vst.msk [vmem:[#allocation3 + $0x2c] sm:$0xf] %vm1825, %v1800
      %1838 = vst.msk [vmem:[#allocation3 + $0x30] sm:$0xf] %vm1825, %v1802
      %1839 = vst.msk [vmem:[#allocation3 + $0x34] sm:$0xf] %vm1825, %v1804
      %1840 = vst.msk [vmem:[#allocation3 + $0x38] sm:$0xf] %vm1825, %v1806
      %1841 = vst.msk [vmem:[#allocation3 + $0x3c] sm:$0xf] %vm1825, %v1808
      %s1842 = scalar_lea.vmem [#allocation2], 16
      %v1843 = vld [vmem:[%s1842] sm:$0xf]
      %v1844 = vld [vmem:[%s1842 + $0x8] sm:$0xf]
      %v1845 = vld [vmem:[%s1842 + $0x10] sm:$0xf]
      %v1846 = vld [vmem:[%s1842 + $0x18] sm:$0xf]
      %v1847 = vld [vmem:[%s1842 + $0x20] sm:$0xf]
      %v1848 = vld [vmem:[%s1842 + $0x28] sm:$0xf]
      %v1849 = vld [vmem:[%s1842 + $0x30] sm:$0xf]
      %v1850 = vld [vmem:[%s1842 + $0x38] sm:$0xf]
      %v1851 = vld [vmem:[%s1842 + $0x40] sm:$0xf]
      %v1852 = vld [vmem:[%s1842 + $0x48] sm:$0xf]
      %v1853 = vld [vmem:[%s1842 + $0x50] sm:$0xf]
      %v1854 = vld [vmem:[%s1842 + $0x58] sm:$0xf]
      %v1855 = vld [vmem:[%s1842 + $0x60] sm:$0xf]
      %v1856 = vld [vmem:[%s1842 + $0x68] sm:$0xf]
      %v1857 = vld [vmem:[%s1842 + $0x70] sm:$0xf]
      %v1858 = vld [vmem:[%s1842 + $0x78] sm:$0xf]
      %1875 = vrot.lane.b32.xlu0 %v1843, 48
      %v1876 = vpop.permute.xlu0 %1875
      %1877 = vrot.lane.b32.xlu0 %v1844, 48
      %v1878 = vpop.permute.xlu0 %1877
      %1879 = vrot.lane.b32.xlu0 %v1845, 48
      %v1880 = vpop.permute.xlu0 %1879
      %1881 = vrot.lane.b32.xlu0 %v1846, 48
      %v1882 = vpop.permute.xlu0 %1881
      %1883 = vrot.lane.b32.xlu0 %v1847, 48
      %v1884 = vpop.permute.xlu0 %1883
      %1885 = vrot.lane.b32.xlu0 %v1848, 48
      %v1886 = vpop.permute.xlu0 %1885
      %1887 = vrot.lane.b32.xlu0 %v1849, 48
      %v1888 = vpop.permute.xlu0 %1887
      %1889 = vrot.lane.b32.xlu0 %v1850, 48
      %v1890 = vpop.permute.xlu0 %1889
      %1891 = vrot.lane.b32.xlu0 %v1851, 48
      %v1892 = vpop.permute.xlu0 %1891
      %1893 = vrot.lane.b32.xlu0 %v1852, 48
      %v1894 = vpop.permute.xlu0 %1893
      %1895 = vrot.lane.b32.xlu0 %v1853, 48
      %v1896 = vpop.permute.xlu0 %1895
      %1897 = vrot.lane.b32.xlu0 %v1854, 48
      %v1898 = vpop.permute.xlu0 %1897
      %1899 = vrot.lane.b32.xlu0 %v1855, 48
      %v1900 = vpop.permute.xlu0 %1899
      %1901 = vrot.lane.b32.xlu0 %v1856, 48
      %v1902 = vpop.permute.xlu0 %1901
      %1903 = vrot.lane.b32.xlu0 %v1857, 48
      %v1904 = vpop.permute.xlu0 %1903
      %1905 = vrot.lane.b32.xlu0 %v1858, 48
      %v1906 = vpop.permute.xlu0 %1905
      %vm1923 = vcmask 454016
      %1924 = vst.msk [vmem:[#allocation3] sm:$0xf] %vm1923, %v1876
      %1925 = vst.msk [vmem:[#allocation3 + $0x4] sm:$0xf] %vm1923, %v1878
      %1926 = vst.msk [vmem:[#allocation3 + $0x8] sm:$0xf] %vm1923, %v1880
      %1927 = vst.msk [vmem:[#allocation3 + $0xc] sm:$0xf] %vm1923, %v1882
      %1928 = vst.msk [vmem:[#allocation3 + $0x10] sm:$0xf] %vm1923, %v1884
      %1929 = vst.msk [vmem:[#allocation3 + $0x14] sm:$0xf] %vm1923, %v1886
      %1930 = vst.msk [vmem:[#allocation3 + $0x18] sm:$0xf] %vm1923, %v1888
      %1931 = vst.msk [vmem:[#allocation3 + $0x1c] sm:$0xf] %vm1923, %v1890
      %1932 = vst.msk [vmem:[#allocation3 + $0x20] sm:$0xf] %vm1923, %v1892
      %1933 = vst.msk [vmem:[#allocation3 + $0x24] sm:$0xf] %vm1923, %v1894
      %1934 = vst.msk [vmem:[#allocation3 + $0x28] sm:$0xf] %vm1923, %v1896
      %1935 = vst.msk [vmem:[#allocation3 + $0x2c] sm:$0xf] %vm1923, %v1898
      %1936 = vst.msk [vmem:[#allocation3 + $0x30] sm:$0xf] %vm1923, %v1900
      %1937 = vst.msk [vmem:[#allocation3 + $0x34] sm:$0xf] %vm1923, %v1902
      %1938 = vst.msk [vmem:[#allocation3 + $0x38] sm:$0xf] %vm1923, %v1904
      %1939 = vst.msk [vmem:[#allocation3 + $0x3c] sm:$0xf] %vm1923, %v1906
      %v1940 = vld [vmem:[%s1842] sm:$0xf]
      %v1941 = vld [vmem:[%s1842 + $0x4] sm:$0x1]
      %v1942 = vld [vmem:[%s1842 + $0x8] sm:$0xf]
      %v1943 = vld [vmem:[%s1842 + $0xc] sm:$0x1]
      %v1944 = vld [vmem:[%s1842 + $0x10] sm:$0xf]
      %v1945 = vld [vmem:[%s1842 + $0x14] sm:$0x1]
      %v1946 = vld [vmem:[%s1842 + $0x18] sm:$0xf]
      %v1947 = vld [vmem:[%s1842 + $0x1c] sm:$0x1]
      %v1948 = vld [vmem:[%s1842 + $0x20] sm:$0xf]
      %v1949 = vld [vmem:[%s1842 + $0x24] sm:$0x1]
      %v1950 = vld [vmem:[%s1842 + $0x28] sm:$0xf]
      %v1951 = vld [vmem:[%s1842 + $0x2c] sm:$0x1]
      %v1952 = vld [vmem:[%s1842 + $0x30] sm:$0xf]
      %v1953 = vld [vmem:[%s1842 + $0x34] sm:$0x1]
      %v1954 = vld [vmem:[%s1842 + $0x38] sm:$0xf]
      %v1955 = vld [vmem:[%s1842 + $0x3c] sm:$0x1]
      %v1956 = vld [vmem:[%s1842 + $0x40] sm:$0xf]
      %v1957 = vld [vmem:[%s1842 + $0x44] sm:$0x1]
      %v1958 = vld [vmem:[%s1842 + $0x48] sm:$0xf]
      %v1959 = vld [vmem:[%s1842 + $0x4c] sm:$0x1]
      %v1960 = vld [vmem:[%s1842 + $0x50] sm:$0xf]
      %v1961 = vld [vmem:[%s1842 + $0x54] sm:$0x1]
      %v1962 = vld [vmem:[%s1842 + $0x58] sm:$0xf]
      %v1963 = vld [vmem:[%s1842 + $0x5c] sm:$0x1]
      %v1964 = vld [vmem:[%s1842 + $0x60] sm:$0xf]
      %v1965 = vld [vmem:[%s1842 + $0x64] sm:$0x1]
      %v1966 = vld [vmem:[%s1842 + $0x68] sm:$0xf]
      %v1967 = vld [vmem:[%s1842 + $0x6c] sm:$0x1]
      %v1968 = vld [vmem:[%s1842 + $0x70] sm:$0xf]
      %v1969 = vld [vmem:[%s1842 + $0x74] sm:$0x1]
      %v1970 = vld [vmem:[%s1842 + $0x78] sm:$0xf]
      %v1971 = vld [vmem:[%s1842 + $0x7c] sm:$0x1]
      %v1973 = vshrl.u32 %v1940, 16
      %v1975 = vrot.slane %v1973, 4
      %v1976 = vshll.u32 %v1940, 16
      %v1978 = vrot.slane %v1976, 5
      %v1979 = vor.u32 %v1975, %v1978
      %v1980 = vrot.slane %v1979, 4
      %v1982 = vshll.u32 %v1941, 16
      %v1984 = vrot.slane %v1982, 5
      %v1985 = vsel %vm745, %v1980, %v1984
      %v1987 = vshrl.u32 %v1942, 16
      %v1989 = vrot.slane %v1987, 4
      %v1990 = vshll.u32 %v1942, 16
      %v1992 = vrot.slane %v1990, 5
      %v1993 = vor.u32 %v1989, %v1992
      %v1994 = vrot.slane %v1993, 4
      %v1996 = vshll.u32 %v1943, 16
      %v1998 = vrot.slane %v1996, 5
      %v1999 = vsel %vm745, %v1994, %v1998
      %v2001 = vshrl.u32 %v1944, 16
      %v2003 = vrot.slane %v2001, 4
      %v2004 = vshll.u32 %v1944, 16
      %v2006 = vrot.slane %v2004, 5
      %v2007 = vor.u32 %v2003, %v2006
      %v2008 = vrot.slane %v2007, 4
      %v2010 = vshll.u32 %v1945, 16
      %v2012 = vrot.slane %v2010, 5
      %v2013 = vsel %vm745, %v2008, %v2012
      %v2015 = vshrl.u32 %v1946, 16
      %v2017 = vrot.slane %v2015, 4
      %v2018 = vshll.u32 %v1946, 16
      %v2020 = vrot.slane %v2018, 5
      %v2021 = vor.u32 %v2017, %v2020
      %v2022 = vrot.slane %v2021, 4
      %v2024 = vshll.u32 %v1947, 16
      %v2026 = vrot.slane %v2024, 5
      %v2027 = vsel %vm745, %v2022, %v2026
      %v2029 = vshrl.u32 %v1948, 16
      %v2031 = vrot.slane %v2029, 4
      %v2032 = vshll.u32 %v1948, 16
      %v2034 = vrot.slane %v2032, 5
      %v2035 = vor.u32 %v2031, %v2034
      %v2036 = vrot.slane %v2035, 4
      %v2038 = vshll.u32 %v1949, 16
      %v2040 = vrot.slane %v2038, 5
      %v2041 = vsel %vm745, %v2036, %v2040
      %v2043 = vshrl.u32 %v1950, 16
      %v2045 = vrot.slane %v2043, 4
      %v2046 = vshll.u32 %v1950, 16
      %v2048 = vrot.slane %v2046, 5
      %v2049 = vor.u32 %v2045, %v2048
      %v2050 = vrot.slane %v2049, 4
      %v2052 = vshll.u32 %v1951, 16
      %v2054 = vrot.slane %v2052, 5
      %v2055 = vsel %vm745, %v2050, %v2054
      %v2057 = vshrl.u32 %v1952, 16
      %v2059 = vrot.slane %v2057, 4
      %v2060 = vshll.u32 %v1952, 16
      %v2062 = vrot.slane %v2060, 5
      %v2063 = vor.u32 %v2059, %v2062
      %v2064 = vrot.slane %v2063, 4
      %v2066 = vshll.u32 %v1953, 16
      %v2068 = vrot.slane %v2066, 5
      %v2069 = vsel %vm745, %v2064, %v2068
      %v2071 = vshrl.u32 %v1954, 16
      %v2073 = vrot.slane %v2071, 4
      %v2074 = vshll.u32 %v1954, 16
      %v2076 = vrot.slane %v2074, 5
      %v2077 = vor.u32 %v2073, %v2076
      %v2078 = vrot.slane %v2077, 4
      %v2080 = vshll.u32 %v1955, 16
      %v2082 = vrot.slane %v2080, 5
      %v2083 = vsel %vm745, %v2078, %v2082
      %v2085 = vshrl.u32 %v1956, 16
      %v2087 = vrot.slane %v2085, 4
      %v2088 = vshll.u32 %v1956, 16
      %v2090 = vrot.slane %v2088, 5
      %v2091 = vor.u32 %v2087, %v2090
      %v2092 = vrot.slane %v2091, 4
      %v2094 = vshll.u32 %v1957, 16
      %v2096 = vrot.slane %v2094, 5
      %v2097 = vsel %vm745, %v2092, %v2096
      %v2099 = vshrl.u32 %v1958, 16
      %v2101 = vrot.slane %v2099, 4
      %v2102 = vshll.u32 %v1958, 16
      %v2104 = vrot.slane %v2102, 5
      %v2105 = vor.u32 %v2101, %v2104
      %v2106 = vrot.slane %v2105, 4
      %v2108 = vshll.u32 %v1959, 16
      %v2110 = vrot.slane %v2108, 5
      %v2111 = vsel %vm745, %v2106, %v2110
      %v2113 = vshrl.u32 %v1960, 16
      %v2115 = vrot.slane %v2113, 4
      %v2116 = vshll.u32 %v1960, 16
      %v2118 = vrot.slane %v2116, 5
      %v2119 = vor.u32 %v2115, %v2118
      %v2120 = vrot.slane %v2119, 4
      %v2122 = vshll.u32 %v1961, 16
      %v2124 = vrot.slane %v2122, 5
      %v2125 = vsel %vm745, %v2120, %v2124
      %v2127 = vshrl.u32 %v1962, 16
      %v2129 = vrot.slane %v2127, 4
      %v2130 = vshll.u32 %v1962, 16
      %v2132 = vrot.slane %v2130, 5
      %v2133 = vor.u32 %v2129, %v2132
      %v2134 = vrot.slane %v2133, 4
      %v2136 = vshll.u32 %v1963, 16
      %v2138 = vrot.slane %v2136, 5
      %v2139 = vsel %vm745, %v2134, %v2138
      %v2141 = vshrl.u32 %v1964, 16
      %v2143 = vrot.slane %v2141, 4
      %v2144 = vshll.u32 %v1964, 16
      %v2146 = vrot.slane %v2144, 5
      %v2147 = vor.u32 %v2143, %v2146
      %v2148 = vrot.slane %v2147, 4
      %v2150 = vshll.u32 %v1965, 16
      %v2152 = vrot.slane %v2150, 5
      %v2153 = vsel %vm745, %v2148, %v2152
      %v2155 = vshrl.u32 %v1966, 16
      %v2157 = vrot.slane %v2155, 4
      %v2158 = vshll.u32 %v1966, 16
      %v2160 = vrot.slane %v2158, 5
      %v2161 = vor.u32 %v2157, %v2160
      %v2162 = vrot.slane %v2161, 4
      %v2164 = vshll.u32 %v1967, 16
      %v2166 = vrot.slane %v2164, 5
      %v2167 = vsel %vm745, %v2162, %v2166
      %v2169 = vshrl.u32 %v1968, 16
      %v2171 = vrot.slane %v2169, 4
      %v2172 = vshll.u32 %v1968, 16
      %v2174 = vrot.slane %v2172, 5
      %v2175 = vor.u32 %v2171, %v2174
      %v2176 = vrot.slane %v2175, 4
      %v2178 = vshll.u32 %v1969, 16
      %v2180 = vrot.slane %v2178, 5
      %v2181 = vsel %vm745, %v2176, %v2180
      %v2183 = vshrl.u32 %v1970, 16
      %v2185 = vrot.slane %v2183, 4
      %v2186 = vshll.u32 %v1970, 16
      %v2188 = vrot.slane %v2186, 5
      %v2189 = vor.u32 %v2185, %v2188
      %v2190 = vrot.slane %v2189, 4
      %v2192 = vshll.u32 %v1971, 16
      %v2194 = vrot.slane %v2192, 5
      %v2195 = vsel %vm745, %v2190, %v2194
      %2196 = vrot.lane.b32.xlu0 %v1985, 56
      %v2197 = vpop.permute.xlu0 %2196
      %2198 = vrot.lane.b32.xlu0 %v1999, 56
      %v2199 = vpop.permute.xlu0 %2198
      %2200 = vrot.lane.b32.xlu0 %v2013, 56
      %v2201 = vpop.permute.xlu0 %2200
      %2202 = vrot.lane.b32.xlu0 %v2027, 56
      %v2203 = vpop.permute.xlu0 %2202
      %2204 = vrot.lane.b32.xlu0 %v2041, 56
      %v2205 = vpop.permute.xlu0 %2204
      %2206 = vrot.lane.b32.xlu0 %v2055, 56
      %v2207 = vpop.permute.xlu0 %2206
      %2208 = vrot.lane.b32.xlu0 %v2069, 56
      %v2209 = vpop.permute.xlu0 %2208
      %2210 = vrot.lane.b32.xlu0 %v2083, 56
      %v2211 = vpop.permute.xlu0 %2210
      %2212 = vrot.lane.b32.xlu0 %v2097, 56
      %v2213 = vpop.permute.xlu0 %2212
      %2214 = vrot.lane.b32.xlu0 %v2111, 56
      %v2215 = vpop.permute.xlu0 %2214
      %2216 = vrot.lane.b32.xlu0 %v2125, 56
      %v2217 = vpop.permute.xlu0 %2216
      %2218 = vrot.lane.b32.xlu0 %v2139, 56
      %v2219 = vpop.permute.xlu0 %2218
      %2220 = vrot.lane.b32.xlu0 %v2153, 56
      %v2221 = vpop.permute.xlu0 %2220
      %2222 = vrot.lane.b32.xlu0 %v2167, 56
      %v2223 = vpop.permute.xlu0 %2222
      %2224 = vrot.lane.b32.xlu0 %v2181, 56
      %v2225 = vpop.permute.xlu0 %2224
      %2226 = vrot.lane.b32.xlu0 %v2195, 56
      %v2227 = vpop.permute.xlu0 %2226
      %vm2244 = vcmask 519616
      %2245 = vst.msk [vmem:[#allocation3] sm:$0xf] %vm2244, %v2197
      %2246 = vst.msk [vmem:[#allocation3 + $0x4] sm:$0xf] %vm2244, %v2199
      %2247 = vst.msk [vmem:[#allocation3 + $0x8] sm:$0xf] %vm2244, %v2201
      %2248 = vst.msk [vmem:[#allocation3 + $0xc] sm:$0xf] %vm2244, %v2203
      %2249 = vst.msk [vmem:[#allocation3 + $0x10] sm:$0xf] %vm2244, %v2205
      %2250 = vst.msk [vmem:[#allocation3 + $0x14] sm:$0xf] %vm2244, %v2207
      %2251 = vst.msk [vmem:[#allocation3 + $0x18] sm:$0xf] %vm2244, %v2209
      %2252 = vst.msk [vmem:[#allocation3 + $0x1c] sm:$0xf] %vm2244, %v2211
      %2253 = vst.msk [vmem:[#allocation3 + $0x20] sm:$0xf] %vm2244, %v2213
      %2254 = vst.msk [vmem:[#allocation3 + $0x24] sm:$0xf] %vm2244, %v2215
      %2255 = vst.msk [vmem:[#allocation3 + $0x28] sm:$0xf] %vm2244, %v2217
      %2256 = vst.msk [vmem:[#allocation3 + $0x2c] sm:$0xf] %vm2244, %v2219
      %2257 = vst.msk [vmem:[#allocation3 + $0x30] sm:$0xf] %vm2244, %v2221
      %2258 = vst.msk [vmem:[#allocation3 + $0x34] sm:$0xf] %vm2244, %v2223
      %2259 = vst.msk [vmem:[#allocation3 + $0x38] sm:$0xf] %vm2244, %v2225
      %2260 = vst.msk [vmem:[#allocation3 + $0x3c] sm:$0xf] %vm2244, %v2227
      %v2261 = vld [vmem:[%s1842] sm:$0xe]
      %v2262 = vld [vmem:[%s1842 + $0x4] sm:$0x1]
      %v2263 = vld [vmem:[%s1842 + $0x8] sm:$0xe]
      %v2264 = vld [vmem:[%s1842 + $0xc] sm:$0x1]
      %v2265 = vld [vmem:[%s1842 + $0x10] sm:$0xe]
      %v2266 = vld [vmem:[%s1842 + $0x14] sm:$0x1]
      %v2267 = vld [vmem:[%s1842 + $0x18] sm:$0xe]
      %v2268 = vld [vmem:[%s1842 + $0x1c] sm:$0x1]
      %v2269 = vld [vmem:[%s1842 + $0x20] sm:$0xe]
      %v2270 = vld [vmem:[%s1842 + $0x24] sm:$0x1]
      %v2271 = vld [vmem:[%s1842 + $0x28] sm:$0xe]
      %v2272 = vld [vmem:[%s1842 + $0x2c] sm:$0x1]
      %v2273 = vld [vmem:[%s1842 + $0x30] sm:$0xe]
      %v2274 = vld [vmem:[%s1842 + $0x34] sm:$0x1]
      %v2275 = vld [vmem:[%s1842 + $0x38] sm:$0xe]
      %v2276 = vld [vmem:[%s1842 + $0x3c] sm:$0x1]
      %v2277 = vld [vmem:[%s1842 + $0x40] sm:$0xe]
      %v2278 = vld [vmem:[%s1842 + $0x44] sm:$0x1]
      %v2279 = vld [vmem:[%s1842 + $0x48] sm:$0xe]
      %v2280 = vld [vmem:[%s1842 + $0x4c] sm:$0x1]
      %v2281 = vld [vmem:[%s1842 + $0x50] sm:$0xe]
      %v2282 = vld [vmem:[%s1842 + $0x54] sm:$0x1]
      %v2283 = vld [vmem:[%s1842 + $0x58] sm:$0xe]
      %v2284 = vld [vmem:[%s1842 + $0x5c] sm:$0x1]
      %v2285 = vld [vmem:[%s1842 + $0x60] sm:$0xe]
      %v2286 = vld [vmem:[%s1842 + $0x64] sm:$0x1]
      %v2287 = vld [vmem:[%s1842 + $0x68] sm:$0xe]
      %v2288 = vld [vmem:[%s1842 + $0x6c] sm:$0x1]
      %v2289 = vld [vmem:[%s1842 + $0x70] sm:$0xe]
      %v2290 = vld [vmem:[%s1842 + $0x74] sm:$0x1]
      %v2291 = vld [vmem:[%s1842 + $0x78] sm:$0xe]
      %v2292 = vld [vmem:[%s1842 + $0x7c] sm:$0x1]
      %v2325 = vrot.slane %v2261, 5
      %v2326 = vrot.slane %v2325, 4
      %v2327 = vrot.slane %v2262, 5
      %v2328 = vsel %vm1101, %v2326, %v2327
      %v2329 = vrot.slane %v2263, 5
      %v2330 = vrot.slane %v2329, 4
      %v2331 = vrot.slane %v2264, 5
      %v2332 = vsel %vm1101, %v2330, %v2331
      %v2333 = vrot.slane %v2265, 5
      %v2334 = vrot.slane %v2333, 4
      %v2335 = vrot.slane %v2266, 5
      %v2336 = vsel %vm1101, %v2334, %v2335
      %v2337 = vrot.slane %v2267, 5
      %v2338 = vrot.slane %v2337, 4
      %v2339 = vrot.slane %v2268, 5
      %v2340 = vsel %vm1101, %v2338, %v2339
      %v2341 = vrot.slane %v2269, 5
      %v2342 = vrot.slane %v2341, 4
      %v2343 = vrot.slane %v2270, 5
      %v2344 = vsel %vm1101, %v2342, %v2343
      %v2345 = vrot.slane %v2271, 5
      %v2346 = vrot.slane %v2345, 4
      %v2347 = vrot.slane %v2272, 5
      %v2348 = vsel %vm1101, %v2346, %v2347
      %v2349 = vrot.slane %v2273, 5
      %v2350 = vrot.slane %v2349, 4
      %v2351 = vrot.slane %v2274, 5
      %v2352 = vsel %vm1101, %v2350, %v2351
      %v2353 = vrot.slane %v2275, 5
      %v2354 = vrot.slane %v2353, 4
      %v2355 = vrot.slane %v2276, 5
      %v2356 = vsel %vm1101, %v2354, %v2355
      %v2357 = vrot.slane %v2277, 5
      %v2358 = vrot.slane %v2357, 4
      %v2359 = vrot.slane %v2278, 5
      %v2360 = vsel %vm1101, %v2358, %v2359
      %v2361 = vrot.slane %v2279, 5
      %v2362 = vrot.slane %v2361, 4
      %v2363 = vrot.slane %v2280, 5
      %v2364 = vsel %vm1101, %v2362, %v2363
      %v2365 = vrot.slane %v2281, 5
      %v2366 = vrot.slane %v2365, 4
      %v2367 = vrot.slane %v2282, 5
      %v2368 = vsel %vm1101, %v2366, %v2367
      %v2369 = vrot.slane %v2283, 5
      %v2370 = vrot.slane %v2369, 4
      %v2371 = vrot.slane %v2284, 5
      %v2372 = vsel %vm1101, %v2370, %v2371
      %v2373 = vrot.slane %v2285, 5
      %v2374 = vrot.slane %v2373, 4
      %v2375 = vrot.slane %v2286, 5
      %v2376 = vsel %vm1101, %v2374, %v2375
      %v2377 = vrot.slane %v2287, 5
      %v2378 = vrot.slane %v2377, 4
      %v2379 = vrot.slane %v2288, 5
      %v2380 = vsel %vm1101, %v2378, %v2379
      %v2381 = vrot.slane %v2289, 5
      %v2382 = vrot.slane %v2381, 4
      %v2383 = vrot.slane %v2290, 5
      %v2384 = vsel %vm1101, %v2382, %v2383
      %v2385 = vrot.slane %v2291, 5
      %v2386 = vrot.slane %v2385, 4
      %v2387 = vrot.slane %v2292, 5
      %v2388 = vsel %vm1101, %v2386, %v2387
      %2389 = vrot.lane.b32.xlu0 %v2328, 64
      %v2390 = vpop.permute.xlu0 %2389
      %2391 = vrot.lane.b32.xlu0 %v2332, 64
      %v2392 = vpop.permute.xlu0 %2391
      %2393 = vrot.lane.b32.xlu0 %v2336, 64
      %v2394 = vpop.permute.xlu0 %2393
      %2395 = vrot.lane.b32.xlu0 %v2340, 64
      %v2396 = vpop.permute.xlu0 %2395
      %2397 = vrot.lane.b32.xlu0 %v2344, 64
      %v2398 = vpop.permute.xlu0 %2397
      %2399 = vrot.lane.b32.xlu0 %v2348, 64
      %v2400 = vpop.permute.xlu0 %2399
      %2401 = vrot.lane.b32.xlu0 %v2352, 64
      %v2402 = vpop.permute.xlu0 %2401
      %2403 = vrot.lane.b32.xlu0 %v2356, 64
      %v2404 = vpop.permute.xlu0 %2403
      %2405 = vrot.lane.b32.xlu0 %v2360, 64
      %v2406 = vpop.permute.xlu0 %2405
      %2407 = vrot.lane.b32.xlu0 %v2364, 64
      %v2408 = vpop.permute.xlu0 %2407
      %2409 = vrot.lane.b32.xlu0 %v2368, 64
      %v2410 = vpop.permute.xlu0 %2409
      %2411 = vrot.lane.b32.xlu0 %v2372, 64
      %v2412 = vpop.permute.xlu0 %2411
      %2413 = vrot.lane.b32.xlu0 %v2376, 64
      %v2414 = vpop.permute.xlu0 %2413
      %2415 = vrot.lane.b32.xlu0 %v2380, 64
      %v2416 = vpop.permute.xlu0 %2415
      %2417 = vrot.lane.b32.xlu0 %v2384, 64
      %v2418 = vpop.permute.xlu0 %2417
      %2419 = vrot.lane.b32.xlu0 %v2388, 64
      %v2420 = vpop.permute.xlu0 %2419
      %vm2437 = vcmask 585216
      %2438 = vst.msk [vmem:[#allocation3] sm:$0xf] %vm2437, %v2390
      %2439 = vst.msk [vmem:[#allocation3 + $0x4] sm:$0xf] %vm2437, %v2392
      %2440 = vst.msk [vmem:[#allocation3 + $0x8] sm:$0xf] %vm2437, %v2394
      %2441 = vst.msk [vmem:[#allocation3 + $0xc] sm:$0xf] %vm2437, %v2396
      %2442 = vst.msk [vmem:[#allocation3 + $0x10] sm:$0xf] %vm2437, %v2398
      %2443 = vst.msk [vmem:[#allocation3 + $0x14] sm:$0xf] %vm2437, %v2400
      %2444 = vst.msk [vmem:[#allocation3 + $0x18] sm:$0xf] %vm2437, %v2402
      %2445 = vst.msk [vmem:[#allocation3 + $0x1c] sm:$0xf] %vm2437, %v2404
      %2446 = vst.msk [vmem:[#allocation3 + $0x20] sm:$0xf] %vm2437, %v2406
      %2447 = vst.msk [vmem:[#allocation3 + $0x24] sm:$0xf] %vm2437, %v2408
      %2448 = vst.msk [vmem:[#allocation3 + $0x28] sm:$0xf] %vm2437, %v2410
      %2449 = vst.msk [vmem:[#allocation3 + $0x2c] sm:$0xf] %vm2437, %v2412
      %2450 = vst.msk [vmem:[#allocation3 + $0x30] sm:$0xf] %vm2437, %v2414
      %2451 = vst.msk [vmem:[#allocation3 + $0x34] sm:$0xf] %vm2437, %v2416
      %2452 = vst.msk [vmem:[#allocation3 + $0x38] sm:$0xf] %vm2437, %v2418
      %2453 = vst.msk [vmem:[#allocation3 + $0x3c] sm:$0xf] %vm2437, %v2420
      %v2454 = vld [vmem:[#allocation3] sm:$0xf]
      %v2455 = vld [vmem:[#allocation3 + $0x4] sm:$0xf]
      %v2456 = vld [vmem:[#allocation3 + $0x8] sm:$0xf]
      %v2457 = vld [vmem:[#allocation3 + $0xc] sm:$0xf]
      %v2458 = vld [vmem:[#allocation3 + $0x10] sm:$0xf]
      %v2459 = vld [vmem:[#allocation3 + $0x14] sm:$0xf]
      %v2460 = vld [vmem:[#allocation3 + $0x18] sm:$0xf]
      %v2461 = vld [vmem:[#allocation3 + $0x1c] sm:$0xf]
      %v2462 = vld [vmem:[#allocation3 + $0x20] sm:$0xf]
      %v2463 = vld [vmem:[#allocation3 + $0x24] sm:$0xf]
      %v2464 = vld [vmem:[#allocation3 + $0x28] sm:$0xf]
      %v2465 = vld [vmem:[#allocation3 + $0x2c] sm:$0xf]
      %v2466 = vld [vmem:[#allocation3 + $0x30] sm:$0xf]
      %v2467 = vld [vmem:[#allocation3 + $0x34] sm:$0xf]
      %v2468 = vld [vmem:[#allocation3 + $0x38] sm:$0xf]
      %v2469 = vld [vmem:[#allocation3 + $0x3c] sm:$0xf]
      %v2470 = vld [vmem:[%s1] sm:$0xf]
      %v2471 = vld [vmem:[%s1 + $0x4] sm:$0xf]
      %v2472 = vld [vmem:[%s1 + $0x8] sm:$0xf]
      %v2473 = vld [vmem:[%s1 + $0xc] sm:$0xf]
      %v2474 = vld [vmem:[%s1 + $0x10] sm:$0xf]
      %v2475 = vld [vmem:[%s1 + $0x14] sm:$0xf]
      %v2476 = vld [vmem:[%s1 + $0x18] sm:$0xf]
      %v2477 = vld [vmem:[%s1 + $0x1c] sm:$0xf]
      %v2478 = vld [vmem:[%s1 + $0x20] sm:$0xf]
      %v2495 = vunpack.c.l.b16 %v2454
      %v2496 = vunpack.c.l.b16 %v2455
      %v2497 = vunpack.c.l.b16 %v2456
      %v2498 = vunpack.c.l.b16 %v2457
      %v2499 = vunpack.c.l.b16 %v2458
      %v2500 = vunpack.c.l.b16 %v2459
      %v2501 = vunpack.c.l.b16 %v2460
      %v2502 = vunpack.c.l.b16 %v2461
      %v2503 = vunpack.c.l.b16 %v2462
      %v2504 = vunpack.c.l.b16 %v2463
      %v2505 = vunpack.c.l.b16 %v2464
      %v2506 = vunpack.c.l.b16 %v2465
      %v2507 = vunpack.c.l.b16 %v2466
      %v2508 = vunpack.c.l.b16 %v2467
      %v2509 = vunpack.c.l.b16 %v2468
      %v2510 = vunpack.c.l.b16 %v2469
      %v2511 = vpack.c.b16 %v2496, %v2495
      %v2512 = vpack.c.b16 %v2498, %v2497
      %v2513 = vpack.c.b16 %v2500, %v2499
      %v2514 = vpack.c.b16 %v2502, %v2501
      %v2515 = vpack.c.b16 %v2504, %v2503
      %v2516 = vpack.c.b16 %v2506, %v2505
      %v2517 = vpack.c.b16 %v2508, %v2507
      %v2518 = vpack.c.b16 %v2510, %v2509
      %v2528 = vunpack.c.l.b16 %v2470
      %v2529 = vunpack.c.l.b16 %v2471
      %v2530 = vunpack.c.l.b16 %v2472
      %v2531 = vunpack.c.l.b16 %v2473
      %v2532 = vunpack.c.l.b16 %v2474
      %v2533 = vunpack.c.l.b16 %v2475
      %v2534 = vunpack.c.l.b16 %v2476
      %v2535 = vunpack.c.l.b16 %v2477
      %v2536 = vunpack.c.l.b16 %v2478
      %v2537 = vpack.c.b16 %v2529, %v2528
      %v2538 = vpack.c.b16 %v2531, %v2530
      %v2539 = vpack.c.b16 %v2533, %v2532
      %v2540 = vpack.c.b16 %v2535, %v2534
      %v2541 = vpack.c.b16 %v2536, %v2536
      %vm2546 = vcmask 588800
      %v2548 = vsel %vm2546, %v2511, 0
      %v2551 = vsel %vm2546, %v2512, 0
      %v2554 = vsel %vm2546, %v2513, 0
      %v2557 = vsel %vm2546, %v2514, 0
      %v2560 = vsel %vm2546, %v2515, 0
      %v2563 = vsel %vm2546, %v2516, 0
      %v2566 = vsel %vm2546, %v2517, 0
      %v2569 = vsel %vm2546, %v2518, 0
      %vm2571 = vcmask 1043456
      %v2573 = vsel %vm2571, %v2541, 0
      %2575 = vmatpush.bf16.msra.mxu0 0
      %2576 = vmatpush.bf16.msra.mxu0 0
      %2577 = vmatpush.bf16.msra.mxu0 0
      %2578 = vmatpush.bf16.msra.mxu0 %v2573
      %2579 = vmatpush.bf16.msra.mxu0 %v2540
      %2580 = vmatpush.bf16.msra.mxu0 %v2539
      %2581 = vmatpush.bf16.msra.mxu0 %v2538
      %2582 = vmatpush.bf16.msra.mxu0 %v2537
      %2583 = vmatmul.bf16.gmra.mxu0 %v2548
      %v2584 = vpop.f32.mrf.mxu0
      %v2585 = vadd.f32 0.0, %v2584
      %v2586 = vpop.f32.mrf.mxu0
      %v2587 = vadd.f32 0.0, %v2586
      %2588 = vmatmul.bf16.gmra.mxu0 %v2551
      %v2589 = vpop.f32.mrf.mxu0
      %v2590 = vadd.f32 0.0, %v2589
      %v2591 = vpop.f32.mrf.mxu0
      %v2592 = vadd.f32 0.0, %v2591
      %2593 = vmatmul.bf16.gmra.mxu0 %v2554
      %v2594 = vpop.f32.mrf.mxu0
      %v2595 = vadd.f32 0.0, %v2594
      %v2596 = vpop.f32.mrf.mxu0
      %v2597 = vadd.f32 0.0, %v2596
      %2598 = vmatmul.bf16.gmra.mxu0 %v2557
      %v2599 = vpop.f32.mrf.mxu0
      %v2600 = vadd.f32 0.0, %v2599
      %v2601 = vpop.f32.mrf.mxu0
      %v2602 = vadd.f32 0.0, %v2601
      %2603 = vmatmul.bf16.gmra.mxu0 %v2560
      %v2604 = vpop.f32.mrf.mxu0
      %v2605 = vadd.f32 0.0, %v2604
      %v2606 = vpop.f32.mrf.mxu0
      %v2607 = vadd.f32 0.0, %v2606
      %2608 = vmatmul.bf16.gmra.mxu0 %v2563
      %v2609 = vpop.f32.mrf.mxu0
      %v2610 = vadd.f32 0.0, %v2609
      %v2611 = vpop.f32.mrf.mxu0
      %v2612 = vadd.f32 0.0, %v2611
      %2613 = vmatmul.bf16.gmra.mxu0 %v2566
      %v2614 = vpop.f32.mrf.mxu0
      %v2615 = vadd.f32 0.0, %v2614
      %v2616 = vpop.f32.mrf.mxu0
      %v2617 = vadd.f32 0.0, %v2616
      %2618 = vmatmul.bf16.gmra.mxu0 %v2569
      %v2619 = vpop.f32.mrf.mxu0
      %v2620 = vadd.f32 0.0, %v2619
      %v2621 = vpop.f32.mrf.mxu0
      %v2622 = vadd.f32 0.0, %v2621
      %2623 = vdwg.mxu0
      %v2624 = vld [vmem:[%s2] sm:$0x1]
      %v2626 = vperm.slane %v2624, 0
      %v2628 = vmul.f32 %v2585, %v2626
      %v2629 = vmul.f32 %v2587, %v2626
      %v2630 = vmul.f32 %v2590, %v2626
      %v2631 = vmul.f32 %v2592, %v2626
      %v2632 = vmul.f32 %v2595, %v2626
      %v2633 = vmul.f32 %v2597, %v2626
      %v2634 = vmul.f32 %v2600, %v2626
      %v2635 = vmul.f32 %v2602, %v2626
      %v2636 = vmul.f32 %v2605, %v2626
      %v2637 = vmul.f32 %v2607, %v2626
      %v2638 = vmul.f32 %v2610, %v2626
      %v2639 = vmul.f32 %v2612, %v2626
      %v2640 = vmul.f32 %v2615, %v2626
      %v2641 = vmul.f32 %v2617, %v2626
      %v2642 = vmul.f32 %v2620, %v2626
      %v2643 = vmul.f32 %v2622, %v2626
      %v2644 = vld [vmem:[%s3] sm:$0x1]
      %v2646 = vperm.slane %v2644, 0
      %v2648 = vadd.f32 %v2628, %v2646
      %v2649 = vadd.f32 %v2629, %v2646
      %v2650 = vadd.f32 %v2630, %v2646
      %v2651 = vadd.f32 %v2631, %v2646
      %v2652 = vadd.f32 %v2632, %v2646
      %v2653 = vadd.f32 %v2633, %v2646
      %v2654 = vadd.f32 %v2634, %v2646
      %v2655 = vadd.f32 %v2635, %v2646
      %v2656 = vadd.f32 %v2636, %v2646
      %v2657 = vadd.f32 %v2637, %v2646
      %v2658 = vadd.f32 %v2638, %v2646
      %v2659 = vadd.f32 %v2639, %v2646
      %v2660 = vadd.f32 %v2640, %v2646
      %v2661 = vadd.f32 %v2641, %v2646
      %v2662 = vadd.f32 %v2642, %v2646
      %v2663 = vadd.f32 %v2643, %v2646
      %vm2664 = vcmp.gt.f32.partialorder %v2648, 0.0
      %vm2665 = vcmp.gt.f32.partialorder %v2649, 0.0
      %vm2666 = vcmp.gt.f32.partialorder %v2650, 0.0
      %vm2667 = vcmp.gt.f32.partialorder %v2651, 0.0
      %vm2668 = vcmp.gt.f32.partialorder %v2652, 0.0
      %vm2669 = vcmp.gt.f32.partialorder %v2653, 0.0
      %vm2670 = vcmp.gt.f32.partialorder %v2654, 0.0
      %vm2671 = vcmp.gt.f32.partialorder %v2655, 0.0
      %vm2672 = vcmp.gt.f32.partialorder %v2656, 0.0
      %vm2673 = vcmp.gt.f32.partialorder %v2657, 0.0
      %vm2674 = vcmp.gt.f32.partialorder %v2658, 0.0
      %vm2675 = vcmp.gt.f32.partialorder %v2659, 0.0
      %vm2676 = vcmp.gt.f32.partialorder %v2660, 0.0
      %vm2677 = vcmp.gt.f32.partialorder %v2661, 0.0
      %vm2678 = vcmp.gt.f32.partialorder %v2662, 0.0
      %vm2679 = vcmp.gt.f32.partialorder %v2663, 0.0
      %v2680 = vmul.f32 %v2648, 0.1
      %v2681 = vmul.f32 %v2649, 0.1
      %v2682 = vmul.f32 %v2650, 0.1
      %v2683 = vmul.f32 %v2651, 0.1
      %v2684 = vmul.f32 %v2652, 0.1
      %v2685 = vmul.f32 %v2653, 0.1
      %v2686 = vmul.f32 %v2654, 0.1
      %v2687 = vmul.f32 %v2655, 0.1
      %v2688 = vmul.f32 %v2656, 0.1
      %v2689 = vmul.f32 %v2657, 0.1
      %v2690 = vmul.f32 %v2658, 0.1
      %v2691 = vmul.f32 %v2659, 0.1
      %v2692 = vmul.f32 %v2660, 0.1
      %v2693 = vmul.f32 %v2661, 0.1
      %v2694 = vmul.f32 %v2662, 0.1
      %v2695 = vmul.f32 %v2663, 0.1
      %v2696 = vsel %vm2664, %v2648, %v2680
      %v2697 = vsel %vm2665, %v2649, %v2681
      %v2698 = vsel %vm2666, %v2650, %v2682
      %v2699 = vsel %vm2667, %v2651, %v2683
      %v2700 = vsel %vm2668, %v2652, %v2684
      %v2701 = vsel %vm2669, %v2653, %v2685
      %v2702 = vsel %vm2670, %v2654, %v2686
      %v2703 = vsel %vm2671, %v2655, %v2687
      %v2704 = vsel %vm2672, %v2656, %v2688
      %v2705 = vsel %vm2673, %v2657, %v2689
      %v2706 = vsel %vm2674, %v2658, %v2690
      %v2707 = vsel %vm2675, %v2659, %v2691
      %v2708 = vsel %vm2676, %v2660, %v2692
      %v2709 = vsel %vm2677, %v2661, %v2693
      %v2710 = vsel %vm2678, %v2662, %v2694
      %v2711 = vsel %vm2679, %v2663, %v2695
      %v2712 = vpack.c.bf16 %v2696, %v2696
      %v2713 = vpack.c.bf16 %v2697, %v2697
      %v2714 = vpack.c.bf16 %v2698, %v2698
      %v2715 = vpack.c.bf16 %v2699, %v2699
      %v2716 = vpack.c.bf16 %v2700, %v2700
      %v2717 = vpack.c.bf16 %v2701, %v2701
      %v2718 = vpack.c.bf16 %v2702, %v2702
      %v2719 = vpack.c.bf16 %v2703, %v2703
      %v2720 = vpack.c.bf16 %v2704, %v2704
      %v2721 = vpack.c.bf16 %v2705, %v2705
      %v2722 = vpack.c.bf16 %v2706, %v2706
      %v2723 = vpack.c.bf16 %v2707, %v2707
      %v2724 = vpack.c.bf16 %v2708, %v2708
      %v2725 = vpack.c.bf16 %v2709, %v2709
      %v2726 = vpack.c.bf16 %v2710, %v2710
      %v2727 = vpack.c.bf16 %v2711, %v2711
      %2728 = vst.msk [vmem:[%s219] sm:$0xf] %vm694, %v2712
      %2729 = vst.msk [vmem:[%s219 + $0x4] sm:$0xf] %vm694, %v2713
      %2730 = vst.msk [vmem:[%s219 + $0x8] sm:$0xf] %vm694, %v2714
      %2731 = vst.msk [vmem:[%s219 + $0xc] sm:$0xf] %vm694, %v2715
      %2732 = vst.msk [vmem:[%s219 + $0x10] sm:$0xf] %vm694, %v2716
      %2733 = vst.msk [vmem:[%s219 + $0x14] sm:$0xf] %vm694, %v2717
      %2734 = vst.msk [vmem:[%s219 + $0x18] sm:$0xf] %vm694, %v2718
      %2735 = vst.msk [vmem:[%s219 + $0x1c] sm:$0xf] %vm694, %v2719
      %2736 = vst.msk [vmem:[%s219 + $0x20] sm:$0xf] %vm694, %v2720
      %2737 = vst.msk [vmem:[%s219 + $0x24] sm:$0xf] %vm694, %v2721
      %2738 = vst.msk [vmem:[%s219 + $0x28] sm:$0xf] %vm694, %v2722
      %2739 = vst.msk [vmem:[%s219 + $0x2c] sm:$0xf] %vm694, %v2723
      %2740 = vst.msk [vmem:[%s219 + $0x30] sm:$0xf] %vm694, %v2724
      %2741 = vst.msk [vmem:[%s219 + $0x34] sm:$0xf] %vm694, %v2725
      %2742 = vst.msk [vmem:[%s219 + $0x38] sm:$0xf] %vm694, %v2726
      %2743 = vst.msk [vmem:[%s219 + $0x3c] sm:$0xf] %vm694, %v2727
      %s2744 = smul.u32 16, %s20
      %p2745 = scmp.lt.s32.totalorder %s19, 1
      %s2746 = scalar_select %p2745, %s19, 1
      %p2747 = scmp.lt.s32.totalorder %s2744, 15
      %s2748 = scalar_select %p2747, %s2744, 15
      %s2749 = smul.addr %s2746, 16
      %s2750 = sadd.s32 %s2748, %s2749
      %s2751 = smul.addr %s2750, 4
      %s2752 = scalar_lea.vmem %s4, %s2751
      // Predicated region
      $region53: #{resblock_body_forward.6} parent=35 // pred_check
        %p2753 = pneg %p136
      $region54: #{resblock_body_forward.6} parent=35 // pred_check_branch
        %2755 = sbr.rel (%p2753) target = $region56
      $region55: #{resblock_body_forward.6} parent=35 // pred_region
        %s2756 = smul.u32 16, %s20
      $region56: #{resblock_body_forward.6} parent=35 // pred_fallthru
        _
    $region36: #{resblock_body_forward.6} parent=5 // pred_fallthru
      _
    %p2757 = scmp.le.s32.totalorder 2, %s10
    // Predicated region
    $region57: #{resblock_body_forward.6} parent=5 // pred_check
      %p2758 = pneg %p2757
    $region58: #{resblock_body_forward.6} parent=5 // pred_check_branch
      %2760 = sbr.rel (%p2758) target = $region60
    $region59: #{resblock_body_forward.6} parent=5 // pred_region
      %s2761 = ssub.s32 %s10, 2
      // Predicated region
      $region61: #{resblock_body_forward.6} parent=59 // pred_check
        %p2762 = pneg %p142
      $region62: #{resblock_body_forward.6} parent=59 // pred_check_branch
        %2764 = sbr.rel (%p2762) target = $region64
      $region63: #{resblock_body_forward.6} parent=59 // pred_region
        %s2765 = smul.u32 16, %s22
        %p2766 = scmp.lt.s32.totalorder %s21, 1
        %s2767 = scalar_select %p2766, %s21, 1
        %p2768 = scmp.lt.s32.totalorder %s2765, 15
        %s2769 = scalar_select %p2768, %s2765, 15
        %s2770 = smul.addr %s2767, 16
        %s2771 = sadd.s32 %s2769, %s2770
        %s2772 = smul.addr %s2771, 4
        %s2773 = scalar_lea.vmem %s4, %s2772
      $region64: #{resblock_body_forward.6} parent=59 // pred_fallthru
        _
    $region60: #{resblock_body_forward.6} parent=5 // pred_fallthru
      _
  $region6: #{resblock_body_forward.6} parent=0 // loop_footer
    %s14 = sadd.s32 1, %s10
  $region7: #{resblock_body_forward.6} parent=0 // loop_footer_branch
    %9 = sbr.rel target = $region3
  $region8: #{resblock_body_forward.6} parent=0 // loop_exit
    _

</llo_original>
